<compile_context>
chip_gen: v7x
topology: tpu7x:2x2x1
jax: 0.10.0
libtpu: 0.0.40
codegen_flags: <defaults>
</compile_context>

<pallas_src>
import jax
import jax.numpy as jnp
from jax.experimental import pallas as pl
from jax.experimental.pallas import tpu as pltpu


# ----------------------------- filter bank (plain-JAX glue) -----------------

def _signed_coords(M, N):
    dy = jnp.arange(M, dtype=jnp.float32)
    dy = jnp.where(dy >= (M + 1) // 2, dy - M, dy)
    dx = jnp.arange(N, dtype=jnp.float32)
    dx = jnp.where(dx >= (N + 1) // 2, dx - N, dx)
    return dy[:, None], dx[None, :]


def _morlet(M, N, sigma, xi, theta, slant):
    """Zero-mean Morlet wavelet sampled on the periodic M x N grid (re, im)."""
    y, x = _signed_coords(M, N)
    xr = x * jnp.cos(theta) + y * jnp.sin(theta)
    yr = -x * jnp.sin(theta) + y * jnp.cos(theta)
    env = jnp.exp(-(xr ** 2 + (slant ** 2) * yr ** 2) / (2.0 * sigma ** 2))
    norm = 1.0 / (2.0 * jnp.pi * sigma ** 2 / slant)
    env_n = norm * env
    gab_re = env_n * jnp.cos(xi * xr)
    gab_im = env_n * jnp.sin(xi * xr)
    beta_re = jnp.sum(gab_re) / jnp.sum(env_n)
    beta_im = jnp.sum(gab_im) / jnp.sum(env_n)
    return gab_re - beta_re * env_n, gab_im - beta_im * env_n


def _gaussian(M, N, sigma):
    y, x = _signed_coords(M, N)
    g = jnp.exp(-(x ** 2 + y ** 2) / (2.0 * sigma ** 2))
    return g / jnp.sum(g)


def _circulant(h):
    """W[q, p] = h[(p - q) mod grid] so that (x_flat @ W)[p] = sum_q x[q] h[p-q]."""
    M, N = h.shape
    qy = jnp.arange(M)[:, None, None, None]
    qx = jnp.arange(N)[None, :, None, None]
    py = jnp.arange(M)[None, None, :, None]
    px = jnp.arange(N)[None, None, None, :]
    W = h[(py - qy) % M, (px - qx) % N]
    return W.reshape(M * N, M * N)


def build_filter_bank(J, L, M, N, Ppad):
    """Deterministic Morlet filter bank -> fused circulant conv matrices.

    Returns:
      w1:     (MN, 2*J*L*MN) bf16, columns = [RE_0..RE_{JL-1} | IM_0..IM_{JL-1}],
              wavelets ordered j-major, theta-minor (kymatio order).
      phi_ds: (MN, Ppad) bf16, Gaussian low-pass with the 2**J subsample folded
              in; columns P..Ppad-1 are zero padding (lane-dense stores).
    """
    sigma0 = 0.8
    xi0 = 3.0 * jnp.pi / 4.0
    slant = 4.0 / L
    psi_r, psi_i = [], []
    for j in range(J):
        for l in range(L):
            theta = (l * jnp.pi) / L
            re, im = _morlet(M, N, sigma0 * 2.0 ** j, xi0 / 2.0 ** j, theta, slant)
            psi_r.append(_circulant(re))
            psi_i.append(_circulant(im))
    w1 = jnp.concatenate(
        [jnp.concatenate(psi_r, axis=1), jnp.concatenate(psi_i, axis=1)],
        axis=1,
    ).astype(jnp.bfloat16)                               # (MN, 2*JL*MN)

    phi = _gaussian(M, N, sigma0 * 2.0 ** J)
    W_phi = _circulant(phi).astype(jnp.float32)          # (MN, MN)
    stride = 2 ** J
    oy = jnp.arange(0, M, stride)
    ox = jnp.arange(0, N, stride)
    cols = (oy[:, None] * N + ox[None, :]).reshape(-1)
    phi_ds = W_phi[:, cols]                              # (MN, P)
    P = phi_ds.shape[1]
    if Ppad > P:
        phi_ds = jnp.pad(phi_ds, ((0, 0), (0, Ppad - P)))
    return w1, phi_ds.astype(jnp.bfloat16)               # (MN, Ppad)


def _vmem_capacity():
    try:
        return pltpu.get_tpu_info().vmem_capacity_bytes
    except Exception:
        return None


def _vmem_limit_bytes():
    """Generation-aware VMEM cap: ~75% of physical VMEM (v7x has only 64 MiB)."""
    cap = _vmem_capacity()
    return int(cap * 3 // 4) if cap is not None else None


def _pick_row_tile(BC):
    """Generation-aware batch*channel row tile (multiple of 8 sublanes)."""
    r8 = lambda v: ((max(v, 1) + 7) // 8) * 8
    cap = _vmem_capacity()
    if cap is not None and cap <= 64 * 1024 * 1024:
        # v7x-class: 2 TensorCores + 64 MiB VMEM -> prefer >= 2 grid steps.
        t = min(128, r8((BC + 1) // 2))
    elif BC >= 256:
        # v6e-class 256-wide MXU: bigger tile amortizes stationary weight loads.
        t = 256
    else:
        # v5e-class (128-wide MXU) / small problems.
        t = min(128, r8(BC))
    return max(8, min(t, r8(BC)))


# ----------------------------- Pallas kernel ---------------------------------

def _make_scat_kernel(J, L, T, MN, Ppad):
    JL = J * L

    def scat_kernel(x_ref, w1_ref, phi_ref, out_ref, p_scr):
        x = x_ref[...]                                   # (T, MN) bf16
        phi = phi_ref[...]                               # (MN, Ppad) bf16

        # ---- order 0: low-pass + subsample of the input -----------------
        out_ref[0:T, :] = jnp.dot(x, phi, preferred_element_type=jnp.float32)

        off2 = 1 + JL                                    # first order-2 channel
        for j1 in range(J):
            # ---- order 1, column block for scale j1 (L wavelets, re|im) --
            c0 = j1 * L * MN
            c1 = (j1 + 1) * L * MN
            re1 = jnp.dot(x, w1_ref[:, c0:c1],
                          preferred_element_type=jnp.float32)      # (T, L*MN)
            im1 = jnp.dot(x, w1_ref[:, JL * MN + c0: JL * MN + c1],
                          preferred_element_type=jnp.float32)      # (T, L*MN)
            u1 = jnp.sqrt(re1 * re1 + im1 * im1)                   # (T, L*MN) f32

            # Row-stack the L parents into the persistent bf16 scratch
            # (reused by both the low-pass and the order-2 matmuls).
            for l1 in range(L):
                p_scr[l1 * T:(l1 + 1) * T, :] = (
                    u1[:, l1 * MN:(l1 + 1) * MN].astype(jnp.bfloat16))
            parents = p_scr[...]                                   # (L*T, MN) bf16

            # Low-pass + subsample of the L order-1 channels: one matmul,
            # stored directly into the output rows (no concat slab).
            r0 = (1 + j1 * L) * T
            out_ref[r0:r0 + L * T, :] = jnp.dot(
                parents, phi, preferred_element_type=jnp.float32)

            # ---- order 2: children j2 > j1, all theta2, all L parents ----
            if j1 < J - 1:
                nc = (J - 1 - j1) * L
                d0 = (j1 + 1) * L * MN
                re2 = jnp.dot(parents, w1_ref[:, d0: JL * MN],
                              preferred_element_type=jnp.float32)  # (L*T, nc*MN)
                im2 = jnp.dot(parents, w1_ref[:, JL * MN + d0: 2 * JL * MN],
                              preferred_element_type=jnp.float32)
                u2 = jnp.sqrt(re2 * re2 + im2 * im2)               # (L*T, nc*MN)
                for l1 in range(L):
                    for c in range(nc):                 # c == (j2, theta2) asc.
                        k = off2 + l1 * nc + c
                        blk = u2[l1 * T:(l1 + 1) * T,
                                 c * MN:(c + 1) * MN].astype(jnp.bfloat16)
                        out_ref[k * T:(k + 1) * T, :] = jnp.dot(
                            blk, phi, preferred_element_type=jnp.float32)
                off2 += L * nc

    return scat_kernel


def scat_transform(x, J, L):
    """Equivalent of ScatTransform(C, J, L, M, N).forward(x) with x NCHW."""
    B, C, M, N = x.shape
    assert M % (2 ** J) == 0 and N % (2 ** J) == 0
    MN = M * N
    Mout, Nout = M >> J, N >> J
    P = Mout * Nout
    Ppad = ((P + 127) // 128) * 128                      # lane-dense output
    JL = J * L
    K = 1 + L * J + (L ** 2) * (J * (J - 1)) // 2
    BC = B * C

    w1, phi_ds = build_filter_bank(J, L, M, N, Ppad)     # bf16, bf16

    # Batch*channel rows tiled over the grid (generation-aware).
    T = _pick_row_tile(BC)
    BCp = ((BC + T - 1) // T) * T
    nb = BCp // T

    x_flat = x.reshape(BC, MN).astype(jnp.bfloat16)
    if BCp != BC:
        x_flat = jnp.pad(x_flat, ((0, BCp - BC), (0, 0)))

    # Advisory cost for XLA's scheduler.
    flops = 2 * BCp * MN * (2 * JL * MN)                           # order 1
    for j1 in range(J - 1):
        flops += 2 * 2 * (L * BCp) * MN * ((J - 1 - j1) * L * MN)  # order 2
    flops += 2 * K * BCp * MN * Ppad                               # low-pass
    trans = BCp * JL * MN
    for j1 in range(J - 1):
        trans += (L * BCp) * (J - 1 - j1) * L * MN
    bytes_accessed = (x_flat.size * 2 + w1.size * 2 + phi_ds.size * 2
                      + nb * K * T * Ppad * 4)

    out = pl.pallas_call(
        _make_scat_kernel(J, L, T, MN, Ppad),
        out_shape=jax.ShapeDtypeStruct((nb * K * T, Ppad), jnp.float32),
        grid=(nb,),
        in_specs=[
            pl.BlockSpec((T, MN), lambda i: (i, 0)),
            # Grid-invariant weights: single-buffered (biggest VMEM tenant).
            pl.BlockSpec((MN, 2 * JL * MN), lambda i: (0, 0),
                         pipeline_mode=pl.Buffered(1)),
            pl.BlockSpec((MN, Ppad), lambda i: (0, 0),
                         pipeline_mode=pl.Buffered(1)),
        ],
        out_specs=pl.BlockSpec((K * T, Ppad), lambda i: (i, 0)),
        scratch_shapes=[pltpu.VMEM((L * T, MN), jnp.bfloat16)],
        compiler_params=pltpu.CompilerParams(
            dimension_semantics=("parallel",),
            vmem_limit_bytes=_vmem_limit_bytes(),
        ),
        cost_estimate=pl.CostEstimate(
            flops=int(flops),
            transcendentals=int(trans),
            bytes_accessed=int(bytes_accessed),
        ),
    )(x_flat, w1, phi_ds)

    # (nb*K*T, Ppad) -> (nb, K, T, Ppad) -> (nb, T, K, Ppad) -> (BCp, K, Ppad)
    out = out.reshape(nb, K, T, Ppad).transpose(0, 2, 1, 3).reshape(BCp, K, Ppad)
    out = out[:BC, :, :P]
    return out.reshape(B, C, K, Mout, Nout)


# ----------------------------- demo -------------------------------------------

if __name__ == "__main__":
    B, C, M, N = 2, 4, 16, 16
    J, L = 2, 4
    key = jax.random.PRNGKey(0)
    x = jax.random.normal(key, (B, C, M, N), dtype=jnp.float32)

    out = scat_transform(x, J, L)
    out = jax.block_until_ready(out)

    K = 1 + L * J + (L ** 2) * (J * (J - 1)) // 2
    assert out.shape == (B, C, K, M >> J, N >> J), out.shape
    assert out.dtype == jnp.float32
    assert bool(jnp.all(jnp.isfinite(out)))
    print("KERNEL_OK")
</pallas_src>

<mosaic_0001>
module attributes {stable_mosaic.version = 11 : i64} {
  func.func @scat_kernel(%arg0: i32, %arg1: memref<8x256xbf16, #tpu.memory_space<vmem>>, %arg2: memref<256x4096xbf16, #tpu.memory_space<vmem>>, %arg3: memref<256x128xbf16, #tpu.memory_space<vmem>>, %arg4: memref<200x128xf32, #tpu.memory_space<vmem>>, %arg5: memref<32x256xbf16, #tpu.memory_space<vmem>>) attributes {dimension_semantics = [#tpu.dimension_semantics<parallel>], iteration_bounds = array<i64: 1>, scalar_prefetch = 0 : i64, scratch_operands = 1 : i64, tpu.core_type = #tpu.core_type<tc>, window_params = [{transform_indices = @transform_0, window_bounds = array<i64: 8, 256>}, {pipeline_mode = #tpu.pipeline_mode<synchronous>, transform_indices = @transform_1, window_bounds = array<i64: 256, 4096>}, {pipeline_mode = #tpu.pipeline_mode<synchronous>, transform_indices = @transform_2, window_bounds = array<i64: 256, 128>}, {transform_indices = @transform_3, window_bounds = array<i64: 200, 128>}]} {
    %c0 = arith.constant 0 : index
    %c0_0 = arith.constant 0 : index
    %0 = vector.load %arg1[%c0, %c0_0] : memref<8x256xbf16, #tpu.memory_space<vmem>>, vector<8x256xbf16>
    %c0_1 = arith.constant 0 : index
    %c0_2 = arith.constant 0 : index
    %1 = vector.load %arg3[%c0_1, %c0_2] : memref<256x128xbf16, #tpu.memory_space<vmem>>, vector<256x128xbf16>
    %cst = arith.constant dense<0.000000e+00> : vector<8x128xf32>
    %2 = tpu.matmul %0, %1, %cst {dimension_numbers = #tpu.dot_dimension_numbers<[1], [0], [0], [1], [0, 0, 1, 1], [], []>} : vector<8x256xbf16>, vector<256x128xbf16>, vector<8x128xf32> -> vector<8x128xf32>
    %c0_3 = arith.constant 0 : index
    %c0_4 = arith.constant 0 : index
    %3 = vector.load %arg4[%c0_3, %c0_4] : memref<200x128xf32, #tpu.memory_space<vmem>>, vector<8x128xf32>
    tpu.vector_store %arg4[%c0_3, %c0_4], %2 {strides = array<i32>} : memref<200x128xf32, #tpu.memory_space<vmem>>, vector<8x128xf32>,
    %c0_5 = arith.constant 0 : index
    %c0_6 = arith.constant 0 : index
    %4 = vector.load %arg2[%c0_5, %c0_6] : memref<256x4096xbf16, #tpu.memory_space<vmem>>, vector<256x1024xbf16>
    %cst_7 = arith.constant dense<0.000000e+00> : vector<8x1024xf32>
    %5 = tpu.matmul %0, %4, %cst_7 {dimension_numbers = #tpu.dot_dimension_numbers<[1], [0], [0], [1], [0, 0, 1, 1], [], []>} : vector<8x256xbf16>, vector<256x1024xbf16>, vector<8x1024xf32> -> vector<8x1024xf32>
    %c0_8 = arith.constant 0 : index
    %c2048 = arith.constant 2048 : index
    %6 = vector.load %arg2[%c0_8, %c2048] : memref<256x4096xbf16, #tpu.memory_space<vmem>>, vector<256x1024xbf16>
    %cst_9 = arith.constant dense<0.000000e+00> : vector<8x1024xf32>
    %7 = tpu.matmul %0, %6, %cst_9 {dimension_numbers = #tpu.dot_dimension_numbers<[1], [0], [0], [1], [0, 0, 1, 1], [], []>} : vector<8x256xbf16>, vector<256x1024xbf16>, vector<8x1024xf32> -> vector<8x1024xf32>
    %8 = arith.mulf %5, %5 : vector<8x1024xf32>
    %9 = arith.mulf %7, %7 : vector<8x1024xf32>
    %10 = arith.addf %8, %9 : vector<8x1024xf32>
    %11 = math.sqrt %10 : vector<8x1024xf32>
    %12 = vector.extract_strided_slice %11 {offsets = [0, 0], sizes = [8, 256], strides = [1, 1]} : vector<8x1024xf32> to vector<8x256xf32>
    %13 = arith.truncf %12 : vector<8x256xf32> to vector<8x256xbf16>
    %c0_10 = arith.constant 0 : index
    %c0_11 = arith.constant 0 : index
    %14 = vector.load %arg5[%c0_10, %c0_11] : memref<32x256xbf16, #tpu.memory_space<vmem>>, vector<8x256xbf16>
    tpu.vector_store %arg5[%c0_10, %c0_11], %13 {strides = array<i32>} : memref<32x256xbf16, #tpu.memory_space<vmem>>, vector<8x256xbf16>,
    %15 = vector.extract_strided_slice %11 {offsets = [0, 256], sizes = [8, 256], strides = [1, 1]} : vector<8x1024xf32> to vector<8x256xf32>
    %16 = arith.truncf %15 : vector<8x256xf32> to vector<8x256xbf16>
    %c8 = arith.constant 8 : index
    %c0_12 = arith.constant 0 : index
    %17 = vector.load %arg5[%c8, %c0_12] : memref<32x256xbf16, #tpu.memory_space<vmem>>, vector<8x256xbf16>
    tpu.vector_store %arg5[%c8, %c0_12], %16 {strides = array<i32>} : memref<32x256xbf16, #tpu.memory_space<vmem>>, vector<8x256xbf16>,
    %18 = vector.extract_strided_slice %11 {offsets = [0, 512], sizes = [8, 256], strides = [1, 1]} : vector<8x1024xf32> to vector<8x256xf32>
    %19 = arith.truncf %18 : vector<8x256xf32> to vector<8x256xbf16>
    %c16 = arith.constant 16 : index
    %c0_13 = arith.constant 0 : index
    %20 = vector.load %arg5[%c16, %c0_13] : memref<32x256xbf16, #tpu.memory_space<vmem>>, vector<8x256xbf16>
    tpu.vector_store %arg5[%c16, %c0_13], %19 {strides = array<i32>} : memref<32x256xbf16, #tpu.memory_space<vmem>>, vector<8x256xbf16>,
    %21 = vector.extract_strided_slice %11 {offsets = [0, 768], sizes = [8, 256], strides = [1, 1]} : vector<8x1024xf32> to vector<8x256xf32>
    %22 = arith.truncf %21 : vector<8x256xf32> to vector<8x256xbf16>
    %c24 = arith.constant 24 : index
    %c0_14 = arith.constant 0 : index
    %23 = vector.load %arg5[%c24, %c0_14] : memref<32x256xbf16, #tpu.memory_space<vmem>>, vector<8x256xbf16>
    tpu.vector_store %arg5[%c24, %c0_14], %22 {strides = array<i32>} : memref<32x256xbf16, #tpu.memory_space<vmem>>, vector<8x256xbf16>,
    %c0_15 = arith.constant 0 : index
    %c0_16 = arith.constant 0 : index
    %24 = vector.load %arg5[%c0_15, %c0_16] : memref<32x256xbf16, #tpu.memory_space<vmem>>, vector<32x256xbf16>
    %cst_17 = arith.constant dense<0.000000e+00> : vector<32x128xf32>
    %25 = tpu.matmul %24, %1, %cst_17 {dimension_numbers = #tpu.dot_dimension_numbers<[1], [0], [0], [1], [0, 0, 1, 1], [], []>} : vector<32x256xbf16>, vector<256x128xbf16>, vector<32x128xf32> -> vector<32x128xf32>
    %c8_18 = arith.constant 8 : index
    %c0_19 = arith.constant 0 : index
    %26 = vector.load %arg4[%c8_18, %c0_19] : memref<200x128xf32, #tpu.memory_space<vmem>>, vector<32x128xf32>
    tpu.vector_store %arg4[%c8_18, %c0_19], %25 {strides = array<i32>} : memref<200x128xf32, #tpu.memory_space<vmem>>, vector<32x128xf32>,
    %c0_20 = arith.constant 0 : index
    %c1024 = arith.constant 1024 : index
    %27 = vector.load %arg2[%c0_20, %c1024] : memref<256x4096xbf16, #tpu.memory_space<vmem>>, vector<256x1024xbf16>
    %cst_21 = arith.constant dense<0.000000e+00> : vector<32x1024xf32>
    %28 = tpu.matmul %24, %27, %cst_21 {dimension_numbers = #tpu.dot_dimension_numbers<[1], [0], [0], [1], [0, 0, 1, 1], [], []>} : vector<32x256xbf16>, vector<256x1024xbf16>, vector<32x1024xf32> -> vector<32x1024xf32>
    %c0_22 = arith.constant 0 : index
    %c3072 = arith.constant 3072 : index
    %29 = vector.load %arg2[%c0_22, %c3072] : memref<256x4096xbf16, #tpu.memory_space<vmem>>, vector<256x1024xbf16>
    %cst_23 = arith.constant dense<0.000000e+00> : vector<32x1024xf32>
    %30 = tpu.matmul %24, %29, %cst_23 {dimension_numbers = #tpu.dot_dimension_numbers<[1], [0], [0], [1], [0, 0, 1, 1], [], []>} : vector<32x256xbf16>, vector<256x1024xbf16>, vector<32x1024xf32> -> vector<32x1024xf32>
    %31 = arith.mulf %28, %28 : vector<32x1024xf32>
    %32 = arith.mulf %30, %30 : vector<32x1024xf32>
    %33 = arith.addf %31, %32 : vector<32x1024xf32>
    %34 = math.sqrt %33 : vector<32x1024xf32>
    %35 = vector.extract_strided_slice %34 {offsets = [0, 0], sizes = [8, 256], strides = [1, 1]} : vector<32x1024xf32> to vector<8x256xf32>
    %36 = arith.truncf %35 : vector<8x256xf32> to vector<8x256xbf16>
    %cst_24 = arith.constant dense<0.000000e+00> : vector<8x128xf32>
    %37 = tpu.matmul %36, %1, %cst_24 {dimension_numbers = #tpu.dot_dimension_numbers<[1], [0], [0], [1], [0, 0, 1, 1], [], []>} : vector<8x256xbf16>, vector<256x128xbf16>, vector<8x128xf32> -> vector<8x128xf32>
    %c72 = arith.constant 72 : index
    %c0_25 = arith.constant 0 : index
    %38 = vector.load %arg4[%c72, %c0_25] : memref<200x128xf32, #tpu.memory_space<vmem>>, vector<8x128xf32>
    tpu.vector_store %arg4[%c72, %c0_25], %37 {strides = array<i32>} : memref<200x128xf32, #tpu.memory_space<vmem>>, vector<8x128xf32>,
    %39 = vector.extract_strided_slice %34 {offsets = [0, 256], sizes = [8, 256], strides = [1, 1]} : vector<32x1024xf32> to vector<8x256xf32>
    %40 = arith.truncf %39 : vector<8x256xf32> to vector<8x256xbf16>
    %cst_26 = arith.constant dense<0.000000e+00> : vector<8x128xf32>
    %41 = tpu.matmul %40, %1, %cst_26 {dimension_numbers = #tpu.dot_dimension_numbers<[1], [0], [0], [1], [0, 0, 1, 1], [], []>} : vector<8x256xbf16>, vector<256x128xbf16>, vector<8x128xf32> -> vector<8x128xf32>
    %c80 = arith.constant 80 : index
    %c0_27 = arith.constant 0 : index
    %42 = vector.load %arg4[%c80, %c0_27] : memref<200x128xf32, #tpu.memory_space<vmem>>, vector<8x128xf32>
    tpu.vector_store %arg4[%c80, %c0_27], %41 {strides = array<i32>} : memref<200x128xf32, #tpu.memory_space<vmem>>, vector<8x128xf32>,
    %43 = vector.extract_strided_slice %34 {offsets = [0, 512], sizes = [8, 256], strides = [1, 1]} : vector<32x1024xf32> to vector<8x256xf32>
    %44 = arith.truncf %43 : vector<8x256xf32> to vector<8x256xbf16>
    %cst_28 = arith.constant dense<0.000000e+00> : vector<8x128xf32>
    %45 = tpu.matmul %44, %1, %cst_28 {dimension_numbers = #tpu.dot_dimension_numbers<[1], [0], [0], [1], [0, 0, 1, 1], [], []>} : vector<8x256xbf16>, vector<256x128xbf16>, vector<8x128xf32> -> vector<8x128xf32>
    %c88 = arith.constant 88 : index
    %c0_29 = arith.constant 0 : index
    %46 = vector.load %arg4[%c88, %c0_29] : memref<200x128xf32, #tpu.memory_space<vmem>>, vector<8x128xf32>
    tpu.vector_store %arg4[%c88, %c0_29], %45 {strides = array<i32>} : memref<200x128xf32, #tpu.memory_space<vmem>>, vector<8x128xf32>,
    %47 = vector.extract_strided_slice %34 {offsets = [0, 768], sizes = [8, 256], strides = [1, 1]} : vector<32x1024xf32> to vector<8x256xf32>
    %48 = arith.truncf %47 : vector<8x256xf32> to vector<8x256xbf16>
    %cst_30 = arith.constant dense<0.000000e+00> : vector<8x128xf32>
    %49 = tpu.matmul %48, %1, %cst_30 {dimension_numbers = #tpu.dot_dimension_numbers<[1], [0], [0], [1], [0, 0, 1, 1], [], []>} : vector<8x256xbf16>, vector<256x128xbf16>, vector<8x128xf32> -> vector<8x128xf32>
    %c96 = arith.constant 96 : index
    %c0_31 = arith.constant 0 : index
    %50 = vector.load %arg4[%c96, %c0_31] : memref<200x128xf32, #tpu.memory_space<vmem>>, vector<8x128xf32>
    tpu.vector_store %arg4[%c96, %c0_31], %49 {strides = array<i32>} : memref<200x128xf32, #tpu.memory_space<vmem>>, vector<8x128xf32>,
    %51 = vector.extract_strided_slice %34 {offsets = [8, 0], sizes = [8, 256], strides = [1, 1]} : vector<32x1024xf32> to vector<8x256xf32>
    %52 = arith.truncf %51 : vector<8x256xf32> to vector<8x256xbf16>
    %cst_32 = arith.constant dense<0.000000e+00> : vector<8x128xf32>
    %53 = tpu.matmul %52, %1, %cst_32 {dimension_numbers = #tpu.dot_dimension_numbers<[1], [0], [0], [1], [0, 0, 1, 1], [], []>} : vector<8x256xbf16>, vector<256x128xbf16>, vector<8x128xf32> -> vector<8x128xf32>
    %c104 = arith.constant 104 : index
    %c0_33 = arith.constant 0 : index
    %54 = vector.load %arg4[%c104, %c0_33] : memref<200x128xf32, #tpu.memory_space<vmem>>, vector<8x128xf32>
    tpu.vector_store %arg4[%c104, %c0_33], %53 {strides = array<i32>} : memref<200x128xf32, #tpu.memory_space<vmem>>, vector<8x128xf32>,
    %55 = vector.extract_strided_slice %34 {offsets = [8, 256], sizes = [8, 256], strides = [1, 1]} : vector<32x1024xf32> to vector<8x256xf32>
    %56 = arith.truncf %55 : vector<8x256xf32> to vector<8x256xbf16>
    %cst_34 = arith.constant dense<0.000000e+00> : vector<8x128xf32>
    %57 = tpu.matmul %56, %1, %cst_34 {dimension_numbers = #tpu.dot_dimension_numbers<[1], [0], [0], [1], [0, 0, 1, 1], [], []>} : vector<8x256xbf16>, vector<256x128xbf16>, vector<8x128xf32> -> vector<8x128xf32>
    %c112 = arith.constant 112 : index
    %c0_35 = arith.constant 0 : index
    %58 = vector.load %arg4[%c112, %c0_35] : memref<200x128xf32, #tpu.memory_space<vmem>>, vector<8x128xf32>
    tpu.vector_store %arg4[%c112, %c0_35], %57 {strides = array<i32>} : memref<200x128xf32, #tpu.memory_space<vmem>>, vector<8x128xf32>,
    %59 = vector.extract_strided_slice %34 {offsets = [8, 512], sizes = [8, 256], strides = [1, 1]} : vector<32x1024xf32> to vector<8x256xf32>
    %60 = arith.truncf %59 : vector<8x256xf32> to vector<8x256xbf16>
    %cst_36 = arith.constant dense<0.000000e+00> : vector<8x128xf32>
    %61 = tpu.matmul %60, %1, %cst_36 {dimension_numbers = #tpu.dot_dimension_numbers<[1], [0], [0], [1], [0, 0, 1, 1], [], []>} : vector<8x256xbf16>, vector<256x128xbf16>, vector<8x128xf32> -> vector<8x128xf32>
    %c120 = arith.constant 120 : index
    %c0_37 = arith.constant 0 : index
    %62 = vector.load %arg4[%c120, %c0_37] : memref<200x128xf32, #tpu.memory_space<vmem>>, vector<8x128xf32>
    tpu.vector_store %arg4[%c120, %c0_37], %61 {strides = array<i32>} : memref<200x128xf32, #tpu.memory_space<vmem>>, vector<8x128xf32>,
    %63 = vector.extract_strided_slice %34 {offsets = [8, 768], sizes = [8, 256], strides = [1, 1]} : vector<32x1024xf32> to vector<8x256xf32>
    %64 = arith.truncf %63 : vector<8x256xf32> to vector<8x256xbf16>
    %cst_38 = arith.constant dense<0.000000e+00> : vector<8x128xf32>
    %65 = tpu.matmul %64, %1, %cst_38 {dimension_numbers = #tpu.dot_dimension_numbers<[1], [0], [0], [1], [0, 0, 1, 1], [], []>} : vector<8x256xbf16>, vector<256x128xbf16>, vector<8x128xf32> -> vector<8x128xf32>
    %c128 = arith.constant 128 : index
    %c0_39 = arith.constant 0 : index
    %66 = vector.load %arg4[%c128, %c0_39] : memref<200x128xf32, #tpu.memory_space<vmem>>, vector<8x128xf32>
    tpu.vector_store %arg4[%c128, %c0_39], %65 {strides = array<i32>} : memref<200x128xf32, #tpu.memory_space<vmem>>, vector<8x128xf32>,
    %67 = vector.extract_strided_slice %34 {offsets = [16, 0], sizes = [8, 256], strides = [1, 1]} : vector<32x1024xf32> to vector<8x256xf32>
    %68 = arith.truncf %67 : vector<8x256xf32> to vector<8x256xbf16>
    %cst_40 = arith.constant dense<0.000000e+00> : vector<8x128xf32>
    %69 = tpu.matmul %68, %1, %cst_40 {dimension_numbers = #tpu.dot_dimension_numbers<[1], [0], [0], [1], [0, 0, 1, 1], [], []>} : vector<8x256xbf16>, vector<256x128xbf16>, vector<8x128xf32> -> vector<8x128xf32>
    %c136 = arith.constant 136 : index
    %c0_41 = arith.constant 0 : index
    %70 = vector.load %arg4[%c136, %c0_41] : memref<200x128xf32, #tpu.memory_space<vmem>>, vector<8x128xf32>
    tpu.vector_store %arg4[%c136, %c0_41], %69 {strides = array<i32>} : memref<200x128xf32, #tpu.memory_space<vmem>>, vector<8x128xf32>,
    %71 = vector.extract_strided_slice %34 {offsets = [16, 256], sizes = [8, 256], strides = [1, 1]} : vector<32x1024xf32> to vector<8x256xf32>
    %72 = arith.truncf %71 : vector<8x256xf32> to vector<8x256xbf16>
    %cst_42 = arith.constant dense<0.000000e+00> : vector<8x128xf32>
    %73 = tpu.matmul %72, %1, %cst_42 {dimension_numbers = #tpu.dot_dimension_numbers<[1], [0], [0], [1], [0, 0, 1, 1], [], []>} : vector<8x256xbf16>, vector<256x128xbf16>, vector<8x128xf32> -> vector<8x128xf32>
    %c144 = arith.constant 144 : index
    %c0_43 = arith.constant 0 : index
    %74 = vector.load %arg4[%c144, %c0_43] : memref<200x128xf32, #tpu.memory_space<vmem>>, vector<8x128xf32>
    tpu.vector_store %arg4[%c144, %c0_43], %73 {strides = array<i32>} : memref<200x128xf32, #tpu.memory_space<vmem>>, vector<8x128xf32>,
    %75 = vector.extract_strided_slice %34 {offsets = [16, 512], sizes = [8, 256], strides = [1, 1]} : vector<32x1024xf32> to vector<8x256xf32>
    %76 = arith.truncf %75 : vector<8x256xf32> to vector<8x256xbf16>
    %cst_44 = arith.constant dense<0.000000e+00> : vector<8x128xf32>
    %77 = tpu.matmul %76, %1, %cst_44 {dimension_numbers = #tpu.dot_dimension_numbers<[1], [0], [0], [1], [0, 0, 1, 1], [], []>} : vector<8x256xbf16>, vector<256x128xbf16>, vector<8x128xf32> -> vector<8x128xf32>
    %c152 = arith.constant 152 : index
    %c0_45 = arith.constant 0 : index
    %78 = vector.load %arg4[%c152, %c0_45] : memref<200x128xf32, #tpu.memory_space<vmem>>, vector<8x128xf32>
    tpu.vector_store %arg4[%c152, %c0_45], %77 {strides = array<i32>} : memref<200x128xf32, #tpu.memory_space<vmem>>, vector<8x128xf32>,
    %79 = vector.extract_strided_slice %34 {offsets = [16, 768], sizes = [8, 256], strides = [1, 1]} : vector<32x1024xf32> to vector<8x256xf32>
    %80 = arith.truncf %79 : vector<8x256xf32> to vector<8x256xbf16>
    %cst_46 = arith.constant dense<0.000000e+00> : vector<8x128xf32>
    %81 = tpu.matmul %80, %1, %cst_46 {dimension_numbers = #tpu.dot_dimension_numbers<[1], [0], [0], [1], [0, 0, 1, 1], [], []>} : vector<8x256xbf16>, vector<256x128xbf16>, vector<8x128xf32> -> vector<8x128xf32>
    %c160 = arith.constant 160 : index
    %c0_47 = arith.constant 0 : index
    %82 = vector.load %arg4[%c160, %c0_47] : memref<200x128xf32, #tpu.memory_space<vmem>>, vector<8x128xf32>
    tpu.vector_store %arg4[%c160, %c0_47], %81 {strides = array<i32>} : memref<200x128xf32, #tpu.memory_space<vmem>>, vector<8x128xf32>,
    %83 = vector.extract_strided_slice %34 {offsets = [24, 0], sizes = [8, 256], strides = [1, 1]} : vector<32x1024xf32> to vector<8x256xf32>
    %84 = arith.truncf %83 : vector<8x256xf32> to vector<8x256xbf16>
    %cst_48 = arith.constant dense<0.000000e+00> : vector<8x128xf32>
    %85 = tpu.matmul %84, %1, %cst_48 {dimension_numbers = #tpu.dot_dimension_numbers<[1], [0], [0], [1], [0, 0, 1, 1], [], []>} : vector<8x256xbf16>, vector<256x128xbf16>, vector<8x128xf32> -> vector<8x128xf32>
    %c168 = arith.constant 168 : index
    %c0_49 = arith.constant 0 : index
    %86 = vector.load %arg4[%c168, %c0_49] : memref<200x128xf32, #tpu.memory_space<vmem>>, vector<8x128xf32>
    tpu.vector_store %arg4[%c168, %c0_49], %85 {strides = array<i32>} : memref<200x128xf32, #tpu.memory_space<vmem>>, vector<8x128xf32>,
    %87 = vector.extract_strided_slice %34 {offsets = [24, 256], sizes = [8, 256], strides = [1, 1]} : vector<32x1024xf32> to vector<8x256xf32>
    %88 = arith.truncf %87 : vector<8x256xf32> to vector<8x256xbf16>
    %cst_50 = arith.constant dense<0.000000e+00> : vector<8x128xf32>
    %89 = tpu.matmul %88, %1, %cst_50 {dimension_numbers = #tpu.dot_dimension_numbers<[1], [0], [0], [1], [0, 0, 1, 1], [], []>} : vector<8x256xbf16>, vector<256x128xbf16>, vector<8x128xf32> -> vector<8x128xf32>
    %c176 = arith.constant 176 : index
    %c0_51 = arith.constant 0 : index
    %90 = vector.load %arg4[%c176, %c0_51] : memref<200x128xf32, #tpu.memory_space<vmem>>, vector<8x128xf32>
    tpu.vector_store %arg4[%c176, %c0_51], %89 {strides = array<i32>} : memref<200x128xf32, #tpu.memory_space<vmem>>, vector<8x128xf32>,
    %91 = vector.extract_strided_slice %34 {offsets = [24, 512], sizes = [8, 256], strides = [1, 1]} : vector<32x1024xf32> to vector<8x256xf32>
    %92 = arith.truncf %91 : vector<8x256xf32> to vector<8x256xbf16>
    %cst_52 = arith.constant dense<0.000000e+00> : vector<8x128xf32>
    %93 = tpu.matmul %92, %1, %cst_52 {dimension_numbers = #tpu.dot_dimension_numbers<[1], [0], [0], [1], [0, 0, 1, 1], [], []>} : vector<8x256xbf16>, vector<256x128xbf16>, vector<8x128xf32> -> vector<8x128xf32>
    %c184 = arith.constant 184 : index
    %c0_53 = arith.constant 0 : index
    %94 = vector.load %arg4[%c184, %c0_53] : memref<200x128xf32, #tpu.memory_space<vmem>>, vector<8x128xf32>
    tpu.vector_store %arg4[%c184, %c0_53], %93 {strides = array<i32>} : memref<200x128xf32, #tpu.memory_space<vmem>>, vector<8x128xf32>,
    %95 = vector.extract_strided_slice %34 {offsets = [24, 768], sizes = [8, 256], strides = [1, 1]} : vector<32x1024xf32> to vector<8x256xf32>
    %96 = arith.truncf %95 : vector<8x256xf32> to vector<8x256xbf16>
    %cst_54 = arith.constant dense<0.000000e+00> : vector<8x128xf32>
    %97 = tpu.matmul %96, %1, %cst_54 {dimension_numbers = #tpu.dot_dimension_numbers<[1], [0], [0], [1], [0, 0, 1, 1], [], []>} : vector<8x256xbf16>, vector<256x128xbf16>, vector<8x128xf32> -> vector<8x128xf32>
    %c192 = arith.constant 192 : index
    %c0_55 = arith.constant 0 : index
    %98 = vector.load %arg4[%c192, %c0_55] : memref<200x128xf32, #tpu.memory_space<vmem>>, vector<8x128xf32>
    tpu.vector_store %arg4[%c192, %c0_55], %97 {strides = array<i32>} : memref<200x128xf32, #tpu.memory_space<vmem>>, vector<8x128xf32>,
    %c0_56 = arith.constant 0 : index
    %c1024_57 = arith.constant 1024 : index
    %99 = vector.load %arg2[%c0_56, %c1024_57] : memref<256x4096xbf16, #tpu.memory_space<vmem>>, vector<256x1024xbf16>
    %cst_58 = arith.constant dense<0.000000e+00> : vector<8x1024xf32>
    %100 = tpu.matmul %0, %99, %cst_58 {dimension_numbers = #tpu.dot_dimension_numbers<[1], [0], [0], [1], [0, 0, 1, 1], [], []>} : vector<8x256xbf16>, vector<256x1024xbf16>, vector<8x1024xf32> -> vector<8x1024xf32>
    %c0_59 = arith.constant 0 : index
    %c3072_60 = arith.constant 3072 : index
    %101 = vector.load %arg2[%c0_59, %c3072_60] : memref<256x4096xbf16, #tpu.memory_space<vmem>>, vector<256x1024xbf16>
    %cst_61 = arith.constant dense<0.000000e+00> : vector<8x1024xf32>
    %102 = tpu.matmul %0, %101, %cst_61 {dimension_numbers = #tpu.dot_dimension_numbers<[1], [0], [0], [1], [0, 0, 1, 1], [], []>} : vector<8x256xbf16>, vector<256x1024xbf16>, vector<8x1024xf32> -> vector<8x1024xf32>
    %103 = arith.mulf %100, %100 : vector<8x1024xf32>
    %104 = arith.mulf %102, %102 : vector<8x1024xf32>
    %105 = arith.addf %103, %104 : vector<8x1024xf32>
    %106 = math.sqrt %105 : vector<8x1024xf32>
    %107 = vector.extract_strided_slice %106 {offsets = [0, 0], sizes = [8, 256], strides = [1, 1]} : vector<8x1024xf32> to vector<8x256xf32>
    %108 = arith.truncf %107 : vector<8x256xf32> to vector<8x256xbf16>
    %c0_62 = arith.constant 0 : index
    %c0_63 = arith.constant 0 : index
    %109 = vector.load %arg5[%c0_62, %c0_63] : memref<32x256xbf16, #tpu.memory_space<vmem>>, vector<8x256xbf16>
    tpu.vector_store %arg5[%c0_62, %c0_63], %108 {strides = array<i32>} : memref<32x256xbf16, #tpu.memory_space<vmem>>, vector<8x256xbf16>,
    %110 = vector.extract_strided_slice %106 {offsets = [0, 256], sizes = [8, 256], strides = [1, 1]} : vector<8x1024xf32> to vector<8x256xf32>
    %111 = arith.truncf %110 : vector<8x256xf32> to vector<8x256xbf16>
    %c8_64 = arith.constant 8 : index
    %c0_65 = arith.constant 0 : index
    %112 = vector.load %arg5[%c8_64, %c0_65] : memref<32x256xbf16, #tpu.memory_space<vmem>>, vector<8x256xbf16>
    tpu.vector_store %arg5[%c8_64, %c0_65], %111 {strides = array<i32>} : memref<32x256xbf16, #tpu.memory_space<vmem>>, vector<8x256xbf16>,
    %113 = vector.extract_strided_slice %106 {offsets = [0, 512], sizes = [8, 256], strides = [1, 1]} : vector<8x1024xf32> to vector<8x256xf32>
    %114 = arith.truncf %113 : vector<8x256xf32> to vector<8x256xbf16>
    %c16_66 = arith.constant 16 : index
    %c0_67 = arith.constant 0 : index
    %115 = vector.load %arg5[%c16_66, %c0_67] : memref<32x256xbf16, #tpu.memory_space<vmem>>, vector<8x256xbf16>
    tpu.vector_store %arg5[%c16_66, %c0_67], %114 {strides = array<i32>} : memref<32x256xbf16, #tpu.memory_space<vmem>>, vector<8x256xbf16>,
    %116 = vector.extract_strided_slice %106 {offsets = [0, 768], sizes = [8, 256], strides = [1, 1]} : vector<8x1024xf32> to vector<8x256xf32>
    %117 = arith.truncf %116 : vector<8x256xf32> to vector<8x256xbf16>
    %c24_68 = arith.constant 24 : index
    %c0_69 = arith.constant 0 : index
    %118 = vector.load %arg5[%c24_68, %c0_69] : memref<32x256xbf16, #tpu.memory_space<vmem>>, vector<8x256xbf16>
    tpu.vector_store %arg5[%c24_68, %c0_69], %117 {strides = array<i32>} : memref<32x256xbf16, #tpu.memory_space<vmem>>, vector<8x256xbf16>,
    %c0_70 = arith.constant 0 : index
    %c0_71 = arith.constant 0 : index
    %119 = vector.load %arg5[%c0_70, %c0_71] : memref<32x256xbf16, #tpu.memory_space<vmem>>, vector<32x256xbf16>
    %cst_72 = arith.constant dense<0.000000e+00> : vector<32x128xf32>
    %120 = tpu.matmul %119, %1, %cst_72 {dimension_numbers = #tpu.dot_dimension_numbers<[1], [0], [0], [1], [0, 0, 1, 1], [], []>} : vector<32x256xbf16>, vector<256x128xbf16>, vector<32x128xf32> -> vector<32x128xf32>
    %c40 = arith.constant 40 : index
    %c0_73 = arith.constant 0 : index
    %121 = vector.load %arg4[%c40, %c0_73] : memref<200x128xf32, #tpu.memory_space<vmem>>, vector<32x128xf32>
    tpu.vector_store %arg4[%c40, %c0_73], %120 {strides = array<i32>} : memref<200x128xf32, #tpu.memory_space<vmem>>, vector<32x128xf32>,
    return
  }
  func.func @transform_0(%arg0: i32) -> (i32, i32) {
    %c0_i32 = arith.constant 0 : i32
    %c0_i32_0 = arith.constant 0 : i32
    return %arg0, %c0_i32 : i32, i32
  }
  func.func @transform_1(%arg0: i32) -> (i32, i32) {
    %c0_i32 = arith.constant 0 : i32
    %c0_i32_0 = arith.constant 0 : i32
    %c0_i32_1 = arith.constant 0 : i32
    return %c0_i32, %c0_i32_0 : i32, i32
  }
  func.func @transform_2(%arg0: i32) -> (i32, i32) {
    %c0_i32 = arith.constant 0 : i32
    %c0_i32_0 = arith.constant 0 : i32
    %c0_i32_1 = arith.constant 0 : i32
    return %c0_i32, %c0_i32_0 : i32, i32
  }
  func.func @transform_3(%arg0: i32) -> (i32, i32) {
    %c0_i32 = arith.constant 0 : i32
    %c0_i32_0 = arith.constant 0 : i32
    return %arg0, %c0_i32 : i32, i32
  }
}

</mosaic_0001>

<llo_original>
// kernel: tpu_custom_call.1
$region0: #{tpu_custom_call.1}
  #allocation0 [shape = 'u32[]', space=smem, size = 0x4, offset = 0x4, fixed_abs, tag = 'smem constant byte address 0x4 - core index']
  #allocation1 [shape = 'u32[144,128]{1,0:T(1,128)}', space=vmem, size = 0x12000, scoped, tag = 'internal scratch']
  #allocation2 [shape = 'bf16[32,256]{1,0:T(16,128)(2,1)}', space=vmem, size = 0x4000, scoped, tag = 'scratch operand']
  %s0 = inlined_call_operand.hbm [shape: bf16[8,256], index: 0, kind: input, shape index: {}]
  %s1 = inlined_call_operand.hbm [shape: bf16[256,4096], index: 1, kind: input, shape index: {}]
  %s2 = inlined_call_operand.hbm [shape: bf16[256,128], index: 2, kind: input, shape index: {}]
  %s3 = inlined_call_operand.hbm [shape: f32[200,128], index: 3, kind: output, shape index: {}]
  %s4 = sld [smem:[#allocation0]]
  $region34: #{tpu_custom_call.1} parent=0
    _
  %s6 = ssub.s32 1, %s4
  %s7 = scalar_select 0, %s6, %s4
  $region1: #{tpu_custom_call.1} parent=0
    #allocation3 [shape = 'u8[4096]{0}', space=vmem, size = 0x1000, scoped, tag = 'input window, operand 0, single buffered']
    #allocation4 [shape = 's32[1]{0}', space=sflag, size = 0x4, scoped, tag = 'scoped memory for tpu_custom_call.1']
    #allocation5 [shape = 's32[1]{0}', space=sflag, size = 0x4, scoped, tag = 'scoped memory for tpu_custom_call.1']
    #allocation6 [shape = 'u8[2097152]{0}', space=vmem, size = 0x200000, scoped, tag = 'input window, operand 1, single buffered']
    #allocation7 [shape = 's32[1]{0}', space=sflag, size = 0x4, scoped, tag = 'scoped memory for tpu_custom_call.1']
    #allocation8 [shape = 'u8[65536]{0}', space=vmem, size = 0x10000, scoped, tag = 'input window, operand 2, single buffered']
    #allocation9 [shape = 'u8[102400]{0}', space=vmem, size = 0x19000, scoped, tag = 'output window, operand 0, single buffered']
    %8 = vsyncpa [#allocation4], 0
    %9 = vsyncpa [#allocation7], 0
    %10 = vsyncpa [#allocation5], 0
    // Predicated region
    $region2: #{tpu_custom_call.1} parent=1 // pred_check
      _
    $region3: #{tpu_custom_call.1} parent=1 // pred_check_branch
      %12 = sbr.rel (0) target = $region5
    $region4: #{tpu_custom_call.1} parent=1 // pred_region
      %s14 = ssub.s32 128, 128
      %15 = vsyncadd [#allocation4], %s14
      %s17 = sshll.u32 [#allocation3], 4
      %s18 = int_to_ptr.vmem [resolvable:$true] %s17
      %20 = dma.hbm_to_vmem [thread:$0]  %s0, 128, %s18, [#allocation4]
    $region5: #{tpu_custom_call.1} parent=1 // pred_fallthru
      _
    // Predicated region
    $region6: #{tpu_custom_call.1} parent=1 // pred_check
      _
    $region7: #{tpu_custom_call.1} parent=1 // pred_check_branch
      %22 = sbr.rel (0) target = $region9
    $region8: #{tpu_custom_call.1} parent=1 // pred_region
      %s24 = ssub.s32 65536, 65536
      %25 = vsyncadd [#allocation7], %s24
      %s26 = sshll.u32 [#allocation6], 4
      %s27 = int_to_ptr.vmem [resolvable:$true] %s26
      %32 = dma.hbm_to_vmem [thread:$0]  %s1, 65536, %s27, [#allocation7], 2048, 2048, 128
    $region9: #{tpu_custom_call.1} parent=1 // pred_fallthru
      _
    // Predicated region
    $region10: #{tpu_custom_call.1} parent=1 // pred_check
      _
    $region11: #{tpu_custom_call.1} parent=1 // pred_check_branch
      %34 = sbr.rel (0) target = $region13
    $region12: #{tpu_custom_call.1} parent=1 // pred_region
      %s36 = ssub.s32 2048, 2048
      %37 = vsyncadd [#allocation7], %s36
      %s38 = sshll.u32 [#allocation8], 4
      %s39 = int_to_ptr.vmem [resolvable:$true] %s38
      %44 = dma.hbm_to_vmem [thread:$0]  %s2, 2048, %s39, [#allocation7], 64, 64, 4
    $region13: #{tpu_custom_call.1} parent=1 // pred_fallthru
      _
    // Predicated region
    $region14: #{tpu_custom_call.1} parent=1 // pred_check
      _
    $region15: #{tpu_custom_call.1} parent=1 // pred_check_branch
      %46 = sbr.rel (0) target = $region17
    $region16: #{tpu_custom_call.1} parent=1 // pred_region
      %47 = dma.done [#allocation4], 128
    $region17: #{tpu_custom_call.1} parent=1 // pred_fallthru
      _
    // Predicated region
    $region18: #{tpu_custom_call.1} parent=1 // pred_check
      _
    $region19: #{tpu_custom_call.1} parent=1 // pred_check_branch
      %49 = sbr.rel (0) target = $region21
    $region20: #{tpu_custom_call.1} parent=1 // pred_region
      %50 = dma.done [#allocation7], 65536
    $region21: #{tpu_custom_call.1} parent=1 // pred_fallthru
      _
    // Predicated region
    $region22: #{tpu_custom_call.1} parent=1 // pred_check
      _
    $region23: #{tpu_custom_call.1} parent=1 // pred_check_branch
      %52 = sbr.rel (0) target = $region25
    $region24: #{tpu_custom_call.1} parent=1 // pred_region
      %53 = dma.done [#allocation7], 2048
    $region25: #{tpu_custom_call.1} parent=1 // pred_fallthru
      _
    %v55 = vld [vmem:[#allocation3] sm:$0xff]
    %v56 = vld [vmem:[#allocation8] sm:$0xf]
    %v57 = vld [vmem:[#allocation8 + $0x4] sm:$0xf]
    %v58 = vld [vmem:[#allocation8 + $0x8] sm:$0xf]
    %v59 = vld [vmem:[#allocation8 + $0xc] sm:$0xf]
    %v60 = vld [vmem:[#allocation8 + $0x10] sm:$0xf]
    %v61 = vld [vmem:[#allocation8 + $0x14] sm:$0xf]
    %v62 = vld [vmem:[#allocation8 + $0x18] sm:$0xf]
    %v63 = vld [vmem:[#allocation8 + $0x1c] sm:$0xf]
    %v64 = vld [vmem:[#allocation8 + $0x20] sm:$0xf]
    %v65 = vld [vmem:[#allocation8 + $0x24] sm:$0xf]
    %v66 = vld [vmem:[#allocation8 + $0x28] sm:$0xf]
    %v67 = vld [vmem:[#allocation8 + $0x2c] sm:$0xf]
    %v68 = vld [vmem:[#allocation8 + $0x30] sm:$0xf]
    %v69 = vld [vmem:[#allocation8 + $0x34] sm:$0xf]
    %v70 = vld [vmem:[#allocation8 + $0x38] sm:$0xf]
    %v71 = vld [vmem:[#allocation8 + $0x3c] sm:$0xf]
    %v72 = vld [vmem:[#allocation8 + $0x40] sm:$0xf]
    %v73 = vld [vmem:[#allocation8 + $0x44] sm:$0xf]
    %v74 = vld [vmem:[#allocation8 + $0x48] sm:$0xf]
    %v75 = vld [vmem:[#allocation8 + $0x4c] sm:$0xf]
    %v76 = vld [vmem:[#allocation8 + $0x50] sm:$0xf]
    %v77 = vld [vmem:[#allocation8 + $0x54] sm:$0xf]
    %v78 = vld [vmem:[#allocation8 + $0x58] sm:$0xf]
    %v79 = vld [vmem:[#allocation8 + $0x5c] sm:$0xf]
    %v80 = vld [vmem:[#allocation8 + $0x60] sm:$0xf]
    %v81 = vld [vmem:[#allocation8 + $0x64] sm:$0xf]
    %v82 = vld [vmem:[#allocation8 + $0x68] sm:$0xf]
    %v83 = vld [vmem:[#allocation8 + $0x6c] sm:$0xf]
    %v84 = vld [vmem:[#allocation8 + $0x70] sm:$0xf]
    %v85 = vld [vmem:[#allocation8 + $0x74] sm:$0xf]
    %v86 = vld [vmem:[#allocation8 + $0x78] sm:$0xf]
    %v87 = vld [vmem:[#allocation8 + $0x7c] sm:$0xf]
    %v89 = vunpack.c.l.b16 %v55
    %v90 = vunpack.c.h.b16 %v55
    %v91 = vpack.c.b16 %v89, %v89
    %v92 = vpack.c.b16 %v90, %v90
    %v127 = vunpack.c.l.b16 %v56
    %v128 = vunpack.c.l.b16 %v57
    %v129 = vunpack.c.l.b16 %v58
    %v130 = vunpack.c.l.b16 %v59
    %v131 = vunpack.c.l.b16 %v60
    %v132 = vunpack.c.l.b16 %v61
    %v133 = vunpack.c.l.b16 %v62
    %v134 = vunpack.c.l.b16 %v63
    %v135 = vunpack.c.l.b16 %v64
    %v136 = vunpack.c.l.b16 %v65
    %v137 = vunpack.c.l.b16 %v66
    %v138 = vunpack.c.l.b16 %v67
    %v139 = vunpack.c.l.b16 %v68
    %v140 = vunpack.c.l.b16 %v69
    %v141 = vunpack.c.l.b16 %v70
    %v142 = vunpack.c.l.b16 %v71
    %v143 = vunpack.c.l.b16 %v72
    %v144 = vunpack.c.l.b16 %v73
    %v145 = vunpack.c.l.b16 %v74
    %v146 = vunpack.c.l.b16 %v75
    %v147 = vunpack.c.l.b16 %v76
    %v148 = vunpack.c.l.b16 %v77
    %v149 = vunpack.c.l.b16 %v78
    %v150 = vunpack.c.l.b16 %v79
    %v151 = vunpack.c.l.b16 %v80
    %v152 = vunpack.c.l.b16 %v81
    %v153 = vunpack.c.l.b16 %v82
    %v154 = vunpack.c.l.b16 %v83
    %v155 = vunpack.c.l.b16 %v84
    %v156 = vunpack.c.l.b16 %v85
    %v157 = vunpack.c.l.b16 %v86
    %v158 = vunpack.c.l.b16 %v87
    %v159 = vpack.c.b16 %v128, %v127
    %v160 = vpack.c.b16 %v130, %v129
    %v161 = vpack.c.b16 %v132, %v131
    %v162 = vpack.c.b16 %v134, %v133
    %v163 = vpack.c.b16 %v136, %v135
    %v164 = vpack.c.b16 %v138, %v137
    %v165 = vpack.c.b16 %v140, %v139
    %v166 = vpack.c.b16 %v142, %v141
    %v167 = vpack.c.b16 %v144, %v143
    %v168 = vpack.c.b16 %v146, %v145
    %v169 = vpack.c.b16 %v148, %v147
    %v170 = vpack.c.b16 %v150, %v149
    %v171 = vpack.c.b16 %v152, %v151
    %v172 = vpack.c.b16 %v154, %v153
    %v173 = vpack.c.b16 %v156, %v155
    %v174 = vpack.c.b16 %v158, %v157
    %191 = vmatprep.subr.bf16.mxu0 0
    %192 = vmatpush1.bf16.msra.mxu0 %v159
    %193 = vmatprep.subr.bf16.mxu0 0
    %194 = vmatpush1.bf16.msra.mxu0 %v160
    %195 = vmatprep.subr.bf16.mxu0 0
    %196 = vmatpush1.bf16.msra.mxu0 %v161
    %197 = vmatprep.subr.bf16.mxu0 0
    %198 = vmatpush1.bf16.msra.mxu0 %v162
    %199 = vmatprep.subr.bf16.mxu0 0
    %200 = vmatpush1.bf16.msra.mxu0 %v163
    %201 = vmatprep.subr.bf16.mxu0 0
    %202 = vmatpush1.bf16.msra.mxu0 %v164
    %203 = vmatprep.subr.bf16.mxu0 0
    %204 = vmatpush1.bf16.msra.mxu0 %v165
    %205 = vmatprep.subr.bf16.mxu0 0
    %206 = vmatpush1.bf16.msra.mxu0 %v166
    %207 = vmatprep.subr.bf16.mxu0 0
    %208 = vmatpush1.bf16.msra.mxu0 %v167
    %209 = vmatprep.subr.bf16.mxu0 0
    %210 = vmatpush1.bf16.msra.mxu0 %v168
    %211 = vmatprep.subr.bf16.mxu0 0
    %212 = vmatpush1.bf16.msra.mxu0 %v169
    %213 = vmatprep.subr.bf16.mxu0 0
    %214 = vmatpush1.bf16.msra.mxu0 %v170
    %215 = vmatprep.subr.bf16.mxu0 0
    %216 = vmatpush1.bf16.msra.mxu0 %v171
    %217 = vmatprep.subr.bf16.mxu0 0
    %218 = vmatpush1.bf16.msra.mxu0 %v172
    %219 = vmatprep.subr.bf16.mxu0 0
    %220 = vmatpush1.bf16.msra.mxu0 %v173
    %221 = vmatprep.subr.bf16.mxu0 0
    %222 = vmatpush1.bf16.msra.mxu0 %v174
    %223 = vmatprep.mubr.bf16.mxu0 %v92
    %224 = vmatmul.mubr.bf16.gmra.mrb[0].mxu0 %v91
    %v225 = vpop.f32.mrb[0].mxu0
    %v226 = vadd.f32 0.0, %v225
    %v227 = vpop.f32.mrb[0].mxu0
    %v228 = vpop.f32.mrb[0].mxu0
    %v229 = vpop.f32.mrb[0].mxu0
    %230 = vdwg.mxu0
    %231 = vst [vmem:[#allocation9] sm:$0xff] %v226
    %v232 = vld [vmem:[#allocation6] sm:$0xff]
    %v233 = vld [vmem:[#allocation6 + $0x8] sm:$0xff]
    %v234 = vld [vmem:[#allocation6 + $0x10] sm:$0xff]
    %v235 = vld [vmem:[#allocation6 + $0x18] sm:$0xff]
    %v236 = vld [vmem:[#allocation6 + $0x80] sm:$0xff]
    %v237 = vld [vmem:[#allocation6 + $0x88] sm:$0xff]
    %v238 = vld [vmem:[#allocation6 + $0x90] sm:$0xff]
    %v239 = vld [vmem:[#allocation6 + $0x98] sm:$0xff]
    %v240 = vld [vmem:[#allocation6 + $0x100] sm:$0xff]
    %v241 = vld [vmem:[#allocation6 + $0x108] sm:$0xff]
    %v242 = vld [vmem:[#allocation6 + $0x110] sm:$0xff]
    %v243 = vld [vmem:[#allocation6 + $0x118] sm:$0xff]
    %v244 = vld [vmem:[#allocation6 + $0x180] sm:$0xff]
    %v245 = vld [vmem:[#allocation6 + $0x188] sm:$0xff]
    %v246 = vld [vmem:[#allocation6 + $0x190] sm:$0xff]
    %v247 = vld [vmem:[#allocation6 + $0x198] sm:$0xff]
    %v248 = vld [vmem:[#allocation6 + $0x200] sm:$0xff]
    %v249 = vld [vmem:[#allocation6 + $0x208] sm:$0xff]
    %v250 = vld [vmem:[#allocation6 + $0x210] sm:$0xff]
    %v251 = vld [vmem:[#allocation6 + $0x218] sm:$0xff]
    %v252 = vld [vmem:[#allocation6 + $0x280] sm:$0xff]
    %v253 = vld [vmem:[#allocation6 + $0x288] sm:$0xff]
    %v254 = vld [vmem:[#allocation6 + $0x290] sm:$0xff]
    %v255 = vld [vmem:[#allocation6 + $0x298] sm:$0xff]
    %v256 = vld [vmem:[#allocation6 + $0x300] sm:$0xff]
    %v257 = vld [vmem:[#allocation6 + $0x308] sm:$0xff]
    %v258 = vld [vmem:[#allocation6 + $0x310] sm:$0xff]
    %v259 = vld [vmem:[#allocation6 + $0x318] sm:$0xff]
    %v260 = vld [vmem:[#allocation6 + $0x380] sm:$0xff]
    %v261 = vld [vmem:[#allocation6 + $0x388] sm:$0xff]
    %v262 = vld [vmem:[#allocation6 + $0x390] sm:$0xff]
    %v263 = vld [vmem:[#allocation6 + $0x398] sm:$0xff]
    %v264 = vld [vmem:[#allocation6 + $0x400] sm:$0xff]
    %v265 = vld [vmem:[#allocation6 + $0x408] sm:$0xff]
    %v266 = vld [vmem:[#allocation6 + $0x410] sm:$0xff]
    %v267 = vld [vmem:[#allocation6 + $0x418] sm:$0xff]
    %v268 = vld [vmem:[#allocation6 + $0x480] sm:$0xff]
    %v269 = vld [vmem:[#allocation6 + $0x488] sm:$0xff]
    %v270 = vld [vmem:[#allocation6 + $0x490] sm:$0xff]
    %v271 = vld [vmem:[#allocation6 + $0x498] sm:$0xff]
    %v272 = vld [vmem:[#allocation6 + $0x500] sm:$0xff]
    %v273 = vld [vmem:[#allocation6 + $0x508] sm:$0xff]
    %v274 = vld [vmem:[#allocation6 + $0x510] sm:$0xff]
    %v275 = vld [vmem:[#allocation6 + $0x518] sm:$0xff]
    %v276 = vld [vmem:[#allocation6 + $0x580] sm:$0xff]
    %v277 = vld [vmem:[#allocation6 + $0x588] sm:$0xff]
    %v278 = vld [vmem:[#allocation6 + $0x590] sm:$0xff]
    %v279 = vld [vmem:[#allocation6 + $0x598] sm:$0xff]
    %v280 = vld [vmem:[#allocation6 + $0x600] sm:$0xff]
    %v281 = vld [vmem:[#allocation6 + $0x608] sm:$0xff]
    %v282 = vld [vmem:[#allocation6 + $0x610] sm:$0xff]
    %v283 = vld [vmem:[#allocation6 + $0x618] sm:$0xff]
    %v284 = vld [vmem:[#allocation6 + $0x680] sm:$0xff]
    %v285 = vld [vmem:[#allocation6 + $0x688] sm:$0xff]
    %v286 = vld [vmem:[#allocation6 + $0x690] sm:$0xff]
    %v287 = vld [vmem:[#allocation6 + $0x698] sm:$0xff]
    %v288 = vld [vmem:[#allocation6 + $0x700] sm:$0xff]
    %v289 = vld [vmem:[#allocation6 + $0x708] sm:$0xff]
    %v290 = vld [vmem:[#allocation6 + $0x710] sm:$0xff]
    %v291 = vld [vmem:[#allocation6 + $0x718] sm:$0xff]
    %v292 = vld [vmem:[#allocation6 + $0x780] sm:$0xff]
    %v293 = vld [vmem:[#allocation6 + $0x788] sm:$0xff]
    %v294 = vld [vmem:[#allocation6 + $0x790] sm:$0xff]
    %v295 = vld [vmem:[#allocation6 + $0x798] sm:$0xff]
    %v296 = vld [vmem:[#allocation6 + $0x800] sm:$0xff]
    %v297 = vld [vmem:[#allocation6 + $0x808] sm:$0xff]
    %v298 = vld [vmem:[#allocation6 + $0x810] sm:$0xff]
    %v299 = vld [vmem:[#allocation6 + $0x818] sm:$0xff]
    %v300 = vld [vmem:[#allocation6 + $0x880] sm:$0xff]
    %v301 = vld [vmem:[#allocation6 + $0x888] sm:$0xff]
    %v302 = vld [vmem:[#allocation6 + $0x890] sm:$0xff]
    %v303 = vld [vmem:[#allocation6 + $0x898] sm:$0xff]
    %v304 = vld [vmem:[#allocation6 + $0x900] sm:$0xff]
    %v305 = vld [vmem:[#allocation6 + $0x908] sm:$0xff]
    %v306 = vld [vmem:[#allocation6 + $0x910] sm:$0xff]
    %v307 = vld [vmem:[#allocation6 + $0x918] sm:$0xff]
    %v308 = vld [vmem:[#allocation6 + $0x980] sm:$0xff]
    %v309 = vld [vmem:[#allocation6 + $0x988] sm:$0xff]
    %v310 = vld [vmem:[#allocation6 + $0x990] sm:$0xff]
    %v311 = vld [vmem:[#allocation6 + $0x998] sm:$0xff]
    %v312 = vld [vmem:[#allocation6 + $0xa00] sm:$0xff]
    %v313 = vld [vmem:[#allocation6 + $0xa08] sm:$0xff]
    %v314 = vld [vmem:[#allocation6 + $0xa10] sm:$0xff]
    %v315 = vld [vmem:[#allocation6 + $0xa18] sm:$0xff]
    %v316 = vld [vmem:[#allocation6 + $0xa80] sm:$0xff]
    %v317 = vld [vmem:[#allocation6 + $0xa88] sm:$0xff]
    %v318 = vld [vmem:[#allocation6 + $0xa90] sm:$0xff]
    %v319 = vld [vmem:[#allocation6 + $0xa98] sm:$0xff]
    %v320 = vld [vmem:[#allocation6 + $0xb00] sm:$0xff]
    %v321 = vld [vmem:[#allocation6 + $0xb08] sm:$0xff]
    %v322 = vld [vmem:[#allocation6 + $0xb10] sm:$0xff]
    %v323 = vld [vmem:[#allocation6 + $0xb18] sm:$0xff]
    %v324 = vld [vmem:[#allocation6 + $0xb80] sm:$0xff]
    %v325 = vld [vmem:[#allocation6 + $0xb88] sm:$0xff]
    %v326 = vld [vmem:[#allocation6 + $0xb90] sm:$0xff]
    %v327 = vld [vmem:[#allocation6 + $0xb98] sm:$0xff]
    %v328 = vld [vmem:[#allocation6 + $0xc00] sm:$0xff]
    %v329 = vld [vmem:[#allocation6 + $0xc08] sm:$0xff]
    %v330 = vld [vmem:[#allocation6 + $0xc10] sm:$0xff]
    %v331 = vld [vmem:[#allocation6 + $0xc18] sm:$0xff]
    %v332 = vld [vmem:[#allocation6 + $0xc80] sm:$0xff]
    %v333 = vld [vmem:[#allocation6 + $0xc88] sm:$0xff]
    %v334 = vld [vmem:[#allocation6 + $0xc90] sm:$0xff]
    %v335 = vld [vmem:[#allocation6 + $0xc98] sm:$0xff]
    %v336 = vld [vmem:[#allocation6 + $0xd00] sm:$0xff]
    %v337 = vld [vmem:[#allocation6 + $0xd08] sm:$0xff]
    %v338 = vld [vmem:[#allocation6 + $0xd10] sm:$0xff]
    %v339 = vld [vmem:[#allocation6 + $0xd18] sm:$0xff]
    %v340 = vld [vmem:[#allocation6 + $0xd80] sm:$0xff]
    %v341 = vld [vmem:[#allocation6 + $0xd88] sm:$0xff]
    %v342 = vld [vmem:[#allocation6 + $0xd90] sm:$0xff]
    %v343 = vld [vmem:[#allocation6 + $0xd98] sm:$0xff]
    %v344 = vld [vmem:[#allocation6 + $0xe00] sm:$0xff]
    %v345 = vld [vmem:[#allocation6 + $0xe08] sm:$0xff]
    %v346 = vld [vmem:[#allocation6 + $0xe10] sm:$0xff]
    %v347 = vld [vmem:[#allocation6 + $0xe18] sm:$0xff]
    %v348 = vld [vmem:[#allocation6 + $0xe80] sm:$0xff]
    %v349 = vld [vmem:[#allocation6 + $0xe88] sm:$0xff]
    %v350 = vld [vmem:[#allocation6 + $0xe90] sm:$0xff]
    %v351 = vld [vmem:[#allocation6 + $0xe98] sm:$0xff]
    %v352 = vld [vmem:[#allocation6 + $0xf00] sm:$0xff]
    %v353 = vld [vmem:[#allocation6 + $0xf08] sm:$0xff]
    %v354 = vld [vmem:[#allocation6 + $0xf10] sm:$0xff]
    %v355 = vld [vmem:[#allocation6 + $0xf18] sm:$0xff]
    %v356 = vld [vmem:[#allocation6 + $0xf80] sm:$0xff]
    %v357 = vld [vmem:[#allocation6 + $0xf88] sm:$0xff]
    %v358 = vld [vmem:[#allocation6 + $0xf90] sm:$0xff]
    %v359 = vld [vmem:[#allocation6 + $0xf98] sm:$0xff]
    %v488 = vunpack.c.l.b16 %v232
    %v489 = vunpack.c.h.b16 %v232
    %v490 = vunpack.c.l.b16 %v233
    %v491 = vunpack.c.h.b16 %v233
    %v492 = vunpack.c.l.b16 %v234
    %v493 = vunpack.c.h.b16 %v234
    %v494 = vunpack.c.l.b16 %v235
    %v495 = vunpack.c.h.b16 %v235
    %v496 = vunpack.c.l.b16 %v236
    %v497 = vunpack.c.h.b16 %v236
    %v498 = vunpack.c.l.b16 %v237
    %v499 = vunpack.c.h.b16 %v237
    %v500 = vunpack.c.l.b16 %v238
    %v501 = vunpack.c.h.b16 %v238
    %v502 = vunpack.c.l.b16 %v239
    %v503 = vunpack.c.h.b16 %v239
    %v504 = vunpack.c.l.b16 %v240
    %v505 = vunpack.c.h.b16 %v240
    %v506 = vunpack.c.l.b16 %v241
    %v507 = vunpack.c.h.b16 %v241
    %v508 = vunpack.c.l.b16 %v242
    %v509 = vunpack.c.h.b16 %v242
    %v510 = vunpack.c.l.b16 %v243
    %v511 = vunpack.c.h.b16 %v243
    %v512 = vunpack.c.l.b16 %v244
    %v513 = vunpack.c.h.b16 %v244
    %v514 = vunpack.c.l.b16 %v245
    %v515 = vunpack.c.h.b16 %v245
    %v516 = vunpack.c.l.b16 %v246
    %v517 = vunpack.c.h.b16 %v246
    %v518 = vunpack.c.l.b16 %v247
    %v519 = vunpack.c.h.b16 %v247
    %v520 = vunpack.c.l.b16 %v248
    %v521 = vunpack.c.h.b16 %v248
    %v522 = vunpack.c.l.b16 %v249
    %v523 = vunpack.c.h.b16 %v249
    %v524 = vunpack.c.l.b16 %v250
    %v525 = vunpack.c.h.b16 %v250
    %v526 = vunpack.c.l.b16 %v251
    %v527 = vunpack.c.h.b16 %v251
    %v528 = vunpack.c.l.b16 %v252
    %v529 = vunpack.c.h.b16 %v252
    %v530 = vunpack.c.l.b16 %v253
    %v531 = vunpack.c.h.b16 %v253
    %v532 = vunpack.c.l.b16 %v254
    %v533 = vunpack.c.h.b16 %v254
    %v534 = vunpack.c.l.b16 %v255
    %v535 = vunpack.c.h.b16 %v255
    %v536 = vunpack.c.l.b16 %v256
    %v537 = vunpack.c.h.b16 %v256
    %v538 = vunpack.c.l.b16 %v257
    %v539 = vunpack.c.h.b16 %v257
    %v540 = vunpack.c.l.b16 %v258
    %v541 = vunpack.c.h.b16 %v258
    %v542 = vunpack.c.l.b16 %v259
    %v543 = vunpack.c.h.b16 %v259
    %v544 = vunpack.c.l.b16 %v260
    %v545 = vunpack.c.h.b16 %v260
    %v546 = vunpack.c.l.b16 %v261
    %v547 = vunpack.c.h.b16 %v261
    %v548 = vunpack.c.l.b16 %v262
    %v549 = vunpack.c.h.b16 %v262
    %v550 = vunpack.c.l.b16 %v263
    %v551 = vunpack.c.h.b16 %v263
    %v552 = vunpack.c.l.b16 %v264
    %v553 = vunpack.c.h.b16 %v264
    %v554 = vunpack.c.l.b16 %v265
    %v555 = vunpack.c.h.b16 %v265
    %v556 = vunpack.c.l.b16 %v266
    %v557 = vunpack.c.h.b16 %v266
    %v558 = vunpack.c.l.b16 %v267
    %v559 = vunpack.c.h.b16 %v267
    %v560 = vunpack.c.l.b16 %v268
    %v561 = vunpack.c.h.b16 %v268
    %v562 = vunpack.c.l.b16 %v269
    %v563 = vunpack.c.h.b16 %v269
    %v564 = vunpack.c.l.b16 %v270
    %v565 = vunpack.c.h.b16 %v270
    %v566 = vunpack.c.l.b16 %v271
    %v567 = vunpack.c.h.b16 %v271
    %v568 = vunpack.c.l.b16 %v272
    %v569 = vunpack.c.h.b16 %v272
    %v570 = vunpack.c.l.b16 %v273
    %v571 = vunpack.c.h.b16 %v273
    %v572 = vunpack.c.l.b16 %v274
    %v573 = vunpack.c.h.b16 %v274
    %v574 = vunpack.c.l.b16 %v275
    %v575 = vunpack.c.h.b16 %v275
    %v576 = vunpack.c.l.b16 %v276
    %v577 = vunpack.c.h.b16 %v276
    %v578 = vunpack.c.l.b16 %v277
    %v579 = vunpack.c.h.b16 %v277
    %v580 = vunpack.c.l.b16 %v278
    %v581 = vunpack.c.h.b16 %v278
    %v582 = vunpack.c.l.b16 %v279
    %v583 = vunpack.c.h.b16 %v279
    %v584 = vunpack.c.l.b16 %v280
    %v585 = vunpack.c.h.b16 %v280
    %v586 = vunpack.c.l.b16 %v281
    %v587 = vunpack.c.h.b16 %v281
    %v588 = vunpack.c.l.b16 %v282
    %v589 = vunpack.c.h.b16 %v282
    %v590 = vunpack.c.l.b16 %v283
    %v591 = vunpack.c.h.b16 %v283
    %v592 = vunpack.c.l.b16 %v284
    %v593 = vunpack.c.h.b16 %v284
    %v594 = vunpack.c.l.b16 %v285
    %v595 = vunpack.c.h.b16 %v285
    %v596 = vunpack.c.l.b16 %v286
    %v597 = vunpack.c.h.b16 %v286
    %v598 = vunpack.c.l.b16 %v287
    %v599 = vunpack.c.h.b16 %v287
    %v600 = vunpack.c.l.b16 %v288
    %v601 = vunpack.c.h.b16 %v288
    %v602 = vunpack.c.l.b16 %v289
    %v603 = vunpack.c.h.b16 %v289
    %v604 = vunpack.c.l.b16 %v290
    %v605 = vunpack.c.h.b16 %v290
    %v606 = vunpack.c.l.b16 %v291
    %v607 = vunpack.c.h.b16 %v291
    %v608 = vunpack.c.l.b16 %v292
    %v609 = vunpack.c.h.b16 %v292
    %v610 = vunpack.c.l.b16 %v293
    %v611 = vunpack.c.h.b16 %v293
    %v612 = vunpack.c.l.b16 %v294
    %v613 = vunpack.c.h.b16 %v294
    %v614 = vunpack.c.l.b16 %v295
    %v615 = vunpack.c.h.b16 %v295
    %v616 = vunpack.c.l.b16 %v296
    %v617 = vunpack.c.h.b16 %v296
    %v618 = vunpack.c.l.b16 %v297
    %v619 = vunpack.c.h.b16 %v297
    %v620 = vunpack.c.l.b16 %v298
    %v621 = vunpack.c.h.b16 %v298
    %v622 = vunpack.c.l.b16 %v299
    %v623 = vunpack.c.h.b16 %v299
    %v624 = vunpack.c.l.b16 %v300
    %v625 = vunpack.c.h.b16 %v300
    %v626 = vunpack.c.l.b16 %v301
    %v627 = vunpack.c.h.b16 %v301
    %v628 = vunpack.c.l.b16 %v302
    %v629 = vunpack.c.h.b16 %v302
    %v630 = vunpack.c.l.b16 %v303
    %v631 = vunpack.c.h.b16 %v303
    %v632 = vunpack.c.l.b16 %v304
    %v633 = vunpack.c.h.b16 %v304
    %v634 = vunpack.c.l.b16 %v305
    %v635 = vunpack.c.h.b16 %v305
    %v636 = vunpack.c.l.b16 %v306
    %v637 = vunpack.c.h.b16 %v306
    %v638 = vunpack.c.l.b16 %v307
    %v639 = vunpack.c.h.b16 %v307
    %v640 = vunpack.c.l.b16 %v308
    %v641 = vunpack.c.h.b16 %v308
    %v642 = vunpack.c.l.b16 %v309
    %v643 = vunpack.c.h.b16 %v309
    %v644 = vunpack.c.l.b16 %v310
    %v645 = vunpack.c.h.b16 %v310
    %v646 = vunpack.c.l.b16 %v311
    %v647 = vunpack.c.h.b16 %v311
    %v648 = vunpack.c.l.b16 %v312
    %v649 = vunpack.c.h.b16 %v312
    %v650 = vunpack.c.l.b16 %v313
    %v651 = vunpack.c.h.b16 %v313
    %v652 = vunpack.c.l.b16 %v314
    %v653 = vunpack.c.h.b16 %v314
    %v654 = vunpack.c.l.b16 %v315
    %v655 = vunpack.c.h.b16 %v315
    %v656 = vunpack.c.l.b16 %v316
    %v657 = vunpack.c.h.b16 %v316
    %v658 = vunpack.c.l.b16 %v317
    %v659 = vunpack.c.h.b16 %v317
    %v660 = vunpack.c.l.b16 %v318
    %v661 = vunpack.c.h.b16 %v318
    %v662 = vunpack.c.l.b16 %v319
    %v663 = vunpack.c.h.b16 %v319
    %v664 = vunpack.c.l.b16 %v320
    %v665 = vunpack.c.h.b16 %v320
    %v666 = vunpack.c.l.b16 %v321
    %v667 = vunpack.c.h.b16 %v321
    %v668 = vunpack.c.l.b16 %v322
    %v669 = vunpack.c.h.b16 %v322
    %v670 = vunpack.c.l.b16 %v323
    %v671 = vunpack.c.h.b16 %v323
    %v672 = vunpack.c.l.b16 %v324
    %v673 = vunpack.c.h.b16 %v324
    %v674 = vunpack.c.l.b16 %v325
    %v675 = vunpack.c.h.b16 %v325
    %v676 = vunpack.c.l.b16 %v326
    %v677 = vunpack.c.h.b16 %v326
    %v678 = vunpack.c.l.b16 %v327
    %v679 = vunpack.c.h.b16 %v327
    %v680 = vunpack.c.l.b16 %v328
    %v681 = vunpack.c.h.b16 %v328
    %v682 = vunpack.c.l.b16 %v329
    %v683 = vunpack.c.h.b16 %v329
    %v684 = vunpack.c.l.b16 %v330
    %v685 = vunpack.c.h.b16 %v330
    %v686 = vunpack.c.l.b16 %v331
    %v687 = vunpack.c.h.b16 %v331
    %v688 = vunpack.c.l.b16 %v332
    %v689 = vunpack.c.h.b16 %v332
    %v690 = vunpack.c.l.b16 %v333
    %v691 = vunpack.c.h.b16 %v333
    %v692 = vunpack.c.l.b16 %v334
    %v693 = vunpack.c.h.b16 %v334
    %v694 = vunpack.c.l.b16 %v335
    %v695 = vunpack.c.h.b16 %v335
    %v696 = vunpack.c.l.b16 %v336
    %v697 = vunpack.c.h.b16 %v336
    %v698 = vunpack.c.l.b16 %v337
    %v699 = vunpack.c.h.b16 %v337
    %v700 = vunpack.c.l.b16 %v338
    %v701 = vunpack.c.h.b16 %v338
    %v702 = vunpack.c.l.b16 %v339
    %v703 = vunpack.c.h.b16 %v339
    %v704 = vunpack.c.l.b16 %v340
    %v705 = vunpack.c.h.b16 %v340
    %v706 = vunpack.c.l.b16 %v341
    %v707 = vunpack.c.h.b16 %v341
    %v708 = vunpack.c.l.b16 %v342
    %v709 = vunpack.c.h.b16 %v342
    %v710 = vunpack.c.l.b16 %v343
    %v711 = vunpack.c.h.b16 %v343
    %v712 = vunpack.c.l.b16 %v344
    %v713 = vunpack.c.h.b16 %v344
    %v714 = vunpack.c.l.b16 %v345
    %v715 = vunpack.c.h.b16 %v345
    %v716 = vunpack.c.l.b16 %v346
    %v717 = vunpack.c.h.b16 %v346
    %v718 = vunpack.c.l.b16 %v347
    %v719 = vunpack.c.h.b16 %v347
    %v720 = vunpack.c.l.b16 %v348
    %v721 = vunpack.c.h.b16 %v348
    %v722 = vunpack.c.l.b16 %v349
    %v723 = vunpack.c.h.b16 %v349
    %v724 = vunpack.c.l.b16 %v350
    %v725 = vunpack.c.h.b16 %v350
    %v726 = vunpack.c.l.b16 %v351
    %v727 = vunpack.c.h.b16 %v351
    %v728 = vunpack.c.l.b16 %v352
    %v729 = vunpack.c.h.b16 %v352
    %v730 = vunpack.c.l.b16 %v353
    %v731 = vunpack.c.h.b16 %v353
    %v732 = vunpack.c.l.b16 %v354
    %v733 = vunpack.c.h.b16 %v354
    %v734 = vunpack.c.l.b16 %v355
    %v735 = vunpack.c.h.b16 %v355
    %v736 = vunpack.c.l.b16 %v356
    %v737 = vunpack.c.h.b16 %v356
    %v738 = vunpack.c.l.b16 %v357
    %v739 = vunpack.c.h.b16 %v357
    %v740 = vunpack.c.l.b16 %v358
    %v741 = vunpack.c.h.b16 %v358
    %v742 = vunpack.c.l.b16 %v359
    %v743 = vunpack.c.h.b16 %v359
    %v744 = vpack.c.b16 %v496, %v488
    %v745 = vpack.c.b16 %v497, %v489
    %v746 = vpack.c.b16 %v498, %v490
    %v747 = vpack.c.b16 %v499, %v491
    %v748 = vpack.c.b16 %v500, %v492
    %v749 = vpack.c.b16 %v501, %v493
    %v750 = vpack.c.b16 %v502, %v494
    %v751 = vpack.c.b16 %v503, %v495
    %v752 = vpack.c.b16 %v512, %v504
    %v753 = vpack.c.b16 %v513, %v505
    %v754 = vpack.c.b16 %v514, %v506
    %v755 = vpack.c.b16 %v515, %v507
    %v756 = vpack.c.b16 %v516, %v508
    %v757 = vpack.c.b16 %v517, %v509
    %v758 = vpack.c.b16 %v518, %v510
    %v759 = vpack.c.b16 %v519, %v511
    %v760 = vpack.c.b16 %v528, %v520
    %v761 = vpack.c.b16 %v529, %v521
    %v762 = vpack.c.b16 %v530, %v522
    %v763 = vpack.c.b16 %v531, %v523
    %v764 = vpack.c.b16 %v532, %v524
    %v765 = vpack.c.b16 %v533, %v525
    %v766 = vpack.c.b16 %v534, %v526
    %v767 = vpack.c.b16 %v535, %v527
    %v768 = vpack.c.b16 %v544, %v536
    %v769 = vpack.c.b16 %v545, %v537
    %v770 = vpack.c.b16 %v546, %v538
    %v771 = vpack.c.b16 %v547, %v539
    %v772 = vpack.c.b16 %v548, %v540
    %v773 = vpack.c.b16 %v549, %v541
    %v774 = vpack.c.b16 %v550, %v542
    %v775 = vpack.c.b16 %v551, %v543
    %v776 = vpack.c.b16 %v560, %v552
    %v777 = vpack.c.b16 %v561, %v553
    %v778 = vpack.c.b16 %v562, %v554
    %v779 = vpack.c.b16 %v563, %v555
    %v780 = vpack.c.b16 %v564, %v556
    %v781 = vpack.c.b16 %v565, %v557
    %v782 = vpack.c.b16 %v566, %v558
    %v783 = vpack.c.b16 %v567, %v559
    %v784 = vpack.c.b16 %v576, %v568
    %v785 = vpack.c.b16 %v577, %v569
    %v786 = vpack.c.b16 %v578, %v570
    %v787 = vpack.c.b16 %v579, %v571
    %v788 = vpack.c.b16 %v580, %v572
    %v789 = vpack.c.b16 %v581, %v573
    %v790 = vpack.c.b16 %v582, %v574
    %v791 = vpack.c.b16 %v583, %v575
    %v792 = vpack.c.b16 %v592, %v584
    %v793 = vpack.c.b16 %v593, %v585
    %v794 = vpack.c.b16 %v594, %v586
    %v795 = vpack.c.b16 %v595, %v587
    %v796 = vpack.c.b16 %v596, %v588
    %v797 = vpack.c.b16 %v597, %v589
    %v798 = vpack.c.b16 %v598, %v590
    %v799 = vpack.c.b16 %v599, %v591
    %v800 = vpack.c.b16 %v608, %v600
    %v801 = vpack.c.b16 %v609, %v601
    %v802 = vpack.c.b16 %v610, %v602
    %v803 = vpack.c.b16 %v611, %v603
    %v804 = vpack.c.b16 %v612, %v604
    %v805 = vpack.c.b16 %v613, %v605
    %v806 = vpack.c.b16 %v614, %v606
    %v807 = vpack.c.b16 %v615, %v607
    %v808 = vpack.c.b16 %v624, %v616
    %v809 = vpack.c.b16 %v625, %v617
    %v810 = vpack.c.b16 %v626, %v618
    %v811 = vpack.c.b16 %v627, %v619
    %v812 = vpack.c.b16 %v628, %v620
    %v813 = vpack.c.b16 %v629, %v621
    %v814 = vpack.c.b16 %v630, %v622
    %v815 = vpack.c.b16 %v631, %v623
    %v816 = vpack.c.b16 %v640, %v632
    %v817 = vpack.c.b16 %v641, %v633
    %v818 = vpack.c.b16 %v642, %v634
    %v819 = vpack.c.b16 %v643, %v635
    %v820 = vpack.c.b16 %v644, %v636
    %v821 = vpack.c.b16 %v645, %v637
    %v822 = vpack.c.b16 %v646, %v638
    %v823 = vpack.c.b16 %v647, %v639
    %v824 = vpack.c.b16 %v656, %v648
    %v825 = vpack.c.b16 %v657, %v649
    %v826 = vpack.c.b16 %v658, %v650
    %v827 = vpack.c.b16 %v659, %v651
    %v828 = vpack.c.b16 %v660, %v652
    %v829 = vpack.c.b16 %v661, %v653
    %v830 = vpack.c.b16 %v662, %v654
    %v831 = vpack.c.b16 %v663, %v655
    %v832 = vpack.c.b16 %v672, %v664
    %v833 = vpack.c.b16 %v673, %v665
    %v834 = vpack.c.b16 %v674, %v666
    %v835 = vpack.c.b16 %v675, %v667
    %v836 = vpack.c.b16 %v676, %v668
    %v837 = vpack.c.b16 %v677, %v669
    %v838 = vpack.c.b16 %v678, %v670
    %v839 = vpack.c.b16 %v679, %v671
    %v840 = vpack.c.b16 %v688, %v680
    %v841 = vpack.c.b16 %v689, %v681
    %v842 = vpack.c.b16 %v690, %v682
    %v843 = vpack.c.b16 %v691, %v683
    %v844 = vpack.c.b16 %v692, %v684
    %v845 = vpack.c.b16 %v693, %v685
    %v846 = vpack.c.b16 %v694, %v686
    %v847 = vpack.c.b16 %v695, %v687
    %v848 = vpack.c.b16 %v704, %v696
    %v849 = vpack.c.b16 %v705, %v697
    %v850 = vpack.c.b16 %v706, %v698
    %v851 = vpack.c.b16 %v707, %v699
    %v852 = vpack.c.b16 %v708, %v700
    %v853 = vpack.c.b16 %v709, %v701
    %v854 = vpack.c.b16 %v710, %v702
    %v855 = vpack.c.b16 %v711, %v703
    %v856 = vpack.c.b16 %v720, %v712
    %v857 = vpack.c.b16 %v721, %v713
    %v858 = vpack.c.b16 %v722, %v714
    %v859 = vpack.c.b16 %v723, %v715
    %v860 = vpack.c.b16 %v724, %v716
    %v861 = vpack.c.b16 %v725, %v717
    %v862 = vpack.c.b16 %v726, %v718
    %v863 = vpack.c.b16 %v727, %v719
    %v864 = vpack.c.b16 %v736, %v728
    %v865 = vpack.c.b16 %v737, %v729
    %v866 = vpack.c.b16 %v738, %v730
    %v867 = vpack.c.b16 %v739, %v731
    %v868 = vpack.c.b16 %v740, %v732
    %v869 = vpack.c.b16 %v741, %v733
    %v870 = vpack.c.b16 %v742, %v734
    %v871 = vpack.c.b16 %v743, %v735
    %1000 = vmatprep.subr.bf16.mxu0 %v745
    %1001 = vmatpush1.bf16.msra.mxu0 %v744
    %1002 = vmatprep.subr.bf16.mxu0 %v753
    %1003 = vmatpush1.bf16.msra.mxu0 %v752
    %1004 = vmatprep.subr.bf16.mxu0 %v761
    %1005 = vmatpush1.bf16.msra.mxu0 %v760
    %1006 = vmatprep.subr.bf16.mxu0 %v769
    %1007 = vmatpush1.bf16.msra.mxu0 %v768
    %1008 = vmatprep.subr.bf16.mxu0 %v777
    %1009 = vmatpush1.bf16.msra.mxu0 %v776
    %1010 = vmatprep.subr.bf16.mxu0 %v785
    %1011 = vmatpush1.bf16.msra.mxu0 %v784
    %1012 = vmatprep.subr.bf16.mxu0 %v793
    %1013 = vmatpush1.bf16.msra.mxu0 %v792
    %1014 = vmatprep.subr.bf16.mxu0 %v801
    %1015 = vmatpush1.bf16.msra.mxu0 %v800
    %1016 = vmatprep.subr.bf16.mxu0 %v809
    %1017 = vmatpush1.bf16.msra.mxu0 %v808
    %1018 = vmatprep.subr.bf16.mxu0 %v817
    %1019 = vmatpush1.bf16.msra.mxu0 %v816
    %1020 = vmatprep.subr.bf16.mxu0 %v825
    %1021 = vmatpush1.bf16.msra.mxu0 %v824
    %1022 = vmatprep.subr.bf16.mxu0 %v833
    %1023 = vmatpush1.bf16.msra.mxu0 %v832
    %1024 = vmatprep.subr.bf16.mxu0 %v841
    %1025 = vmatpush1.bf16.msra.mxu0 %v840
    %1026 = vmatprep.subr.bf16.mxu0 %v849
    %1027 = vmatpush1.bf16.msra.mxu0 %v848
    %1028 = vmatprep.subr.bf16.mxu0 %v857
    %1029 = vmatpush1.bf16.msra.mxu0 %v856
    %1030 = vmatprep.subr.bf16.mxu0 %v865
    %1031 = vmatpush1.bf16.msra.mxu0 %v864
    %1032 = vmatprep.mubr.bf16.mxu0 %v92
    %1033 = vmatmul.mubr.bf16.gmra.mrb[0].mxu0 %v91
    %v1034 = vpop.f32.mrb[0].mxu0
    %v1035 = vadd.f32 0.0, %v1034
    %v1036 = vpop.f32.mrb[0].mxu0
    %v1037 = vadd.f32 0.0, %v1036
    %v1038 = vpop.f32.mrb[0].mxu0
    %v1039 = vpop.f32.mrb[0].mxu0
    %1040 = vdwg.mxu0
    %1041 = vmatprep.subr.bf16.mxu0 %v747
    %1042 = vmatpush1.bf16.msra.mxu0 %v746
    %1043 = vmatprep.subr.bf16.mxu0 %v755
    %1044 = vmatpush1.bf16.msra.mxu0 %v754
    %1045 = vmatprep.subr.bf16.mxu0 %v763
    %1046 = vmatpush1.bf16.msra.mxu0 %v762
    %1047 = vmatprep.subr.bf16.mxu0 %v771
    %1048 = vmatpush1.bf16.msra.mxu0 %v770
    %1049 = vmatprep.subr.bf16.mxu0 %v779
    %1050 = vmatpush1.bf16.msra.mxu0 %v778
    %1051 = vmatprep.subr.bf16.mxu0 %v787
    %1052 = vmatpush1.bf16.msra.mxu0 %v786
    %1053 = vmatprep.subr.bf16.mxu0 %v795
    %1054 = vmatpush1.bf16.msra.mxu0 %v794
    %1055 = vmatprep.subr.bf16.mxu0 %v803
    %1056 = vmatpush1.bf16.msra.mxu0 %v802
    %1057 = vmatprep.subr.bf16.mxu0 %v811
    %1058 = vmatpush1.bf16.msra.mxu0 %v810
    %1059 = vmatprep.subr.bf16.mxu0 %v819
    %1060 = vmatpush1.bf16.msra.mxu0 %v818
    %1061 = vmatprep.subr.bf16.mxu0 %v827
    %1062 = vmatpush1.bf16.msra.mxu0 %v826
    %1063 = vmatprep.subr.bf16.mxu0 %v835
    %1064 = vmatpush1.bf16.msra.mxu0 %v834
    %1065 = vmatprep.subr.bf16.mxu0 %v843
    %1066 = vmatpush1.bf16.msra.mxu0 %v842
    %1067 = vmatprep.subr.bf16.mxu0 %v851
    %1068 = vmatpush1.bf16.msra.mxu0 %v850
    %1069 = vmatprep.subr.bf16.mxu0 %v859
    %1070 = vmatpush1.bf16.msra.mxu0 %v858
    %1071 = vmatprep.subr.bf16.mxu0 %v867
    %1072 = vmatpush1.bf16.msra.mxu0 %v866
    %1073 = vmatprep.mubr.bf16.mxu0 %v92
    %1074 = vmatmul.mubr.bf16.gmra.mrb[0].mxu0 %v91
    %v1075 = vpop.f32.mrb[0].mxu0
    %v1076 = vadd.f32 0.0, %v1075
    %v1077 = vpop.f32.mrb[0].mxu0
    %v1078 = vadd.f32 0.0, %v1077
    %v1079 = vpop.f32.mrb[0].mxu0
    %v1080 = vpop.f32.mrb[0].mxu0
    %1081 = vdwg.mxu0
    %1082 = vmatprep.subr.bf16.mxu0 %v749
    %1083 = vmatpush1.bf16.msra.mxu0 %v748
    %1084 = vmatprep.subr.bf16.mxu0 %v757
    %1085 = vmatpush1.bf16.msra.mxu0 %v756
    %1086 = vmatprep.subr.bf16.mxu0 %v765
    %1087 = vmatpush1.bf16.msra.mxu0 %v764
    %1088 = vmatprep.subr.bf16.mxu0 %v773
    %1089 = vmatpush1.bf16.msra.mxu0 %v772
    %1090 = vmatprep.subr.bf16.mxu0 %v781
    %1091 = vmatpush1.bf16.msra.mxu0 %v780
    %1092 = vmatprep.subr.bf16.mxu0 %v789
    %1093 = vmatpush1.bf16.msra.mxu0 %v788
    %1094 = vmatprep.subr.bf16.mxu0 %v797
    %1095 = vmatpush1.bf16.msra.mxu0 %v796
    %1096 = vmatprep.subr.bf16.mxu0 %v805
    %1097 = vmatpush1.bf16.msra.mxu0 %v804
    %1098 = vmatprep.subr.bf16.mxu0 %v813
    %1099 = vmatpush1.bf16.msra.mxu0 %v812
    %1100 = vmatprep.subr.bf16.mxu0 %v821
    %1101 = vmatpush1.bf16.msra.mxu0 %v820
    %1102 = vmatprep.subr.bf16.mxu0 %v829
    %1103 = vmatpush1.bf16.msra.mxu0 %v828
    %1104 = vmatprep.subr.bf16.mxu0 %v837
    %1105 = vmatpush1.bf16.msra.mxu0 %v836
    %1106 = vmatprep.subr.bf16.mxu0 %v845
    %1107 = vmatpush1.bf16.msra.mxu0 %v844
    %1108 = vmatprep.subr.bf16.mxu0 %v853
    %1109 = vmatpush1.bf16.msra.mxu0 %v852
    %1110 = vmatprep.subr.bf16.mxu0 %v861
    %1111 = vmatpush1.bf16.msra.mxu0 %v860
    %1112 = vmatprep.subr.bf16.mxu0 %v869
    %1113 = vmatpush1.bf16.msra.mxu0 %v868
    %1114 = vmatprep.mubr.bf16.mxu0 %v92
    %1115 = vmatmul.mubr.bf16.gmra.mrb[0].mxu0 %v91
    %v1116 = vpop.f32.mrb[0].mxu0
    %v1117 = vadd.f32 0.0, %v1116
    %v1118 = vpop.f32.mrb[0].mxu0
    %v1119 = vadd.f32 0.0, %v1118
    %v1120 = vpop.f32.mrb[0].mxu0
    %v1121 = vpop.f32.mrb[0].mxu0
    %1122 = vdwg.mxu0
    %1123 = vmatprep.subr.bf16.mxu0 %v751
    %1124 = vmatpush1.bf16.msra.mxu0 %v750
    %1125 = vmatprep.subr.bf16.mxu0 %v759
    %1126 = vmatpush1.bf16.msra.mxu0 %v758
    %1127 = vmatprep.subr.bf16.mxu0 %v767
    %1128 = vmatpush1.bf16.msra.mxu0 %v766
    %1129 = vmatprep.subr.bf16.mxu0 %v775
    %1130 = vmatpush1.bf16.msra.mxu0 %v774
    %1131 = vmatprep.subr.bf16.mxu0 %v783
    %1132 = vmatpush1.bf16.msra.mxu0 %v782
    %1133 = vmatprep.subr.bf16.mxu0 %v791
    %1134 = vmatpush1.bf16.msra.mxu0 %v790
    %1135 = vmatprep.subr.bf16.mxu0 %v799
    %1136 = vmatpush1.bf16.msra.mxu0 %v798
    %1137 = vmatprep.subr.bf16.mxu0 %v807
    %1138 = vmatpush1.bf16.msra.mxu0 %v806
    %1139 = vmatprep.subr.bf16.mxu0 %v815
    %1140 = vmatpush1.bf16.msra.mxu0 %v814
    %1141 = vmatprep.subr.bf16.mxu0 %v823
    %1142 = vmatpush1.bf16.msra.mxu0 %v822
    %1143 = vmatprep.subr.bf16.mxu0 %v831
    %1144 = vmatpush1.bf16.msra.mxu0 %v830
    %1145 = vmatprep.subr.bf16.mxu0 %v839
    %1146 = vmatpush1.bf16.msra.mxu0 %v838
    %1147 = vmatprep.subr.bf16.mxu0 %v847
    %1148 = vmatpush1.bf16.msra.mxu0 %v846
    %1149 = vmatprep.subr.bf16.mxu0 %v855
    %1150 = vmatpush1.bf16.msra.mxu0 %v854
    %1151 = vmatprep.subr.bf16.mxu0 %v863
    %1152 = vmatpush1.bf16.msra.mxu0 %v862
    %1153 = vmatprep.subr.bf16.mxu0 %v871
    %1154 = vmatpush1.bf16.msra.mxu0 %v870
    %1155 = vmatprep.mubr.bf16.mxu0 %v92
    %1156 = vmatmul.mubr.bf16.gmra.mrb[0].mxu0 %v91
    %v1157 = vpop.f32.mrb[0].mxu0
    %v1158 = vadd.f32 0.0, %v1157
    %v1159 = vpop.f32.mrb[0].mxu0
    %v1160 = vadd.f32 0.0, %v1159
    %v1161 = vpop.f32.mrb[0].mxu0
    %v1162 = vpop.f32.mrb[0].mxu0
    %1163 = vdwg.mxu0
    %v1164 = vld [vmem:[#allocation6 + $0x40] sm:$0xff]
    %v1165 = vld [vmem:[#allocation6 + $0x48] sm:$0xff]
    %v1166 = vld [vmem:[#allocation6 + $0x50] sm:$0xff]
    %v1167 = vld [vmem:[#allocation6 + $0x58] sm:$0xff]
    %v1168 = vld [vmem:[#allocation6 + $0xc0] sm:$0xff]
    %v1169 = vld [vmem:[#allocation6 + $0xc8] sm:$0xff]
    %v1170 = vld [vmem:[#allocation6 + $0xd0] sm:$0xff]
    %v1171 = vld [vmem:[#allocation6 + $0xd8] sm:$0xff]
    %v1172 = vld [vmem:[#allocation6 + $0x140] sm:$0xff]
    %v1173 = vld [vmem:[#allocation6 + $0x148] sm:$0xff]
    %v1174 = vld [vmem:[#allocation6 + $0x150] sm:$0xff]
    %v1175 = vld [vmem:[#allocation6 + $0x158] sm:$0xff]
    %v1176 = vld [vmem:[#allocation6 + $0x1c0] sm:$0xff]
    %v1177 = vld [vmem:[#allocation6 + $0x1c8] sm:$0xff]
    %v1178 = vld [vmem:[#allocation6 + $0x1d0] sm:$0xff]
    %v1179 = vld [vmem:[#allocation6 + $0x1d8] sm:$0xff]
    %v1180 = vld [vmem:[#allocation6 + $0x240] sm:$0xff]
    %v1181 = vld [vmem:[#allocation6 + $0x248] sm:$0xff]
    %v1182 = vld [vmem:[#allocation6 + $0x250] sm:$0xff]
    %v1183 = vld [vmem:[#allocation6 + $0x258] sm:$0xff]
    %v1184 = vld [vmem:[#allocation6 + $0x2c0] sm:$0xff]
    %v1185 = vld [vmem:[#allocation6 + $0x2c8] sm:$0xff]
    %v1186 = vld [vmem:[#allocation6 + $0x2d0] sm:$0xff]
    %v1187 = vld [vmem:[#allocation6 + $0x2d8] sm:$0xff]
    %v1188 = vld [vmem:[#allocation6 + $0x340] sm:$0xff]
    %v1189 = vld [vmem:[#allocation6 + $0x348] sm:$0xff]
    %v1190 = vld [vmem:[#allocation6 + $0x350] sm:$0xff]
    %v1191 = vld [vmem:[#allocation6 + $0x358] sm:$0xff]
    %v1192 = vld [vmem:[#allocation6 + $0x3c0] sm:$0xff]
    %v1193 = vld [vmem:[#allocation6 + $0x3c8] sm:$0xff]
    %v1194 = vld [vmem:[#allocation6 + $0x3d0] sm:$0xff]
    %v1195 = vld [vmem:[#allocation6 + $0x3d8] sm:$0xff]
    %v1196 = vld [vmem:[#allocation6 + $0x440] sm:$0xff]
    %v1197 = vld [vmem:[#allocation6 + $0x448] sm:$0xff]
    %v1198 = vld [vmem:[#allocation6 + $0x450] sm:$0xff]
    %v1199 = vld [vmem:[#allocation6 + $0x458] sm:$0xff]
    %v1200 = vld [vmem:[#allocation6 + $0x4c0] sm:$0xff]
    %v1201 = vld [vmem:[#allocation6 + $0x4c8] sm:$0xff]
    %v1202 = vld [vmem:[#allocation6 + $0x4d0] sm:$0xff]
    %v1203 = vld [vmem:[#allocation6 + $0x4d8] sm:$0xff]
    %v1204 = vld [vmem:[#allocation6 + $0x540] sm:$0xff]
    %v1205 = vld [vmem:[#allocation6 + $0x548] sm:$0xff]
    %v1206 = vld [vmem:[#allocation6 + $0x550] sm:$0xff]
    %v1207 = vld [vmem:[#allocation6 + $0x558] sm:$0xff]
    %v1208 = vld [vmem:[#allocation6 + $0x5c0] sm:$0xff]
    %v1209 = vld [vmem:[#allocation6 + $0x5c8] sm:$0xff]
    %v1210 = vld [vmem:[#allocation6 + $0x5d0] sm:$0xff]
    %v1211 = vld [vmem:[#allocation6 + $0x5d8] sm:$0xff]
    %v1212 = vld [vmem:[#allocation6 + $0x640] sm:$0xff]
    %v1213 = vld [vmem:[#allocation6 + $0x648] sm:$0xff]
    %v1214 = vld [vmem:[#allocation6 + $0x650] sm:$0xff]
    %v1215 = vld [vmem:[#allocation6 + $0x658] sm:$0xff]
    %v1216 = vld [vmem:[#allocation6 + $0x6c0] sm:$0xff]
    %v1217 = vld [vmem:[#allocation6 + $0x6c8] sm:$0xff]
    %v1218 = vld [vmem:[#allocation6 + $0x6d0] sm:$0xff]
    %v1219 = vld [vmem:[#allocation6 + $0x6d8] sm:$0xff]
    %v1220 = vld [vmem:[#allocation6 + $0x740] sm:$0xff]
    %v1221 = vld [vmem:[#allocation6 + $0x748] sm:$0xff]
    %v1222 = vld [vmem:[#allocation6 + $0x750] sm:$0xff]
    %v1223 = vld [vmem:[#allocation6 + $0x758] sm:$0xff]
    %v1224 = vld [vmem:[#allocation6 + $0x7c0] sm:$0xff]
    %v1225 = vld [vmem:[#allocation6 + $0x7c8] sm:$0xff]
    %v1226 = vld [vmem:[#allocation6 + $0x7d0] sm:$0xff]
    %v1227 = vld [vmem:[#allocation6 + $0x7d8] sm:$0xff]
    %v1228 = vld [vmem:[#allocation6 + $0x840] sm:$0xff]
    %v1229 = vld [vmem:[#allocation6 + $0x848] sm:$0xff]
    %v1230 = vld [vmem:[#allocation6 + $0x850] sm:$0xff]
    %v1231 = vld [vmem:[#allocation6 + $0x858] sm:$0xff]
    %v1232 = vld [vmem:[#allocation6 + $0x8c0] sm:$0xff]
    %v1233 = vld [vmem:[#allocation6 + $0x8c8] sm:$0xff]
    %v1234 = vld [vmem:[#allocation6 + $0x8d0] sm:$0xff]
    %v1235 = vld [vmem:[#allocation6 + $0x8d8] sm:$0xff]
    %v1236 = vld [vmem:[#allocation6 + $0x940] sm:$0xff]
    %v1237 = vld [vmem:[#allocation6 + $0x948] sm:$0xff]
    %v1238 = vld [vmem:[#allocation6 + $0x950] sm:$0xff]
    %v1239 = vld [vmem:[#allocation6 + $0x958] sm:$0xff]
    %v1240 = vld [vmem:[#allocation6 + $0x9c0] sm:$0xff]
    %v1241 = vld [vmem:[#allocation6 + $0x9c8] sm:$0xff]
    %v1242 = vld [vmem:[#allocation6 + $0x9d0] sm:$0xff]
    %v1243 = vld [vmem:[#allocation6 + $0x9d8] sm:$0xff]
    %v1244 = vld [vmem:[#allocation6 + $0xa40] sm:$0xff]
    %v1245 = vld [vmem:[#allocation6 + $0xa48] sm:$0xff]
    %v1246 = vld [vmem:[#allocation6 + $0xa50] sm:$0xff]
    %v1247 = vld [vmem:[#allocation6 + $0xa58] sm:$0xff]
    %v1248 = vld [vmem:[#allocation6 + $0xac0] sm:$0xff]
    %v1249 = vld [vmem:[#allocation6 + $0xac8] sm:$0xff]
    %v1250 = vld [vmem:[#allocation6 + $0xad0] sm:$0xff]
    %v1251 = vld [vmem:[#allocation6 + $0xad8] sm:$0xff]
    %v1252 = vld [vmem:[#allocation6 + $0xb40] sm:$0xff]
    %v1253 = vld [vmem:[#allocation6 + $0xb48] sm:$0xff]
    %v1254 = vld [vmem:[#allocation6 + $0xb50] sm:$0xff]
    %v1255 = vld [vmem:[#allocation6 + $0xb58] sm:$0xff]
    %v1256 = vld [vmem:[#allocation6 + $0xbc0] sm:$0xff]
    %v1257 = vld [vmem:[#allocation6 + $0xbc8] sm:$0xff]
    %v1258 = vld [vmem:[#allocation6 + $0xbd0] sm:$0xff]
    %v1259 = vld [vmem:[#allocation6 + $0xbd8] sm:$0xff]
    %v1260 = vld [vmem:[#allocation6 + $0xc40] sm:$0xff]
    %v1261 = vld [vmem:[#allocation6 + $0xc48] sm:$0xff]
    %v1262 = vld [vmem:[#allocation6 + $0xc50] sm:$0xff]
    %v1263 = vld [vmem:[#allocation6 + $0xc58] sm:$0xff]
    %v1264 = vld [vmem:[#allocation6 + $0xcc0] sm:$0xff]
    %v1265 = vld [vmem:[#allocation6 + $0xcc8] sm:$0xff]
    %v1266 = vld [vmem:[#allocation6 + $0xcd0] sm:$0xff]
    %v1267 = vld [vmem:[#allocation6 + $0xcd8] sm:$0xff]
    %v1268 = vld [vmem:[#allocation6 + $0xd40] sm:$0xff]
    %v1269 = vld [vmem:[#allocation6 + $0xd48] sm:$0xff]
    %v1270 = vld [vmem:[#allocation6 + $0xd50] sm:$0xff]
    %v1271 = vld [vmem:[#allocation6 + $0xd58] sm:$0xff]
    %v1272 = vld [vmem:[#allocation6 + $0xdc0] sm:$0xff]
    %v1273 = vld [vmem:[#allocation6 + $0xdc8] sm:$0xff]
    %v1274 = vld [vmem:[#allocation6 + $0xdd0] sm:$0xff]
    %v1275 = vld [vmem:[#allocation6 + $0xdd8] sm:$0xff]
    %v1276 = vld [vmem:[#allocation6 + $0xe40] sm:$0xff]
    %v1277 = vld [vmem:[#allocation6 + $0xe48] sm:$0xff]
    %v1278 = vld [vmem:[#allocation6 + $0xe50] sm:$0xff]
    %v1279 = vld [vmem:[#allocation6 + $0xe58] sm:$0xff]
    %v1280 = vld [vmem:[#allocation6 + $0xec0] sm:$0xff]
    %v1281 = vld [vmem:[#allocation6 + $0xec8] sm:$0xff]
    %v1282 = vld [vmem:[#allocation6 + $0xed0] sm:$0xff]
    %v1283 = vld [vmem:[#allocation6 + $0xed8] sm:$0xff]
    %v1284 = vld [vmem:[#allocation6 + $0xf40] sm:$0xff]
    %v1285 = vld [vmem:[#allocation6 + $0xf48] sm:$0xff]
    %v1286 = vld [vmem:[#allocation6 + $0xf50] sm:$0xff]
    %v1287 = vld [vmem:[#allocation6 + $0xf58] sm:$0xff]
    %v1288 = vld [vmem:[#allocation6 + $0xfc0] sm:$0xff]
    %v1289 = vld [vmem:[#allocation6 + $0xfc8] sm:$0xff]
    %v1290 = vld [vmem:[#allocation6 + $0xfd0] sm:$0xff]
    %v1291 = vld [vmem:[#allocation6 + $0xfd8] sm:$0xff]
    %v1420 = vunpack.c.l.b16 %v1164
    %v1421 = vunpack.c.h.b16 %v1164
    %v1422 = vunpack.c.l.b16 %v1165
    %v1423 = vunpack.c.h.b16 %v1165
    %v1424 = vunpack.c.l.b16 %v1166
    %v1425 = vunpack.c.h.b16 %v1166
    %v1426 = vunpack.c.l.b16 %v1167
    %v1427 = vunpack.c.h.b16 %v1167
    %v1428 = vunpack.c.l.b16 %v1168
    %v1429 = vunpack.c.h.b16 %v1168
    %v1430 = vunpack.c.l.b16 %v1169
    %v1431 = vunpack.c.h.b16 %v1169
    %v1432 = vunpack.c.l.b16 %v1170
    %v1433 = vunpack.c.h.b16 %v1170
    %v1434 = vunpack.c.l.b16 %v1171
    %v1435 = vunpack.c.h.b16 %v1171
    %v1436 = vunpack.c.l.b16 %v1172
    %v1437 = vunpack.c.h.b16 %v1172
    %v1438 = vunpack.c.l.b16 %v1173
    %v1439 = vunpack.c.h.b16 %v1173
    %v1440 = vunpack.c.l.b16 %v1174
    %v1441 = vunpack.c.h.b16 %v1174
    %v1442 = vunpack.c.l.b16 %v1175
    %v1443 = vunpack.c.h.b16 %v1175
    %v1444 = vunpack.c.l.b16 %v1176
    %v1445 = vunpack.c.h.b16 %v1176
    %v1446 = vunpack.c.l.b16 %v1177
    %v1447 = vunpack.c.h.b16 %v1177
    %v1448 = vunpack.c.l.b16 %v1178
    %v1449 = vunpack.c.h.b16 %v1178
    %v1450 = vunpack.c.l.b16 %v1179
    %v1451 = vunpack.c.h.b16 %v1179
    %v1452 = vunpack.c.l.b16 %v1180
    %v1453 = vunpack.c.h.b16 %v1180
    %v1454 = vunpack.c.l.b16 %v1181
    %v1455 = vunpack.c.h.b16 %v1181
    %v1456 = vunpack.c.l.b16 %v1182
    %v1457 = vunpack.c.h.b16 %v1182
    %v1458 = vunpack.c.l.b16 %v1183
    %v1459 = vunpack.c.h.b16 %v1183
    %v1460 = vunpack.c.l.b16 %v1184
    %v1461 = vunpack.c.h.b16 %v1184
    %v1462 = vunpack.c.l.b16 %v1185
    %v1463 = vunpack.c.h.b16 %v1185
    %v1464 = vunpack.c.l.b16 %v1186
    %v1465 = vunpack.c.h.b16 %v1186
    %v1466 = vunpack.c.l.b16 %v1187
    %v1467 = vunpack.c.h.b16 %v1187
    %v1468 = vunpack.c.l.b16 %v1188
    %v1469 = vunpack.c.h.b16 %v1188
    %v1470 = vunpack.c.l.b16 %v1189
    %v1471 = vunpack.c.h.b16 %v1189
    %v1472 = vunpack.c.l.b16 %v1190
    %v1473 = vunpack.c.h.b16 %v1190
    %v1474 = vunpack.c.l.b16 %v1191
    %v1475 = vunpack.c.h.b16 %v1191
    %v1476 = vunpack.c.l.b16 %v1192
    %v1477 = vunpack.c.h.b16 %v1192
    %v1478 = vunpack.c.l.b16 %v1193
    %v1479 = vunpack.c.h.b16 %v1193
    %v1480 = vunpack.c.l.b16 %v1194
    %v1481 = vunpack.c.h.b16 %v1194
    %v1482 = vunpack.c.l.b16 %v1195
    %v1483 = vunpack.c.h.b16 %v1195
    %v1484 = vunpack.c.l.b16 %v1196
    %v1485 = vunpack.c.h.b16 %v1196
    %v1486 = vunpack.c.l.b16 %v1197
    %v1487 = vunpack.c.h.b16 %v1197
    %v1488 = vunpack.c.l.b16 %v1198
    %v1489 = vunpack.c.h.b16 %v1198
    %v1490 = vunpack.c.l.b16 %v1199
    %v1491 = vunpack.c.h.b16 %v1199
    %v1492 = vunpack.c.l.b16 %v1200
    %v1493 = vunpack.c.h.b16 %v1200
    %v1494 = vunpack.c.l.b16 %v1201
    %v1495 = vunpack.c.h.b16 %v1201
    %v1496 = vunpack.c.l.b16 %v1202
    %v1497 = vunpack.c.h.b16 %v1202
    %v1498 = vunpack.c.l.b16 %v1203
    %v1499 = vunpack.c.h.b16 %v1203
    %v1500 = vunpack.c.l.b16 %v1204
    %v1501 = vunpack.c.h.b16 %v1204
    %v1502 = vunpack.c.l.b16 %v1205
    %v1503 = vunpack.c.h.b16 %v1205
    %v1504 = vunpack.c.l.b16 %v1206
    %v1505 = vunpack.c.h.b16 %v1206
    %v1506 = vunpack.c.l.b16 %v1207
    %v1507 = vunpack.c.h.b16 %v1207
    %v1508 = vunpack.c.l.b16 %v1208
    %v1509 = vunpack.c.h.b16 %v1208
    %v1510 = vunpack.c.l.b16 %v1209
    %v1511 = vunpack.c.h.b16 %v1209
    %v1512 = vunpack.c.l.b16 %v1210
    %v1513 = vunpack.c.h.b16 %v1210
    %v1514 = vunpack.c.l.b16 %v1211
    %v1515 = vunpack.c.h.b16 %v1211
    %v1516 = vunpack.c.l.b16 %v1212
    %v1517 = vunpack.c.h.b16 %v1212
    %v1518 = vunpack.c.l.b16 %v1213
    %v1519 = vunpack.c.h.b16 %v1213
    %v1520 = vunpack.c.l.b16 %v1214
    %v1521 = vunpack.c.h.b16 %v1214
    %v1522 = vunpack.c.l.b16 %v1215
    %v1523 = vunpack.c.h.b16 %v1215
    %v1524 = vunpack.c.l.b16 %v1216
    %v1525 = vunpack.c.h.b16 %v1216
    %v1526 = vunpack.c.l.b16 %v1217
    %v1527 = vunpack.c.h.b16 %v1217
    %v1528 = vunpack.c.l.b16 %v1218
    %v1529 = vunpack.c.h.b16 %v1218
    %v1530 = vunpack.c.l.b16 %v1219
    %v1531 = vunpack.c.h.b16 %v1219
    %v1532 = vunpack.c.l.b16 %v1220
    %v1533 = vunpack.c.h.b16 %v1220
    %v1534 = vunpack.c.l.b16 %v1221
    %v1535 = vunpack.c.h.b16 %v1221
    %v1536 = vunpack.c.l.b16 %v1222
    %v1537 = vunpack.c.h.b16 %v1222
    %v1538 = vunpack.c.l.b16 %v1223
    %v1539 = vunpack.c.h.b16 %v1223
    %v1540 = vunpack.c.l.b16 %v1224
    %v1541 = vunpack.c.h.b16 %v1224
    %v1542 = vunpack.c.l.b16 %v1225
    %v1543 = vunpack.c.h.b16 %v1225
    %v1544 = vunpack.c.l.b16 %v1226
    %v1545 = vunpack.c.h.b16 %v1226
    %v1546 = vunpack.c.l.b16 %v1227
    %v1547 = vunpack.c.h.b16 %v1227
    %v1548 = vunpack.c.l.b16 %v1228
    %v1549 = vunpack.c.h.b16 %v1228
    %v1550 = vunpack.c.l.b16 %v1229
    %v1551 = vunpack.c.h.b16 %v1229
    %v1552 = vunpack.c.l.b16 %v1230
    %v1553 = vunpack.c.h.b16 %v1230
    %v1554 = vunpack.c.l.b16 %v1231
    %v1555 = vunpack.c.h.b16 %v1231
    %v1556 = vunpack.c.l.b16 %v1232
    %v1557 = vunpack.c.h.b16 %v1232
    %v1558 = vunpack.c.l.b16 %v1233
    %v1559 = vunpack.c.h.b16 %v1233
    %v1560 = vunpack.c.l.b16 %v1234
    %v1561 = vunpack.c.h.b16 %v1234
    %v1562 = vunpack.c.l.b16 %v1235
    %v1563 = vunpack.c.h.b16 %v1235
    %v1564 = vunpack.c.l.b16 %v1236
    %v1565 = vunpack.c.h.b16 %v1236
    %v1566 = vunpack.c.l.b16 %v1237
    %v1567 = vunpack.c.h.b16 %v1237
    %v1568 = vunpack.c.l.b16 %v1238
    %v1569 = vunpack.c.h.b16 %v1238
    %v1570 = vunpack.c.l.b16 %v1239
    %v1571 = vunpack.c.h.b16 %v1239
    %v1572 = vunpack.c.l.b16 %v1240
    %v1573 = vunpack.c.h.b16 %v1240
    %v1574 = vunpack.c.l.b16 %v1241
    %v1575 = vunpack.c.h.b16 %v1241
    %v1576 = vunpack.c.l.b16 %v1242
    %v1577 = vunpack.c.h.b16 %v1242
    %v1578 = vunpack.c.l.b16 %v1243
    %v1579 = vunpack.c.h.b16 %v1243
    %v1580 = vunpack.c.l.b16 %v1244
    %v1581 = vunpack.c.h.b16 %v1244
    %v1582 = vunpack.c.l.b16 %v1245
    %v1583 = vunpack.c.h.b16 %v1245
    %v1584 = vunpack.c.l.b16 %v1246
    %v1585 = vunpack.c.h.b16 %v1246
    %v1586 = vunpack.c.l.b16 %v1247
    %v1587 = vunpack.c.h.b16 %v1247
    %v1588 = vunpack.c.l.b16 %v1248
    %v1589 = vunpack.c.h.b16 %v1248
    %v1590 = vunpack.c.l.b16 %v1249
    %v1591 = vunpack.c.h.b16 %v1249
    %v1592 = vunpack.c.l.b16 %v1250
    %v1593 = vunpack.c.h.b16 %v1250
    %v1594 = vunpack.c.l.b16 %v1251
    %v1595 = vunpack.c.h.b16 %v1251
    %v1596 = vunpack.c.l.b16 %v1252
    %v1597 = vunpack.c.h.b16 %v1252
    %v1598 = vunpack.c.l.b16 %v1253
    %v1599 = vunpack.c.h.b16 %v1253
    %v1600 = vunpack.c.l.b16 %v1254
    %v1601 = vunpack.c.h.b16 %v1254
    %v1602 = vunpack.c.l.b16 %v1255
    %v1603 = vunpack.c.h.b16 %v1255
    %v1604 = vunpack.c.l.b16 %v1256
    %v1605 = vunpack.c.h.b16 %v1256
    %v1606 = vunpack.c.l.b16 %v1257
    %v1607 = vunpack.c.h.b16 %v1257
    %v1608 = vunpack.c.l.b16 %v1258
    %v1609 = vunpack.c.h.b16 %v1258
    %v1610 = vunpack.c.l.b16 %v1259
    %v1611 = vunpack.c.h.b16 %v1259
    %v1612 = vunpack.c.l.b16 %v1260
    %v1613 = vunpack.c.h.b16 %v1260
    %v1614 = vunpack.c.l.b16 %v1261
    %v1615 = vunpack.c.h.b16 %v1261
    %v1616 = vunpack.c.l.b16 %v1262
    %v1617 = vunpack.c.h.b16 %v1262
    %v1618 = vunpack.c.l.b16 %v1263
    %v1619 = vunpack.c.h.b16 %v1263
    %v1620 = vunpack.c.l.b16 %v1264
    %v1621 = vunpack.c.h.b16 %v1264
    %v1622 = vunpack.c.l.b16 %v1265
    %v1623 = vunpack.c.h.b16 %v1265
    %v1624 = vunpack.c.l.b16 %v1266
    %v1625 = vunpack.c.h.b16 %v1266
    %v1626 = vunpack.c.l.b16 %v1267
    %v1627 = vunpack.c.h.b16 %v1267
    %v1628 = vunpack.c.l.b16 %v1268
    %v1629 = vunpack.c.h.b16 %v1268
    %v1630 = vunpack.c.l.b16 %v1269
    %v1631 = vunpack.c.h.b16 %v1269
    %v1632 = vunpack.c.l.b16 %v1270
    %v1633 = vunpack.c.h.b16 %v1270
    %v1634 = vunpack.c.l.b16 %v1271
    %v1635 = vunpack.c.h.b16 %v1271
    %v1636 = vunpack.c.l.b16 %v1272
    %v1637 = vunpack.c.h.b16 %v1272
    %v1638 = vunpack.c.l.b16 %v1273
    %v1639 = vunpack.c.h.b16 %v1273
    %v1640 = vunpack.c.l.b16 %v1274
    %v1641 = vunpack.c.h.b16 %v1274
    %v1642 = vunpack.c.l.b16 %v1275
    %v1643 = vunpack.c.h.b16 %v1275
    %v1644 = vunpack.c.l.b16 %v1276
    %v1645 = vunpack.c.h.b16 %v1276
    %v1646 = vunpack.c.l.b16 %v1277
    %v1647 = vunpack.c.h.b16 %v1277
    %v1648 = vunpack.c.l.b16 %v1278
    %v1649 = vunpack.c.h.b16 %v1278
    %v1650 = vunpack.c.l.b16 %v1279
    %v1651 = vunpack.c.h.b16 %v1279
    %v1652 = vunpack.c.l.b16 %v1280
    %v1653 = vunpack.c.h.b16 %v1280
    %v1654 = vunpack.c.l.b16 %v1281
    %v1655 = vunpack.c.h.b16 %v1281
    %v1656 = vunpack.c.l.b16 %v1282
    %v1657 = vunpack.c.h.b16 %v1282
    %v1658 = vunpack.c.l.b16 %v1283
    %v1659 = vunpack.c.h.b16 %v1283
    %v1660 = vunpack.c.l.b16 %v1284
    %v1661 = vunpack.c.h.b16 %v1284
    %v1662 = vunpack.c.l.b16 %v1285
    %v1663 = vunpack.c.h.b16 %v1285
    %v1664 = vunpack.c.l.b16 %v1286
    %v1665 = vunpack.c.h.b16 %v1286
    %v1666 = vunpack.c.l.b16 %v1287
    %v1667 = vunpack.c.h.b16 %v1287
    %v1668 = vunpack.c.l.b16 %v1288
    %v1669 = vunpack.c.h.b16 %v1288
    %v1670 = vunpack.c.l.b16 %v1289
    %v1671 = vunpack.c.h.b16 %v1289
    %v1672 = vunpack.c.l.b16 %v1290
    %v1673 = vunpack.c.h.b16 %v1290
    %v1674 = vunpack.c.l.b16 %v1291
    %v1675 = vunpack.c.h.b16 %v1291
    %v1676 = vpack.c.b16 %v1428, %v1420
    %v1677 = vpack.c.b16 %v1429, %v1421
    %v1678 = vpack.c.b16 %v1430, %v1422
    %v1679 = vpack.c.b16 %v1431, %v1423
    %v1680 = vpack.c.b16 %v1432, %v1424
    %v1681 = vpack.c.b16 %v1433, %v1425
    %v1682 = vpack.c.b16 %v1434, %v1426
    %v1683 = vpack.c.b16 %v1435, %v1427
    %v1684 = vpack.c.b16 %v1444, %v1436
    %v1685 = vpack.c.b16 %v1445, %v1437
    %v1686 = vpack.c.b16 %v1446, %v1438
    %v1687 = vpack.c.b16 %v1447, %v1439
    %v1688 = vpack.c.b16 %v1448, %v1440
    %v1689 = vpack.c.b16 %v1449, %v1441
    %v1690 = vpack.c.b16 %v1450, %v1442
    %v1691 = vpack.c.b16 %v1451, %v1443
    %v1692 = vpack.c.b16 %v1460, %v1452
    %v1693 = vpack.c.b16 %v1461, %v1453
    %v1694 = vpack.c.b16 %v1462, %v1454
    %v1695 = vpack.c.b16 %v1463, %v1455
    %v1696 = vpack.c.b16 %v1464, %v1456
    %v1697 = vpack.c.b16 %v1465, %v1457
    %v1698 = vpack.c.b16 %v1466, %v1458
    %v1699 = vpack.c.b16 %v1467, %v1459
    %v1700 = vpack.c.b16 %v1476, %v1468
    %v1701 = vpack.c.b16 %v1477, %v1469
    %v1702 = vpack.c.b16 %v1478, %v1470
    %v1703 = vpack.c.b16 %v1479, %v1471
    %v1704 = vpack.c.b16 %v1480, %v1472
    %v1705 = vpack.c.b16 %v1481, %v1473
    %v1706 = vpack.c.b16 %v1482, %v1474
    %v1707 = vpack.c.b16 %v1483, %v1475
    %v1708 = vpack.c.b16 %v1492, %v1484
    %v1709 = vpack.c.b16 %v1493, %v1485
    %v1710 = vpack.c.b16 %v1494, %v1486
    %v1711 = vpack.c.b16 %v1495, %v1487
    %v1712 = vpack.c.b16 %v1496, %v1488
    %v1713 = vpack.c.b16 %v1497, %v1489
    %v1714 = vpack.c.b16 %v1498, %v1490
    %v1715 = vpack.c.b16 %v1499, %v1491
    %v1716 = vpack.c.b16 %v1508, %v1500
    %v1717 = vpack.c.b16 %v1509, %v1501
    %v1718 = vpack.c.b16 %v1510, %v1502
    %v1719 = vpack.c.b16 %v1511, %v1503
    %v1720 = vpack.c.b16 %v1512, %v1504
    %v1721 = vpack.c.b16 %v1513, %v1505
    %v1722 = vpack.c.b16 %v1514, %v1506
    %v1723 = vpack.c.b16 %v1515, %v1507
    %v1724 = vpack.c.b16 %v1524, %v1516
    %v1725 = vpack.c.b16 %v1525, %v1517
    %v1726 = vpack.c.b16 %v1526, %v1518
    %v1727 = vpack.c.b16 %v1527, %v1519
    %v1728 = vpack.c.b16 %v1528, %v1520
    %v1729 = vpack.c.b16 %v1529, %v1521
    %v1730 = vpack.c.b16 %v1530, %v1522
    %v1731 = vpack.c.b16 %v1531, %v1523
    %v1732 = vpack.c.b16 %v1540, %v1532
    %v1733 = vpack.c.b16 %v1541, %v1533
    %v1734 = vpack.c.b16 %v1542, %v1534
    %v1735 = vpack.c.b16 %v1543, %v1535
    %v1736 = vpack.c.b16 %v1544, %v1536
    %v1737 = vpack.c.b16 %v1545, %v1537
    %v1738 = vpack.c.b16 %v1546, %v1538
    %v1739 = vpack.c.b16 %v1547, %v1539
    %v1740 = vpack.c.b16 %v1556, %v1548
    %v1741 = vpack.c.b16 %v1557, %v1549
    %v1742 = vpack.c.b16 %v1558, %v1550
    %v1743 = vpack.c.b16 %v1559, %v1551
    %v1744 = vpack.c.b16 %v1560, %v1552
    %v1745 = vpack.c.b16 %v1561, %v1553
    %v1746 = vpack.c.b16 %v1562, %v1554
    %v1747 = vpack.c.b16 %v1563, %v1555
    %v1748 = vpack.c.b16 %v1572, %v1564
    %v1749 = vpack.c.b16 %v1573, %v1565
    %v1750 = vpack.c.b16 %v1574, %v1566
    %v1751 = vpack.c.b16 %v1575, %v1567
    %v1752 = vpack.c.b16 %v1576, %v1568
    %v1753 = vpack.c.b16 %v1577, %v1569
    %v1754 = vpack.c.b16 %v1578, %v1570
    %v1755 = vpack.c.b16 %v1579, %v1571
    %v1756 = vpack.c.b16 %v1588, %v1580
    %v1757 = vpack.c.b16 %v1589, %v1581
    %v1758 = vpack.c.b16 %v1590, %v1582
    %v1759 = vpack.c.b16 %v1591, %v1583
    %v1760 = vpack.c.b16 %v1592, %v1584
    %v1761 = vpack.c.b16 %v1593, %v1585
    %v1762 = vpack.c.b16 %v1594, %v1586
    %v1763 = vpack.c.b16 %v1595, %v1587
    %v1764 = vpack.c.b16 %v1604, %v1596
    %v1765 = vpack.c.b16 %v1605, %v1597
    %v1766 = vpack.c.b16 %v1606, %v1598
    %v1767 = vpack.c.b16 %v1607, %v1599
    %v1768 = vpack.c.b16 %v1608, %v1600
    %v1769 = vpack.c.b16 %v1609, %v1601
    %v1770 = vpack.c.b16 %v1610, %v1602
    %v1771 = vpack.c.b16 %v1611, %v1603
    %v1772 = vpack.c.b16 %v1620, %v1612
    %v1773 = vpack.c.b16 %v1621, %v1613
    %v1774 = vpack.c.b16 %v1622, %v1614
    %v1775 = vpack.c.b16 %v1623, %v1615
    %v1776 = vpack.c.b16 %v1624, %v1616
    %v1777 = vpack.c.b16 %v1625, %v1617
    %v1778 = vpack.c.b16 %v1626, %v1618
    %v1779 = vpack.c.b16 %v1627, %v1619
    %v1780 = vpack.c.b16 %v1636, %v1628
    %v1781 = vpack.c.b16 %v1637, %v1629
    %v1782 = vpack.c.b16 %v1638, %v1630
    %v1783 = vpack.c.b16 %v1639, %v1631
    %v1784 = vpack.c.b16 %v1640, %v1632
    %v1785 = vpack.c.b16 %v1641, %v1633
    %v1786 = vpack.c.b16 %v1642, %v1634
    %v1787 = vpack.c.b16 %v1643, %v1635
    %v1788 = vpack.c.b16 %v1652, %v1644
    %v1789 = vpack.c.b16 %v1653, %v1645
    %v1790 = vpack.c.b16 %v1654, %v1646
    %v1791 = vpack.c.b16 %v1655, %v1647
    %v1792 = vpack.c.b16 %v1656, %v1648
    %v1793 = vpack.c.b16 %v1657, %v1649
    %v1794 = vpack.c.b16 %v1658, %v1650
    %v1795 = vpack.c.b16 %v1659, %v1651
    %v1796 = vpack.c.b16 %v1668, %v1660
    %v1797 = vpack.c.b16 %v1669, %v1661
    %v1798 = vpack.c.b16 %v1670, %v1662
    %v1799 = vpack.c.b16 %v1671, %v1663
    %v1800 = vpack.c.b16 %v1672, %v1664
    %v1801 = vpack.c.b16 %v1673, %v1665
    %v1802 = vpack.c.b16 %v1674, %v1666
    %v1803 = vpack.c.b16 %v1675, %v1667
    %1932 = vmatprep.subr.bf16.mxu0 %v1677
    %1933 = vmatpush1.bf16.msra.mxu0 %v1676
    %1934 = vmatprep.subr.bf16.mxu0 %v1685
    %1935 = vmatpush1.bf16.msra.mxu0 %v1684
    %1936 = vmatprep.subr.bf16.mxu0 %v1693
    %1937 = vmatpush1.bf16.msra.mxu0 %v1692
    %1938 = vmatprep.subr.bf16.mxu0 %v1701
    %1939 = vmatpush1.bf16.msra.mxu0 %v1700
    %1940 = vmatprep.subr.bf16.mxu0 %v1709
    %1941 = vmatpush1.bf16.msra.mxu0 %v1708
    %1942 = vmatprep.subr.bf16.mxu0 %v1717
    %1943 = vmatpush1.bf16.msra.mxu0 %v1716
    %1944 = vmatprep.subr.bf16.mxu0 %v1725
    %1945 = vmatpush1.bf16.msra.mxu0 %v1724
    %1946 = vmatprep.subr.bf16.mxu0 %v1733
    %1947 = vmatpush1.bf16.msra.mxu0 %v1732
    %1948 = vmatprep.subr.bf16.mxu0 %v1741
    %1949 = vmatpush1.bf16.msra.mxu0 %v1740
    %1950 = vmatprep.subr.bf16.mxu0 %v1749
    %1951 = vmatpush1.bf16.msra.mxu0 %v1748
    %1952 = vmatprep.subr.bf16.mxu0 %v1757
    %1953 = vmatpush1.bf16.msra.mxu0 %v1756
    %1954 = vmatprep.subr.bf16.mxu0 %v1765
    %1955 = vmatpush1.bf16.msra.mxu0 %v1764
    %1956 = vmatprep.subr.bf16.mxu0 %v1773
    %1957 = vmatpush1.bf16.msra.mxu0 %v1772
    %1958 = vmatprep.subr.bf16.mxu0 %v1781
    %1959 = vmatpush1.bf16.msra.mxu0 %v1780
    %1960 = vmatprep.subr.bf16.mxu0 %v1789
    %1961 = vmatpush1.bf16.msra.mxu0 %v1788
    %1962 = vmatprep.subr.bf16.mxu0 %v1797
    %1963 = vmatpush1.bf16.msra.mxu0 %v1796
    %1964 = vmatprep.mubr.bf16.mxu0 %v92
    %1965 = vmatmul.mubr.bf16.gmra.mrb[0].mxu0 %v91
    %v1966 = vpop.f32.mrb[0].mxu0
    %v1967 = vadd.f32 0.0, %v1966
    %v1968 = vpop.f32.mrb[0].mxu0
    %v1969 = vadd.f32 0.0, %v1968
    %v1970 = vpop.f32.mrb[0].mxu0
    %v1971 = vpop.f32.mrb[0].mxu0
    %1972 = vdwg.mxu0
    %1973 = vmatprep.subr.bf16.mxu0 %v1679
    %1974 = vmatpush1.bf16.msra.mxu0 %v1678
    %1975 = vmatprep.subr.bf16.mxu0 %v1687
    %1976 = vmatpush1.bf16.msra.mxu0 %v1686
    %1977 = vmatprep.subr.bf16.mxu0 %v1695
    %1978 = vmatpush1.bf16.msra.mxu0 %v1694
    %1979 = vmatprep.subr.bf16.mxu0 %v1703
    %1980 = vmatpush1.bf16.msra.mxu0 %v1702
    %1981 = vmatprep.subr.bf16.mxu0 %v1711
    %1982 = vmatpush1.bf16.msra.mxu0 %v1710
    %1983 = vmatprep.subr.bf16.mxu0 %v1719
    %1984 = vmatpush1.bf16.msra.mxu0 %v1718
    %1985 = vmatprep.subr.bf16.mxu0 %v1727
    %1986 = vmatpush1.bf16.msra.mxu0 %v1726
    %1987 = vmatprep.subr.bf16.mxu0 %v1735
    %1988 = vmatpush1.bf16.msra.mxu0 %v1734
    %1989 = vmatprep.subr.bf16.mxu0 %v1743
    %1990 = vmatpush1.bf16.msra.mxu0 %v1742
    %1991 = vmatprep.subr.bf16.mxu0 %v1751
    %1992 = vmatpush1.bf16.msra.mxu0 %v1750
    %1993 = vmatprep.subr.bf16.mxu0 %v1759
    %1994 = vmatpush1.bf16.msra.mxu0 %v1758
    %1995 = vmatprep.subr.bf16.mxu0 %v1767
    %1996 = vmatpush1.bf16.msra.mxu0 %v1766
    %1997 = vmatprep.subr.bf16.mxu0 %v1775
    %1998 = vmatpush1.bf16.msra.mxu0 %v1774
    %1999 = vmatprep.subr.bf16.mxu0 %v1783
    %2000 = vmatpush1.bf16.msra.mxu0 %v1782
    %2001 = vmatprep.subr.bf16.mxu0 %v1791
    %2002 = vmatpush1.bf16.msra.mxu0 %v1790
    %2003 = vmatprep.subr.bf16.mxu0 %v1799
    %2004 = vmatpush1.bf16.msra.mxu0 %v1798
    %2005 = vmatprep.mubr.bf16.mxu0 %v92
    %2006 = vmatmul.mubr.bf16.gmra.mrb[0].mxu0 %v91
    %v2007 = vpop.f32.mrb[0].mxu0
    %v2008 = vadd.f32 0.0, %v2007
    %v2009 = vpop.f32.mrb[0].mxu0
    %v2010 = vadd.f32 0.0, %v2009
    %v2011 = vpop.f32.mrb[0].mxu0
    %v2012 = vpop.f32.mrb[0].mxu0
    %2013 = vdwg.mxu0
    %2014 = vmatprep.subr.bf16.mxu0 %v1681
    %2015 = vmatpush1.bf16.msra.mxu0 %v1680
    %2016 = vmatprep.subr.bf16.mxu0 %v1689
    %2017 = vmatpush1.bf16.msra.mxu0 %v1688
    %2018 = vmatprep.subr.bf16.mxu0 %v1697
    %2019 = vmatpush1.bf16.msra.mxu0 %v1696
    %2020 = vmatprep.subr.bf16.mxu0 %v1705
    %2021 = vmatpush1.bf16.msra.mxu0 %v1704
    %2022 = vmatprep.subr.bf16.mxu0 %v1713
    %2023 = vmatpush1.bf16.msra.mxu0 %v1712
    %2024 = vmatprep.subr.bf16.mxu0 %v1721
    %2025 = vmatpush1.bf16.msra.mxu0 %v1720
    %2026 = vmatprep.subr.bf16.mxu0 %v1729
    %2027 = vmatpush1.bf16.msra.mxu0 %v1728
    %2028 = vmatprep.subr.bf16.mxu0 %v1737
    %2029 = vmatpush1.bf16.msra.mxu0 %v1736
    %2030 = vmatprep.subr.bf16.mxu0 %v1745
    %2031 = vmatpush1.bf16.msra.mxu0 %v1744
    %2032 = vmatprep.subr.bf16.mxu0 %v1753
    %2033 = vmatpush1.bf16.msra.mxu0 %v1752
    %2034 = vmatprep.subr.bf16.mxu0 %v1761
    %2035 = vmatpush1.bf16.msra.mxu0 %v1760
    %2036 = vmatprep.subr.bf16.mxu0 %v1769
    %2037 = vmatpush1.bf16.msra.mxu0 %v1768
    %2038 = vmatprep.subr.bf16.mxu0 %v1777
    %2039 = vmatpush1.bf16.msra.mxu0 %v1776
    %2040 = vmatprep.subr.bf16.mxu0 %v1785
    %2041 = vmatpush1.bf16.msra.mxu0 %v1784
    %2042 = vmatprep.subr.bf16.mxu0 %v1793
    %2043 = vmatpush1.bf16.msra.mxu0 %v1792
    %2044 = vmatprep.subr.bf16.mxu0 %v1801
    %2045 = vmatpush1.bf16.msra.mxu0 %v1800
    %2046 = vmatprep.mubr.bf16.mxu0 %v92
    %2047 = vmatmul.mubr.bf16.gmra.mrb[0].mxu0 %v91
    %v2048 = vpop.f32.mrb[0].mxu0
    %v2049 = vadd.f32 0.0, %v2048
    %v2050 = vpop.f32.mrb[0].mxu0
    %v2051 = vadd.f32 0.0, %v2050
    %v2052 = vpop.f32.mrb[0].mxu0
    %v2053 = vpop.f32.mrb[0].mxu0
    %2054 = vdwg.mxu0
    %2055 = vmatprep.subr.bf16.mxu0 %v1683
    %2056 = vmatpush1.bf16.msra.mxu0 %v1682
    %2057 = vmatprep.subr.bf16.mxu0 %v1691
    %2058 = vmatpush1.bf16.msra.mxu0 %v1690
    %2059 = vmatprep.subr.bf16.mxu0 %v1699
    %2060 = vmatpush1.bf16.msra.mxu0 %v1698
    %2061 = vmatprep.subr.bf16.mxu0 %v1707
    %2062 = vmatpush1.bf16.msra.mxu0 %v1706
    %2063 = vmatprep.subr.bf16.mxu0 %v1715
    %2064 = vmatpush1.bf16.msra.mxu0 %v1714
    %2065 = vmatprep.subr.bf16.mxu0 %v1723
    %2066 = vmatpush1.bf16.msra.mxu0 %v1722
    %2067 = vmatprep.subr.bf16.mxu0 %v1731
    %2068 = vmatpush1.bf16.msra.mxu0 %v1730
    %2069 = vmatprep.subr.bf16.mxu0 %v1739
    %2070 = vmatpush1.bf16.msra.mxu0 %v1738
    %2071 = vmatprep.subr.bf16.mxu0 %v1747
    %2072 = vmatpush1.bf16.msra.mxu0 %v1746
    %2073 = vmatprep.subr.bf16.mxu0 %v1755
    %2074 = vmatpush1.bf16.msra.mxu0 %v1754
    %2075 = vmatprep.subr.bf16.mxu0 %v1763
    %2076 = vmatpush1.bf16.msra.mxu0 %v1762
    %2077 = vmatprep.subr.bf16.mxu0 %v1771
    %2078 = vmatpush1.bf16.msra.mxu0 %v1770
    %2079 = vmatprep.subr.bf16.mxu0 %v1779
    %2080 = vmatpush1.bf16.msra.mxu0 %v1778
    %2081 = vmatprep.subr.bf16.mxu0 %v1787
    %2082 = vmatpush1.bf16.msra.mxu0 %v1786
    %2083 = vmatprep.subr.bf16.mxu0 %v1795
    %2084 = vmatpush1.bf16.msra.mxu0 %v1794
    %2085 = vmatprep.subr.bf16.mxu0 %v1803
    %2086 = vmatpush1.bf16.msra.mxu0 %v1802
    %2087 = vmatprep.mubr.bf16.mxu0 %v92
    %2088 = vmatmul.mubr.bf16.gmra.mrb[0].mxu0 %v91
    %v2089 = vpop.f32.mrb[0].mxu0
    %v2090 = vadd.f32 0.0, %v2089
    %v2091 = vpop.f32.mrb[0].mxu0
    %v2092 = vadd.f32 0.0, %v2091
    %v2093 = vpop.f32.mrb[0].mxu0
    %v2094 = vpop.f32.mrb[0].mxu0
    %2095 = vdwg.mxu0
    %v2096 = vmul.f32 %v1035, %v1035
    %v2097 = vmul.f32 %v1037, %v1037
    %v2098 = vmul.f32 %v1076, %v1076
    %v2099 = vmul.f32 %v1078, %v1078
    %v2100 = vmul.f32 %v1117, %v1117
    %v2101 = vmul.f32 %v1119, %v1119
    %v2102 = vmul.f32 %v1158, %v1158
    %v2103 = vmul.f32 %v1160, %v1160
    %v2104 = vmul.f32 %v1967, %v1967
    %v2105 = vmul.f32 %v1969, %v1969
    %v2106 = vmul.f32 %v2008, %v2008
    %v2107 = vmul.f32 %v2010, %v2010
    %v2108 = vmul.f32 %v2049, %v2049
    %v2109 = vmul.f32 %v2051, %v2051
    %v2110 = vmul.f32 %v2090, %v2090
    %v2111 = vmul.f32 %v2092, %v2092
    %v2112 = vadd.f32 %v2096, %v2104
    %v2113 = vadd.f32 %v2097, %v2105
    %v2114 = vadd.f32 %v2098, %v2106
    %v2115 = vadd.f32 %v2099, %v2107
    %v2116 = vadd.f32 %v2100, %v2108
    %v2117 = vadd.f32 %v2101, %v2109
    %v2118 = vadd.f32 %v2102, %v2110
    %v2119 = vadd.f32 %v2103, %v2111
    %v2120 = vrsqrt.pop %v2112
    %v2121 = vmul.f32 %v2112, %v2120
    %vm2122 = vcmp.eq.f32.partialorder %v2112, inf
    %v2123 = vsel %vm2122, %v2112, %v2121
    %vm2124 = vcmp.eq.f32.partialorder %v2112, 0.0
    %v2125 = vand.u32 %v2112, 2147483648
    %v2126 = vsel %vm2124, %v2125, %v2123
    %v2127 = vrsqrt.pop %v2113
    %v2128 = vmul.f32 %v2113, %v2127
    %vm2129 = vcmp.eq.f32.partialorder %v2113, inf
    %v2130 = vsel %vm2129, %v2113, %v2128
    %vm2131 = vcmp.eq.f32.partialorder %v2113, 0.0
    %v2132 = vand.u32 %v2113, 2147483648
    %v2133 = vsel %vm2131, %v2132, %v2130
    %v2134 = vrsqrt.pop %v2114
    %v2135 = vmul.f32 %v2114, %v2134
    %vm2136 = vcmp.eq.f32.partialorder %v2114, inf
    %v2137 = vsel %vm2136, %v2114, %v2135
    %vm2138 = vcmp.eq.f32.partialorder %v2114, 0.0
    %v2139 = vand.u32 %v2114, 2147483648
    %v2140 = vsel %vm2138, %v2139, %v2137
    %v2141 = vrsqrt.pop %v2115
    %v2142 = vmul.f32 %v2115, %v2141
    %vm2143 = vcmp.eq.f32.partialorder %v2115, inf
    %v2144 = vsel %vm2143, %v2115, %v2142
    %vm2145 = vcmp.eq.f32.partialorder %v2115, 0.0
    %v2146 = vand.u32 %v2115, 2147483648
    %v2147 = vsel %vm2145, %v2146, %v2144
    %v2148 = vrsqrt.pop %v2116
    %v2149 = vmul.f32 %v2116, %v2148
    %vm2150 = vcmp.eq.f32.partialorder %v2116, inf
    %v2151 = vsel %vm2150, %v2116, %v2149
    %vm2152 = vcmp.eq.f32.partialorder %v2116, 0.0
    %v2153 = vand.u32 %v2116, 2147483648
    %v2154 = vsel %vm2152, %v2153, %v2151
    %v2155 = vrsqrt.pop %v2117
    %v2156 = vmul.f32 %v2117, %v2155
    %vm2157 = vcmp.eq.f32.partialorder %v2117, inf
    %v2158 = vsel %vm2157, %v2117, %v2156
    %vm2159 = vcmp.eq.f32.partialorder %v2117, 0.0
    %v2160 = vand.u32 %v2117, 2147483648
    %v2161 = vsel %vm2159, %v2160, %v2158
    %v2162 = vrsqrt.pop %v2118
    %v2163 = vmul.f32 %v2118, %v2162
    %vm2164 = vcmp.eq.f32.partialorder %v2118, inf
    %v2165 = vsel %vm2164, %v2118, %v2163
    %vm2166 = vcmp.eq.f32.partialorder %v2118, 0.0
    %v2167 = vand.u32 %v2118, 2147483648
    %v2168 = vsel %vm2166, %v2167, %v2165
    %v2169 = vrsqrt.pop %v2119
    %v2170 = vmul.f32 %v2119, %v2169
    %vm2171 = vcmp.eq.f32.partialorder %v2119, inf
    %v2172 = vsel %vm2171, %v2119, %v2170
    %vm2173 = vcmp.eq.f32.partialorder %v2119, 0.0
    %v2174 = vand.u32 %v2119, 2147483648
    %v2175 = vsel %vm2173, %v2174, %v2172
    %v2176 = vpack.c.bf16 %v2126, %v2126
    %v2177 = vpack.c.bf16 %v2133, %v2133
    %2178 = vst [vmem:[#allocation2] sm:$0xf] %v2176
    %2179 = vst [vmem:[#allocation2 + $0x8] sm:$0xf] %v2177
    %v2180 = vpack.c.bf16 %v2140, %v2140
    %v2181 = vpack.c.bf16 %v2147, %v2147
    %v2184 = vrot.slane %v2180, 4
    %v2185 = vrot.slane %v2181, 4
    %2188 = vst [vmem:[#allocation2] sm:$0xf0] %v2184
    %2189 = vst [vmem:[#allocation2 + $0x8] sm:$0xf0] %v2185
    %v2190 = vpack.c.bf16 %v2154, %v2154
    %v2191 = vpack.c.bf16 %v2161, %v2161
    %2192 = vst [vmem:[#allocation2 + $0x10] sm:$0xf] %v2190
    %2193 = vst [vmem:[#allocation2 + $0x18] sm:$0xf] %v2191
    %v2194 = vpack.c.bf16 %v2168, %v2168
    %v2195 = vpack.c.bf16 %v2175, %v2175
    %v2198 = vrot.slane %v2194, 4
    %v2199 = vrot.slane %v2195, 4
    %2202 = vst [vmem:[#allocation2 + $0x10] sm:$0xf0] %v2198
    %2203 = vst [vmem:[#allocation2 + $0x18] sm:$0xf0] %v2199
    %v2204 = vld [vmem:[#allocation2] sm:$0xff]
    %v2205 = vld [vmem:[#allocation2 + $0x8] sm:$0xff]
    %v2206 = vld [vmem:[#allocation2 + $0x10] sm:$0xff]
    %v2207 = vld [vmem:[#allocation2 + $0x18] sm:$0xff]
    %2208 = vmatprep.subr.bf16.mxu0 0
    %2209 = vmatpush1.bf16.msra.mxu0 %v159
    %2210 = vmatprep.subr.bf16.mxu0 0
    %2211 = vmatpush1.bf16.msra.mxu0 %v160
    %2212 = vmatprep.subr.bf16.mxu0 0
    %2213 = vmatpush1.bf16.msra.mxu0 %v161
    %2214 = vmatprep.subr.bf16.mxu0 0
    %2215 = vmatpush1.bf16.msra.mxu0 %v162
    %2216 = vmatprep.subr.bf16.mxu0 0
    %2217 = vmatpush1.bf16.msra.mxu0 %v163
    %2218 = vmatprep.subr.bf16.mxu0 0
    %2219 = vmatpush1.bf16.msra.mxu0 %v164
    %2220 = vmatprep.subr.bf16.mxu0 0
    %2221 = vmatpush1.bf16.msra.mxu0 %v165
    %2222 = vmatprep.subr.bf16.mxu0 0
    %2223 = vmatpush1.bf16.msra.mxu0 %v166
    %2224 = vmatprep.subr.bf16.mxu0 0
    %2225 = vmatpush1.bf16.msra.mxu0 %v167
    %2226 = vmatprep.subr.bf16.mxu0 0
    %2227 = vmatpush1.bf16.msra.mxu0 %v168
    %2228 = vmatprep.subr.bf16.mxu0 0
    %2229 = vmatpush1.bf16.msra.mxu0 %v169
    %2230 = vmatprep.subr.bf16.mxu0 0
    %2231 = vmatpush1.bf16.msra.mxu0 %v170
    %2232 = vmatprep.subr.bf16.mxu0 0
    %2233 = vmatpush1.bf16.msra.mxu0 %v171
    %2234 = vmatprep.subr.bf16.mxu0 0
    %2235 = vmatpush1.bf16.msra.mxu0 %v172
    %2236 = vmatprep.subr.bf16.mxu0 0
    %2237 = vmatpush1.bf16.msra.mxu0 %v173
    %2238 = vmatprep.subr.bf16.mxu0 0
    %2239 = vmatpush1.bf16.msra.mxu0 %v174
    %2240 = vmatprep.mubr.bf16.mxu0 %v2205
    %2241 = vmatmul.mubr.bf16.gmra.mrb[0].mxu0 %v2204
    %v2242 = vpop.f32.mrb[0].mxu0
    %v2243 = vadd.f32 0.0, %v2242
    %v2244 = vpop.f32.mrb[0].mxu0
    %v2245 = vpop.f32.mrb[0].mxu0
    %v2246 = vadd.f32 0.0, %v2245
    %v2247 = vpop.f32.mrb[0].mxu0
    %2248 = vmatprep.mubr.bf16.mxu0 %v2207
    %2249 = vmatmul.mubr.bf16.gmra.mrb[0].mxu0 %v2206
    %v2250 = vpop.f32.mrb[0].mxu0
    %v2251 = vadd.f32 0.0, %v2250
    %v2252 = vpop.f32.mrb[0].mxu0
    %v2253 = vpop.f32.mrb[0].mxu0
    %v2254 = vadd.f32 0.0, %v2253
    %v2255 = vpop.f32.mrb[0].mxu0
    %2256 = vdwg.mxu0
    %2257 = vst [vmem:[#allocation9 + $0x8] sm:$0xff] %v2243
    %2258 = vst [vmem:[#allocation9 + $0x10] sm:$0xff] %v2246
    %2259 = vst [vmem:[#allocation9 + $0x18] sm:$0xff] %v2251
    %2260 = vst [vmem:[#allocation9 + $0x20] sm:$0xff] %v2254
    %v2261 = vld [vmem:[#allocation6 + $0x20] sm:$0xff]
    %v2262 = vld [vmem:[#allocation6 + $0x28] sm:$0xff]
    %v2263 = vld [vmem:[#allocation6 + $0x30] sm:$0xff]
    %v2264 = vld [vmem:[#allocation6 + $0x38] sm:$0xff]
    %v2265 = vld [vmem:[#allocation6 + $0xa0] sm:$0xff]
    %v2266 = vld [vmem:[#allocation6 + $0xa8] sm:$0xff]
    %v2267 = vld [vmem:[#allocation6 + $0xb0] sm:$0xff]
    %v2268 = vld [vmem:[#allocation6 + $0xb8] sm:$0xff]
    %v2269 = vld [vmem:[#allocation6 + $0x120] sm:$0xff]
    %v2270 = vld [vmem:[#allocation6 + $0x128] sm:$0xff]
    %v2271 = vld [vmem:[#allocation6 + $0x130] sm:$0xff]
    %v2272 = vld [vmem:[#allocation6 + $0x138] sm:$0xff]
    %v2273 = vld [vmem:[#allocation6 + $0x1a0] sm:$0xff]
    %v2274 = vld [vmem:[#allocation6 + $0x1a8] sm:$0xff]
    %v2275 = vld [vmem:[#allocation6 + $0x1b0] sm:$0xff]
    %v2276 = vld [vmem:[#allocation6 + $0x1b8] sm:$0xff]
    %v2277 = vld [vmem:[#allocation6 + $0x220] sm:$0xff]
    %v2278 = vld [vmem:[#allocation6 + $0x228] sm:$0xff]
    %v2279 = vld [vmem:[#allocation6 + $0x230] sm:$0xff]
    %v2280 = vld [vmem:[#allocation6 + $0x238] sm:$0xff]
    %v2281 = vld [vmem:[#allocation6 + $0x2a0] sm:$0xff]
    %v2282 = vld [vmem:[#allocation6 + $0x2a8] sm:$0xff]
    %v2283 = vld [vmem:[#allocation6 + $0x2b0] sm:$0xff]
    %v2284 = vld [vmem:[#allocation6 + $0x2b8] sm:$0xff]
    %v2285 = vld [vmem:[#allocation6 + $0x320] sm:$0xff]
    %v2286 = vld [vmem:[#allocation6 + $0x328] sm:$0xff]
    %v2287 = vld [vmem:[#allocation6 + $0x330] sm:$0xff]
    %v2288 = vld [vmem:[#allocation6 + $0x338] sm:$0xff]
    %v2289 = vld [vmem:[#allocation6 + $0x3a0] sm:$0xff]
    %v2290 = vld [vmem:[#allocation6 + $0x3a8] sm:$0xff]
    %v2291 = vld [vmem:[#allocation6 + $0x3b0] sm:$0xff]
    %v2292 = vld [vmem:[#allocation6 + $0x3b8] sm:$0xff]
    %v2293 = vld [vmem:[#allocation6 + $0x420] sm:$0xff]
    %v2294 = vld [vmem:[#allocation6 + $0x428] sm:$0xff]
    %v2295 = vld [vmem:[#allocation6 + $0x430] sm:$0xff]
    %v2296 = vld [vmem:[#allocation6 + $0x438] sm:$0xff]
    %v2297 = vld [vmem:[#allocation6 + $0x4a0] sm:$0xff]
    %v2298 = vld [vmem:[#allocation6 + $0x4a8] sm:$0xff]
    %v2299 = vld [vmem:[#allocation6 + $0x4b0] sm:$0xff]
    %v2300 = vld [vmem:[#allocation6 + $0x4b8] sm:$0xff]
    %v2301 = vld [vmem:[#allocation6 + $0x520] sm:$0xff]
    %v2302 = vld [vmem:[#allocation6 + $0x528] sm:$0xff]
    %v2303 = vld [vmem:[#allocation6 + $0x530] sm:$0xff]
    %v2304 = vld [vmem:[#allocation6 + $0x538] sm:$0xff]
    %v2305 = vld [vmem:[#allocation6 + $0x5a0] sm:$0xff]
    %v2306 = vld [vmem:[#allocation6 + $0x5a8] sm:$0xff]
    %v2307 = vld [vmem:[#allocation6 + $0x5b0] sm:$0xff]
    %v2308 = vld [vmem:[#allocation6 + $0x5b8] sm:$0xff]
    %v2309 = vld [vmem:[#allocation6 + $0x620] sm:$0xff]
    %v2310 = vld [vmem:[#allocation6 + $0x628] sm:$0xff]
    %v2311 = vld [vmem:[#allocation6 + $0x630] sm:$0xff]
    %v2312 = vld [vmem:[#allocation6 + $0x638] sm:$0xff]
    %v2313 = vld [vmem:[#allocation6 + $0x6a0] sm:$0xff]
    %v2314 = vld [vmem:[#allocation6 + $0x6a8] sm:$0xff]
    %v2315 = vld [vmem:[#allocation6 + $0x6b0] sm:$0xff]
    %v2316 = vld [vmem:[#allocation6 + $0x6b8] sm:$0xff]
    %v2317 = vld [vmem:[#allocation6 + $0x720] sm:$0xff]
    %v2318 = vld [vmem:[#allocation6 + $0x728] sm:$0xff]
    %v2319 = vld [vmem:[#allocation6 + $0x730] sm:$0xff]
    %v2320 = vld [vmem:[#allocation6 + $0x738] sm:$0xff]
    %v2321 = vld [vmem:[#allocation6 + $0x7a0] sm:$0xff]
    %v2322 = vld [vmem:[#allocation6 + $0x7a8] sm:$0xff]
    %v2323 = vld [vmem:[#allocation6 + $0x7b0] sm:$0xff]
    %v2324 = vld [vmem:[#allocation6 + $0x7b8] sm:$0xff]
    %v2325 = vld [vmem:[#allocation6 + $0x820] sm:$0xff]
    %v2326 = vld [vmem:[#allocation6 + $0x828] sm:$0xff]
    %v2327 = vld [vmem:[#allocation6 + $0x830] sm:$0xff]
    %v2328 = vld [vmem:[#allocation6 + $0x838] sm:$0xff]
    %v2329 = vld [vmem:[#allocation6 + $0x8a0] sm:$0xff]
    %v2330 = vld [vmem:[#allocation6 + $0x8a8] sm:$0xff]
    %v2331 = vld [vmem:[#allocation6 + $0x8b0] sm:$0xff]
    %v2332 = vld [vmem:[#allocation6 + $0x8b8] sm:$0xff]
    %v2333 = vld [vmem:[#allocation6 + $0x920] sm:$0xff]
    %v2334 = vld [vmem:[#allocation6 + $0x928] sm:$0xff]
    %v2335 = vld [vmem:[#allocation6 + $0x930] sm:$0xff]
    %v2336 = vld [vmem:[#allocation6 + $0x938] sm:$0xff]
    %v2337 = vld [vmem:[#allocation6 + $0x9a0] sm:$0xff]
    %v2338 = vld [vmem:[#allocation6 + $0x9a8] sm:$0xff]
    %v2339 = vld [vmem:[#allocation6 + $0x9b0] sm:$0xff]
    %v2340 = vld [vmem:[#allocation6 + $0x9b8] sm:$0xff]
    %v2341 = vld [vmem:[#allocation6 + $0xa20] sm:$0xff]
    %v2342 = vld [vmem:[#allocation6 + $0xa28] sm:$0xff]
    %v2343 = vld [vmem:[#allocation6 + $0xa30] sm:$0xff]
    %v2344 = vld [vmem:[#allocation6 + $0xa38] sm:$0xff]
    %v2345 = vld [vmem:[#allocation6 + $0xaa0] sm:$0xff]
    %v2346 = vld [vmem:[#allocation6 + $0xaa8] sm:$0xff]
    %v2347 = vld [vmem:[#allocation6 + $0xab0] sm:$0xff]
    %v2348 = vld [vmem:[#allocation6 + $0xab8] sm:$0xff]
    %v2349 = vld [vmem:[#allocation6 + $0xb20] sm:$0xff]
    %v2350 = vld [vmem:[#allocation6 + $0xb28] sm:$0xff]
    %v2351 = vld [vmem:[#allocation6 + $0xb30] sm:$0xff]
    %v2352 = vld [vmem:[#allocation6 + $0xb38] sm:$0xff]
    %v2353 = vld [vmem:[#allocation6 + $0xba0] sm:$0xff]
    %v2354 = vld [vmem:[#allocation6 + $0xba8] sm:$0xff]
    %v2355 = vld [vmem:[#allocation6 + $0xbb0] sm:$0xff]
    %v2356 = vld [vmem:[#allocation6 + $0xbb8] sm:$0xff]
    %v2357 = vld [vmem:[#allocation6 + $0xc20] sm:$0xff]
    %v2358 = vld [vmem:[#allocation6 + $0xc28] sm:$0xff]
    %v2359 = vld [vmem:[#allocation6 + $0xc30] sm:$0xff]
    %v2360 = vld [vmem:[#allocation6 + $0xc38] sm:$0xff]
    %v2361 = vld [vmem:[#allocation6 + $0xca0] sm:$0xff]
    %v2362 = vld [vmem:[#allocation6 + $0xca8] sm:$0xff]
    %v2363 = vld [vmem:[#allocation6 + $0xcb0] sm:$0xff]
    %v2364 = vld [vmem:[#allocation6 + $0xcb8] sm:$0xff]
    %v2365 = vld [vmem:[#allocation6 + $0xd20] sm:$0xff]
    %v2366 = vld [vmem:[#allocation6 + $0xd28] sm:$0xff]
    %v2367 = vld [vmem:[#allocation6 + $0xd30] sm:$0xff]
    %v2368 = vld [vmem:[#allocation6 + $0xd38] sm:$0xff]
    %v2369 = vld [vmem:[#allocation6 + $0xda0] sm:$0xff]
    %v2370 = vld [vmem:[#allocation6 + $0xda8] sm:$0xff]
    %v2371 = vld [vmem:[#allocation6 + $0xdb0] sm:$0xff]
    %v2372 = vld [vmem:[#allocation6 + $0xdb8] sm:$0xff]
    %v2373 = vld [vmem:[#allocation6 + $0xe20] sm:$0xff]
    %v2374 = vld [vmem:[#allocation6 + $0xe28] sm:$0xff]
    %v2375 = vld [vmem:[#allocation6 + $0xe30] sm:$0xff]
    %v2376 = vld [vmem:[#allocation6 + $0xe38] sm:$0xff]
    %v2377 = vld [vmem:[#allocation6 + $0xea0] sm:$0xff]
    %v2378 = vld [vmem:[#allocation6 + $0xea8] sm:$0xff]
    %v2379 = vld [vmem:[#allocation6 + $0xeb0] sm:$0xff]
    %v2380 = vld [vmem:[#allocation6 + $0xeb8] sm:$0xff]
    %v2381 = vld [vmem:[#allocation6 + $0xf20] sm:$0xff]
    %v2382 = vld [vmem:[#allocation6 + $0xf28] sm:$0xff]
    %v2383 = vld [vmem:[#allocation6 + $0xf30] sm:$0xff]
    %v2384 = vld [vmem:[#allocation6 + $0xf38] sm:$0xff]
    %v2385 = vld [vmem:[#allocation6 + $0xfa0] sm:$0xff]
    %v2386 = vld [vmem:[#allocation6 + $0xfa8] sm:$0xff]
    %v2387 = vld [vmem:[#allocation6 + $0xfb0] sm:$0xff]
    %v2388 = vld [vmem:[#allocation6 + $0xfb8] sm:$0xff]
    %v2517 = vunpack.c.l.b16 %v2261
    %v2518 = vunpack.c.h.b16 %v2261
    %v2519 = vunpack.c.l.b16 %v2262
    %v2520 = vunpack.c.h.b16 %v2262
    %v2521 = vunpack.c.l.b16 %v2263
    %v2522 = vunpack.c.h.b16 %v2263
    %v2523 = vunpack.c.l.b16 %v2264
    %v2524 = vunpack.c.h.b16 %v2264
    %v2525 = vunpack.c.l.b16 %v2265
    %v2526 = vunpack.c.h.b16 %v2265
    %v2527 = vunpack.c.l.b16 %v2266
    %v2528 = vunpack.c.h.b16 %v2266
    %v2529 = vunpack.c.l.b16 %v2267
    %v2530 = vunpack.c.h.b16 %v2267
    %v2531 = vunpack.c.l.b16 %v2268
    %v2532 = vunpack.c.h.b16 %v2268
    %v2533 = vunpack.c.l.b16 %v2269
    %v2534 = vunpack.c.h.b16 %v2269
    %v2535 = vunpack.c.l.b16 %v2270
    %v2536 = vunpack.c.h.b16 %v2270
    %v2537 = vunpack.c.l.b16 %v2271
    %v2538 = vunpack.c.h.b16 %v2271
    %v2539 = vunpack.c.l.b16 %v2272
    %v2540 = vunpack.c.h.b16 %v2272
    %v2541 = vunpack.c.l.b16 %v2273
    %v2542 = vunpack.c.h.b16 %v2273
    %v2543 = vunpack.c.l.b16 %v2274
    %v2544 = vunpack.c.h.b16 %v2274
    %v2545 = vunpack.c.l.b16 %v2275
    %v2546 = vunpack.c.h.b16 %v2275
    %v2547 = vunpack.c.l.b16 %v2276
    %v2548 = vunpack.c.h.b16 %v2276
    %v2549 = vunpack.c.l.b16 %v2277
    %v2550 = vunpack.c.h.b16 %v2277
    %v2551 = vunpack.c.l.b16 %v2278
    %v2552 = vunpack.c.h.b16 %v2278
    %v2553 = vunpack.c.l.b16 %v2279
    %v2554 = vunpack.c.h.b16 %v2279
    %v2555 = vunpack.c.l.b16 %v2280
    %v2556 = vunpack.c.h.b16 %v2280
    %v2557 = vunpack.c.l.b16 %v2281
    %v2558 = vunpack.c.h.b16 %v2281
    %v2559 = vunpack.c.l.b16 %v2282
    %v2560 = vunpack.c.h.b16 %v2282
    %v2561 = vunpack.c.l.b16 %v2283
    %v2562 = vunpack.c.h.b16 %v2283
    %v2563 = vunpack.c.l.b16 %v2284
    %v2564 = vunpack.c.h.b16 %v2284
    %v2565 = vunpack.c.l.b16 %v2285
    %v2566 = vunpack.c.h.b16 %v2285
    %v2567 = vunpack.c.l.b16 %v2286
    %v2568 = vunpack.c.h.b16 %v2286
    %v2569 = vunpack.c.l.b16 %v2287
    %v2570 = vunpack.c.h.b16 %v2287
    %v2571 = vunpack.c.l.b16 %v2288
    %v2572 = vunpack.c.h.b16 %v2288
    %v2573 = vunpack.c.l.b16 %v2289
    %v2574 = vunpack.c.h.b16 %v2289
    %v2575 = vunpack.c.l.b16 %v2290
    %v2576 = vunpack.c.h.b16 %v2290
    %v2577 = vunpack.c.l.b16 %v2291
    %v2578 = vunpack.c.h.b16 %v2291
    %v2579 = vunpack.c.l.b16 %v2292
    %v2580 = vunpack.c.h.b16 %v2292
    %v2581 = vunpack.c.l.b16 %v2293
    %v2582 = vunpack.c.h.b16 %v2293
    %v2583 = vunpack.c.l.b16 %v2294
    %v2584 = vunpack.c.h.b16 %v2294
    %v2585 = vunpack.c.l.b16 %v2295
    %v2586 = vunpack.c.h.b16 %v2295
    %v2587 = vunpack.c.l.b16 %v2296
    %v2588 = vunpack.c.h.b16 %v2296
    %v2589 = vunpack.c.l.b16 %v2297
    %v2590 = vunpack.c.h.b16 %v2297
    %v2591 = vunpack.c.l.b16 %v2298
    %v2592 = vunpack.c.h.b16 %v2298
    %v2593 = vunpack.c.l.b16 %v2299
    %v2594 = vunpack.c.h.b16 %v2299
    %v2595 = vunpack.c.l.b16 %v2300
    %v2596 = vunpack.c.h.b16 %v2300
    %v2597 = vunpack.c.l.b16 %v2301
    %v2598 = vunpack.c.h.b16 %v2301
    %v2599 = vunpack.c.l.b16 %v2302
    %v2600 = vunpack.c.h.b16 %v2302
    %v2601 = vunpack.c.l.b16 %v2303
    %v2602 = vunpack.c.h.b16 %v2303
    %v2603 = vunpack.c.l.b16 %v2304
    %v2604 = vunpack.c.h.b16 %v2304
    %v2605 = vunpack.c.l.b16 %v2305
    %v2606 = vunpack.c.h.b16 %v2305
    %v2607 = vunpack.c.l.b16 %v2306
    %v2608 = vunpack.c.h.b16 %v2306
    %v2609 = vunpack.c.l.b16 %v2307
    %v2610 = vunpack.c.h.b16 %v2307
    %v2611 = vunpack.c.l.b16 %v2308
    %v2612 = vunpack.c.h.b16 %v2308
    %v2613 = vunpack.c.l.b16 %v2309
    %v2614 = vunpack.c.h.b16 %v2309
    %v2615 = vunpack.c.l.b16 %v2310
    %v2616 = vunpack.c.h.b16 %v2310
    %v2617 = vunpack.c.l.b16 %v2311
    %v2618 = vunpack.c.h.b16 %v2311
    %v2619 = vunpack.c.l.b16 %v2312
    %v2620 = vunpack.c.h.b16 %v2312
    %v2621 = vunpack.c.l.b16 %v2313
    %v2622 = vunpack.c.h.b16 %v2313
    %v2623 = vunpack.c.l.b16 %v2314
    %v2624 = vunpack.c.h.b16 %v2314
    %v2625 = vunpack.c.l.b16 %v2315
    %v2626 = vunpack.c.h.b16 %v2315
    %v2627 = vunpack.c.l.b16 %v2316
    %v2628 = vunpack.c.h.b16 %v2316
    %v2629 = vunpack.c.l.b16 %v2317
    %v2630 = vunpack.c.h.b16 %v2317
    %v2631 = vunpack.c.l.b16 %v2318
    %v2632 = vunpack.c.h.b16 %v2318
    %v2633 = vunpack.c.l.b16 %v2319
    %v2634 = vunpack.c.h.b16 %v2319
    %v2635 = vunpack.c.l.b16 %v2320
    %v2636 = vunpack.c.h.b16 %v2320
    %v2637 = vunpack.c.l.b16 %v2321
    %v2638 = vunpack.c.h.b16 %v2321
    %v2639 = vunpack.c.l.b16 %v2322
    %v2640 = vunpack.c.h.b16 %v2322
    %v2641 = vunpack.c.l.b16 %v2323
    %v2642 = vunpack.c.h.b16 %v2323
    %v2643 = vunpack.c.l.b16 %v2324
    %v2644 = vunpack.c.h.b16 %v2324
    %v2645 = vunpack.c.l.b16 %v2325
    %v2646 = vunpack.c.h.b16 %v2325
    %v2647 = vunpack.c.l.b16 %v2326
    %v2648 = vunpack.c.h.b16 %v2326
    %v2649 = vunpack.c.l.b16 %v2327
    %v2650 = vunpack.c.h.b16 %v2327
    %v2651 = vunpack.c.l.b16 %v2328
    %v2652 = vunpack.c.h.b16 %v2328
    %v2653 = vunpack.c.l.b16 %v2329
    %v2654 = vunpack.c.h.b16 %v2329
    %v2655 = vunpack.c.l.b16 %v2330
    %v2656 = vunpack.c.h.b16 %v2330
    %v2657 = vunpack.c.l.b16 %v2331
    %v2658 = vunpack.c.h.b16 %v2331
    %v2659 = vunpack.c.l.b16 %v2332
    %v2660 = vunpack.c.h.b16 %v2332
    %v2661 = vunpack.c.l.b16 %v2333
    %v2662 = vunpack.c.h.b16 %v2333
    %v2663 = vunpack.c.l.b16 %v2334
    %v2664 = vunpack.c.h.b16 %v2334
    %v2665 = vunpack.c.l.b16 %v2335
    %v2666 = vunpack.c.h.b16 %v2335
    %v2667 = vunpack.c.l.b16 %v2336
    %v2668 = vunpack.c.h.b16 %v2336
    %v2669 = vunpack.c.l.b16 %v2337
    %v2670 = vunpack.c.h.b16 %v2337
    %v2671 = vunpack.c.l.b16 %v2338
    %v2672 = vunpack.c.h.b16 %v2338
    %v2673 = vunpack.c.l.b16 %v2339
    %v2674 = vunpack.c.h.b16 %v2339
    %v2675 = vunpack.c.l.b16 %v2340
    %v2676 = vunpack.c.h.b16 %v2340
    %v2677 = vunpack.c.l.b16 %v2341
    %v2678 = vunpack.c.h.b16 %v2341
    %v2679 = vunpack.c.l.b16 %v2342
    %v2680 = vunpack.c.h.b16 %v2342
    %v2681 = vunpack.c.l.b16 %v2343
    %v2682 = vunpack.c.h.b16 %v2343
    %v2683 = vunpack.c.l.b16 %v2344
    %v2684 = vunpack.c.h.b16 %v2344
    %v2685 = vunpack.c.l.b16 %v2345
    %v2686 = vunpack.c.h.b16 %v2345
    %v2687 = vunpack.c.l.b16 %v2346
    %v2688 = vunpack.c.h.b16 %v2346
    %v2689 = vunpack.c.l.b16 %v2347
    %v2690 = vunpack.c.h.b16 %v2347
    %v2691 = vunpack.c.l.b16 %v2348
    %v2692 = vunpack.c.h.b16 %v2348
    %v2693 = vunpack.c.l.b16 %v2349
    %v2694 = vunpack.c.h.b16 %v2349
    %v2695 = vunpack.c.l.b16 %v2350
    %v2696 = vunpack.c.h.b16 %v2350
    %v2697 = vunpack.c.l.b16 %v2351
    %v2698 = vunpack.c.h.b16 %v2351
    %v2699 = vunpack.c.l.b16 %v2352
    %v2700 = vunpack.c.h.b16 %v2352
    %v2701 = vunpack.c.l.b16 %v2353
    %v2702 = vunpack.c.h.b16 %v2353
    %v2703 = vunpack.c.l.b16 %v2354
    %v2704 = vunpack.c.h.b16 %v2354
    %v2705 = vunpack.c.l.b16 %v2355
    %v2706 = vunpack.c.h.b16 %v2355
    %v2707 = vunpack.c.l.b16 %v2356
    %v2708 = vunpack.c.h.b16 %v2356
    %v2709 = vunpack.c.l.b16 %v2357
    %v2710 = vunpack.c.h.b16 %v2357
    %v2711 = vunpack.c.l.b16 %v2358
    %v2712 = vunpack.c.h.b16 %v2358
    %v2713 = vunpack.c.l.b16 %v2359
    %v2714 = vunpack.c.h.b16 %v2359
    %v2715 = vunpack.c.l.b16 %v2360
    %v2716 = vunpack.c.h.b16 %v2360
    %v2717 = vunpack.c.l.b16 %v2361
    %v2718 = vunpack.c.h.b16 %v2361
    %v2719 = vunpack.c.l.b16 %v2362
    %v2720 = vunpack.c.h.b16 %v2362
    %v2721 = vunpack.c.l.b16 %v2363
    %v2722 = vunpack.c.h.b16 %v2363
    %v2723 = vunpack.c.l.b16 %v2364
    %v2724 = vunpack.c.h.b16 %v2364
    %v2725 = vunpack.c.l.b16 %v2365
    %v2726 = vunpack.c.h.b16 %v2365
    %v2727 = vunpack.c.l.b16 %v2366
    %v2728 = vunpack.c.h.b16 %v2366
    %v2729 = vunpack.c.l.b16 %v2367
    %v2730 = vunpack.c.h.b16 %v2367
    %v2731 = vunpack.c.l.b16 %v2368
    %v2732 = vunpack.c.h.b16 %v2368
    %v2733 = vunpack.c.l.b16 %v2369
    %v2734 = vunpack.c.h.b16 %v2369
    %v2735 = vunpack.c.l.b16 %v2370
    %v2736 = vunpack.c.h.b16 %v2370
    %v2737 = vunpack.c.l.b16 %v2371
    %v2738 = vunpack.c.h.b16 %v2371
    %v2739 = vunpack.c.l.b16 %v2372
    %v2740 = vunpack.c.h.b16 %v2372
    %v2741 = vunpack.c.l.b16 %v2373
    %v2742 = vunpack.c.h.b16 %v2373
    %v2743 = vunpack.c.l.b16 %v2374
    %v2744 = vunpack.c.h.b16 %v2374
    %v2745 = vunpack.c.l.b16 %v2375
    %v2746 = vunpack.c.h.b16 %v2375
    %v2747 = vunpack.c.l.b16 %v2376
    %v2748 = vunpack.c.h.b16 %v2376
    %v2749 = vunpack.c.l.b16 %v2377
    %v2750 = vunpack.c.h.b16 %v2377
    %v2751 = vunpack.c.l.b16 %v2378
    %v2752 = vunpack.c.h.b16 %v2378
    %v2753 = vunpack.c.l.b16 %v2379
    %v2754 = vunpack.c.h.b16 %v2379
    %v2755 = vunpack.c.l.b16 %v2380
    %v2756 = vunpack.c.h.b16 %v2380
    %v2757 = vunpack.c.l.b16 %v2381
    %v2758 = vunpack.c.h.b16 %v2381
    %v2759 = vunpack.c.l.b16 %v2382
    %v2760 = vunpack.c.h.b16 %v2382
    %v2761 = vunpack.c.l.b16 %v2383
    %v2762 = vunpack.c.h.b16 %v2383
    %v2763 = vunpack.c.l.b16 %v2384
    %v2764 = vunpack.c.h.b16 %v2384
    %v2765 = vunpack.c.l.b16 %v2385
    %v2766 = vunpack.c.h.b16 %v2385
    %v2767 = vunpack.c.l.b16 %v2386
    %v2768 = vunpack.c.h.b16 %v2386
    %v2769 = vunpack.c.l.b16 %v2387
    %v2770 = vunpack.c.h.b16 %v2387
    %v2771 = vunpack.c.l.b16 %v2388
    %v2772 = vunpack.c.h.b16 %v2388
    %v2773 = vpack.c.b16 %v2525, %v2517
    %v2774 = vpack.c.b16 %v2526, %v2518
    %v2775 = vpack.c.b16 %v2527, %v2519
    %v2776 = vpack.c.b16 %v2528, %v2520
    %v2777 = vpack.c.b16 %v2529, %v2521
    %v2778 = vpack.c.b16 %v2530, %v2522
    %v2779 = vpack.c.b16 %v2531, %v2523
    %v2780 = vpack.c.b16 %v2532, %v2524
    %v2781 = vpack.c.b16 %v2541, %v2533
    %v2782 = vpack.c.b16 %v2542, %v2534
    %v2783 = vpack.c.b16 %v2543, %v2535
    %v2784 = vpack.c.b16 %v2544, %v2536
    %v2785 = vpack.c.b16 %v2545, %v2537
    %v2786 = vpack.c.b16 %v2546, %v2538
    %v2787 = vpack.c.b16 %v2547, %v2539
    %v2788 = vpack.c.b16 %v2548, %v2540
    %v2789 = vpack.c.b16 %v2557, %v2549
    %v2790 = vpack.c.b16 %v2558, %v2550
    %v2791 = vpack.c.b16 %v2559, %v2551
    %v2792 = vpack.c.b16 %v2560, %v2552
    %v2793 = vpack.c.b16 %v2561, %v2553
    %v2794 = vpack.c.b16 %v2562, %v2554
    %v2795 = vpack.c.b16 %v2563, %v2555
    %v2796 = vpack.c.b16 %v2564, %v2556
    %v2797 = vpack.c.b16 %v2573, %v2565
    %v2798 = vpack.c.b16 %v2574, %v2566
    %v2799 = vpack.c.b16 %v2575, %v2567
    %v2800 = vpack.c.b16 %v2576, %v2568
    %v2801 = vpack.c.b16 %v2577, %v2569
    %v2802 = vpack.c.b16 %v2578, %v2570
    %v2803 = vpack.c.b16 %v2579, %v2571
    %v2804 = vpack.c.b16 %v2580, %v2572
    %v2805 = vpack.c.b16 %v2589, %v2581
    %v2806 = vpack.c.b16 %v2590, %v2582
    %v2807 = vpack.c.b16 %v2591, %v2583
    %v2808 = vpack.c.b16 %v2592, %v2584
    %v2809 = vpack.c.b16 %v2593, %v2585
    %v2810 = vpack.c.b16 %v2594, %v2586
    %v2811 = vpack.c.b16 %v2595, %v2587
    %v2812 = vpack.c.b16 %v2596, %v2588
    %v2813 = vpack.c.b16 %v2605, %v2597
    %v2814 = vpack.c.b16 %v2606, %v2598
    %v2815 = vpack.c.b16 %v2607, %v2599
    %v2816 = vpack.c.b16 %v2608, %v2600
    %v2817 = vpack.c.b16 %v2609, %v2601
    %v2818 = vpack.c.b16 %v2610, %v2602
    %v2819 = vpack.c.b16 %v2611, %v2603
    %v2820 = vpack.c.b16 %v2612, %v2604
    %v2821 = vpack.c.b16 %v2621, %v2613
    %v2822 = vpack.c.b16 %v2622, %v2614
    %v2823 = vpack.c.b16 %v2623, %v2615
    %v2824 = vpack.c.b16 %v2624, %v2616
    %v2825 = vpack.c.b16 %v2625, %v2617
    %v2826 = vpack.c.b16 %v2626, %v2618
    %v2827 = vpack.c.b16 %v2627, %v2619
    %v2828 = vpack.c.b16 %v2628, %v2620
    %v2829 = vpack.c.b16 %v2637, %v2629
    %v2830 = vpack.c.b16 %v2638, %v2630
    %v2831 = vpack.c.b16 %v2639, %v2631
    %v2832 = vpack.c.b16 %v2640, %v2632
    %v2833 = vpack.c.b16 %v2641, %v2633
    %v2834 = vpack.c.b16 %v2642, %v2634
    %v2835 = vpack.c.b16 %v2643, %v2635
    %v2836 = vpack.c.b16 %v2644, %v2636
    %v2837 = vpack.c.b16 %v2653, %v2645
    %v2838 = vpack.c.b16 %v2654, %v2646
    %v2839 = vpack.c.b16 %v2655, %v2647
    %v2840 = vpack.c.b16 %v2656, %v2648
    %v2841 = vpack.c.b16 %v2657, %v2649
    %v2842 = vpack.c.b16 %v2658, %v2650
    %v2843 = vpack.c.b16 %v2659, %v2651
    %v2844 = vpack.c.b16 %v2660, %v2652
    %v2845 = vpack.c.b16 %v2669, %v2661
    %v2846 = vpack.c.b16 %v2670, %v2662
    %v2847 = vpack.c.b16 %v2671, %v2663
    %v2848 = vpack.c.b16 %v2672, %v2664
    %v2849 = vpack.c.b16 %v2673, %v2665
    %v2850 = vpack.c.b16 %v2674, %v2666
    %v2851 = vpack.c.b16 %v2675, %v2667
    %v2852 = vpack.c.b16 %v2676, %v2668
    %v2853 = vpack.c.b16 %v2685, %v2677
    %v2854 = vpack.c.b16 %v2686, %v2678
    %v2855 = vpack.c.b16 %v2687, %v2679
    %v2856 = vpack.c.b16 %v2688, %v2680
    %v2857 = vpack.c.b16 %v2689, %v2681
    %v2858 = vpack.c.b16 %v2690, %v2682
    %v2859 = vpack.c.b16 %v2691, %v2683
    %v2860 = vpack.c.b16 %v2692, %v2684
    %v2861 = vpack.c.b16 %v2701, %v2693
    %v2862 = vpack.c.b16 %v2702, %v2694
    %v2863 = vpack.c.b16 %v2703, %v2695
    %v2864 = vpack.c.b16 %v2704, %v2696
    %v2865 = vpack.c.b16 %v2705, %v2697
    %v2866 = vpack.c.b16 %v2706, %v2698
    %v2867 = vpack.c.b16 %v2707, %v2699
    %v2868 = vpack.c.b16 %v2708, %v2700
    %v2869 = vpack.c.b16 %v2717, %v2709
    %v2870 = vpack.c.b16 %v2718, %v2710
    %v2871 = vpack.c.b16 %v2719, %v2711
    %v2872 = vpack.c.b16 %v2720, %v2712
    %v2873 = vpack.c.b16 %v2721, %v2713
    %v2874 = vpack.c.b16 %v2722, %v2714
    %v2875 = vpack.c.b16 %v2723, %v2715
    %v2876 = vpack.c.b16 %v2724, %v2716
    %v2877 = vpack.c.b16 %v2733, %v2725
    %v2878 = vpack.c.b16 %v2734, %v2726
    %v2879 = vpack.c.b16 %v2735, %v2727
    %v2880 = vpack.c.b16 %v2736, %v2728
    %v2881 = vpack.c.b16 %v2737, %v2729
    %v2882 = vpack.c.b16 %v2738, %v2730
    %v2883 = vpack.c.b16 %v2739, %v2731
    %v2884 = vpack.c.b16 %v2740, %v2732
    %v2885 = vpack.c.b16 %v2749, %v2741
    %v2886 = vpack.c.b16 %v2750, %v2742
    %v2887 = vpack.c.b16 %v2751, %v2743
    %v2888 = vpack.c.b16 %v2752, %v2744
    %v2889 = vpack.c.b16 %v2753, %v2745
    %v2890 = vpack.c.b16 %v2754, %v2746
    %v2891 = vpack.c.b16 %v2755, %v2747
    %v2892 = vpack.c.b16 %v2756, %v2748
    %v2893 = vpack.c.b16 %v2765, %v2757
    %v2894 = vpack.c.b16 %v2766, %v2758
    %v2895 = vpack.c.b16 %v2767, %v2759
    %v2896 = vpack.c.b16 %v2768, %v2760
    %v2897 = vpack.c.b16 %v2769, %v2761
    %v2898 = vpack.c.b16 %v2770, %v2762
    %v2899 = vpack.c.b16 %v2771, %v2763
    %v2900 = vpack.c.b16 %v2772, %v2764
    %3029 = vmatprep.subr.bf16.mxu0 %v2774
    %3030 = vmatpush1.bf16.msra.mxu0 %v2773
    %3031 = vmatprep.subr.bf16.mxu0 %v2782
    %3032 = vmatpush1.bf16.msra.mxu0 %v2781
    %3033 = vmatprep.subr.bf16.mxu0 %v2790
    %3034 = vmatpush1.bf16.msra.mxu0 %v2789
    %3035 = vmatprep.subr.bf16.mxu0 %v2798
    %3036 = vmatpush1.bf16.msra.mxu0 %v2797
    %3037 = vmatprep.subr.bf16.mxu0 %v2806
    %3038 = vmatpush1.bf16.msra.mxu0 %v2805
    %3039 = vmatprep.subr.bf16.mxu0 %v2814
    %3040 = vmatpush1.bf16.msra.mxu0 %v2813
    %3041 = vmatprep.subr.bf16.mxu0 %v2822
    %3042 = vmatpush1.bf16.msra.mxu0 %v2821
    %3043 = vmatprep.subr.bf16.mxu0 %v2830
    %3044 = vmatpush1.bf16.msra.mxu0 %v2829
    %3045 = vmatprep.subr.bf16.mxu0 %v2838
    %3046 = vmatpush1.bf16.msra.mxu0 %v2837
    %3047 = vmatprep.subr.bf16.mxu0 %v2846
    %3048 = vmatpush1.bf16.msra.mxu0 %v2845
    %3049 = vmatprep.subr.bf16.mxu0 %v2854
    %3050 = vmatpush1.bf16.msra.mxu0 %v2853
    %3051 = vmatprep.subr.bf16.mxu0 %v2862
    %3052 = vmatpush1.bf16.msra.mxu0 %v2861
    %3053 = vmatprep.subr.bf16.mxu0 %v2870
    %3054 = vmatpush1.bf16.msra.mxu0 %v2869
    %3055 = vmatprep.subr.bf16.mxu0 %v2878
    %3056 = vmatpush1.bf16.msra.mxu0 %v2877
    %3057 = vmatprep.subr.bf16.mxu0 %v2886
    %3058 = vmatpush1.bf16.msra.mxu0 %v2885
    %3059 = vmatprep.subr.bf16.mxu0 %v2894
    %3060 = vmatpush1.bf16.msra.mxu0 %v2893
    %3061 = vmatprep.mubr.bf16.mxu0 %v2205
    %3062 = vmatmul.mubr.bf16.gmra.mrb[0].mxu0 %v2204
    %v3063 = vpop.f32.mrb[0].mxu0
    %v3064 = vadd.f32 0.0, %v3063
    %v3065 = vpop.f32.mrb[0].mxu0
    %v3066 = vadd.f32 0.0, %v3065
    %v3067 = vpop.f32.mrb[0].mxu0
    %v3068 = vadd.f32 0.0, %v3067
    %v3069 = vpop.f32.mrb[0].mxu0
    %v3070 = vadd.f32 0.0, %v3069
    %3071 = vmatprep.mubr.bf16.mxu0 %v2207
    %3072 = vmatmul.mubr.bf16.gmra.mrb[0].mxu0 %v2206
    %v3073 = vpop.f32.mrb[0].mxu0
    %v3074 = vadd.f32 0.0, %v3073
    %v3075 = vpop.f32.mrb[0].mxu0
    %v3076 = vadd.f32 0.0, %v3075
    %v3077 = vpop.f32.mrb[0].mxu0
    %v3078 = vadd.f32 0.0, %v3077
    %v3079 = vpop.f32.mrb[0].mxu0
    %v3080 = vadd.f32 0.0, %v3079
    %3081 = vdwg.mxu0
    %3082 = vmatprep.subr.bf16.mxu0 %v2776
    %3083 = vmatpush1.bf16.msra.mxu0 %v2775
    %3084 = vmatprep.subr.bf16.mxu0 %v2784
    %3085 = vmatpush1.bf16.msra.mxu0 %v2783
    %3086 = vmatprep.subr.bf16.mxu0 %v2792
    %3087 = vmatpush1.bf16.msra.mxu0 %v2791
    %3088 = vmatprep.subr.bf16.mxu0 %v2800
    %3089 = vmatpush1.bf16.msra.mxu0 %v2799
    %3090 = vmatprep.subr.bf16.mxu0 %v2808
    %3091 = vmatpush1.bf16.msra.mxu0 %v2807
    %3092 = vmatprep.subr.bf16.mxu0 %v2816
    %3093 = vmatpush1.bf16.msra.mxu0 %v2815
    %3094 = vmatprep.subr.bf16.mxu0 %v2824
    %3095 = vmatpush1.bf16.msra.mxu0 %v2823
    %3096 = vmatprep.subr.bf16.mxu0 %v2832
    %3097 = vmatpush1.bf16.msra.mxu0 %v2831
    %3098 = vmatprep.subr.bf16.mxu0 %v2840
    %3099 = vmatpush1.bf16.msra.mxu0 %v2839
    %3100 = vmatprep.subr.bf16.mxu0 %v2848
    %3101 = vmatpush1.bf16.msra.mxu0 %v2847
    %3102 = vmatprep.subr.bf16.mxu0 %v2856
    %3103 = vmatpush1.bf16.msra.mxu0 %v2855
    %3104 = vmatprep.subr.bf16.mxu0 %v2864
    %3105 = vmatpush1.bf16.msra.mxu0 %v2863
    %3106 = vmatprep.subr.bf16.mxu0 %v2872
    %3107 = vmatpush1.bf16.msra.mxu0 %v2871
    %3108 = vmatprep.subr.bf16.mxu0 %v2880
    %3109 = vmatpush1.bf16.msra.mxu0 %v2879
    %3110 = vmatprep.subr.bf16.mxu0 %v2888
    %3111 = vmatpush1.bf16.msra.mxu0 %v2887
    %3112 = vmatprep.subr.bf16.mxu0 %v2896
    %3113 = vmatpush1.bf16.msra.mxu0 %v2895
    %3114 = vmatprep.mubr.bf16.mxu0 %v2205
    %3115 = vmatmul.mubr.bf16.gmra.mrb[0].mxu0 %v2204
    %v3116 = vpop.f32.mrb[0].mxu0
    %v3117 = vadd.f32 0.0, %v3116
    %v3118 = vpop.f32.mrb[0].mxu0
    %v3119 = vadd.f32 0.0, %v3118
    %v3120 = vpop.f32.mrb[0].mxu0
    %v3121 = vadd.f32 0.0, %v3120
    %v3122 = vpop.f32.mrb[0].mxu0
    %v3123 = vadd.f32 0.0, %v3122
    %3124 = vmatprep.mubr.bf16.mxu0 %v2207
    %3125 = vmatmul.mubr.bf16.gmra.mrb[0].mxu0 %v2206
    %v3126 = vpop.f32.mrb[0].mxu0
    %v3127 = vadd.f32 0.0, %v3126
    %v3128 = vpop.f32.mrb[0].mxu0
    %v3129 = vadd.f32 0.0, %v3128
    %v3130 = vpop.f32.mrb[0].mxu0
    %v3131 = vadd.f32 0.0, %v3130
    %v3132 = vpop.f32.mrb[0].mxu0
    %v3133 = vadd.f32 0.0, %v3132
    %3134 = vdwg.mxu0
    %3135 = vmatprep.subr.bf16.mxu0 %v2778
    %3136 = vmatpush1.bf16.msra.mxu0 %v2777
    %3137 = vmatprep.subr.bf16.mxu0 %v2786
    %3138 = vmatpush1.bf16.msra.mxu0 %v2785
    %3139 = vmatprep.subr.bf16.mxu0 %v2794
    %3140 = vmatpush1.bf16.msra.mxu0 %v2793
    %3141 = vmatprep.subr.bf16.mxu0 %v2802
    %3142 = vmatpush1.bf16.msra.mxu0 %v2801
    %3143 = vmatprep.subr.bf16.mxu0 %v2810
    %3144 = vmatpush1.bf16.msra.mxu0 %v2809
    %3145 = vmatprep.subr.bf16.mxu0 %v2818
    %3146 = vmatpush1.bf16.msra.mxu0 %v2817
    %3147 = vmatprep.subr.bf16.mxu0 %v2826
    %3148 = vmatpush1.bf16.msra.mxu0 %v2825
    %3149 = vmatprep.subr.bf16.mxu0 %v2834
    %3150 = vmatpush1.bf16.msra.mxu0 %v2833
    %3151 = vmatprep.subr.bf16.mxu0 %v2842
    %3152 = vmatpush1.bf16.msra.mxu0 %v2841
    %3153 = vmatprep.subr.bf16.mxu0 %v2850
    %3154 = vmatpush1.bf16.msra.mxu0 %v2849
    %3155 = vmatprep.subr.bf16.mxu0 %v2858
    %3156 = vmatpush1.bf16.msra.mxu0 %v2857
    %3157 = vmatprep.subr.bf16.mxu0 %v2866
    %3158 = vmatpush1.bf16.msra.mxu0 %v2865
    %3159 = vmatprep.subr.bf16.mxu0 %v2874
    %3160 = vmatpush1.bf16.msra.mxu0 %v2873
    %3161 = vmatprep.subr.bf16.mxu0 %v2882
    %3162 = vmatpush1.bf16.msra.mxu0 %v2881
    %3163 = vmatprep.subr.bf16.mxu0 %v2890
    %3164 = vmatpush1.bf16.msra.mxu0 %v2889
    %3165 = vmatprep.subr.bf16.mxu0 %v2898
    %3166 = vmatpush1.bf16.msra.mxu0 %v2897
    %3167 = vmatprep.mubr.bf16.mxu0 %v2205
    %3168 = vmatmul.mubr.bf16.gmra.mrb[0].mxu0 %v2204
    %v3169 = vpop.f32.mrb[0].mxu0
    %v3170 = vadd.f32 0.0, %v3169
    %v3171 = vpop.f32.mrb[0].mxu0
    %v3172 = vadd.f32 0.0, %v3171
    %v3173 = vpop.f32.mrb[0].mxu0
    %v3174 = vadd.f32 0.0, %v3173
    %v3175 = vpop.f32.mrb[0].mxu0
    %v3176 = vadd.f32 0.0, %v3175
    %3177 = vmatprep.mubr.bf16.mxu0 %v2207
    %3178 = vmatmul.mubr.bf16.gmra.mrb[0].mxu0 %v2206
    %v3179 = vpop.f32.mrb[0].mxu0
    %v3180 = vadd.f32 0.0, %v3179
    %v3181 = vpop.f32.mrb[0].mxu0
    %v3182 = vadd.f32 0.0, %v3181
    %v3183 = vpop.f32.mrb[0].mxu0
    %v3184 = vadd.f32 0.0, %v3183
    %v3185 = vpop.f32.mrb[0].mxu0
    %v3186 = vadd.f32 0.0, %v3185
    %3187 = vdwg.mxu0
    %3188 = vmatprep.subr.bf16.mxu0 %v2780
    %3189 = vmatpush1.bf16.msra.mxu0 %v2779
    %3190 = vmatprep.subr.bf16.mxu0 %v2788
    %3191 = vmatpush1.bf16.msra.mxu0 %v2787
    %3192 = vmatprep.subr.bf16.mxu0 %v2796
    %3193 = vmatpush1.bf16.msra.mxu0 %v2795
    %3194 = vmatprep.subr.bf16.mxu0 %v2804
    %3195 = vmatpush1.bf16.msra.mxu0 %v2803
    %3196 = vmatprep.subr.bf16.mxu0 %v2812
    %3197 = vmatpush1.bf16.msra.mxu0 %v2811
    %3198 = vmatprep.subr.bf16.mxu0 %v2820
    %3199 = vmatpush1.bf16.msra.mxu0 %v2819
    %3200 = vmatprep.subr.bf16.mxu0 %v2828
    %3201 = vmatpush1.bf16.msra.mxu0 %v2827
    %3202 = vmatprep.subr.bf16.mxu0 %v2836
    %3203 = vmatpush1.bf16.msra.mxu0 %v2835
    %3204 = vmatprep.subr.bf16.mxu0 %v2844
    %3205 = vmatpush1.bf16.msra.mxu0 %v2843
    %3206 = vmatprep.subr.bf16.mxu0 %v2852
    %3207 = vmatpush1.bf16.msra.mxu0 %v2851
    %3208 = vmatprep.subr.bf16.mxu0 %v2860
    %3209 = vmatpush1.bf16.msra.mxu0 %v2859
    %3210 = vmatprep.subr.bf16.mxu0 %v2868
    %3211 = vmatpush1.bf16.msra.mxu0 %v2867
    %3212 = vmatprep.subr.bf16.mxu0 %v2876
    %3213 = vmatpush1.bf16.msra.mxu0 %v2875
    %3214 = vmatprep.subr.bf16.mxu0 %v2884
    %3215 = vmatpush1.bf16.msra.mxu0 %v2883
    %3216 = vmatprep.subr.bf16.mxu0 %v2892
    %3217 = vmatpush1.bf16.msra.mxu0 %v2891
    %3218 = vmatprep.subr.bf16.mxu0 %v2900
    %3219 = vmatpush1.bf16.msra.mxu0 %v2899
    %3220 = vmatprep.mubr.bf16.mxu0 %v2205
    %3221 = vmatmul.mubr.bf16.gmra.mrb[0].mxu0 %v2204
    %v3222 = vpop.f32.mrb[0].mxu0
    %v3223 = vadd.f32 0.0, %v3222
    %v3224 = vpop.f32.mrb[0].mxu0
    %v3225 = vadd.f32 0.0, %v3224
    %v3226 = vpop.f32.mrb[0].mxu0
    %v3227 = vadd.f32 0.0, %v3226
    %v3228 = vpop.f32.mrb[0].mxu0
    %v3229 = vadd.f32 0.0, %v3228
    %3230 = vmatprep.mubr.bf16.mxu0 %v2207
    %3231 = vmatmul.mubr.bf16.gmra.mrb[0].mxu0 %v2206
    %v3232 = vpop.f32.mrb[0].mxu0
    %v3233 = vadd.f32 0.0, %v3232
    %v3234 = vpop.f32.mrb[0].mxu0
    %v3235 = vadd.f32 0.0, %v3234
    %v3236 = vpop.f32.mrb[0].mxu0
    %v3237 = vadd.f32 0.0, %v3236
    %v3238 = vpop.f32.mrb[0].mxu0
    %v3239 = vadd.f32 0.0, %v3238
    %3240 = vdwg.mxu0
    %v3241 = vld [vmem:[#allocation6 + $0x60] sm:$0xff]
    %v3242 = vld [vmem:[#allocation6 + $0x68] sm:$0xff]
    %v3243 = vld [vmem:[#allocation6 + $0x70] sm:$0xff]
    %v3244 = vld [vmem:[#allocation6 + $0x78] sm:$0xff]
    %v3245 = vld [vmem:[#allocation6 + $0xe0] sm:$0xff]
    %v3246 = vld [vmem:[#allocation6 + $0xe8] sm:$0xff]
    %v3247 = vld [vmem:[#allocation6 + $0xf0] sm:$0xff]
    %v3248 = vld [vmem:[#allocation6 + $0xf8] sm:$0xff]
    %v3249 = vld [vmem:[#allocation6 + $0x160] sm:$0xff]
    %v3250 = vld [vmem:[#allocation6 + $0x168] sm:$0xff]
    %v3251 = vld [vmem:[#allocation6 + $0x170] sm:$0xff]
    %v3252 = vld [vmem:[#allocation6 + $0x178] sm:$0xff]
    %v3253 = vld [vmem:[#allocation6 + $0x1e0] sm:$0xff]
    %v3254 = vld [vmem:[#allocation6 + $0x1e8] sm:$0xff]
    %v3255 = vld [vmem:[#allocation6 + $0x1f0] sm:$0xff]
    %v3256 = vld [vmem:[#allocation6 + $0x1f8] sm:$0xff]
    %v3257 = vld [vmem:[#allocation6 + $0x260] sm:$0xff]
    %v3258 = vld [vmem:[#allocation6 + $0x268] sm:$0xff]
    %v3259 = vld [vmem:[#allocation6 + $0x270] sm:$0xff]
    %v3260 = vld [vmem:[#allocation6 + $0x278] sm:$0xff]
    %v3261 = vld [vmem:[#allocation6 + $0x2e0] sm:$0xff]
    %v3262 = vld [vmem:[#allocation6 + $0x2e8] sm:$0xff]
    %v3263 = vld [vmem:[#allocation6 + $0x2f0] sm:$0xff]
    %v3264 = vld [vmem:[#allocation6 + $0x2f8] sm:$0xff]
    %v3265 = vld [vmem:[#allocation6 + $0x360] sm:$0xff]
    %v3266 = vld [vmem:[#allocation6 + $0x368] sm:$0xff]
    %v3267 = vld [vmem:[#allocation6 + $0x370] sm:$0xff]
    %v3268 = vld [vmem:[#allocation6 + $0x378] sm:$0xff]
    %v3269 = vld [vmem:[#allocation6 + $0x3e0] sm:$0xff]
    %v3270 = vld [vmem:[#allocation6 + $0x3e8] sm:$0xff]
    %v3271 = vld [vmem:[#allocation6 + $0x3f0] sm:$0xff]
    %v3272 = vld [vmem:[#allocation6 + $0x3f8] sm:$0xff]
    %v3273 = vld [vmem:[#allocation6 + $0x460] sm:$0xff]
    %v3274 = vld [vmem:[#allocation6 + $0x468] sm:$0xff]
    %v3275 = vld [vmem:[#allocation6 + $0x470] sm:$0xff]
    %v3276 = vld [vmem:[#allocation6 + $0x478] sm:$0xff]
    %v3277 = vld [vmem:[#allocation6 + $0x4e0] sm:$0xff]
    %v3278 = vld [vmem:[#allocation6 + $0x4e8] sm:$0xff]
    %v3279 = vld [vmem:[#allocation6 + $0x4f0] sm:$0xff]
    %v3280 = vld [vmem:[#allocation6 + $0x4f8] sm:$0xff]
    %v3281 = vld [vmem:[#allocation6 + $0x560] sm:$0xff]
    %v3282 = vld [vmem:[#allocation6 + $0x568] sm:$0xff]
    %v3283 = vld [vmem:[#allocation6 + $0x570] sm:$0xff]
    %v3284 = vld [vmem:[#allocation6 + $0x578] sm:$0xff]
    %v3285 = vld [vmem:[#allocation6 + $0x5e0] sm:$0xff]
    %v3286 = vld [vmem:[#allocation6 + $0x5e8] sm:$0xff]
    %v3287 = vld [vmem:[#allocation6 + $0x5f0] sm:$0xff]
    %v3288 = vld [vmem:[#allocation6 + $0x5f8] sm:$0xff]
    %v3289 = vld [vmem:[#allocation6 + $0x660] sm:$0xff]
    %v3290 = vld [vmem:[#allocation6 + $0x668] sm:$0xff]
    %v3291 = vld [vmem:[#allocation6 + $0x670] sm:$0xff]
    %v3292 = vld [vmem:[#allocation6 + $0x678] sm:$0xff]
    %v3293 = vld [vmem:[#allocation6 + $0x6e0] sm:$0xff]
    %v3294 = vld [vmem:[#allocation6 + $0x6e8] sm:$0xff]
    %v3295 = vld [vmem:[#allocation6 + $0x6f0] sm:$0xff]
    %v3296 = vld [vmem:[#allocation6 + $0x6f8] sm:$0xff]
    %v3297 = vld [vmem:[#allocation6 + $0x760] sm:$0xff]
    %v3298 = vld [vmem:[#allocation6 + $0x768] sm:$0xff]
    %v3299 = vld [vmem:[#allocation6 + $0x770] sm:$0xff]
    %v3300 = vld [vmem:[#allocation6 + $0x778] sm:$0xff]
    %v3301 = vld [vmem:[#allocation6 + $0x7e0] sm:$0xff]
    %v3302 = vld [vmem:[#allocation6 + $0x7e8] sm:$0xff]
    %v3303 = vld [vmem:[#allocation6 + $0x7f0] sm:$0xff]
    %v3304 = vld [vmem:[#allocation6 + $0x7f8] sm:$0xff]
    %v3305 = vld [vmem:[#allocation6 + $0x860] sm:$0xff]
    %v3306 = vld [vmem:[#allocation6 + $0x868] sm:$0xff]
    %v3307 = vld [vmem:[#allocation6 + $0x870] sm:$0xff]
    %v3308 = vld [vmem:[#allocation6 + $0x878] sm:$0xff]
    %v3309 = vld [vmem:[#allocation6 + $0x8e0] sm:$0xff]
    %v3310 = vld [vmem:[#allocation6 + $0x8e8] sm:$0xff]
    %v3311 = vld [vmem:[#allocation6 + $0x8f0] sm:$0xff]
    %v3312 = vld [vmem:[#allocation6 + $0x8f8] sm:$0xff]
    %v3313 = vld [vmem:[#allocation6 + $0x960] sm:$0xff]
    %v3314 = vld [vmem:[#allocation6 + $0x968] sm:$0xff]
    %v3315 = vld [vmem:[#allocation6 + $0x970] sm:$0xff]
    %v3316 = vld [vmem:[#allocation6 + $0x978] sm:$0xff]
    %v3317 = vld [vmem:[#allocation6 + $0x9e0] sm:$0xff]
    %v3318 = vld [vmem:[#allocation6 + $0x9e8] sm:$0xff]
    %v3319 = vld [vmem:[#allocation6 + $0x9f0] sm:$0xff]
    %v3320 = vld [vmem:[#allocation6 + $0x9f8] sm:$0xff]
    %v3321 = vld [vmem:[#allocation6 + $0xa60] sm:$0xff]
    %v3322 = vld [vmem:[#allocation6 + $0xa68] sm:$0xff]
    %v3323 = vld [vmem:[#allocation6 + $0xa70] sm:$0xff]
    %v3324 = vld [vmem:[#allocation6 + $0xa78] sm:$0xff]
    %v3325 = vld [vmem:[#allocation6 + $0xae0] sm:$0xff]
    %v3326 = vld [vmem:[#allocation6 + $0xae8] sm:$0xff]
    %v3327 = vld [vmem:[#allocation6 + $0xaf0] sm:$0xff]
    %v3328 = vld [vmem:[#allocation6 + $0xaf8] sm:$0xff]
    %v3329 = vld [vmem:[#allocation6 + $0xb60] sm:$0xff]
    %v3330 = vld [vmem:[#allocation6 + $0xb68] sm:$0xff]
    %v3331 = vld [vmem:[#allocation6 + $0xb70] sm:$0xff]
    %v3332 = vld [vmem:[#allocation6 + $0xb78] sm:$0xff]
    %v3333 = vld [vmem:[#allocation6 + $0xbe0] sm:$0xff]
    %v3334 = vld [vmem:[#allocation6 + $0xbe8] sm:$0xff]
    %v3335 = vld [vmem:[#allocation6 + $0xbf0] sm:$0xff]
    %v3336 = vld [vmem:[#allocation6 + $0xbf8] sm:$0xff]
    %v3337 = vld [vmem:[#allocation6 + $0xc60] sm:$0xff]
    %v3338 = vld [vmem:[#allocation6 + $0xc68] sm:$0xff]
    %v3339 = vld [vmem:[#allocation6 + $0xc70] sm:$0xff]
    %v3340 = vld [vmem:[#allocation6 + $0xc78] sm:$0xff]
    %v3341 = vld [vmem:[#allocation6 + $0xce0] sm:$0xff]
    %v3342 = vld [vmem:[#allocation6 + $0xce8] sm:$0xff]
    %v3343 = vld [vmem:[#allocation6 + $0xcf0] sm:$0xff]
    %v3344 = vld [vmem:[#allocation6 + $0xcf8] sm:$0xff]
    %v3345 = vld [vmem:[#allocation6 + $0xd60] sm:$0xff]
    %v3346 = vld [vmem:[#allocation6 + $0xd68] sm:$0xff]
    %v3347 = vld [vmem:[#allocation6 + $0xd70] sm:$0xff]
    %v3348 = vld [vmem:[#allocation6 + $0xd78] sm:$0xff]
    %v3349 = vld [vmem:[#allocation6 + $0xde0] sm:$0xff]
    %v3350 = vld [vmem:[#allocation6 + $0xde8] sm:$0xff]
    %v3351 = vld [vmem:[#allocation6 + $0xdf0] sm:$0xff]
    %v3352 = vld [vmem:[#allocation6 + $0xdf8] sm:$0xff]
    %v3353 = vld [vmem:[#allocation6 + $0xe60] sm:$0xff]
    %v3354 = vld [vmem:[#allocation6 + $0xe68] sm:$0xff]
    %v3355 = vld [vmem:[#allocation6 + $0xe70] sm:$0xff]
    %v3356 = vld [vmem:[#allocation6 + $0xe78] sm:$0xff]
    %v3357 = vld [vmem:[#allocation6 + $0xee0] sm:$0xff]
    %v3358 = vld [vmem:[#allocation6 + $0xee8] sm:$0xff]
    %v3359 = vld [vmem:[#allocation6 + $0xef0] sm:$0xff]
    %v3360 = vld [vmem:[#allocation6 + $0xef8] sm:$0xff]
    %v3361 = vld [vmem:[#allocation6 + $0xf60] sm:$0xff]
    %v3362 = vld [vmem:[#allocation6 + $0xf68] sm:$0xff]
    %v3363 = vld [vmem:[#allocation6 + $0xf70] sm:$0xff]
    %v3364 = vld [vmem:[#allocation6 + $0xf78] sm:$0xff]
    %v3365 = vld [vmem:[#allocation6 + $0xfe0] sm:$0xff]
    %v3366 = vld [vmem:[#allocation6 + $0xfe8] sm:$0xff]
    %v3367 = vld [vmem:[#allocation6 + $0xff0] sm:$0xff]
    %v3368 = vld [vmem:[#allocation6 + $0xff8] sm:$0xff]
    %v3497 = vunpack.c.l.b16 %v3241
    %v3498 = vunpack.c.h.b16 %v3241
    %v3499 = vunpack.c.l.b16 %v3242
    %v3500 = vunpack.c.h.b16 %v3242
    %v3501 = vunpack.c.l.b16 %v3243
    %v3502 = vunpack.c.h.b16 %v3243
    %v3503 = vunpack.c.l.b16 %v3244
    %v3504 = vunpack.c.h.b16 %v3244
    %v3505 = vunpack.c.l.b16 %v3245
    %v3506 = vunpack.c.h.b16 %v3245
    %v3507 = vunpack.c.l.b16 %v3246
    %v3508 = vunpack.c.h.b16 %v3246
    %v3509 = vunpack.c.l.b16 %v3247
    %v3510 = vunpack.c.h.b16 %v3247
    %v3511 = vunpack.c.l.b16 %v3248
    %v3512 = vunpack.c.h.b16 %v3248
    %v3513 = vunpack.c.l.b16 %v3249
    %v3514 = vunpack.c.h.b16 %v3249
    %v3515 = vunpack.c.l.b16 %v3250
    %v3516 = vunpack.c.h.b16 %v3250
    %v3517 = vunpack.c.l.b16 %v3251
    %v3518 = vunpack.c.h.b16 %v3251
    %v3519 = vunpack.c.l.b16 %v3252
    %v3520 = vunpack.c.h.b16 %v3252
    %v3521 = vunpack.c.l.b16 %v3253
    %v3522 = vunpack.c.h.b16 %v3253
    %v3523 = vunpack.c.l.b16 %v3254
    %v3524 = vunpack.c.h.b16 %v3254
    %v3525 = vunpack.c.l.b16 %v3255
    %v3526 = vunpack.c.h.b16 %v3255
    %v3527 = vunpack.c.l.b16 %v3256
    %v3528 = vunpack.c.h.b16 %v3256
    %v3529 = vunpack.c.l.b16 %v3257
    %v3530 = vunpack.c.h.b16 %v3257
    %v3531 = vunpack.c.l.b16 %v3258
    %v3532 = vunpack.c.h.b16 %v3258
    %v3533 = vunpack.c.l.b16 %v3259
    %v3534 = vunpack.c.h.b16 %v3259
    %v3535 = vunpack.c.l.b16 %v3260
    %v3536 = vunpack.c.h.b16 %v3260
    %v3537 = vunpack.c.l.b16 %v3261
    %v3538 = vunpack.c.h.b16 %v3261
    %v3539 = vunpack.c.l.b16 %v3262
    %v3540 = vunpack.c.h.b16 %v3262
    %v3541 = vunpack.c.l.b16 %v3263
    %v3542 = vunpack.c.h.b16 %v3263
    %v3543 = vunpack.c.l.b16 %v3264
    %v3544 = vunpack.c.h.b16 %v3264
    %v3545 = vunpack.c.l.b16 %v3265
    %v3546 = vunpack.c.h.b16 %v3265
    %v3547 = vunpack.c.l.b16 %v3266
    %v3548 = vunpack.c.h.b16 %v3266
    %v3549 = vunpack.c.l.b16 %v3267
    %v3550 = vunpack.c.h.b16 %v3267
    %v3551 = vunpack.c.l.b16 %v3268
    %v3552 = vunpack.c.h.b16 %v3268
    %v3553 = vunpack.c.l.b16 %v3269
    %v3554 = vunpack.c.h.b16 %v3269
    %v3555 = vunpack.c.l.b16 %v3270
    %v3556 = vunpack.c.h.b16 %v3270
    %v3557 = vunpack.c.l.b16 %v3271
    %v3558 = vunpack.c.h.b16 %v3271
    %v3559 = vunpack.c.l.b16 %v3272
    %v3560 = vunpack.c.h.b16 %v3272
    %v3561 = vunpack.c.l.b16 %v3273
    %v3562 = vunpack.c.h.b16 %v3273
    %v3563 = vunpack.c.l.b16 %v3274
    %v3564 = vunpack.c.h.b16 %v3274
    %v3565 = vunpack.c.l.b16 %v3275
    %v3566 = vunpack.c.h.b16 %v3275
    %v3567 = vunpack.c.l.b16 %v3276
    %v3568 = vunpack.c.h.b16 %v3276
    %v3569 = vunpack.c.l.b16 %v3277
    %v3570 = vunpack.c.h.b16 %v3277
    %v3571 = vunpack.c.l.b16 %v3278
    %v3572 = vunpack.c.h.b16 %v3278
    %v3573 = vunpack.c.l.b16 %v3279
    %v3574 = vunpack.c.h.b16 %v3279
    %v3575 = vunpack.c.l.b16 %v3280
    %v3576 = vunpack.c.h.b16 %v3280
    %v3577 = vunpack.c.l.b16 %v3281
    %v3578 = vunpack.c.h.b16 %v3281
    %v3579 = vunpack.c.l.b16 %v3282
    %v3580 = vunpack.c.h.b16 %v3282
    %v3581 = vunpack.c.l.b16 %v3283
    %v3582 = vunpack.c.h.b16 %v3283
    %v3583 = vunpack.c.l.b16 %v3284
    %v3584 = vunpack.c.h.b16 %v3284
    %v3585 = vunpack.c.l.b16 %v3285
    %v3586 = vunpack.c.h.b16 %v3285
    %v3587 = vunpack.c.l.b16 %v3286
    %v3588 = vunpack.c.h.b16 %v3286
    %v3589 = vunpack.c.l.b16 %v3287
    %v3590 = vunpack.c.h.b16 %v3287
    %v3591 = vunpack.c.l.b16 %v3288
    %v3592 = vunpack.c.h.b16 %v3288
    %v3593 = vunpack.c.l.b16 %v3289
    %v3594 = vunpack.c.h.b16 %v3289
    %v3595 = vunpack.c.l.b16 %v3290
    %v3596 = vunpack.c.h.b16 %v3290
    %v3597 = vunpack.c.l.b16 %v3291
    %v3598 = vunpack.c.h.b16 %v3291
    %v3599 = vunpack.c.l.b16 %v3292
    %v3600 = vunpack.c.h.b16 %v3292
    %v3601 = vunpack.c.l.b16 %v3293
    %v3602 = vunpack.c.h.b16 %v3293
    %v3603 = vunpack.c.l.b16 %v3294
    %v3604 = vunpack.c.h.b16 %v3294
    %v3605 = vunpack.c.l.b16 %v3295
    %v3606 = vunpack.c.h.b16 %v3295
    %v3607 = vunpack.c.l.b16 %v3296
    %v3608 = vunpack.c.h.b16 %v3296
    %v3609 = vunpack.c.l.b16 %v3297
    %v3610 = vunpack.c.h.b16 %v3297
    %v3611 = vunpack.c.l.b16 %v3298
    %v3612 = vunpack.c.h.b16 %v3298
    %v3613 = vunpack.c.l.b16 %v3299
    %v3614 = vunpack.c.h.b16 %v3299
    %v3615 = vunpack.c.l.b16 %v3300
    %v3616 = vunpack.c.h.b16 %v3300
    %v3617 = vunpack.c.l.b16 %v3301
    %v3618 = vunpack.c.h.b16 %v3301
    %v3619 = vunpack.c.l.b16 %v3302
    %v3620 = vunpack.c.h.b16 %v3302
    %v3621 = vunpack.c.l.b16 %v3303
    %v3622 = vunpack.c.h.b16 %v3303
    %v3623 = vunpack.c.l.b16 %v3304
    %v3624 = vunpack.c.h.b16 %v3304
    %v3625 = vunpack.c.l.b16 %v3305
    %v3626 = vunpack.c.h.b16 %v3305
    %v3627 = vunpack.c.l.b16 %v3306
    %v3628 = vunpack.c.h.b16 %v3306
    %v3629 = vunpack.c.l.b16 %v3307
    %v3630 = vunpack.c.h.b16 %v3307
    %v3631 = vunpack.c.l.b16 %v3308
    %v3632 = vunpack.c.h.b16 %v3308
    %v3633 = vunpack.c.l.b16 %v3309
    %v3634 = vunpack.c.h.b16 %v3309
    %v3635 = vunpack.c.l.b16 %v3310
    %v3636 = vunpack.c.h.b16 %v3310
    %v3637 = vunpack.c.l.b16 %v3311
    %v3638 = vunpack.c.h.b16 %v3311
    %v3639 = vunpack.c.l.b16 %v3312
    %v3640 = vunpack.c.h.b16 %v3312
    %v3641 = vunpack.c.l.b16 %v3313
    %v3642 = vunpack.c.h.b16 %v3313
    %v3643 = vunpack.c.l.b16 %v3314
    %v3644 = vunpack.c.h.b16 %v3314
    %v3645 = vunpack.c.l.b16 %v3315
    %v3646 = vunpack.c.h.b16 %v3315
    %v3647 = vunpack.c.l.b16 %v3316
    %v3648 = vunpack.c.h.b16 %v3316
    %v3649 = vunpack.c.l.b16 %v3317
    %v3650 = vunpack.c.h.b16 %v3317
    %v3651 = vunpack.c.l.b16 %v3318
    %v3652 = vunpack.c.h.b16 %v3318
    %v3653 = vunpack.c.l.b16 %v3319
    %v3654 = vunpack.c.h.b16 %v3319
    %v3655 = vunpack.c.l.b16 %v3320
    %v3656 = vunpack.c.h.b16 %v3320
    %v3657 = vunpack.c.l.b16 %v3321
    %v3658 = vunpack.c.h.b16 %v3321
    %v3659 = vunpack.c.l.b16 %v3322
    %v3660 = vunpack.c.h.b16 %v3322
    %v3661 = vunpack.c.l.b16 %v3323
    %v3662 = vunpack.c.h.b16 %v3323
    %v3663 = vunpack.c.l.b16 %v3324
    %v3664 = vunpack.c.h.b16 %v3324
    %v3665 = vunpack.c.l.b16 %v3325
    %v3666 = vunpack.c.h.b16 %v3325
    %v3667 = vunpack.c.l.b16 %v3326
    %v3668 = vunpack.c.h.b16 %v3326
    %v3669 = vunpack.c.l.b16 %v3327
    %v3670 = vunpack.c.h.b16 %v3327
    %v3671 = vunpack.c.l.b16 %v3328
    %v3672 = vunpack.c.h.b16 %v3328
    %v3673 = vunpack.c.l.b16 %v3329
    %v3674 = vunpack.c.h.b16 %v3329
    %v3675 = vunpack.c.l.b16 %v3330
    %v3676 = vunpack.c.h.b16 %v3330
    %v3677 = vunpack.c.l.b16 %v3331
    %v3678 = vunpack.c.h.b16 %v3331
    %v3679 = vunpack.c.l.b16 %v3332
    %v3680 = vunpack.c.h.b16 %v3332
    %v3681 = vunpack.c.l.b16 %v3333
    %v3682 = vunpack.c.h.b16 %v3333
    %v3683 = vunpack.c.l.b16 %v3334
    %v3684 = vunpack.c.h.b16 %v3334
    %v3685 = vunpack.c.l.b16 %v3335
    %v3686 = vunpack.c.h.b16 %v3335
    %v3687 = vunpack.c.l.b16 %v3336
    %v3688 = vunpack.c.h.b16 %v3336
    %v3689 = vunpack.c.l.b16 %v3337
    %v3690 = vunpack.c.h.b16 %v3337
    %v3691 = vunpack.c.l.b16 %v3338
    %v3692 = vunpack.c.h.b16 %v3338
    %v3693 = vunpack.c.l.b16 %v3339
    %v3694 = vunpack.c.h.b16 %v3339
    %v3695 = vunpack.c.l.b16 %v3340
    %v3696 = vunpack.c.h.b16 %v3340
    %v3697 = vunpack.c.l.b16 %v3341
    %v3698 = vunpack.c.h.b16 %v3341
    %v3699 = vunpack.c.l.b16 %v3342
    %v3700 = vunpack.c.h.b16 %v3342
    %v3701 = vunpack.c.l.b16 %v3343
    %v3702 = vunpack.c.h.b16 %v3343
    %v3703 = vunpack.c.l.b16 %v3344
    %v3704 = vunpack.c.h.b16 %v3344
    %v3705 = vunpack.c.l.b16 %v3345
    %v3706 = vunpack.c.h.b16 %v3345
    %v3707 = vunpack.c.l.b16 %v3346
    %v3708 = vunpack.c.h.b16 %v3346
    %v3709 = vunpack.c.l.b16 %v3347
    %v3710 = vunpack.c.h.b16 %v3347
    %v3711 = vunpack.c.l.b16 %v3348
    %v3712 = vunpack.c.h.b16 %v3348
    %v3713 = vunpack.c.l.b16 %v3349
    %v3714 = vunpack.c.h.b16 %v3349
    %v3715 = vunpack.c.l.b16 %v3350
    %v3716 = vunpack.c.h.b16 %v3350
    %v3717 = vunpack.c.l.b16 %v3351
    %v3718 = vunpack.c.h.b16 %v3351
    %v3719 = vunpack.c.l.b16 %v3352
    %v3720 = vunpack.c.h.b16 %v3352
    %v3721 = vunpack.c.l.b16 %v3353
    %v3722 = vunpack.c.h.b16 %v3353
    %v3723 = vunpack.c.l.b16 %v3354
    %v3724 = vunpack.c.h.b16 %v3354
    %v3725 = vunpack.c.l.b16 %v3355
    %v3726 = vunpack.c.h.b16 %v3355
    %v3727 = vunpack.c.l.b16 %v3356
    %v3728 = vunpack.c.h.b16 %v3356
    %v3729 = vunpack.c.l.b16 %v3357
    %v3730 = vunpack.c.h.b16 %v3357
    %v3731 = vunpack.c.l.b16 %v3358
    %v3732 = vunpack.c.h.b16 %v3358
    %v3733 = vunpack.c.l.b16 %v3359
    %v3734 = vunpack.c.h.b16 %v3359
    %v3735 = vunpack.c.l.b16 %v3360
    %v3736 = vunpack.c.h.b16 %v3360
    %v3737 = vunpack.c.l.b16 %v3361
    %v3738 = vunpack.c.h.b16 %v3361
    %v3739 = vunpack.c.l.b16 %v3362
    %v3740 = vunpack.c.h.b16 %v3362
    %v3741 = vunpack.c.l.b16 %v3363
    %v3742 = vunpack.c.h.b16 %v3363
    %v3743 = vunpack.c.l.b16 %v3364
    %v3744 = vunpack.c.h.b16 %v3364
    %v3745 = vunpack.c.l.b16 %v3365
    %v3746 = vunpack.c.h.b16 %v3365
    %v3747 = vunpack.c.l.b16 %v3366
    %v3748 = vunpack.c.h.b16 %v3366
    %v3749 = vunpack.c.l.b16 %v3367
    %v3750 = vunpack.c.h.b16 %v3367
    %v3751 = vunpack.c.l.b16 %v3368
    %v3752 = vunpack.c.h.b16 %v3368
    %v3753 = vpack.c.b16 %v3505, %v3497
    %v3754 = vpack.c.b16 %v3506, %v3498
    %v3755 = vpack.c.b16 %v3507, %v3499
    %v3756 = vpack.c.b16 %v3508, %v3500
    %v3757 = vpack.c.b16 %v3509, %v3501
    %v3758 = vpack.c.b16 %v3510, %v3502
    %v3759 = vpack.c.b16 %v3511, %v3503
    %v3760 = vpack.c.b16 %v3512, %v3504
    %v3761 = vpack.c.b16 %v3521, %v3513
    %v3762 = vpack.c.b16 %v3522, %v3514
    %v3763 = vpack.c.b16 %v3523, %v3515
    %v3764 = vpack.c.b16 %v3524, %v3516
    %v3765 = vpack.c.b16 %v3525, %v3517
    %v3766 = vpack.c.b16 %v3526, %v3518
    %v3767 = vpack.c.b16 %v3527, %v3519
    %v3768 = vpack.c.b16 %v3528, %v3520
    %v3769 = vpack.c.b16 %v3537, %v3529
    %v3770 = vpack.c.b16 %v3538, %v3530
    %v3771 = vpack.c.b16 %v3539, %v3531
    %v3772 = vpack.c.b16 %v3540, %v3532
    %v3773 = vpack.c.b16 %v3541, %v3533
    %v3774 = vpack.c.b16 %v3542, %v3534
    %v3775 = vpack.c.b16 %v3543, %v3535
    %v3776 = vpack.c.b16 %v3544, %v3536
    %v3777 = vpack.c.b16 %v3553, %v3545
    %v3778 = vpack.c.b16 %v3554, %v3546
    %v3779 = vpack.c.b16 %v3555, %v3547
    %v3780 = vpack.c.b16 %v3556, %v3548
    %v3781 = vpack.c.b16 %v3557, %v3549
    %v3782 = vpack.c.b16 %v3558, %v3550
    %v3783 = vpack.c.b16 %v3559, %v3551
    %v3784 = vpack.c.b16 %v3560, %v3552
    %v3785 = vpack.c.b16 %v3569, %v3561
    %v3786 = vpack.c.b16 %v3570, %v3562
    %v3787 = vpack.c.b16 %v3571, %v3563
    %v3788 = vpack.c.b16 %v3572, %v3564
    %v3789 = vpack.c.b16 %v3573, %v3565
    %v3790 = vpack.c.b16 %v3574, %v3566
    %v3791 = vpack.c.b16 %v3575, %v3567
    %v3792 = vpack.c.b16 %v3576, %v3568
    %v3793 = vpack.c.b16 %v3585, %v3577
    %v3794 = vpack.c.b16 %v3586, %v3578
    %v3795 = vpack.c.b16 %v3587, %v3579
    %v3796 = vpack.c.b16 %v3588, %v3580
    %v3797 = vpack.c.b16 %v3589, %v3581
    %v3798 = vpack.c.b16 %v3590, %v3582
    %v3799 = vpack.c.b16 %v3591, %v3583
    %v3800 = vpack.c.b16 %v3592, %v3584
    %v3801 = vpack.c.b16 %v3601, %v3593
    %v3802 = vpack.c.b16 %v3602, %v3594
    %v3803 = vpack.c.b16 %v3603, %v3595
    %v3804 = vpack.c.b16 %v3604, %v3596
    %v3805 = vpack.c.b16 %v3605, %v3597
    %v3806 = vpack.c.b16 %v3606, %v3598
    %v3807 = vpack.c.b16 %v3607, %v3599
    %v3808 = vpack.c.b16 %v3608, %v3600
    %v3809 = vpack.c.b16 %v3617, %v3609
    %v3810 = vpack.c.b16 %v3618, %v3610
    %v3811 = vpack.c.b16 %v3619, %v3611
    %v3812 = vpack.c.b16 %v3620, %v3612
    %v3813 = vpack.c.b16 %v3621, %v3613
    %v3814 = vpack.c.b16 %v3622, %v3614
    %v3815 = vpack.c.b16 %v3623, %v3615
    %v3816 = vpack.c.b16 %v3624, %v3616
    %v3817 = vpack.c.b16 %v3633, %v3625
    %v3818 = vpack.c.b16 %v3634, %v3626
    %v3819 = vpack.c.b16 %v3635, %v3627
    %v3820 = vpack.c.b16 %v3636, %v3628
    %v3821 = vpack.c.b16 %v3637, %v3629
    %v3822 = vpack.c.b16 %v3638, %v3630
    %v3823 = vpack.c.b16 %v3639, %v3631
    %v3824 = vpack.c.b16 %v3640, %v3632
    %v3825 = vpack.c.b16 %v3649, %v3641
    %v3826 = vpack.c.b16 %v3650, %v3642
    %v3827 = vpack.c.b16 %v3651, %v3643
    %v3828 = vpack.c.b16 %v3652, %v3644
    %v3829 = vpack.c.b16 %v3653, %v3645
    %v3830 = vpack.c.b16 %v3654, %v3646
    %v3831 = vpack.c.b16 %v3655, %v3647
    %v3832 = vpack.c.b16 %v3656, %v3648
    %v3833 = vpack.c.b16 %v3665, %v3657
    %v3834 = vpack.c.b16 %v3666, %v3658
    %v3835 = vpack.c.b16 %v3667, %v3659
    %v3836 = vpack.c.b16 %v3668, %v3660
    %v3837 = vpack.c.b16 %v3669, %v3661
    %v3838 = vpack.c.b16 %v3670, %v3662
    %v3839 = vpack.c.b16 %v3671, %v3663
    %v3840 = vpack.c.b16 %v3672, %v3664
    %v3841 = vpack.c.b16 %v3681, %v3673
    %v3842 = vpack.c.b16 %v3682, %v3674
    %v3843 = vpack.c.b16 %v3683, %v3675
    %v3844 = vpack.c.b16 %v3684, %v3676
    %v3845 = vpack.c.b16 %v3685, %v3677
    %v3846 = vpack.c.b16 %v3686, %v3678
    %v3847 = vpack.c.b16 %v3687, %v3679
    %v3848 = vpack.c.b16 %v3688, %v3680
    %v3849 = vpack.c.b16 %v3697, %v3689
    %v3850 = vpack.c.b16 %v3698, %v3690
    %v3851 = vpack.c.b16 %v3699, %v3691
    %v3852 = vpack.c.b16 %v3700, %v3692
    %v3853 = vpack.c.b16 %v3701, %v3693
    %v3854 = vpack.c.b16 %v3702, %v3694
    %v3855 = vpack.c.b16 %v3703, %v3695
    %v3856 = vpack.c.b16 %v3704, %v3696
    %v3857 = vpack.c.b16 %v3713, %v3705
    %v3858 = vpack.c.b16 %v3714, %v3706
    %v3859 = vpack.c.b16 %v3715, %v3707
    %v3860 = vpack.c.b16 %v3716, %v3708
    %v3861 = vpack.c.b16 %v3717, %v3709
    %v3862 = vpack.c.b16 %v3718, %v3710
    %v3863 = vpack.c.b16 %v3719, %v3711
    %v3864 = vpack.c.b16 %v3720, %v3712
    %v3865 = vpack.c.b16 %v3729, %v3721
    %v3866 = vpack.c.b16 %v3730, %v3722
    %v3867 = vpack.c.b16 %v3731, %v3723
    %v3868 = vpack.c.b16 %v3732, %v3724
    %v3869 = vpack.c.b16 %v3733, %v3725
    %v3870 = vpack.c.b16 %v3734, %v3726
    %v3871 = vpack.c.b16 %v3735, %v3727
    %v3872 = vpack.c.b16 %v3736, %v3728
    %v3873 = vpack.c.b16 %v3745, %v3737
    %v3874 = vpack.c.b16 %v3746, %v3738
    %v3875 = vpack.c.b16 %v3747, %v3739
    %v3876 = vpack.c.b16 %v3748, %v3740
    %v3877 = vpack.c.b16 %v3749, %v3741
    %v3878 = vpack.c.b16 %v3750, %v3742
    %v3879 = vpack.c.b16 %v3751, %v3743
    %v3880 = vpack.c.b16 %v3752, %v3744
    %4009 = vmatprep.subr.bf16.mxu0 %v3754
    %4010 = vmatpush1.bf16.msra.mxu0 %v3753
    %4011 = vmatprep.subr.bf16.mxu0 %v3762
    %4012 = vmatpush1.bf16.msra.mxu0 %v3761
    %4013 = vmatprep.subr.bf16.mxu0 %v3770
    %4014 = vmatpush1.bf16.msra.mxu0 %v3769
    %4015 = vmatprep.subr.bf16.mxu0 %v3778
    %4016 = vmatpush1.bf16.msra.mxu0 %v3777
    %4017 = vmatprep.subr.bf16.mxu0 %v3786
    %4018 = vmatpush1.bf16.msra.mxu0 %v3785
    %4019 = vmatprep.subr.bf16.mxu0 %v3794
    %4020 = vmatpush1.bf16.msra.mxu0 %v3793
    %4021 = vmatprep.subr.bf16.mxu0 %v3802
    %4022 = vmatpush1.bf16.msra.mxu0 %v3801
    %4023 = vmatprep.subr.bf16.mxu0 %v3810
    %4024 = vmatpush1.bf16.msra.mxu0 %v3809
    %4025 = vmatprep.subr.bf16.mxu0 %v3818
    %4026 = vmatpush1.bf16.msra.mxu0 %v3817
    %4027 = vmatprep.subr.bf16.mxu0 %v3826
    %4028 = vmatpush1.bf16.msra.mxu0 %v3825
    %4029 = vmatprep.subr.bf16.mxu0 %v3834
    %4030 = vmatpush1.bf16.msra.mxu0 %v3833
    %4031 = vmatprep.subr.bf16.mxu0 %v3842
    %4032 = vmatpush1.bf16.msra.mxu0 %v3841
    %4033 = vmatprep.subr.bf16.mxu0 %v3850
    %4034 = vmatpush1.bf16.msra.mxu0 %v3849
    %4035 = vmatprep.subr.bf16.mxu0 %v3858
    %4036 = vmatpush1.bf16.msra.mxu0 %v3857
    %4037 = vmatprep.subr.bf16.mxu0 %v3866
    %4038 = vmatpush1.bf16.msra.mxu0 %v3865
    %4039 = vmatprep.subr.bf16.mxu0 %v3874
    %4040 = vmatpush1.bf16.msra.mxu0 %v3873
    %4041 = vmatprep.mubr.bf16.mxu0 %v2205
    %4042 = vmatmul.mubr.bf16.gmra.mrb[0].mxu0 %v2204
    %v4043 = vpop.f32.mrb[0].mxu0
    %v4044 = vadd.f32 0.0, %v4043
    %v4045 = vpop.f32.mrb[0].mxu0
    %v4046 = vadd.f32 0.0, %v4045
    %v4047 = vpop.f32.mrb[0].mxu0
    %v4048 = vadd.f32 0.0, %v4047
    %v4049 = vpop.f32.mrb[0].mxu0
    %v4050 = vadd.f32 0.0, %v4049
    %4051 = vmatprep.mubr.bf16.mxu0 %v2207
    %4052 = vmatmul.mubr.bf16.gmra.mrb[0].mxu0 %v2206
    %v4053 = vpop.f32.mrb[0].mxu0
    %v4054 = vadd.f32 0.0, %v4053
    %v4055 = vpop.f32.mrb[0].mxu0
    %v4056 = vadd.f32 0.0, %v4055
    %v4057 = vpop.f32.mrb[0].mxu0
    %v4058 = vadd.f32 0.0, %v4057
    %v4059 = vpop.f32.mrb[0].mxu0
    %v4060 = vadd.f32 0.0, %v4059
    %4061 = vdwg.mxu0
    %4062 = vmatprep.subr.bf16.mxu0 %v3756
    %4063 = vmatpush1.bf16.msra.mxu0 %v3755
    %4064 = vmatprep.subr.bf16.mxu0 %v3764
    %4065 = vmatpush1.bf16.msra.mxu0 %v3763
    %4066 = vmatprep.subr.bf16.mxu0 %v3772
    %4067 = vmatpush1.bf16.msra.mxu0 %v3771
    %4068 = vmatprep.subr.bf16.mxu0 %v3780
    %4069 = vmatpush1.bf16.msra.mxu0 %v3779
    %4070 = vmatprep.subr.bf16.mxu0 %v3788
    %4071 = vmatpush1.bf16.msra.mxu0 %v3787
    %4072 = vmatprep.subr.bf16.mxu0 %v3796
    %4073 = vmatpush1.bf16.msra.mxu0 %v3795
    %4074 = vmatprep.subr.bf16.mxu0 %v3804
    %4075 = vmatpush1.bf16.msra.mxu0 %v3803
    %4076 = vmatprep.subr.bf16.mxu0 %v3812
    %4077 = vmatpush1.bf16.msra.mxu0 %v3811
    %4078 = vmatprep.subr.bf16.mxu0 %v3820
    %4079 = vmatpush1.bf16.msra.mxu0 %v3819
    %4080 = vmatprep.subr.bf16.mxu0 %v3828
    %4081 = vmatpush1.bf16.msra.mxu0 %v3827
    %4082 = vmatprep.subr.bf16.mxu0 %v3836
    %4083 = vmatpush1.bf16.msra.mxu0 %v3835
    %4084 = vmatprep.subr.bf16.mxu0 %v3844
    %4085 = vmatpush1.bf16.msra.mxu0 %v3843
    %4086 = vmatprep.subr.bf16.mxu0 %v3852
    %4087 = vmatpush1.bf16.msra.mxu0 %v3851
    %4088 = vmatprep.subr.bf16.mxu0 %v3860
    %4089 = vmatpush1.bf16.msra.mxu0 %v3859
    %4090 = vmatprep.subr.bf16.mxu0 %v3868
    %4091 = vmatpush1.bf16.msra.mxu0 %v3867
    %4092 = vmatprep.subr.bf16.mxu0 %v3876
    %4093 = vmatpush1.bf16.msra.mxu0 %v3875
    %4094 = vmatprep.mubr.bf16.mxu0 %v2205
    %4095 = vmatmul.mubr.bf16.gmra.mrb[0].mxu0 %v2204
    %v4096 = vpop.f32.mrb[0].mxu0
    %v4097 = vadd.f32 0.0, %v4096
    %v4098 = vpop.f32.mrb[0].mxu0
    %v4099 = vadd.f32 0.0, %v4098
    %v4100 = vpop.f32.mrb[0].mxu0
    %v4101 = vadd.f32 0.0, %v4100
    %v4102 = vpop.f32.mrb[0].mxu0
    %v4103 = vadd.f32 0.0, %v4102
    %4104 = vmatprep.mubr.bf16.mxu0 %v2207
    %4105 = vmatmul.mubr.bf16.gmra.mrb[0].mxu0 %v2206
    %v4106 = vpop.f32.mrb[0].mxu0
    %v4107 = vadd.f32 0.0, %v4106
    %v4108 = vpop.f32.mrb[0].mxu0
    %v4109 = vadd.f32 0.0, %v4108
    %v4110 = vpop.f32.mrb[0].mxu0
    %v4111 = vadd.f32 0.0, %v4110
    %v4112 = vpop.f32.mrb[0].mxu0
    %v4113 = vadd.f32 0.0, %v4112
    %4114 = vdwg.mxu0
    %4115 = vmatprep.subr.bf16.mxu0 %v3758
    %4116 = vmatpush1.bf16.msra.mxu0 %v3757
    %4117 = vmatprep.subr.bf16.mxu0 %v3766
    %4118 = vmatpush1.bf16.msra.mxu0 %v3765
    %4119 = vmatprep.subr.bf16.mxu0 %v3774
    %4120 = vmatpush1.bf16.msra.mxu0 %v3773
    %4121 = vmatprep.subr.bf16.mxu0 %v3782
    %4122 = vmatpush1.bf16.msra.mxu0 %v3781
    %4123 = vmatprep.subr.bf16.mxu0 %v3790
    %4124 = vmatpush1.bf16.msra.mxu0 %v3789
    %4125 = vmatprep.subr.bf16.mxu0 %v3798
    %4126 = vmatpush1.bf16.msra.mxu0 %v3797
    %4127 = vmatprep.subr.bf16.mxu0 %v3806
    %4128 = vmatpush1.bf16.msra.mxu0 %v3805
    %4129 = vmatprep.subr.bf16.mxu0 %v3814
    %4130 = vmatpush1.bf16.msra.mxu0 %v3813
    %4131 = vmatprep.subr.bf16.mxu0 %v3822
    %4132 = vmatpush1.bf16.msra.mxu0 %v3821
    %4133 = vmatprep.subr.bf16.mxu0 %v3830
    %4134 = vmatpush1.bf16.msra.mxu0 %v3829
    %4135 = vmatprep.subr.bf16.mxu0 %v3838
    %4136 = vmatpush1.bf16.msra.mxu0 %v3837
    %4137 = vmatprep.subr.bf16.mxu0 %v3846
    %4138 = vmatpush1.bf16.msra.mxu0 %v3845
    %4139 = vmatprep.subr.bf16.mxu0 %v3854
    %4140 = vmatpush1.bf16.msra.mxu0 %v3853
    %4141 = vmatprep.subr.bf16.mxu0 %v3862
    %4142 = vmatpush1.bf16.msra.mxu0 %v3861
    %4143 = vmatprep.subr.bf16.mxu0 %v3870
    %4144 = vmatpush1.bf16.msra.mxu0 %v3869
    %4145 = vmatprep.subr.bf16.mxu0 %v3878
    %4146 = vmatpush1.bf16.msra.mxu0 %v3877
    %4147 = vmatprep.mubr.bf16.mxu0 %v2205
    %4148 = vmatmul.mubr.bf16.gmra.mrb[0].mxu0 %v2204
    %v4149 = vpop.f32.mrb[0].mxu0
    %v4150 = vadd.f32 0.0, %v4149
    %v4151 = vpop.f32.mrb[0].mxu0
    %v4152 = vadd.f32 0.0, %v4151
    %v4153 = vpop.f32.mrb[0].mxu0
    %v4154 = vadd.f32 0.0, %v4153
    %v4155 = vpop.f32.mrb[0].mxu0
    %v4156 = vadd.f32 0.0, %v4155
    %4157 = vmatprep.mubr.bf16.mxu0 %v2207
    %4158 = vmatmul.mubr.bf16.gmra.mrb[0].mxu0 %v2206
    %v4159 = vpop.f32.mrb[0].mxu0
    %v4160 = vadd.f32 0.0, %v4159
    %v4161 = vpop.f32.mrb[0].mxu0
    %v4162 = vadd.f32 0.0, %v4161
    %v4163 = vpop.f32.mrb[0].mxu0
    %v4164 = vadd.f32 0.0, %v4163
    %v4165 = vpop.f32.mrb[0].mxu0
    %v4166 = vadd.f32 0.0, %v4165
    %4167 = vdwg.mxu0
    %4168 = vmatprep.subr.bf16.mxu0 %v3760
    %4169 = vmatpush1.bf16.msra.mxu0 %v3759
    %4170 = vmatprep.subr.bf16.mxu0 %v3768
    %4171 = vmatpush1.bf16.msra.mxu0 %v3767
    %4172 = vmatprep.subr.bf16.mxu0 %v3776
    %4173 = vmatpush1.bf16.msra.mxu0 %v3775
    %4174 = vmatprep.subr.bf16.mxu0 %v3784
    %4175 = vmatpush1.bf16.msra.mxu0 %v3783
    %4176 = vmatprep.subr.bf16.mxu0 %v3792
    %4177 = vmatpush1.bf16.msra.mxu0 %v3791
    %4178 = vmatprep.subr.bf16.mxu0 %v3800
    %4179 = vmatpush1.bf16.msra.mxu0 %v3799
    %4180 = vmatprep.subr.bf16.mxu0 %v3808
    %4181 = vmatpush1.bf16.msra.mxu0 %v3807
    %4182 = vmatprep.subr.bf16.mxu0 %v3816
    %4183 = vmatpush1.bf16.msra.mxu0 %v3815
    %4184 = vmatprep.subr.bf16.mxu0 %v3824
    %4185 = vmatpush1.bf16.msra.mxu0 %v3823
    %4186 = vmatprep.subr.bf16.mxu0 %v3832
    %4187 = vmatpush1.bf16.msra.mxu0 %v3831
    %4188 = vmatprep.subr.bf16.mxu0 %v3840
    %4189 = vmatpush1.bf16.msra.mxu0 %v3839
    %4190 = vmatprep.subr.bf16.mxu0 %v3848
    %4191 = vmatpush1.bf16.msra.mxu0 %v3847
    %4192 = vmatprep.subr.bf16.mxu0 %v3856
    %4193 = vmatpush1.bf16.msra.mxu0 %v3855
    %4194 = vmatprep.subr.bf16.mxu0 %v3864
    %4195 = vmatpush1.bf16.msra.mxu0 %v3863
    %4196 = vmatprep.subr.bf16.mxu0 %v3872
    %4197 = vmatpush1.bf16.msra.mxu0 %v3871
    %4198 = vmatprep.subr.bf16.mxu0 %v3880
    %4199 = vmatpush1.bf16.msra.mxu0 %v3879
    %4200 = vmatprep.mubr.bf16.mxu0 %v2205
    %4201 = vmatmul.mubr.bf16.gmra.mrb[0].mxu0 %v2204
    %v4202 = vpop.f32.mrb[0].mxu0
    %v4203 = vadd.f32 0.0, %v4202
    %v4204 = vpop.f32.mrb[0].mxu0
    %v4205 = vadd.f32 0.0, %v4204
    %v4206 = vpop.f32.mrb[0].mxu0
    %v4207 = vadd.f32 0.0, %v4206
    %v4208 = vpop.f32.mrb[0].mxu0
    %v4209 = vadd.f32 0.0, %v4208
    %4210 = vmatprep.mubr.bf16.mxu0 %v2207
    %4211 = vmatmul.mubr.bf16.gmra.mrb[0].mxu0 %v2206
    %v4212 = vpop.f32.mrb[0].mxu0
    %v4213 = vadd.f32 0.0, %v4212
    %v4214 = vpop.f32.mrb[0].mxu0
    %v4215 = vadd.f32 0.0, %v4214
    %v4216 = vpop.f32.mrb[0].mxu0
    %v4217 = vadd.f32 0.0, %v4216
    %v4218 = vpop.f32.mrb[0].mxu0
    %v4219 = vadd.f32 0.0, %v4218
    %4220 = vdwg.mxu0
    %v4221 = vmul.f32 %v3064, %v3064
    %v4222 = vmul.f32 %v3066, %v3066
    %v4223 = vmul.f32 %v3117, %v3117
    %v4224 = vmul.f32 %v3119, %v3119
    %v4225 = vmul.f32 %v3170, %v3170
    %v4226 = vmul.f32 %v3172, %v3172
    %v4227 = vmul.f32 %v3223, %v3223
    %v4228 = vmul.f32 %v3225, %v3225
    %v4229 = vmul.f32 %v3068, %v3068
    %v4230 = vmul.f32 %v3070, %v3070
    %v4231 = vmul.f32 %v3121, %v3121
    %v4232 = vmul.f32 %v3123, %v3123
    %v4233 = vmul.f32 %v3174, %v3174
    %v4234 = vmul.f32 %v3176, %v3176
    %v4235 = vmul.f32 %v3227, %v3227
    %v4236 = vmul.f32 %v3229, %v3229
    %v4237 = vmul.f32 %v3074, %v3074
    %v4238 = vmul.f32 %v3076, %v3076
    %v4239 = vmul.f32 %v3127, %v3127
    %v4240 = vmul.f32 %v3129, %v3129
    %v4241 = vmul.f32 %v3180, %v3180
    %v4242 = vmul.f32 %v3182, %v3182
    %v4243 = vmul.f32 %v3233, %v3233
    %v4244 = vmul.f32 %v3235, %v3235
    %v4245 = vmul.f32 %v3078, %v3078
    %v4246 = vmul.f32 %v3080, %v3080
    %v4247 = vmul.f32 %v3131, %v3131
    %v4248 = vmul.f32 %v3133, %v3133
    %v4249 = vmul.f32 %v3184, %v3184
    %v4250 = vmul.f32 %v3186, %v3186
    %v4251 = vmul.f32 %v3237, %v3237
    %v4252 = vmul.f32 %v3239, %v3239
    %v4253 = vmul.f32 %v4044, %v4044
    %v4254 = vmul.f32 %v4046, %v4046
    %v4255 = vmul.f32 %v4097, %v4097
    %v4256 = vmul.f32 %v4099, %v4099
    %v4257 = vmul.f32 %v4150, %v4150
    %v4258 = vmul.f32 %v4152, %v4152
    %v4259 = vmul.f32 %v4203, %v4203
    %v4260 = vmul.f32 %v4205, %v4205
    %v4261 = vmul.f32 %v4048, %v4048
    %v4262 = vmul.f32 %v4050, %v4050
    %v4263 = vmul.f32 %v4101, %v4101
    %v4264 = vmul.f32 %v4103, %v4103
    %v4265 = vmul.f32 %v4154, %v4154
    %v4266 = vmul.f32 %v4156, %v4156
    %v4267 = vmul.f32 %v4207, %v4207
    %v4268 = vmul.f32 %v4209, %v4209
    %v4269 = vmul.f32 %v4054, %v4054
    %v4270 = vmul.f32 %v4056, %v4056
    %v4271 = vmul.f32 %v4107, %v4107
    %v4272 = vmul.f32 %v4109, %v4109
    %v4273 = vmul.f32 %v4160, %v4160
    %v4274 = vmul.f32 %v4162, %v4162
    %v4275 = vmul.f32 %v4213, %v4213
    %v4276 = vmul.f32 %v4215, %v4215
    %v4277 = vmul.f32 %v4058, %v4058
    %v4278 = vmul.f32 %v4060, %v4060
    %v4279 = vmul.f32 %v4111, %v4111
    %v4280 = vmul.f32 %v4113, %v4113
    %v4281 = vmul.f32 %v4164, %v4164
    %v4282 = vmul.f32 %v4166, %v4166
    %v4283 = vmul.f32 %v4217, %v4217
    %v4284 = vmul.f32 %v4219, %v4219
    %v4285 = vadd.f32 %v4221, %v4253
    %v4286 = vadd.f32 %v4222, %v4254
    %v4287 = vadd.f32 %v4223, %v4255
    %v4288 = vadd.f32 %v4224, %v4256
    %v4289 = vadd.f32 %v4225, %v4257
    %v4290 = vadd.f32 %v4226, %v4258
    %v4291 = vadd.f32 %v4227, %v4259
    %v4292 = vadd.f32 %v4228, %v4260
    %v4293 = vadd.f32 %v4229, %v4261
    %v4294 = vadd.f32 %v4230, %v4262
    %v4295 = vadd.f32 %v4231, %v4263
    %v4296 = vadd.f32 %v4232, %v4264
    %v4297 = vadd.f32 %v4233, %v4265
    %v4298 = vadd.f32 %v4234, %v4266
    %v4299 = vadd.f32 %v4235, %v4267
    %v4300 = vadd.f32 %v4236, %v4268
    %v4301 = vadd.f32 %v4237, %v4269
    %v4302 = vadd.f32 %v4238, %v4270
    %v4303 = vadd.f32 %v4239, %v4271
    %v4304 = vadd.f32 %v4240, %v4272
    %v4305 = vadd.f32 %v4241, %v4273
    %v4306 = vadd.f32 %v4242, %v4274
    %v4307 = vadd.f32 %v4243, %v4275
    %v4308 = vadd.f32 %v4244, %v4276
    %v4309 = vadd.f32 %v4245, %v4277
    %v4310 = vadd.f32 %v4246, %v4278
    %v4311 = vadd.f32 %v4247, %v4279
    %v4312 = vadd.f32 %v4248, %v4280
    %v4313 = vadd.f32 %v4249, %v4281
    %v4314 = vadd.f32 %v4250, %v4282
    %v4315 = vadd.f32 %v4251, %v4283
    %v4316 = vadd.f32 %v4252, %v4284
    %v4317 = vrsqrt.pop %v4285
    %v4318 = vmul.f32 %v4285, %v4317
    %vm4319 = vcmp.eq.f32.partialorder %v4285, inf
    %v4320 = vsel %vm4319, %v4285, %v4318
    %vm4321 = vcmp.eq.f32.partialorder %v4285, 0.0
    %v4322 = vand.u32 %v4285, 2147483648
    %v4323 = vsel %vm4321, %v4322, %v4320
    %v4324 = vrsqrt.pop %v4286
    %v4325 = vmul.f32 %v4286, %v4324
    %vm4326 = vcmp.eq.f32.partialorder %v4286, inf
    %v4327 = vsel %vm4326, %v4286, %v4325
    %vm4328 = vcmp.eq.f32.partialorder %v4286, 0.0
    %v4329 = vand.u32 %v4286, 2147483648
    %v4330 = vsel %vm4328, %v4329, %v4327
    %v4331 = vrsqrt.pop %v4287
    %v4332 = vmul.f32 %v4287, %v4331
    %vm4333 = vcmp.eq.f32.partialorder %v4287, inf
    %v4334 = vsel %vm4333, %v4287, %v4332
    %vm4335 = vcmp.eq.f32.partialorder %v4287, 0.0
    %v4336 = vand.u32 %v4287, 2147483648
    %v4337 = vsel %vm4335, %v4336, %v4334
    %v4338 = vrsqrt.pop %v4288
    %v4339 = vmul.f32 %v4288, %v4338
    %vm4340 = vcmp.eq.f32.partialorder %v4288, inf
    %v4341 = vsel %vm4340, %v4288, %v4339
    %vm4342 = vcmp.eq.f32.partialorder %v4288, 0.0
    %v4343 = vand.u32 %v4288, 2147483648
    %v4344 = vsel %vm4342, %v4343, %v4341
    %v4345 = vrsqrt.pop %v4289
    %v4346 = vmul.f32 %v4289, %v4345
    %vm4347 = vcmp.eq.f32.partialorder %v4289, inf
    %v4348 = vsel %vm4347, %v4289, %v4346
    %vm4349 = vcmp.eq.f32.partialorder %v4289, 0.0
    %v4350 = vand.u32 %v4289, 2147483648
    %v4351 = vsel %vm4349, %v4350, %v4348
    %v4352 = vrsqrt.pop %v4290
    %v4353 = vmul.f32 %v4290, %v4352
    %vm4354 = vcmp.eq.f32.partialorder %v4290, inf
    %v4355 = vsel %vm4354, %v4290, %v4353
    %vm4356 = vcmp.eq.f32.partialorder %v4290, 0.0
    %v4357 = vand.u32 %v4290, 2147483648
    %v4358 = vsel %vm4356, %v4357, %v4355
    %v4359 = vrsqrt.pop %v4291
    %v4360 = vmul.f32 %v4291, %v4359
    %vm4361 = vcmp.eq.f32.partialorder %v4291, inf
    %v4362 = vsel %vm4361, %v4291, %v4360
    %vm4363 = vcmp.eq.f32.partialorder %v4291, 0.0
    %v4364 = vand.u32 %v4291, 2147483648
    %v4365 = vsel %vm4363, %v4364, %v4362
    %v4366 = vrsqrt.pop %v4292
    %v4367 = vmul.f32 %v4292, %v4366
    %vm4368 = vcmp.eq.f32.partialorder %v4292, inf
    %v4369 = vsel %vm4368, %v4292, %v4367
    %vm4370 = vcmp.eq.f32.partialorder %v4292, 0.0
    %v4371 = vand.u32 %v4292, 2147483648
    %v4372 = vsel %vm4370, %v4371, %v4369
    %v4373 = vrsqrt.pop %v4293
    %v4374 = vmul.f32 %v4293, %v4373
    %vm4375 = vcmp.eq.f32.partialorder %v4293, inf
    %v4376 = vsel %vm4375, %v4293, %v4374
    %vm4377 = vcmp.eq.f32.partialorder %v4293, 0.0
    %v4378 = vand.u32 %v4293, 2147483648
    %v4379 = vsel %vm4377, %v4378, %v4376
    %v4380 = vrsqrt.pop %v4294
    %v4381 = vmul.f32 %v4294, %v4380
    %vm4382 = vcmp.eq.f32.partialorder %v4294, inf
    %v4383 = vsel %vm4382, %v4294, %v4381
    %vm4384 = vcmp.eq.f32.partialorder %v4294, 0.0
    %v4385 = vand.u32 %v4294, 2147483648
    %v4386 = vsel %vm4384, %v4385, %v4383
    %v4387 = vrsqrt.pop %v4295
    %v4388 = vmul.f32 %v4295, %v4387
    %vm4389 = vcmp.eq.f32.partialorder %v4295, inf
    %v4390 = vsel %vm4389, %v4295, %v4388
    %vm4391 = vcmp.eq.f32.partialorder %v4295, 0.0
    %v4392 = vand.u32 %v4295, 2147483648
    %v4393 = vsel %vm4391, %v4392, %v4390
    %v4394 = vrsqrt.pop %v4296
    %v4395 = vmul.f32 %v4296, %v4394
    %vm4396 = vcmp.eq.f32.partialorder %v4296, inf
    %v4397 = vsel %vm4396, %v4296, %v4395
    %vm4398 = vcmp.eq.f32.partialorder %v4296, 0.0
    %v4399 = vand.u32 %v4296, 2147483648
    %v4400 = vsel %vm4398, %v4399, %v4397
    %v4401 = vrsqrt.pop %v4297
    %v4402 = vmul.f32 %v4297, %v4401
    %vm4403 = vcmp.eq.f32.partialorder %v4297, inf
    %v4404 = vsel %vm4403, %v4297, %v4402
    %vm4405 = vcmp.eq.f32.partialorder %v4297, 0.0
    %v4406 = vand.u32 %v4297, 2147483648
    %v4407 = vsel %vm4405, %v4406, %v4404
    %v4408 = vrsqrt.pop %v4298
    %v4409 = vmul.f32 %v4298, %v4408
    %vm4410 = vcmp.eq.f32.partialorder %v4298, inf
    %v4411 = vsel %vm4410, %v4298, %v4409
    %vm4412 = vcmp.eq.f32.partialorder %v4298, 0.0
    %v4413 = vand.u32 %v4298, 2147483648
    %v4414 = vsel %vm4412, %v4413, %v4411
    %v4415 = vrsqrt.pop %v4299
    %v4416 = vmul.f32 %v4299, %v4415
    %vm4417 = vcmp.eq.f32.partialorder %v4299, inf
    %v4418 = vsel %vm4417, %v4299, %v4416
    %vm4419 = vcmp.eq.f32.partialorder %v4299, 0.0
    %v4420 = vand.u32 %v4299, 2147483648
    %v4421 = vsel %vm4419, %v4420, %v4418
    %v4422 = vrsqrt.pop %v4300
    %v4423 = vmul.f32 %v4300, %v4422
    %vm4424 = vcmp.eq.f32.partialorder %v4300, inf
    %v4425 = vsel %vm4424, %v4300, %v4423
    %vm4426 = vcmp.eq.f32.partialorder %v4300, 0.0
    %v4427 = vand.u32 %v4300, 2147483648
    %v4428 = vsel %vm4426, %v4427, %v4425
    %v4429 = vrsqrt.pop %v4301
    %v4430 = vmul.f32 %v4301, %v4429
    %vm4431 = vcmp.eq.f32.partialorder %v4301, inf
    %v4432 = vsel %vm4431, %v4301, %v4430
    %vm4433 = vcmp.eq.f32.partialorder %v4301, 0.0
    %v4434 = vand.u32 %v4301, 2147483648
    %v4435 = vsel %vm4433, %v4434, %v4432
    %v4436 = vrsqrt.pop %v4302
    %v4437 = vmul.f32 %v4302, %v4436
    %vm4438 = vcmp.eq.f32.partialorder %v4302, inf
    %v4439 = vsel %vm4438, %v4302, %v4437
    %vm4440 = vcmp.eq.f32.partialorder %v4302, 0.0
    %v4441 = vand.u32 %v4302, 2147483648
    %v4442 = vsel %vm4440, %v4441, %v4439
    %v4443 = vrsqrt.pop %v4303
    %v4444 = vmul.f32 %v4303, %v4443
    %vm4445 = vcmp.eq.f32.partialorder %v4303, inf
    %v4446 = vsel %vm4445, %v4303, %v4444
    %vm4447 = vcmp.eq.f32.partialorder %v4303, 0.0
    %v4448 = vand.u32 %v4303, 2147483648
    %v4449 = vsel %vm4447, %v4448, %v4446
    %v4450 = vrsqrt.pop %v4304
    %v4451 = vmul.f32 %v4304, %v4450
    %vm4452 = vcmp.eq.f32.partialorder %v4304, inf
    %v4453 = vsel %vm4452, %v4304, %v4451
    %vm4454 = vcmp.eq.f32.partialorder %v4304, 0.0
    %v4455 = vand.u32 %v4304, 2147483648
    %v4456 = vsel %vm4454, %v4455, %v4453
    %v4457 = vrsqrt.pop %v4305
    %v4458 = vmul.f32 %v4305, %v4457
    %vm4459 = vcmp.eq.f32.partialorder %v4305, inf
    %v4460 = vsel %vm4459, %v4305, %v4458
    %vm4461 = vcmp.eq.f32.partialorder %v4305, 0.0
    %v4462 = vand.u32 %v4305, 2147483648
    %v4463 = vsel %vm4461, %v4462, %v4460
    %v4464 = vrsqrt.pop %v4306
    %v4465 = vmul.f32 %v4306, %v4464
    %vm4466 = vcmp.eq.f32.partialorder %v4306, inf
    %v4467 = vsel %vm4466, %v4306, %v4465
    %vm4468 = vcmp.eq.f32.partialorder %v4306, 0.0
    %v4469 = vand.u32 %v4306, 2147483648
    %v4470 = vsel %vm4468, %v4469, %v4467
    %v4471 = vrsqrt.pop %v4307
    %v4472 = vmul.f32 %v4307, %v4471
    %vm4473 = vcmp.eq.f32.partialorder %v4307, inf
    %v4474 = vsel %vm4473, %v4307, %v4472
    %vm4475 = vcmp.eq.f32.partialorder %v4307, 0.0
    %v4476 = vand.u32 %v4307, 2147483648
    %v4477 = vsel %vm4475, %v4476, %v4474
    %v4478 = vrsqrt.pop %v4308
    %v4479 = vmul.f32 %v4308, %v4478
    %vm4480 = vcmp.eq.f32.partialorder %v4308, inf
    %v4481 = vsel %vm4480, %v4308, %v4479
    %vm4482 = vcmp.eq.f32.partialorder %v4308, 0.0
    %v4483 = vand.u32 %v4308, 2147483648
    %v4484 = vsel %vm4482, %v4483, %v4481
    %v4485 = vrsqrt.pop %v4309
    %v4486 = vmul.f32 %v4309, %v4485
    %vm4487 = vcmp.eq.f32.partialorder %v4309, inf
    %v4488 = vsel %vm4487, %v4309, %v4486
    %vm4489 = vcmp.eq.f32.partialorder %v4309, 0.0
    %v4490 = vand.u32 %v4309, 2147483648
    %v4491 = vsel %vm4489, %v4490, %v4488
    %v4492 = vrsqrt.pop %v4310
    %v4493 = vmul.f32 %v4310, %v4492
    %vm4494 = vcmp.eq.f32.partialorder %v4310, inf
    %v4495 = vsel %vm4494, %v4310, %v4493
    %vm4496 = vcmp.eq.f32.partialorder %v4310, 0.0
    %v4497 = vand.u32 %v4310, 2147483648
    %v4498 = vsel %vm4496, %v4497, %v4495
    %v4499 = vrsqrt.pop %v4311
    %v4500 = vmul.f32 %v4311, %v4499
    %vm4501 = vcmp.eq.f32.partialorder %v4311, inf
    %v4502 = vsel %vm4501, %v4311, %v4500
    %vm4503 = vcmp.eq.f32.partialorder %v4311, 0.0
    %v4504 = vand.u32 %v4311, 2147483648
    %v4505 = vsel %vm4503, %v4504, %v4502
    %v4506 = vrsqrt.pop %v4312
    %v4507 = vmul.f32 %v4312, %v4506
    %vm4508 = vcmp.eq.f32.partialorder %v4312, inf
    %v4509 = vsel %vm4508, %v4312, %v4507
    %vm4510 = vcmp.eq.f32.partialorder %v4312, 0.0
    %v4511 = vand.u32 %v4312, 2147483648
    %v4512 = vsel %vm4510, %v4511, %v4509
    %v4513 = vrsqrt.pop %v4313
    %v4514 = vmul.f32 %v4313, %v4513
    %vm4515 = vcmp.eq.f32.partialorder %v4313, inf
    %v4516 = vsel %vm4515, %v4313, %v4514
    %vm4517 = vcmp.eq.f32.partialorder %v4313, 0.0
    %v4518 = vand.u32 %v4313, 2147483648
    %v4519 = vsel %vm4517, %v4518, %v4516
    %v4520 = vrsqrt.pop %v4314
    %v4521 = vmul.f32 %v4314, %v4520
    %vm4522 = vcmp.eq.f32.partialorder %v4314, inf
    %v4523 = vsel %vm4522, %v4314, %v4521
    %vm4524 = vcmp.eq.f32.partialorder %v4314, 0.0
    %v4525 = vand.u32 %v4314, 2147483648
    %v4526 = vsel %vm4524, %v4525, %v4523
    %v4527 = vrsqrt.pop %v4315
    %v4528 = vmul.f32 %v4315, %v4527
    %vm4529 = vcmp.eq.f32.partialorder %v4315, inf
    %v4530 = vsel %vm4529, %v4315, %v4528
    %vm4531 = vcmp.eq.f32.partialorder %v4315, 0.0
    %v4532 = vand.u32 %v4315, 2147483648
    %v4533 = vsel %vm4531, %v4532, %v4530
    %v4534 = vrsqrt.pop %v4316
    %v4535 = vmul.f32 %v4316, %v4534
    %vm4536 = vcmp.eq.f32.partialorder %v4316, inf
    %v4537 = vsel %vm4536, %v4316, %v4535
    %vm4538 = vcmp.eq.f32.partialorder %v4316, 0.0
    %v4539 = vand.u32 %v4316, 2147483648
    %v4540 = vsel %vm4538, %v4539, %v4537
    %v4541 = vpack.c.bf16 %v4323, %v4323
    %v4542 = vpack.c.bf16 %v4330, %v4330
    %4543 = vmatprep.subr.bf16.mxu0 0
    %4544 = vmatpush1.bf16.msra.mxu0 %v159
    %4545 = vmatprep.subr.bf16.mxu0 0
    %4546 = vmatpush1.bf16.msra.mxu0 %v160
    %4547 = vmatprep.subr.bf16.mxu0 0
    %4548 = vmatpush1.bf16.msra.mxu0 %v161
    %4549 = vmatprep.subr.bf16.mxu0 0
    %4550 = vmatpush1.bf16.msra.mxu0 %v162
    %4551 = vmatprep.subr.bf16.mxu0 0
    %4552 = vmatpush1.bf16.msra.mxu0 %v163
    %4553 = vmatprep.subr.bf16.mxu0 0
    %4554 = vmatpush1.bf16.msra.mxu0 %v164
    %4555 = vmatprep.subr.bf16.mxu0 0
    %4556 = vmatpush1.bf16.msra.mxu0 %v165
    %4557 = vmatprep.subr.bf16.mxu0 0
    %4558 = vmatpush1.bf16.msra.mxu0 %v166
    %4559 = vmatprep.subr.bf16.mxu0 0
    %4560 = vmatpush1.bf16.msra.mxu0 %v167
    %4561 = vmatprep.subr.bf16.mxu0 0
    %4562 = vmatpush1.bf16.msra.mxu0 %v168
    %4563 = vmatprep.subr.bf16.mxu0 0
    %4564 = vmatpush1.bf16.msra.mxu0 %v169
    %4565 = vmatprep.subr.bf16.mxu0 0
    %4566 = vmatpush1.bf16.msra.mxu0 %v170
    %4567 = vmatprep.subr.bf16.mxu0 0
    %4568 = vmatpush1.bf16.msra.mxu0 %v171
    %4569 = vmatprep.subr.bf16.mxu0 0
    %4570 = vmatpush1.bf16.msra.mxu0 %v172
    %4571 = vmatprep.subr.bf16.mxu0 0
    %4572 = vmatpush1.bf16.msra.mxu0 %v173
    %4573 = vmatprep.subr.bf16.mxu0 0
    %4574 = vmatpush1.bf16.msra.mxu0 %v174
    %4575 = vmatprep.mubr.bf16.mxu0 %v4542
    %4576 = vmatmul.mubr.bf16.gmra.mrb[0].mxu0 %v4541
    %v4577 = vpop.f32.mrb[0].mxu0
    %v4578 = vadd.f32 0.0, %v4577
    %v4579 = vpop.f32.mrb[0].mxu0
    %v4580 = vpop.f32.mrb[0].mxu0
    %v4581 = vpop.f32.mrb[0].mxu0
    %4582 = vdwg.mxu0
    %4583 = vst [vmem:[#allocation9 + $0x48] sm:$0xff] %v4578
    %v4584 = vpack.c.bf16 %v4337, %v4337
    %v4585 = vpack.c.bf16 %v4344, %v4344
    %4586 = vmatprep.subr.bf16.mxu0 0
    %4587 = vmatpush1.bf16.msra.mxu0 %v159
    %4588 = vmatprep.subr.bf16.mxu0 0
    %4589 = vmatpush1.bf16.msra.mxu0 %v160
    %4590 = vmatprep.subr.bf16.mxu0 0
    %4591 = vmatpush1.bf16.msra.mxu0 %v161
    %4592 = vmatprep.subr.bf16.mxu0 0
    %4593 = vmatpush1.bf16.msra.mxu0 %v162
    %4594 = vmatprep.subr.bf16.mxu0 0
    %4595 = vmatpush1.bf16.msra.mxu0 %v163
    %4596 = vmatprep.subr.bf16.mxu0 0
    %4597 = vmatpush1.bf16.msra.mxu0 %v164
    %4598 = vmatprep.subr.bf16.mxu0 0
    %4599 = vmatpush1.bf16.msra.mxu0 %v165
    %4600 = vmatprep.subr.bf16.mxu0 0
    %4601 = vmatpush1.bf16.msra.mxu0 %v166
    %4602 = vmatprep.subr.bf16.mxu0 0
    %4603 = vmatpush1.bf16.msra.mxu0 %v167
    %4604 = vmatprep.subr.bf16.mxu0 0
    %4605 = vmatpush1.bf16.msra.mxu0 %v168
    %4606 = vmatprep.subr.bf16.mxu0 0
    %4607 = vmatpush1.bf16.msra.mxu0 %v169
    %4608 = vmatprep.subr.bf16.mxu0 0
    %4609 = vmatpush1.bf16.msra.mxu0 %v170
    %4610 = vmatprep.subr.bf16.mxu0 0
    %4611 = vmatpush1.bf16.msra.mxu0 %v171
    %4612 = vmatprep.subr.bf16.mxu0 0
    %4613 = vmatpush1.bf16.msra.mxu0 %v172
    %4614 = vmatprep.subr.bf16.mxu0 0
    %4615 = vmatpush1.bf16.msra.mxu0 %v173
    %4616 = vmatprep.subr.bf16.mxu0 0
    %4617 = vmatpush1.bf16.msra.mxu0 %v174
    %4618 = vmatprep.mubr.bf16.mxu0 %v4585
    %4619 = vmatmul.mubr.bf16.gmra.mrb[0].mxu0 %v4584
    %v4620 = vpop.f32.mrb[0].mxu0
    %v4621 = vadd.f32 0.0, %v4620
    %v4622 = vpop.f32.mrb[0].mxu0
    %v4623 = vpop.f32.mrb[0].mxu0
    %v4624 = vpop.f32.mrb[0].mxu0
    %4625 = vdwg.mxu0
    %4626 = vst [vmem:[#allocation9 + $0x50] sm:$0xff] %v4621
    %v4627 = vpack.c.bf16 %v4351, %v4351
    %v4628 = vpack.c.bf16 %v4358, %v4358
    %4629 = vmatprep.subr.bf16.mxu0 0
    %4630 = vmatpush1.bf16.msra.mxu0 %v159
    %4631 = vmatprep.subr.bf16.mxu0 0
    %4632 = vmatpush1.bf16.msra.mxu0 %v160
    %4633 = vmatprep.subr.bf16.mxu0 0
    %4634 = vmatpush1.bf16.msra.mxu0 %v161
    %4635 = vmatprep.subr.bf16.mxu0 0
    %4636 = vmatpush1.bf16.msra.mxu0 %v162
    %4637 = vmatprep.subr.bf16.mxu0 0
    %4638 = vmatpush1.bf16.msra.mxu0 %v163
    %4639 = vmatprep.subr.bf16.mxu0 0
    %4640 = vmatpush1.bf16.msra.mxu0 %v164
    %4641 = vmatprep.subr.bf16.mxu0 0
    %4642 = vmatpush1.bf16.msra.mxu0 %v165
    %4643 = vmatprep.subr.bf16.mxu0 0
    %4644 = vmatpush1.bf16.msra.mxu0 %v166
    %4645 = vmatprep.subr.bf16.mxu0 0
    %4646 = vmatpush1.bf16.msra.mxu0 %v167
    %4647 = vmatprep.subr.bf16.mxu0 0
    %4648 = vmatpush1.bf16.msra.mxu0 %v168
    %4649 = vmatprep.subr.bf16.mxu0 0
    %4650 = vmatpush1.bf16.msra.mxu0 %v169
    %4651 = vmatprep.subr.bf16.mxu0 0
    %4652 = vmatpush1.bf16.msra.mxu0 %v170
    %4653 = vmatprep.subr.bf16.mxu0 0
    %4654 = vmatpush1.bf16.msra.mxu0 %v171
    %4655 = vmatprep.subr.bf16.mxu0 0
    %4656 = vmatpush1.bf16.msra.mxu0 %v172
    %4657 = vmatprep.subr.bf16.mxu0 0
    %4658 = vmatpush1.bf16.msra.mxu0 %v173
    %4659 = vmatprep.subr.bf16.mxu0 0
    %4660 = vmatpush1.bf16.msra.mxu0 %v174
    %4661 = vmatprep.mubr.bf16.mxu0 %v4628
    %4662 = vmatmul.mubr.bf16.gmra.mrb[0].mxu0 %v4627
    %v4663 = vpop.f32.mrb[0].mxu0
    %v4664 = vadd.f32 0.0, %v4663
    %v4665 = vpop.f32.mrb[0].mxu0
    %v4666 = vpop.f32.mrb[0].mxu0
    %v4667 = vpop.f32.mrb[0].mxu0
    %4668 = vdwg.mxu0
    %4669 = vst [vmem:[#allocation9 + $0x58] sm:$0xff] %v4664
    %v4670 = vpack.c.bf16 %v4365, %v4365
    %v4671 = vpack.c.bf16 %v4372, %v4372
    %4672 = vmatprep.subr.bf16.mxu0 0
    %4673 = vmatpush1.bf16.msra.mxu0 %v159
    %4674 = vmatprep.subr.bf16.mxu0 0
    %4675 = vmatpush1.bf16.msra.mxu0 %v160
    %4676 = vmatprep.subr.bf16.mxu0 0
    %4677 = vmatpush1.bf16.msra.mxu0 %v161
    %4678 = vmatprep.subr.bf16.mxu0 0
    %4679 = vmatpush1.bf16.msra.mxu0 %v162
    %4680 = vmatprep.subr.bf16.mxu0 0
    %4681 = vmatpush1.bf16.msra.mxu0 %v163
    %4682 = vmatprep.subr.bf16.mxu0 0
    %4683 = vmatpush1.bf16.msra.mxu0 %v164
    %4684 = vmatprep.subr.bf16.mxu0 0
    %4685 = vmatpush1.bf16.msra.mxu0 %v165
    %4686 = vmatprep.subr.bf16.mxu0 0
    %4687 = vmatpush1.bf16.msra.mxu0 %v166
    %4688 = vmatprep.subr.bf16.mxu0 0
    %4689 = vmatpush1.bf16.msra.mxu0 %v167
    %4690 = vmatprep.subr.bf16.mxu0 0
    %4691 = vmatpush1.bf16.msra.mxu0 %v168
    %4692 = vmatprep.subr.bf16.mxu0 0
    %4693 = vmatpush1.bf16.msra.mxu0 %v169
    %4694 = vmatprep.subr.bf16.mxu0 0
    %4695 = vmatpush1.bf16.msra.mxu0 %v170
    %4696 = vmatprep.subr.bf16.mxu0 0
    %4697 = vmatpush1.bf16.msra.mxu0 %v171
    %4698 = vmatprep.subr.bf16.mxu0 0
    %4699 = vmatpush1.bf16.msra.mxu0 %v172
    %4700 = vmatprep.subr.bf16.mxu0 0
    %4701 = vmatpush1.bf16.msra.mxu0 %v173
    %4702 = vmatprep.subr.bf16.mxu0 0
    %4703 = vmatpush1.bf16.msra.mxu0 %v174
    %4704 = vmatprep.mubr.bf16.mxu0 %v4671
    %4705 = vmatmul.mubr.bf16.gmra.mrb[0].mxu0 %v4670
    %v4706 = vpop.f32.mrb[0].mxu0
    %v4707 = vadd.f32 0.0, %v4706
    %v4708 = vpop.f32.mrb[0].mxu0
    %v4709 = vpop.f32.mrb[0].mxu0
    %v4710 = vpop.f32.mrb[0].mxu0
    %4711 = vdwg.mxu0
    %4712 = vst [vmem:[#allocation9 + $0x60] sm:$0xff] %v4707
    %v4713 = vpack.c.bf16 %v4379, %v4379
    %v4714 = vpack.c.bf16 %v4386, %v4386
    %4715 = vmatprep.subr.bf16.mxu0 0
    %4716 = vmatpush1.bf16.msra.mxu0 %v159
    %4717 = vmatprep.subr.bf16.mxu0 0
    %4718 = vmatpush1.bf16.msra.mxu0 %v160
    %4719 = vmatprep.subr.bf16.mxu0 0
    %4720 = vmatpush1.bf16.msra.mxu0 %v161
    %4721 = vmatprep.subr.bf16.mxu0 0
    %4722 = vmatpush1.bf16.msra.mxu0 %v162
    %4723 = vmatprep.subr.bf16.mxu0 0
    %4724 = vmatpush1.bf16.msra.mxu0 %v163
    %4725 = vmatprep.subr.bf16.mxu0 0
    %4726 = vmatpush1.bf16.msra.mxu0 %v164
    %4727 = vmatprep.subr.bf16.mxu0 0
    %4728 = vmatpush1.bf16.msra.mxu0 %v165
    %4729 = vmatprep.subr.bf16.mxu0 0
    %4730 = vmatpush1.bf16.msra.mxu0 %v166
    %4731 = vmatprep.subr.bf16.mxu0 0
    %4732 = vmatpush1.bf16.msra.mxu0 %v167
    %4733 = vmatprep.subr.bf16.mxu0 0
    %4734 = vmatpush1.bf16.msra.mxu0 %v168
    %4735 = vmatprep.subr.bf16.mxu0 0
    %4736 = vmatpush1.bf16.msra.mxu0 %v169
    %4737 = vmatprep.subr.bf16.mxu0 0
    %4738 = vmatpush1.bf16.msra.mxu0 %v170
    %4739 = vmatprep.subr.bf16.mxu0 0
    %4740 = vmatpush1.bf16.msra.mxu0 %v171
    %4741 = vmatprep.subr.bf16.mxu0 0
    %4742 = vmatpush1.bf16.msra.mxu0 %v172
    %4743 = vmatprep.subr.bf16.mxu0 0
    %4744 = vmatpush1.bf16.msra.mxu0 %v173
    %4745 = vmatprep.subr.bf16.mxu0 0
    %4746 = vmatpush1.bf16.msra.mxu0 %v174
    %4747 = vmatprep.mubr.bf16.mxu0 %v4714
    %4748 = vmatmul.mubr.bf16.gmra.mrb[0].mxu0 %v4713
    %v4749 = vpop.f32.mrb[0].mxu0
    %v4750 = vadd.f32 0.0, %v4749
    %v4751 = vpop.f32.mrb[0].mxu0
    %v4752 = vpop.f32.mrb[0].mxu0
    %v4753 = vpop.f32.mrb[0].mxu0
    %4754 = vdwg.mxu0
    %4755 = vst [vmem:[#allocation9 + $0x68] sm:$0xff] %v4750
    %v4756 = vpack.c.bf16 %v4393, %v4393
    %v4757 = vpack.c.bf16 %v4400, %v4400
    %4758 = vmatprep.subr.bf16.mxu0 0
    %4759 = vmatpush1.bf16.msra.mxu0 %v159
    %4760 = vmatprep.subr.bf16.mxu0 0
    %4761 = vmatpush1.bf16.msra.mxu0 %v160
    %4762 = vmatprep.subr.bf16.mxu0 0
    %4763 = vmatpush1.bf16.msra.mxu0 %v161
    %4764 = vmatprep.subr.bf16.mxu0 0
    %4765 = vmatpush1.bf16.msra.mxu0 %v162
    %4766 = vmatprep.subr.bf16.mxu0 0
    %4767 = vmatpush1.bf16.msra.mxu0 %v163
    %4768 = vmatprep.subr.bf16.mxu0 0
    %4769 = vmatpush1.bf16.msra.mxu0 %v164
    %4770 = vmatprep.subr.bf16.mxu0 0
    %4771 = vmatpush1.bf16.msra.mxu0 %v165
    %4772 = vmatprep.subr.bf16.mxu0 0
    %4773 = vmatpush1.bf16.msra.mxu0 %v166
    %4774 = vmatprep.subr.bf16.mxu0 0
    %4775 = vmatpush1.bf16.msra.mxu0 %v167
    %4776 = vmatprep.subr.bf16.mxu0 0
    %4777 = vmatpush1.bf16.msra.mxu0 %v168
    %4778 = vmatprep.subr.bf16.mxu0 0
    %4779 = vmatpush1.bf16.msra.mxu0 %v169
    %4780 = vmatprep.subr.bf16.mxu0 0
    %4781 = vmatpush1.bf16.msra.mxu0 %v170
    %4782 = vmatprep.subr.bf16.mxu0 0
    %4783 = vmatpush1.bf16.msra.mxu0 %v171
    %4784 = vmatprep.subr.bf16.mxu0 0
    %4785 = vmatpush1.bf16.msra.mxu0 %v172
    %4786 = vmatprep.subr.bf16.mxu0 0
    %4787 = vmatpush1.bf16.msra.mxu0 %v173
    %4788 = vmatprep.subr.bf16.mxu0 0
    %4789 = vmatpush1.bf16.msra.mxu0 %v174
    %4790 = vmatprep.mubr.bf16.mxu0 %v4757
    %4791 = vmatmul.mubr.bf16.gmra.mrb[0].mxu0 %v4756
    %v4792 = vpop.f32.mrb[0].mxu0
    %v4793 = vadd.f32 0.0, %v4792
    %v4794 = vpop.f32.mrb[0].mxu0
    %v4795 = vpop.f32.mrb[0].mxu0
    %v4796 = vpop.f32.mrb[0].mxu0
    %4797 = vdwg.mxu0
    %4798 = vst [vmem:[#allocation9 + $0x70] sm:$0xff] %v4793
    %v4799 = vpack.c.bf16 %v4407, %v4407
    %v4800 = vpack.c.bf16 %v4414, %v4414
    %4801 = vmatprep.subr.bf16.mxu0 0
    %4802 = vmatpush1.bf16.msra.mxu0 %v159
    %4803 = vmatprep.subr.bf16.mxu0 0
    %4804 = vmatpush1.bf16.msra.mxu0 %v160
    %4805 = vmatprep.subr.bf16.mxu0 0
    %4806 = vmatpush1.bf16.msra.mxu0 %v161
    %4807 = vmatprep.subr.bf16.mxu0 0
    %4808 = vmatpush1.bf16.msra.mxu0 %v162
    %4809 = vmatprep.subr.bf16.mxu0 0
    %4810 = vmatpush1.bf16.msra.mxu0 %v163
    %4811 = vmatprep.subr.bf16.mxu0 0
    %4812 = vmatpush1.bf16.msra.mxu0 %v164
    %4813 = vmatprep.subr.bf16.mxu0 0
    %4814 = vmatpush1.bf16.msra.mxu0 %v165
    %4815 = vmatprep.subr.bf16.mxu0 0
    %4816 = vmatpush1.bf16.msra.mxu0 %v166
    %4817 = vmatprep.subr.bf16.mxu0 0
    %4818 = vmatpush1.bf16.msra.mxu0 %v167
    %4819 = vmatprep.subr.bf16.mxu0 0
    %4820 = vmatpush1.bf16.msra.mxu0 %v168
    %4821 = vmatprep.subr.bf16.mxu0 0
    %4822 = vmatpush1.bf16.msra.mxu0 %v169
    %4823 = vmatprep.subr.bf16.mxu0 0
    %4824 = vmatpush1.bf16.msra.mxu0 %v170
    %4825 = vmatprep.subr.bf16.mxu0 0
    %4826 = vmatpush1.bf16.msra.mxu0 %v171
    %4827 = vmatprep.subr.bf16.mxu0 0
    %4828 = vmatpush1.bf16.msra.mxu0 %v172
    %4829 = vmatprep.subr.bf16.mxu0 0
    %4830 = vmatpush1.bf16.msra.mxu0 %v173
    %4831 = vmatprep.subr.bf16.mxu0 0
    %4832 = vmatpush1.bf16.msra.mxu0 %v174
    %4833 = vmatprep.mubr.bf16.mxu0 %v4800
    %4834 = vmatmul.mubr.bf16.gmra.mrb[0].mxu0 %v4799
    %v4835 = vpop.f32.mrb[0].mxu0
    %v4836 = vadd.f32 0.0, %v4835
    %v4837 = vpop.f32.mrb[0].mxu0
    %v4838 = vpop.f32.mrb[0].mxu0
    %v4839 = vpop.f32.mrb[0].mxu0
    %4840 = vdwg.mxu0
    %4841 = vst [vmem:[#allocation9 + $0x78] sm:$0xff] %v4836
    %v4842 = vpack.c.bf16 %v4421, %v4421
    %v4843 = vpack.c.bf16 %v4428, %v4428
    %4844 = vmatprep.subr.bf16.mxu0 0
    %4845 = vmatpush1.bf16.msra.mxu0 %v159
    %4846 = vmatprep.subr.bf16.mxu0 0
    %4847 = vmatpush1.bf16.msra.mxu0 %v160
    %4848 = vmatprep.subr.bf16.mxu0 0
    %4849 = vmatpush1.bf16.msra.mxu0 %v161
    %4850 = vmatprep.subr.bf16.mxu0 0
    %4851 = vmatpush1.bf16.msra.mxu0 %v162
    %4852 = vmatprep.subr.bf16.mxu0 0
    %4853 = vmatpush1.bf16.msra.mxu0 %v163
    %4854 = vmatprep.subr.bf16.mxu0 0
    %4855 = vmatpush1.bf16.msra.mxu0 %v164
    %4856 = vmatprep.subr.bf16.mxu0 0
    %4857 = vmatpush1.bf16.msra.mxu0 %v165
    %4858 = vmatprep.subr.bf16.mxu0 0
    %4859 = vmatpush1.bf16.msra.mxu0 %v166
    %4860 = vmatprep.subr.bf16.mxu0 0
    %4861 = vmatpush1.bf16.msra.mxu0 %v167
    %4862 = vmatprep.subr.bf16.mxu0 0
    %4863 = vmatpush1.bf16.msra.mxu0 %v168
    %4864 = vmatprep.subr.bf16.mxu0 0
    %4865 = vmatpush1.bf16.msra.mxu0 %v169
    %4866 = vmatprep.subr.bf16.mxu0 0
    %4867 = vmatpush1.bf16.msra.mxu0 %v170
    %4868 = vmatprep.subr.bf16.mxu0 0
    %4869 = vmatpush1.bf16.msra.mxu0 %v171
    %4870 = vmatprep.subr.bf16.mxu0 0
    %4871 = vmatpush1.bf16.msra.mxu0 %v172
    %4872 = vmatprep.subr.bf16.mxu0 0
    %4873 = vmatpush1.bf16.msra.mxu0 %v173
    %4874 = vmatprep.subr.bf16.mxu0 0
    %4875 = vmatpush1.bf16.msra.mxu0 %v174
    %4876 = vmatprep.mubr.bf16.mxu0 %v4843
    %4877 = vmatmul.mubr.bf16.gmra.mrb[0].mxu0 %v4842
    %v4878 = vpop.f32.mrb[0].mxu0
    %v4879 = vadd.f32 0.0, %v4878
    %v4880 = vpop.f32.mrb[0].mxu0
    %v4881 = vpop.f32.mrb[0].mxu0
    %v4882 = vpop.f32.mrb[0].mxu0
    %4883 = vdwg.mxu0
    %4884 = vst [vmem:[#allocation9 + $0x80] sm:$0xff] %v4879
    %v4885 = vpack.c.bf16 %v4435, %v4435
    %v4886 = vpack.c.bf16 %v4442, %v4442
    %4887 = vmatprep.subr.bf16.mxu0 0
    %4888 = vmatpush1.bf16.msra.mxu0 %v159
    %4889 = vmatprep.subr.bf16.mxu0 0
    %4890 = vmatpush1.bf16.msra.mxu0 %v160
    %4891 = vmatprep.subr.bf16.mxu0 0
    %4892 = vmatpush1.bf16.msra.mxu0 %v161
    %4893 = vmatprep.subr.bf16.mxu0 0
    %4894 = vmatpush1.bf16.msra.mxu0 %v162
    %4895 = vmatprep.subr.bf16.mxu0 0
    %4896 = vmatpush1.bf16.msra.mxu0 %v163
    %4897 = vmatprep.subr.bf16.mxu0 0
    %4898 = vmatpush1.bf16.msra.mxu0 %v164
    %4899 = vmatprep.subr.bf16.mxu0 0
    %4900 = vmatpush1.bf16.msra.mxu0 %v165
    %4901 = vmatprep.subr.bf16.mxu0 0
    %4902 = vmatpush1.bf16.msra.mxu0 %v166
    %4903 = vmatprep.subr.bf16.mxu0 0
    %4904 = vmatpush1.bf16.msra.mxu0 %v167
    %4905 = vmatprep.subr.bf16.mxu0 0
    %4906 = vmatpush1.bf16.msra.mxu0 %v168
    %4907 = vmatprep.subr.bf16.mxu0 0
    %4908 = vmatpush1.bf16.msra.mxu0 %v169
    %4909 = vmatprep.subr.bf16.mxu0 0
    %4910 = vmatpush1.bf16.msra.mxu0 %v170
    %4911 = vmatprep.subr.bf16.mxu0 0
    %4912 = vmatpush1.bf16.msra.mxu0 %v171
    %4913 = vmatprep.subr.bf16.mxu0 0
    %4914 = vmatpush1.bf16.msra.mxu0 %v172
    %4915 = vmatprep.subr.bf16.mxu0 0
    %4916 = vmatpush1.bf16.msra.mxu0 %v173
    %4917 = vmatprep.subr.bf16.mxu0 0
    %4918 = vmatpush1.bf16.msra.mxu0 %v174
    %4919 = vmatprep.mubr.bf16.mxu0 %v4886
    %4920 = vmatmul.mubr.bf16.gmra.mrb[0].mxu0 %v4885
    %v4921 = vpop.f32.mrb[0].mxu0
    %v4922 = vadd.f32 0.0, %v4921
    %v4923 = vpop.f32.mrb[0].mxu0
    %v4924 = vpop.f32.mrb[0].mxu0
    %v4925 = vpop.f32.mrb[0].mxu0
    %4926 = vdwg.mxu0
    %4927 = vst [vmem:[#allocation9 + $0x88] sm:$0xff] %v4922
    %v4928 = vpack.c.bf16 %v4449, %v4449
    %v4929 = vpack.c.bf16 %v4456, %v4456
    %4930 = vmatprep.subr.bf16.mxu0 0
    %4931 = vmatpush1.bf16.msra.mxu0 %v159
    %4932 = vmatprep.subr.bf16.mxu0 0
    %4933 = vmatpush1.bf16.msra.mxu0 %v160
    %4934 = vmatprep.subr.bf16.mxu0 0
    %4935 = vmatpush1.bf16.msra.mxu0 %v161
    %4936 = vmatprep.subr.bf16.mxu0 0
    %4937 = vmatpush1.bf16.msra.mxu0 %v162
    %4938 = vmatprep.subr.bf16.mxu0 0
    %4939 = vmatpush1.bf16.msra.mxu0 %v163
    %4940 = vmatprep.subr.bf16.mxu0 0
    %4941 = vmatpush1.bf16.msra.mxu0 %v164
    %4942 = vmatprep.subr.bf16.mxu0 0
    %4943 = vmatpush1.bf16.msra.mxu0 %v165
    %4944 = vmatprep.subr.bf16.mxu0 0
    %4945 = vmatpush1.bf16.msra.mxu0 %v166
    %4946 = vmatprep.subr.bf16.mxu0 0
    %4947 = vmatpush1.bf16.msra.mxu0 %v167
    %4948 = vmatprep.subr.bf16.mxu0 0
    %4949 = vmatpush1.bf16.msra.mxu0 %v168
    %4950 = vmatprep.subr.bf16.mxu0 0
    %4951 = vmatpush1.bf16.msra.mxu0 %v169
    %4952 = vmatprep.subr.bf16.mxu0 0
    %4953 = vmatpush1.bf16.msra.mxu0 %v170
    %4954 = vmatprep.subr.bf16.mxu0 0
    %4955 = vmatpush1.bf16.msra.mxu0 %v171
    %4956 = vmatprep.subr.bf16.mxu0 0
    %4957 = vmatpush1.bf16.msra.mxu0 %v172
    %4958 = vmatprep.subr.bf16.mxu0 0
    %4959 = vmatpush1.bf16.msra.mxu0 %v173
    %4960 = vmatprep.subr.bf16.mxu0 0
    %4961 = vmatpush1.bf16.msra.mxu0 %v174
    %4962 = vmatprep.mubr.bf16.mxu0 %v4929
    %4963 = vmatmul.mubr.bf16.gmra.mrb[0].mxu0 %v4928
    %v4964 = vpop.f32.mrb[0].mxu0
    %v4965 = vadd.f32 0.0, %v4964
    %v4966 = vpop.f32.mrb[0].mxu0
    %v4967 = vpop.f32.mrb[0].mxu0
    %v4968 = vpop.f32.mrb[0].mxu0
    %4969 = vdwg.mxu0
    %4970 = vst [vmem:[#allocation9 + $0x90] sm:$0xff] %v4965
    %v4971 = vpack.c.bf16 %v4463, %v4463
    %v4972 = vpack.c.bf16 %v4470, %v4470
    %4973 = vmatprep.subr.bf16.mxu0 0
    %4974 = vmatpush1.bf16.msra.mxu0 %v159
    %4975 = vmatprep.subr.bf16.mxu0 0
    %4976 = vmatpush1.bf16.msra.mxu0 %v160
    %4977 = vmatprep.subr.bf16.mxu0 0
    %4978 = vmatpush1.bf16.msra.mxu0 %v161
    %4979 = vmatprep.subr.bf16.mxu0 0
    %4980 = vmatpush1.bf16.msra.mxu0 %v162
    %4981 = vmatprep.subr.bf16.mxu0 0
    %4982 = vmatpush1.bf16.msra.mxu0 %v163
    %4983 = vmatprep.subr.bf16.mxu0 0
    %4984 = vmatpush1.bf16.msra.mxu0 %v164
    %4985 = vmatprep.subr.bf16.mxu0 0
    %4986 = vmatpush1.bf16.msra.mxu0 %v165
    %4987 = vmatprep.subr.bf16.mxu0 0
    %4988 = vmatpush1.bf16.msra.mxu0 %v166
    %4989 = vmatprep.subr.bf16.mxu0 0
    %4990 = vmatpush1.bf16.msra.mxu0 %v167
    %4991 = vmatprep.subr.bf16.mxu0 0
    %4992 = vmatpush1.bf16.msra.mxu0 %v168
    %4993 = vmatprep.subr.bf16.mxu0 0
    %4994 = vmatpush1.bf16.msra.mxu0 %v169
    %4995 = vmatprep.subr.bf16.mxu0 0
    %4996 = vmatpush1.bf16.msra.mxu0 %v170
    %4997 = vmatprep.subr.bf16.mxu0 0
    %4998 = vmatpush1.bf16.msra.mxu0 %v171
    %4999 = vmatprep.subr.bf16.mxu0 0
    %5000 = vmatpush1.bf16.msra.mxu0 %v172
    %5001 = vmatprep.subr.bf16.mxu0 0
    %5002 = vmatpush1.bf16.msra.mxu0 %v173
    %5003 = vmatprep.subr.bf16.mxu0 0
    %5004 = vmatpush1.bf16.msra.mxu0 %v174
    %5005 = vmatprep.mubr.bf16.mxu0 %v4972
    %5006 = vmatmul.mubr.bf16.gmra.mrb[0].mxu0 %v4971
    %v5007 = vpop.f32.mrb[0].mxu0
    %v5008 = vadd.f32 0.0, %v5007
    %v5009 = vpop.f32.mrb[0].mxu0
    %v5010 = vpop.f32.mrb[0].mxu0
    %v5011 = vpop.f32.mrb[0].mxu0
    %5012 = vdwg.mxu0
    %5013 = vst [vmem:[#allocation9 + $0x98] sm:$0xff] %v5008
    %v5014 = vpack.c.bf16 %v4477, %v4477
    %v5015 = vpack.c.bf16 %v4484, %v4484
    %5016 = vmatprep.subr.bf16.mxu0 0
    %5017 = vmatpush1.bf16.msra.mxu0 %v159
    %5018 = vmatprep.subr.bf16.mxu0 0
    %5019 = vmatpush1.bf16.msra.mxu0 %v160
    %5020 = vmatprep.subr.bf16.mxu0 0
    %5021 = vmatpush1.bf16.msra.mxu0 %v161
    %5022 = vmatprep.subr.bf16.mxu0 0
    %5023 = vmatpush1.bf16.msra.mxu0 %v162
    %5024 = vmatprep.subr.bf16.mxu0 0
    %5025 = vmatpush1.bf16.msra.mxu0 %v163
    %5026 = vmatprep.subr.bf16.mxu0 0
    %5027 = vmatpush1.bf16.msra.mxu0 %v164
    %5028 = vmatprep.subr.bf16.mxu0 0
    %5029 = vmatpush1.bf16.msra.mxu0 %v165
    %5030 = vmatprep.subr.bf16.mxu0 0
    %5031 = vmatpush1.bf16.msra.mxu0 %v166
    %5032 = vmatprep.subr.bf16.mxu0 0
    %5033 = vmatpush1.bf16.msra.mxu0 %v167
    %5034 = vmatprep.subr.bf16.mxu0 0
    %5035 = vmatpush1.bf16.msra.mxu0 %v168
    %5036 = vmatprep.subr.bf16.mxu0 0
    %5037 = vmatpush1.bf16.msra.mxu0 %v169
    %5038 = vmatprep.subr.bf16.mxu0 0
    %5039 = vmatpush1.bf16.msra.mxu0 %v170
    %5040 = vmatprep.subr.bf16.mxu0 0
    %5041 = vmatpush1.bf16.msra.mxu0 %v171
    %5042 = vmatprep.subr.bf16.mxu0 0
    %5043 = vmatpush1.bf16.msra.mxu0 %v172
    %5044 = vmatprep.subr.bf16.mxu0 0
    %5045 = vmatpush1.bf16.msra.mxu0 %v173
    %5046 = vmatprep.subr.bf16.mxu0 0
    %5047 = vmatpush1.bf16.msra.mxu0 %v174
    %5048 = vmatprep.mubr.bf16.mxu0 %v5015
    %5049 = vmatmul.mubr.bf16.gmra.mrb[0].mxu0 %v5014
    %v5050 = vpop.f32.mrb[0].mxu0
    %v5051 = vadd.f32 0.0, %v5050
    %v5052 = vpop.f32.mrb[0].mxu0
    %v5053 = vpop.f32.mrb[0].mxu0
    %v5054 = vpop.f32.mrb[0].mxu0
    %5055 = vdwg.mxu0
    %5056 = vst [vmem:[#allocation9 + $0xa0] sm:$0xff] %v5051
    %v5057 = vpack.c.bf16 %v4491, %v4491
    %v5058 = vpack.c.bf16 %v4498, %v4498
    %5059 = vmatprep.subr.bf16.mxu0 0
    %5060 = vmatpush1.bf16.msra.mxu0 %v159
    %5061 = vmatprep.subr.bf16.mxu0 0
    %5062 = vmatpush1.bf16.msra.mxu0 %v160
    %5063 = vmatprep.subr.bf16.mxu0 0
    %5064 = vmatpush1.bf16.msra.mxu0 %v161
    %5065 = vmatprep.subr.bf16.mxu0 0
    %5066 = vmatpush1.bf16.msra.mxu0 %v162
    %5067 = vmatprep.subr.bf16.mxu0 0
    %5068 = vmatpush1.bf16.msra.mxu0 %v163
    %5069 = vmatprep.subr.bf16.mxu0 0
    %5070 = vmatpush1.bf16.msra.mxu0 %v164
    %5071 = vmatprep.subr.bf16.mxu0 0
    %5072 = vmatpush1.bf16.msra.mxu0 %v165
    %5073 = vmatprep.subr.bf16.mxu0 0
    %5074 = vmatpush1.bf16.msra.mxu0 %v166
    %5075 = vmatprep.subr.bf16.mxu0 0
    %5076 = vmatpush1.bf16.msra.mxu0 %v167
    %5077 = vmatprep.subr.bf16.mxu0 0
    %5078 = vmatpush1.bf16.msra.mxu0 %v168
    %5079 = vmatprep.subr.bf16.mxu0 0
    %5080 = vmatpush1.bf16.msra.mxu0 %v169
    %5081 = vmatprep.subr.bf16.mxu0 0
    %5082 = vmatpush1.bf16.msra.mxu0 %v170
    %5083 = vmatprep.subr.bf16.mxu0 0
    %5084 = vmatpush1.bf16.msra.mxu0 %v171
    %5085 = vmatprep.subr.bf16.mxu0 0
    %5086 = vmatpush1.bf16.msra.mxu0 %v172
    %5087 = vmatprep.subr.bf16.mxu0 0
    %5088 = vmatpush1.bf16.msra.mxu0 %v173
    %5089 = vmatprep.subr.bf16.mxu0 0
    %5090 = vmatpush1.bf16.msra.mxu0 %v174
    %5091 = vmatprep.mubr.bf16.mxu0 %v5058
    %5092 = vmatmul.mubr.bf16.gmra.mrb[0].mxu0 %v5057
    %v5093 = vpop.f32.mrb[0].mxu0
    %v5094 = vadd.f32 0.0, %v5093
    %v5095 = vpop.f32.mrb[0].mxu0
    %v5096 = vpop.f32.mrb[0].mxu0
    %v5097 = vpop.f32.mrb[0].mxu0
    %5098 = vdwg.mxu0
    %5099 = vst [vmem:[#allocation9 + $0xa8] sm:$0xff] %v5094
    %v5100 = vpack.c.bf16 %v4505, %v4505
    %v5101 = vpack.c.bf16 %v4512, %v4512
    %5102 = vmatprep.subr.bf16.mxu0 0
    %5103 = vmatpush1.bf16.msra.mxu0 %v159
    %5104 = vmatprep.subr.bf16.mxu0 0
    %5105 = vmatpush1.bf16.msra.mxu0 %v160
    %5106 = vmatprep.subr.bf16.mxu0 0
    %5107 = vmatpush1.bf16.msra.mxu0 %v161
    %5108 = vmatprep.subr.bf16.mxu0 0
    %5109 = vmatpush1.bf16.msra.mxu0 %v162
    %5110 = vmatprep.subr.bf16.mxu0 0
    %5111 = vmatpush1.bf16.msra.mxu0 %v163
    %5112 = vmatprep.subr.bf16.mxu0 0
    %5113 = vmatpush1.bf16.msra.mxu0 %v164
    %5114 = vmatprep.subr.bf16.mxu0 0
    %5115 = vmatpush1.bf16.msra.mxu0 %v165
    %5116 = vmatprep.subr.bf16.mxu0 0
    %5117 = vmatpush1.bf16.msra.mxu0 %v166
    %5118 = vmatprep.subr.bf16.mxu0 0
    %5119 = vmatpush1.bf16.msra.mxu0 %v167
    %5120 = vmatprep.subr.bf16.mxu0 0
    %5121 = vmatpush1.bf16.msra.mxu0 %v168
    %5122 = vmatprep.subr.bf16.mxu0 0
    %5123 = vmatpush1.bf16.msra.mxu0 %v169
    %5124 = vmatprep.subr.bf16.mxu0 0
    %5125 = vmatpush1.bf16.msra.mxu0 %v170
    %5126 = vmatprep.subr.bf16.mxu0 0
    %5127 = vmatpush1.bf16.msra.mxu0 %v171
    %5128 = vmatprep.subr.bf16.mxu0 0
    %5129 = vmatpush1.bf16.msra.mxu0 %v172
    %5130 = vmatprep.subr.bf16.mxu0 0
    %5131 = vmatpush1.bf16.msra.mxu0 %v173
    %5132 = vmatprep.subr.bf16.mxu0 0
    %5133 = vmatpush1.bf16.msra.mxu0 %v174
    %5134 = vmatprep.mubr.bf16.mxu0 %v5101
    %5135 = vmatmul.mubr.bf16.gmra.mrb[0].mxu0 %v5100
    %v5136 = vpop.f32.mrb[0].mxu0
    %v5137 = vadd.f32 0.0, %v5136
    %v5138 = vpop.f32.mrb[0].mxu0
    %v5139 = vpop.f32.mrb[0].mxu0
    %v5140 = vpop.f32.mrb[0].mxu0
    %5141 = vdwg.mxu0
    %5142 = vst [vmem:[#allocation9 + $0xb0] sm:$0xff] %v5137
    %v5143 = vpack.c.bf16 %v4519, %v4519
    %v5144 = vpack.c.bf16 %v4526, %v4526
    %5145 = vmatprep.subr.bf16.mxu0 0
    %5146 = vmatpush1.bf16.msra.mxu0 %v159
    %5147 = vmatprep.subr.bf16.mxu0 0
    %5148 = vmatpush1.bf16.msra.mxu0 %v160
    %5149 = vmatprep.subr.bf16.mxu0 0
    %5150 = vmatpush1.bf16.msra.mxu0 %v161
    %5151 = vmatprep.subr.bf16.mxu0 0
    %5152 = vmatpush1.bf16.msra.mxu0 %v162
    %5153 = vmatprep.subr.bf16.mxu0 0
    %5154 = vmatpush1.bf16.msra.mxu0 %v163
    %5155 = vmatprep.subr.bf16.mxu0 0
    %5156 = vmatpush1.bf16.msra.mxu0 %v164
    %5157 = vmatprep.subr.bf16.mxu0 0
    %5158 = vmatpush1.bf16.msra.mxu0 %v165
    %5159 = vmatprep.subr.bf16.mxu0 0
    %5160 = vmatpush1.bf16.msra.mxu0 %v166
    %5161 = vmatprep.subr.bf16.mxu0 0
    %5162 = vmatpush1.bf16.msra.mxu0 %v167
    %5163 = vmatprep.subr.bf16.mxu0 0
    %5164 = vmatpush1.bf16.msra.mxu0 %v168
    %5165 = vmatprep.subr.bf16.mxu0 0
    %5166 = vmatpush1.bf16.msra.mxu0 %v169
    %5167 = vmatprep.subr.bf16.mxu0 0
    %5168 = vmatpush1.bf16.msra.mxu0 %v170
    %5169 = vmatprep.subr.bf16.mxu0 0
    %5170 = vmatpush1.bf16.msra.mxu0 %v171
    %5171 = vmatprep.subr.bf16.mxu0 0
    %5172 = vmatpush1.bf16.msra.mxu0 %v172
    %5173 = vmatprep.subr.bf16.mxu0 0
    %5174 = vmatpush1.bf16.msra.mxu0 %v173
    %5175 = vmatprep.subr.bf16.mxu0 0
    %5176 = vmatpush1.bf16.msra.mxu0 %v174
    %5177 = vmatprep.mubr.bf16.mxu0 %v5144
    %5178 = vmatmul.mubr.bf16.gmra.mrb[0].mxu0 %v5143
    %v5179 = vpop.f32.mrb[0].mxu0
    %v5180 = vadd.f32 0.0, %v5179
    %v5181 = vpop.f32.mrb[0].mxu0
    %v5182 = vpop.f32.mrb[0].mxu0
    %v5183 = vpop.f32.mrb[0].mxu0
    %5184 = vdwg.mxu0
    %5185 = vst [vmem:[#allocation9 + $0xb8] sm:$0xff] %v5180
    %v5186 = vpack.c.bf16 %v4533, %v4533
    %v5187 = vpack.c.bf16 %v4540, %v4540
    %5188 = vmatprep.subr.bf16.mxu0 0
    %5189 = vmatpush1.bf16.msra.mxu0 %v159
    %5190 = vmatprep.subr.bf16.mxu0 0
    %5191 = vmatpush1.bf16.msra.mxu0 %v160
    %5192 = vmatprep.subr.bf16.mxu0 0
    %5193 = vmatpush1.bf16.msra.mxu0 %v161
    %5194 = vmatprep.subr.bf16.mxu0 0
    %5195 = vmatpush1.bf16.msra.mxu0 %v162
    %5196 = vmatprep.subr.bf16.mxu0 0
    %5197 = vmatpush1.bf16.msra.mxu0 %v163
    %5198 = vmatprep.subr.bf16.mxu0 0
    %5199 = vmatpush1.bf16.msra.mxu0 %v164
    %5200 = vmatprep.subr.bf16.mxu0 0
    %5201 = vmatpush1.bf16.msra.mxu0 %v165
    %5202 = vmatprep.subr.bf16.mxu0 0
    %5203 = vmatpush1.bf16.msra.mxu0 %v166
    %5204 = vmatprep.subr.bf16.mxu0 0
    %5205 = vmatpush1.bf16.msra.mxu0 %v167
    %5206 = vmatprep.subr.bf16.mxu0 0
    %5207 = vmatpush1.bf16.msra.mxu0 %v168
    %5208 = vmatprep.subr.bf16.mxu0 0
    %5209 = vmatpush1.bf16.msra.mxu0 %v169
    %5210 = vmatprep.subr.bf16.mxu0 0
    %5211 = vmatpush1.bf16.msra.mxu0 %v170
    %5212 = vmatprep.subr.bf16.mxu0 0
    %5213 = vmatpush1.bf16.msra.mxu0 %v171
    %5214 = vmatprep.subr.bf16.mxu0 0
    %5215 = vmatpush1.bf16.msra.mxu0 %v172
    %5216 = vmatprep.subr.bf16.mxu0 0
    %5217 = vmatpush1.bf16.msra.mxu0 %v173
    %5218 = vmatprep.subr.bf16.mxu0 0
    %5219 = vmatpush1.bf16.msra.mxu0 %v174
    %5220 = vmatprep.mubr.bf16.mxu0 %v5187
    %5221 = vmatmul.mubr.bf16.gmra.mrb[0].mxu0 %v5186
    %v5222 = vpop.f32.mrb[0].mxu0
    %v5223 = vadd.f32 0.0, %v5222
    %v5224 = vpop.f32.mrb[0].mxu0
    %v5225 = vpop.f32.mrb[0].mxu0
    %v5226 = vpop.f32.mrb[0].mxu0
    %5227 = vdwg.mxu0
    %5228 = vst [vmem:[#allocation9 + $0xc0] sm:$0xff] %v5223
    %v5229 = vld [vmem:[#allocation6 + $0x20] sm:$0xff]
    %v5230 = vld [vmem:[#allocation6 + $0x28] sm:$0xff]
    %v5231 = vld [vmem:[#allocation6 + $0x30] sm:$0xff]
    %v5232 = vld [vmem:[#allocation6 + $0x38] sm:$0xff]
    %v5233 = vld [vmem:[#allocation6 + $0xa0] sm:$0xff]
    %v5234 = vld [vmem:[#allocation6 + $0xa8] sm:$0xff]
    %v5235 = vld [vmem:[#allocation6 + $0xb0] sm:$0xff]
    %v5236 = vld [vmem:[#allocation6 + $0xb8] sm:$0xff]
    %v5237 = vld [vmem:[#allocation6 + $0x120] sm:$0xff]
    %v5238 = vld [vmem:[#allocation6 + $0x128] sm:$0xff]
    %v5239 = vld [vmem:[#allocation6 + $0x130] sm:$0xff]
    %v5240 = vld [vmem:[#allocation6 + $0x138] sm:$0xff]
    %v5241 = vld [vmem:[#allocation6 + $0x1a0] sm:$0xff]
    %v5242 = vld [vmem:[#allocation6 + $0x1a8] sm:$0xff]
    %v5243 = vld [vmem:[#allocation6 + $0x1b0] sm:$0xff]
    %v5244 = vld [vmem:[#allocation6 + $0x1b8] sm:$0xff]
    %v5245 = vld [vmem:[#allocation6 + $0x220] sm:$0xff]
    %v5246 = vld [vmem:[#allocation6 + $0x228] sm:$0xff]
    %v5247 = vld [vmem:[#allocation6 + $0x230] sm:$0xff]
    %v5248 = vld [vmem:[#allocation6 + $0x238] sm:$0xff]
    %v5249 = vld [vmem:[#allocation6 + $0x2a0] sm:$0xff]
    %v5250 = vld [vmem:[#allocation6 + $0x2a8] sm:$0xff]
    %v5251 = vld [vmem:[#allocation6 + $0x2b0] sm:$0xff]
    %v5252 = vld [vmem:[#allocation6 + $0x2b8] sm:$0xff]
    %v5253 = vld [vmem:[#allocation6 + $0x320] sm:$0xff]
    %v5254 = vld [vmem:[#allocation6 + $0x328] sm:$0xff]
    %v5255 = vld [vmem:[#allocation6 + $0x330] sm:$0xff]
    %v5256 = vld [vmem:[#allocation6 + $0x338] sm:$0xff]
    %v5257 = vld [vmem:[#allocation6 + $0x3a0] sm:$0xff]
    %v5258 = vld [vmem:[#allocation6 + $0x3a8] sm:$0xff]
    %v5259 = vld [vmem:[#allocation6 + $0x3b0] sm:$0xff]
    %v5260 = vld [vmem:[#allocation6 + $0x3b8] sm:$0xff]
    %v5261 = vld [vmem:[#allocation6 + $0x420] sm:$0xff]
    %v5262 = vld [vmem:[#allocation6 + $0x428] sm:$0xff]
    %v5263 = vld [vmem:[#allocation6 + $0x430] sm:$0xff]
    %v5264 = vld [vmem:[#allocation6 + $0x438] sm:$0xff]
    %v5265 = vld [vmem:[#allocation6 + $0x4a0] sm:$0xff]
    %v5266 = vld [vmem:[#allocation6 + $0x4a8] sm:$0xff]
    %v5267 = vld [vmem:[#allocation6 + $0x4b0] sm:$0xff]
    %v5268 = vld [vmem:[#allocation6 + $0x4b8] sm:$0xff]
    %v5269 = vld [vmem:[#allocation6 + $0x520] sm:$0xff]
    %v5270 = vld [vmem:[#allocation6 + $0x528] sm:$0xff]
    %v5271 = vld [vmem:[#allocation6 + $0x530] sm:$0xff]
    %v5272 = vld [vmem:[#allocation6 + $0x538] sm:$0xff]
    %v5273 = vld [vmem:[#allocation6 + $0x5a0] sm:$0xff]
    %v5274 = vld [vmem:[#allocation6 + $0x5a8] sm:$0xff]
    %v5275 = vld [vmem:[#allocation6 + $0x5b0] sm:$0xff]
    %v5276 = vld [vmem:[#allocation6 + $0x5b8] sm:$0xff]
    %v5277 = vld [vmem:[#allocation6 + $0x620] sm:$0xff]
    %v5278 = vld [vmem:[#allocation6 + $0x628] sm:$0xff]
    %v5279 = vld [vmem:[#allocation6 + $0x630] sm:$0xff]
    %v5280 = vld [vmem:[#allocation6 + $0x638] sm:$0xff]
    %v5281 = vld [vmem:[#allocation6 + $0x6a0] sm:$0xff]
    %v5282 = vld [vmem:[#allocation6 + $0x6a8] sm:$0xff]
    %v5283 = vld [vmem:[#allocation6 + $0x6b0] sm:$0xff]
    %v5284 = vld [vmem:[#allocation6 + $0x6b8] sm:$0xff]
    %v5285 = vld [vmem:[#allocation6 + $0x720] sm:$0xff]
    %v5286 = vld [vmem:[#allocation6 + $0x728] sm:$0xff]
    %v5287 = vld [vmem:[#allocation6 + $0x730] sm:$0xff]
    %v5288 = vld [vmem:[#allocation6 + $0x738] sm:$0xff]
    %v5289 = vld [vmem:[#allocation6 + $0x7a0] sm:$0xff]
    %v5290 = vld [vmem:[#allocation6 + $0x7a8] sm:$0xff]
    %v5291 = vld [vmem:[#allocation6 + $0x7b0] sm:$0xff]
    %v5292 = vld [vmem:[#allocation6 + $0x7b8] sm:$0xff]
    %v5293 = vld [vmem:[#allocation6 + $0x820] sm:$0xff]
    %v5294 = vld [vmem:[#allocation6 + $0x828] sm:$0xff]
    %v5295 = vld [vmem:[#allocation6 + $0x830] sm:$0xff]
    %v5296 = vld [vmem:[#allocation6 + $0x838] sm:$0xff]
    %v5297 = vld [vmem:[#allocation6 + $0x8a0] sm:$0xff]
    %v5298 = vld [vmem:[#allocation6 + $0x8a8] sm:$0xff]
    %v5299 = vld [vmem:[#allocation6 + $0x8b0] sm:$0xff]
    %v5300 = vld [vmem:[#allocation6 + $0x8b8] sm:$0xff]
    %v5301 = vld [vmem:[#allocation6 + $0x920] sm:$0xff]
    %v5302 = vld [vmem:[#allocation6 + $0x928] sm:$0xff]
    %v5303 = vld [vmem:[#allocation6 + $0x930] sm:$0xff]
    %v5304 = vld [vmem:[#allocation6 + $0x938] sm:$0xff]
    %v5305 = vld [vmem:[#allocation6 + $0x9a0] sm:$0xff]
    %v5306 = vld [vmem:[#allocation6 + $0x9a8] sm:$0xff]
    %v5307 = vld [vmem:[#allocation6 + $0x9b0] sm:$0xff]
    %v5308 = vld [vmem:[#allocation6 + $0x9b8] sm:$0xff]
    %v5309 = vld [vmem:[#allocation6 + $0xa20] sm:$0xff]
    %v5310 = vld [vmem:[#allocation6 + $0xa28] sm:$0xff]
    %v5311 = vld [vmem:[#allocation6 + $0xa30] sm:$0xff]
    %v5312 = vld [vmem:[#allocation6 + $0xa38] sm:$0xff]
    %v5313 = vld [vmem:[#allocation6 + $0xaa0] sm:$0xff]
    %v5314 = vld [vmem:[#allocation6 + $0xaa8] sm:$0xff]
    %v5315 = vld [vmem:[#allocation6 + $0xab0] sm:$0xff]
    %v5316 = vld [vmem:[#allocation6 + $0xab8] sm:$0xff]
    %v5317 = vld [vmem:[#allocation6 + $0xb20] sm:$0xff]
    %v5318 = vld [vmem:[#allocation6 + $0xb28] sm:$0xff]
    %v5319 = vld [vmem:[#allocation6 + $0xb30] sm:$0xff]
    %v5320 = vld [vmem:[#allocation6 + $0xb38] sm:$0xff]
    %v5321 = vld [vmem:[#allocation6 + $0xba0] sm:$0xff]
    %v5322 = vld [vmem:[#allocation6 + $0xba8] sm:$0xff]
    %v5323 = vld [vmem:[#allocation6 + $0xbb0] sm:$0xff]
    %v5324 = vld [vmem:[#allocation6 + $0xbb8] sm:$0xff]
    %v5325 = vld [vmem:[#allocation6 + $0xc20] sm:$0xff]
    %v5326 = vld [vmem:[#allocation6 + $0xc28] sm:$0xff]
    %v5327 = vld [vmem:[#allocation6 + $0xc30] sm:$0xff]
    %v5328 = vld [vmem:[#allocation6 + $0xc38] sm:$0xff]
    %v5329 = vld [vmem:[#allocation6 + $0xca0] sm:$0xff]
    %v5330 = vld [vmem:[#allocation6 + $0xca8] sm:$0xff]
    %v5331 = vld [vmem:[#allocation6 + $0xcb0] sm:$0xff]
    %v5332 = vld [vmem:[#allocation6 + $0xcb8] sm:$0xff]
    %v5333 = vld [vmem:[#allocation6 + $0xd20] sm:$0xff]
    %v5334 = vld [vmem:[#allocation6 + $0xd28] sm:$0xff]
    %v5335 = vld [vmem:[#allocation6 + $0xd30] sm:$0xff]
    %v5336 = vld [vmem:[#allocation6 + $0xd38] sm:$0xff]
    %v5337 = vld [vmem:[#allocation6 + $0xda0] sm:$0xff]
    %v5338 = vld [vmem:[#allocation6 + $0xda8] sm:$0xff]
    %v5339 = vld [vmem:[#allocation6 + $0xdb0] sm:$0xff]
    %v5340 = vld [vmem:[#allocation6 + $0xdb8] sm:$0xff]
    %v5341 = vld [vmem:[#allocation6 + $0xe20] sm:$0xff]
    %v5342 = vld [vmem:[#allocation6 + $0xe28] sm:$0xff]
    %v5343 = vld [vmem:[#allocation6 + $0xe30] sm:$0xff]
    %v5344 = vld [vmem:[#allocation6 + $0xe38] sm:$0xff]
    %v5345 = vld [vmem:[#allocation6 + $0xea0] sm:$0xff]
    %v5346 = vld [vmem:[#allocation6 + $0xea8] sm:$0xff]
    %v5347 = vld [vmem:[#allocation6 + $0xeb0] sm:$0xff]
    %v5348 = vld [vmem:[#allocation6 + $0xeb8] sm:$0xff]
    %v5349 = vld [vmem:[#allocation6 + $0xf20] sm:$0xff]
    %v5350 = vld [vmem:[#allocation6 + $0xf28] sm:$0xff]
    %v5351 = vld [vmem:[#allocation6 + $0xf30] sm:$0xff]
    %v5352 = vld [vmem:[#allocation6 + $0xf38] sm:$0xff]
    %v5353 = vld [vmem:[#allocation6 + $0xfa0] sm:$0xff]
    %v5354 = vld [vmem:[#allocation6 + $0xfa8] sm:$0xff]
    %v5355 = vld [vmem:[#allocation6 + $0xfb0] sm:$0xff]
    %v5356 = vld [vmem:[#allocation6 + $0xfb8] sm:$0xff]
    %v5485 = vunpack.c.l.b16 %v5229
    %v5486 = vunpack.c.h.b16 %v5229
    %v5487 = vunpack.c.l.b16 %v5230
    %v5488 = vunpack.c.h.b16 %v5230
    %v5489 = vunpack.c.l.b16 %v5231
    %v5490 = vunpack.c.h.b16 %v5231
    %v5491 = vunpack.c.l.b16 %v5232
    %v5492 = vunpack.c.h.b16 %v5232
    %v5493 = vunpack.c.l.b16 %v5233
    %v5494 = vunpack.c.h.b16 %v5233
    %v5495 = vunpack.c.l.b16 %v5234
    %v5496 = vunpack.c.h.b16 %v5234
    %v5497 = vunpack.c.l.b16 %v5235
    %v5498 = vunpack.c.h.b16 %v5235
    %v5499 = vunpack.c.l.b16 %v5236
    %v5500 = vunpack.c.h.b16 %v5236
    %v5501 = vunpack.c.l.b16 %v5237
    %v5502 = vunpack.c.h.b16 %v5237
    %v5503 = vunpack.c.l.b16 %v5238
    %v5504 = vunpack.c.h.b16 %v5238
    %v5505 = vunpack.c.l.b16 %v5239
    %v5506 = vunpack.c.h.b16 %v5239
    %v5507 = vunpack.c.l.b16 %v5240
    %v5508 = vunpack.c.h.b16 %v5240
    %v5509 = vunpack.c.l.b16 %v5241
    %v5510 = vunpack.c.h.b16 %v5241
    %v5511 = vunpack.c.l.b16 %v5242
    %v5512 = vunpack.c.h.b16 %v5242
    %v5513 = vunpack.c.l.b16 %v5243
    %v5514 = vunpack.c.h.b16 %v5243
    %v5515 = vunpack.c.l.b16 %v5244
    %v5516 = vunpack.c.h.b16 %v5244
    %v5517 = vunpack.c.l.b16 %v5245
    %v5518 = vunpack.c.h.b16 %v5245
    %v5519 = vunpack.c.l.b16 %v5246
    %v5520 = vunpack.c.h.b16 %v5246
    %v5521 = vunpack.c.l.b16 %v5247
    %v5522 = vunpack.c.h.b16 %v5247
    %v5523 = vunpack.c.l.b16 %v5248
    %v5524 = vunpack.c.h.b16 %v5248
    %v5525 = vunpack.c.l.b16 %v5249
    %v5526 = vunpack.c.h.b16 %v5249
    %v5527 = vunpack.c.l.b16 %v5250
    %v5528 = vunpack.c.h.b16 %v5250
    %v5529 = vunpack.c.l.b16 %v5251
    %v5530 = vunpack.c.h.b16 %v5251
    %v5531 = vunpack.c.l.b16 %v5252
    %v5532 = vunpack.c.h.b16 %v5252
    %v5533 = vunpack.c.l.b16 %v5253
    %v5534 = vunpack.c.h.b16 %v5253
    %v5535 = vunpack.c.l.b16 %v5254
    %v5536 = vunpack.c.h.b16 %v5254
    %v5537 = vunpack.c.l.b16 %v5255
    %v5538 = vunpack.c.h.b16 %v5255
    %v5539 = vunpack.c.l.b16 %v5256
    %v5540 = vunpack.c.h.b16 %v5256
    %v5541 = vunpack.c.l.b16 %v5257
    %v5542 = vunpack.c.h.b16 %v5257
    %v5543 = vunpack.c.l.b16 %v5258
    %v5544 = vunpack.c.h.b16 %v5258
    %v5545 = vunpack.c.l.b16 %v5259
    %v5546 = vunpack.c.h.b16 %v5259
    %v5547 = vunpack.c.l.b16 %v5260
    %v5548 = vunpack.c.h.b16 %v5260
    %v5549 = vunpack.c.l.b16 %v5261
    %v5550 = vunpack.c.h.b16 %v5261
    %v5551 = vunpack.c.l.b16 %v5262
    %v5552 = vunpack.c.h.b16 %v5262
    %v5553 = vunpack.c.l.b16 %v5263
    %v5554 = vunpack.c.h.b16 %v5263
    %v5555 = vunpack.c.l.b16 %v5264
    %v5556 = vunpack.c.h.b16 %v5264
    %v5557 = vunpack.c.l.b16 %v5265
    %v5558 = vunpack.c.h.b16 %v5265
    %v5559 = vunpack.c.l.b16 %v5266
    %v5560 = vunpack.c.h.b16 %v5266
    %v5561 = vunpack.c.l.b16 %v5267
    %v5562 = vunpack.c.h.b16 %v5267
    %v5563 = vunpack.c.l.b16 %v5268
    %v5564 = vunpack.c.h.b16 %v5268
    %v5565 = vunpack.c.l.b16 %v5269
    %v5566 = vunpack.c.h.b16 %v5269
    %v5567 = vunpack.c.l.b16 %v5270
    %v5568 = vunpack.c.h.b16 %v5270
    %v5569 = vunpack.c.l.b16 %v5271
    %v5570 = vunpack.c.h.b16 %v5271
    %v5571 = vunpack.c.l.b16 %v5272
    %v5572 = vunpack.c.h.b16 %v5272
    %v5573 = vunpack.c.l.b16 %v5273
    %v5574 = vunpack.c.h.b16 %v5273
    %v5575 = vunpack.c.l.b16 %v5274
    %v5576 = vunpack.c.h.b16 %v5274
    %v5577 = vunpack.c.l.b16 %v5275
    %v5578 = vunpack.c.h.b16 %v5275
    %v5579 = vunpack.c.l.b16 %v5276
    %v5580 = vunpack.c.h.b16 %v5276
    %v5581 = vunpack.c.l.b16 %v5277
    %v5582 = vunpack.c.h.b16 %v5277
    %v5583 = vunpack.c.l.b16 %v5278
    %v5584 = vunpack.c.h.b16 %v5278
    %v5585 = vunpack.c.l.b16 %v5279
    %v5586 = vunpack.c.h.b16 %v5279
    %v5587 = vunpack.c.l.b16 %v5280
    %v5588 = vunpack.c.h.b16 %v5280
    %v5589 = vunpack.c.l.b16 %v5281
    %v5590 = vunpack.c.h.b16 %v5281
    %v5591 = vunpack.c.l.b16 %v5282
    %v5592 = vunpack.c.h.b16 %v5282
    %v5593 = vunpack.c.l.b16 %v5283
    %v5594 = vunpack.c.h.b16 %v5283
    %v5595 = vunpack.c.l.b16 %v5284
    %v5596 = vunpack.c.h.b16 %v5284
    %v5597 = vunpack.c.l.b16 %v5285
    %v5598 = vunpack.c.h.b16 %v5285
    %v5599 = vunpack.c.l.b16 %v5286
    %v5600 = vunpack.c.h.b16 %v5286
    %v5601 = vunpack.c.l.b16 %v5287
    %v5602 = vunpack.c.h.b16 %v5287
    %v5603 = vunpack.c.l.b16 %v5288
    %v5604 = vunpack.c.h.b16 %v5288
    %v5605 = vunpack.c.l.b16 %v5289
    %v5606 = vunpack.c.h.b16 %v5289
    %v5607 = vunpack.c.l.b16 %v5290
    %v5608 = vunpack.c.h.b16 %v5290
    %v5609 = vunpack.c.l.b16 %v5291
    %v5610 = vunpack.c.h.b16 %v5291
    %v5611 = vunpack.c.l.b16 %v5292
    %v5612 = vunpack.c.h.b16 %v5292
    %v5613 = vunpack.c.l.b16 %v5293
    %v5614 = vunpack.c.h.b16 %v5293
    %v5615 = vunpack.c.l.b16 %v5294
    %v5616 = vunpack.c.h.b16 %v5294
    %v5617 = vunpack.c.l.b16 %v5295
    %v5618 = vunpack.c.h.b16 %v5295
    %v5619 = vunpack.c.l.b16 %v5296
    %v5620 = vunpack.c.h.b16 %v5296
    %v5621 = vunpack.c.l.b16 %v5297
    %v5622 = vunpack.c.h.b16 %v5297
    %v5623 = vunpack.c.l.b16 %v5298
    %v5624 = vunpack.c.h.b16 %v5298
    %v5625 = vunpack.c.l.b16 %v5299
    %v5626 = vunpack.c.h.b16 %v5299
    %v5627 = vunpack.c.l.b16 %v5300
    %v5628 = vunpack.c.h.b16 %v5300
    %v5629 = vunpack.c.l.b16 %v5301
    %v5630 = vunpack.c.h.b16 %v5301
    %v5631 = vunpack.c.l.b16 %v5302
    %v5632 = vunpack.c.h.b16 %v5302
    %v5633 = vunpack.c.l.b16 %v5303
    %v5634 = vunpack.c.h.b16 %v5303
    %v5635 = vunpack.c.l.b16 %v5304
    %v5636 = vunpack.c.h.b16 %v5304
    %v5637 = vunpack.c.l.b16 %v5305
    %v5638 = vunpack.c.h.b16 %v5305
    %v5639 = vunpack.c.l.b16 %v5306
    %v5640 = vunpack.c.h.b16 %v5306
    %v5641 = vunpack.c.l.b16 %v5307
    %v5642 = vunpack.c.h.b16 %v5307
    %v5643 = vunpack.c.l.b16 %v5308
    %v5644 = vunpack.c.h.b16 %v5308
    %v5645 = vunpack.c.l.b16 %v5309
    %v5646 = vunpack.c.h.b16 %v5309
    %v5647 = vunpack.c.l.b16 %v5310
    %v5648 = vunpack.c.h.b16 %v5310
    %v5649 = vunpack.c.l.b16 %v5311
    %v5650 = vunpack.c.h.b16 %v5311
    %v5651 = vunpack.c.l.b16 %v5312
    %v5652 = vunpack.c.h.b16 %v5312
    %v5653 = vunpack.c.l.b16 %v5313
    %v5654 = vunpack.c.h.b16 %v5313
    %v5655 = vunpack.c.l.b16 %v5314
    %v5656 = vunpack.c.h.b16 %v5314
    %v5657 = vunpack.c.l.b16 %v5315
    %v5658 = vunpack.c.h.b16 %v5315
    %v5659 = vunpack.c.l.b16 %v5316
    %v5660 = vunpack.c.h.b16 %v5316
    %v5661 = vunpack.c.l.b16 %v5317
    %v5662 = vunpack.c.h.b16 %v5317
    %v5663 = vunpack.c.l.b16 %v5318
    %v5664 = vunpack.c.h.b16 %v5318
    %v5665 = vunpack.c.l.b16 %v5319
    %v5666 = vunpack.c.h.b16 %v5319
    %v5667 = vunpack.c.l.b16 %v5320
    %v5668 = vunpack.c.h.b16 %v5320
    %v5669 = vunpack.c.l.b16 %v5321
    %v5670 = vunpack.c.h.b16 %v5321
    %v5671 = vunpack.c.l.b16 %v5322
    %v5672 = vunpack.c.h.b16 %v5322
    %v5673 = vunpack.c.l.b16 %v5323
    %v5674 = vunpack.c.h.b16 %v5323
    %v5675 = vunpack.c.l.b16 %v5324
    %v5676 = vunpack.c.h.b16 %v5324
    %v5677 = vunpack.c.l.b16 %v5325
    %v5678 = vunpack.c.h.b16 %v5325
    %v5679 = vunpack.c.l.b16 %v5326
    %v5680 = vunpack.c.h.b16 %v5326
    %v5681 = vunpack.c.l.b16 %v5327
    %v5682 = vunpack.c.h.b16 %v5327
    %v5683 = vunpack.c.l.b16 %v5328
    %v5684 = vunpack.c.h.b16 %v5328
    %v5685 = vunpack.c.l.b16 %v5329
    %v5686 = vunpack.c.h.b16 %v5329
    %v5687 = vunpack.c.l.b16 %v5330
    %v5688 = vunpack.c.h.b16 %v5330
    %v5689 = vunpack.c.l.b16 %v5331
    %v5690 = vunpack.c.h.b16 %v5331
    %v5691 = vunpack.c.l.b16 %v5332
    %v5692 = vunpack.c.h.b16 %v5332
    %v5693 = vunpack.c.l.b16 %v5333
    %v5694 = vunpack.c.h.b16 %v5333
    %v5695 = vunpack.c.l.b16 %v5334
    %v5696 = vunpack.c.h.b16 %v5334
    %v5697 = vunpack.c.l.b16 %v5335
    %v5698 = vunpack.c.h.b16 %v5335
    %v5699 = vunpack.c.l.b16 %v5336
    %v5700 = vunpack.c.h.b16 %v5336
    %v5701 = vunpack.c.l.b16 %v5337
    %v5702 = vunpack.c.h.b16 %v5337
    %v5703 = vunpack.c.l.b16 %v5338
    %v5704 = vunpack.c.h.b16 %v5338
    %v5705 = vunpack.c.l.b16 %v5339
    %v5706 = vunpack.c.h.b16 %v5339
    %v5707 = vunpack.c.l.b16 %v5340
    %v5708 = vunpack.c.h.b16 %v5340
    %v5709 = vunpack.c.l.b16 %v5341
    %v5710 = vunpack.c.h.b16 %v5341
    %v5711 = vunpack.c.l.b16 %v5342
    %v5712 = vunpack.c.h.b16 %v5342
    %v5713 = vunpack.c.l.b16 %v5343
    %v5714 = vunpack.c.h.b16 %v5343
    %v5715 = vunpack.c.l.b16 %v5344
    %v5716 = vunpack.c.h.b16 %v5344
    %v5717 = vunpack.c.l.b16 %v5345
    %v5718 = vunpack.c.h.b16 %v5345
    %v5719 = vunpack.c.l.b16 %v5346
    %v5720 = vunpack.c.h.b16 %v5346
    %v5721 = vunpack.c.l.b16 %v5347
    %v5722 = vunpack.c.h.b16 %v5347
    %v5723 = vunpack.c.l.b16 %v5348
    %v5724 = vunpack.c.h.b16 %v5348
    %v5725 = vunpack.c.l.b16 %v5349
    %v5726 = vunpack.c.h.b16 %v5349
    %v5727 = vunpack.c.l.b16 %v5350
    %v5728 = vunpack.c.h.b16 %v5350
    %v5729 = vunpack.c.l.b16 %v5351
    %v5730 = vunpack.c.h.b16 %v5351
    %v5731 = vunpack.c.l.b16 %v5352
    %v5732 = vunpack.c.h.b16 %v5352
    %v5733 = vunpack.c.l.b16 %v5353
    %v5734 = vunpack.c.h.b16 %v5353
    %v5735 = vunpack.c.l.b16 %v5354
    %v5736 = vunpack.c.h.b16 %v5354
    %v5737 = vunpack.c.l.b16 %v5355
    %v5738 = vunpack.c.h.b16 %v5355
    %v5739 = vunpack.c.l.b16 %v5356
    %v5740 = vunpack.c.h.b16 %v5356
    %v5741 = vpack.c.b16 %v5493, %v5485
    %v5742 = vpack.c.b16 %v5494, %v5486
    %v5743 = vpack.c.b16 %v5495, %v5487
    %v5744 = vpack.c.b16 %v5496, %v5488
    %v5745 = vpack.c.b16 %v5497, %v5489
    %v5746 = vpack.c.b16 %v5498, %v5490
    %v5747 = vpack.c.b16 %v5499, %v5491
    %v5748 = vpack.c.b16 %v5500, %v5492
    %v5749 = vpack.c.b16 %v5509, %v5501
    %v5750 = vpack.c.b16 %v5510, %v5502
    %v5751 = vpack.c.b16 %v5511, %v5503
    %v5752 = vpack.c.b16 %v5512, %v5504
    %v5753 = vpack.c.b16 %v5513, %v5505
    %v5754 = vpack.c.b16 %v5514, %v5506
    %v5755 = vpack.c.b16 %v5515, %v5507
    %v5756 = vpack.c.b16 %v5516, %v5508
    %v5757 = vpack.c.b16 %v5525, %v5517
    %v5758 = vpack.c.b16 %v5526, %v5518
    %v5759 = vpack.c.b16 %v5527, %v5519
    %v5760 = vpack.c.b16 %v5528, %v5520
    %v5761 = vpack.c.b16 %v5529, %v5521
    %v5762 = vpack.c.b16 %v5530, %v5522
    %v5763 = vpack.c.b16 %v5531, %v5523
    %v5764 = vpack.c.b16 %v5532, %v5524
    %v5765 = vpack.c.b16 %v5541, %v5533
    %v5766 = vpack.c.b16 %v5542, %v5534
    %v5767 = vpack.c.b16 %v5543, %v5535
    %v5768 = vpack.c.b16 %v5544, %v5536
    %v5769 = vpack.c.b16 %v5545, %v5537
    %v5770 = vpack.c.b16 %v5546, %v5538
    %v5771 = vpack.c.b16 %v5547, %v5539
    %v5772 = vpack.c.b16 %v5548, %v5540
    %v5773 = vpack.c.b16 %v5557, %v5549
    %v5774 = vpack.c.b16 %v5558, %v5550
    %v5775 = vpack.c.b16 %v5559, %v5551
    %v5776 = vpack.c.b16 %v5560, %v5552
    %v5777 = vpack.c.b16 %v5561, %v5553
    %v5778 = vpack.c.b16 %v5562, %v5554
    %v5779 = vpack.c.b16 %v5563, %v5555
    %v5780 = vpack.c.b16 %v5564, %v5556
    %v5781 = vpack.c.b16 %v5573, %v5565
    %v5782 = vpack.c.b16 %v5574, %v5566
    %v5783 = vpack.c.b16 %v5575, %v5567
    %v5784 = vpack.c.b16 %v5576, %v5568
    %v5785 = vpack.c.b16 %v5577, %v5569
    %v5786 = vpack.c.b16 %v5578, %v5570
    %v5787 = vpack.c.b16 %v5579, %v5571
    %v5788 = vpack.c.b16 %v5580, %v5572
    %v5789 = vpack.c.b16 %v5589, %v5581
    %v5790 = vpack.c.b16 %v5590, %v5582
    %v5791 = vpack.c.b16 %v5591, %v5583
    %v5792 = vpack.c.b16 %v5592, %v5584
    %v5793 = vpack.c.b16 %v5593, %v5585
    %v5794 = vpack.c.b16 %v5594, %v5586
    %v5795 = vpack.c.b16 %v5595, %v5587
    %v5796 = vpack.c.b16 %v5596, %v5588
    %v5797 = vpack.c.b16 %v5605, %v5597
    %v5798 = vpack.c.b16 %v5606, %v5598
    %v5799 = vpack.c.b16 %v5607, %v5599
    %v5800 = vpack.c.b16 %v5608, %v5600
    %v5801 = vpack.c.b16 %v5609, %v5601
    %v5802 = vpack.c.b16 %v5610, %v5602
    %v5803 = vpack.c.b16 %v5611, %v5603
    %v5804 = vpack.c.b16 %v5612, %v5604
    %v5805 = vpack.c.b16 %v5621, %v5613
    %v5806 = vpack.c.b16 %v5622, %v5614
    %v5807 = vpack.c.b16 %v5623, %v5615
    %v5808 = vpack.c.b16 %v5624, %v5616
    %v5809 = vpack.c.b16 %v5625, %v5617
    %v5810 = vpack.c.b16 %v5626, %v5618
    %v5811 = vpack.c.b16 %v5627, %v5619
    %v5812 = vpack.c.b16 %v5628, %v5620
    %v5813 = vpack.c.b16 %v5637, %v5629
    %v5814 = vpack.c.b16 %v5638, %v5630
    %v5815 = vpack.c.b16 %v5639, %v5631
    %v5816 = vpack.c.b16 %v5640, %v5632
    %v5817 = vpack.c.b16 %v5641, %v5633
    %v5818 = vpack.c.b16 %v5642, %v5634
    %v5819 = vpack.c.b16 %v5643, %v5635
    %v5820 = vpack.c.b16 %v5644, %v5636
    %v5821 = vpack.c.b16 %v5653, %v5645
    %v5822 = vpack.c.b16 %v5654, %v5646
    %v5823 = vpack.c.b16 %v5655, %v5647
    %v5824 = vpack.c.b16 %v5656, %v5648
    %v5825 = vpack.c.b16 %v5657, %v5649
    %v5826 = vpack.c.b16 %v5658, %v5650
    %v5827 = vpack.c.b16 %v5659, %v5651
    %v5828 = vpack.c.b16 %v5660, %v5652
    %v5829 = vpack.c.b16 %v5669, %v5661
    %v5830 = vpack.c.b16 %v5670, %v5662
    %v5831 = vpack.c.b16 %v5671, %v5663
    %v5832 = vpack.c.b16 %v5672, %v5664
    %v5833 = vpack.c.b16 %v5673, %v5665
    %v5834 = vpack.c.b16 %v5674, %v5666
    %v5835 = vpack.c.b16 %v5675, %v5667
    %v5836 = vpack.c.b16 %v5676, %v5668
    %v5837 = vpack.c.b16 %v5685, %v5677
    %v5838 = vpack.c.b16 %v5686, %v5678
    %v5839 = vpack.c.b16 %v5687, %v5679
    %v5840 = vpack.c.b16 %v5688, %v5680
    %v5841 = vpack.c.b16 %v5689, %v5681
    %v5842 = vpack.c.b16 %v5690, %v5682
    %v5843 = vpack.c.b16 %v5691, %v5683
    %v5844 = vpack.c.b16 %v5692, %v5684
    %v5845 = vpack.c.b16 %v5701, %v5693
    %v5846 = vpack.c.b16 %v5702, %v5694
    %v5847 = vpack.c.b16 %v5703, %v5695
    %v5848 = vpack.c.b16 %v5704, %v5696
    %v5849 = vpack.c.b16 %v5705, %v5697
    %v5850 = vpack.c.b16 %v5706, %v5698
    %v5851 = vpack.c.b16 %v5707, %v5699
    %v5852 = vpack.c.b16 %v5708, %v5700
    %v5853 = vpack.c.b16 %v5717, %v5709
    %v5854 = vpack.c.b16 %v5718, %v5710
    %v5855 = vpack.c.b16 %v5719, %v5711
    %v5856 = vpack.c.b16 %v5720, %v5712
    %v5857 = vpack.c.b16 %v5721, %v5713
    %v5858 = vpack.c.b16 %v5722, %v5714
    %v5859 = vpack.c.b16 %v5723, %v5715
    %v5860 = vpack.c.b16 %v5724, %v5716
    %v5861 = vpack.c.b16 %v5733, %v5725
    %v5862 = vpack.c.b16 %v5734, %v5726
    %v5863 = vpack.c.b16 %v5735, %v5727
    %v5864 = vpack.c.b16 %v5736, %v5728
    %v5865 = vpack.c.b16 %v5737, %v5729
    %v5866 = vpack.c.b16 %v5738, %v5730
    %v5867 = vpack.c.b16 %v5739, %v5731
    %v5868 = vpack.c.b16 %v5740, %v5732
    %5997 = vmatprep.subr.bf16.mxu0 %v5742
    %5998 = vmatpush1.bf16.msra.mxu0 %v5741
    %5999 = vmatprep.subr.bf16.mxu0 %v5750
    %6000 = vmatpush1.bf16.msra.mxu0 %v5749
    %6001 = vmatprep.subr.bf16.mxu0 %v5758
    %6002 = vmatpush1.bf16.msra.mxu0 %v5757
    %6003 = vmatprep.subr.bf16.mxu0 %v5766
    %6004 = vmatpush1.bf16.msra.mxu0 %v5765
    %6005 = vmatprep.subr.bf16.mxu0 %v5774
    %6006 = vmatpush1.bf16.msra.mxu0 %v5773
    %6007 = vmatprep.subr.bf16.mxu0 %v5782
    %6008 = vmatpush1.bf16.msra.mxu0 %v5781
    %6009 = vmatprep.subr.bf16.mxu0 %v5790
    %6010 = vmatpush1.bf16.msra.mxu0 %v5789
    %6011 = vmatprep.subr.bf16.mxu0 %v5798
    %6012 = vmatpush1.bf16.msra.mxu0 %v5797
    %6013 = vmatprep.subr.bf16.mxu0 %v5806
    %6014 = vmatpush1.bf16.msra.mxu0 %v5805
    %6015 = vmatprep.subr.bf16.mxu0 %v5814
    %6016 = vmatpush1.bf16.msra.mxu0 %v5813
    %6017 = vmatprep.subr.bf16.mxu0 %v5822
    %6018 = vmatpush1.bf16.msra.mxu0 %v5821
    %6019 = vmatprep.subr.bf16.mxu0 %v5830
    %6020 = vmatpush1.bf16.msra.mxu0 %v5829
    %6021 = vmatprep.subr.bf16.mxu0 %v5838
    %6022 = vmatpush1.bf16.msra.mxu0 %v5837
    %6023 = vmatprep.subr.bf16.mxu0 %v5846
    %6024 = vmatpush1.bf16.msra.mxu0 %v5845
    %6025 = vmatprep.subr.bf16.mxu0 %v5854
    %6026 = vmatpush1.bf16.msra.mxu0 %v5853
    %6027 = vmatprep.subr.bf16.mxu0 %v5862
    %6028 = vmatpush1.bf16.msra.mxu0 %v5861
    %6029 = vmatprep.mubr.bf16.mxu0 %v92
    %6030 = vmatmul.mubr.bf16.gmra.mrb[0].mxu0 %v91
    %v6031 = vpop.f32.mrb[0].mxu0
    %v6032 = vadd.f32 0.0, %v6031
    %v6033 = vpop.f32.mrb[0].mxu0
    %v6034 = vadd.f32 0.0, %v6033
    %v6035 = vpop.f32.mrb[0].mxu0
    %v6036 = vpop.f32.mrb[0].mxu0
    %6037 = vdwg.mxu0
    %6038 = vmatprep.subr.bf16.mxu0 %v5744
    %6039 = vmatpush1.bf16.msra.mxu0 %v5743
    %6040 = vmatprep.subr.bf16.mxu0 %v5752
    %6041 = vmatpush1.bf16.msra.mxu0 %v5751
    %6042 = vmatprep.subr.bf16.mxu0 %v5760
    %6043 = vmatpush1.bf16.msra.mxu0 %v5759
    %6044 = vmatprep.subr.bf16.mxu0 %v5768
    %6045 = vmatpush1.bf16.msra.mxu0 %v5767
    %6046 = vmatprep.subr.bf16.mxu0 %v5776
    %6047 = vmatpush1.bf16.msra.mxu0 %v5775
    %6048 = vmatprep.subr.bf16.mxu0 %v5784
    %6049 = vmatpush1.bf16.msra.mxu0 %v5783
    %6050 = vmatprep.subr.bf16.mxu0 %v5792
    %6051 = vmatpush1.bf16.msra.mxu0 %v5791
    %6052 = vmatprep.subr.bf16.mxu0 %v5800
    %6053 = vmatpush1.bf16.msra.mxu0 %v5799
    %6054 = vmatprep.subr.bf16.mxu0 %v5808
    %6055 = vmatpush1.bf16.msra.mxu0 %v5807
    %6056 = vmatprep.subr.bf16.mxu0 %v5816
    %6057 = vmatpush1.bf16.msra.mxu0 %v5815
    %6058 = vmatprep.subr.bf16.mxu0 %v5824
    %6059 = vmatpush1.bf16.msra.mxu0 %v5823
    %6060 = vmatprep.subr.bf16.mxu0 %v5832
    %6061 = vmatpush1.bf16.msra.mxu0 %v5831
    %6062 = vmatprep.subr.bf16.mxu0 %v5840
    %6063 = vmatpush1.bf16.msra.mxu0 %v5839
    %6064 = vmatprep.subr.bf16.mxu0 %v5848
    %6065 = vmatpush1.bf16.msra.mxu0 %v5847
    %6066 = vmatprep.subr.bf16.mxu0 %v5856
    %6067 = vmatpush1.bf16.msra.mxu0 %v5855
    %6068 = vmatprep.subr.bf16.mxu0 %v5864
    %6069 = vmatpush1.bf16.msra.mxu0 %v5863
    %6070 = vmatprep.mubr.bf16.mxu0 %v92
    %6071 = vmatmul.mubr.bf16.gmra.mrb[0].mxu0 %v91
    %v6072 = vpop.f32.mrb[0].mxu0
    %v6073 = vadd.f32 0.0, %v6072
    %v6074 = vpop.f32.mrb[0].mxu0
    %v6075 = vadd.f32 0.0, %v6074
    %v6076 = vpop.f32.mrb[0].mxu0
    %v6077 = vpop.f32.mrb[0].mxu0
    %6078 = vdwg.mxu0
    %6079 = vmatprep.subr.bf16.mxu0 %v5746
    %6080 = vmatpush1.bf16.msra.mxu0 %v5745
    %6081 = vmatprep.subr.bf16.mxu0 %v5754
    %6082 = vmatpush1.bf16.msra.mxu0 %v5753
    %6083 = vmatprep.subr.bf16.mxu0 %v5762
    %6084 = vmatpush1.bf16.msra.mxu0 %v5761
    %6085 = vmatprep.subr.bf16.mxu0 %v5770
    %6086 = vmatpush1.bf16.msra.mxu0 %v5769
    %6087 = vmatprep.subr.bf16.mxu0 %v5778
    %6088 = vmatpush1.bf16.msra.mxu0 %v5777
    %6089 = vmatprep.subr.bf16.mxu0 %v5786
    %6090 = vmatpush1.bf16.msra.mxu0 %v5785
    %6091 = vmatprep.subr.bf16.mxu0 %v5794
    %6092 = vmatpush1.bf16.msra.mxu0 %v5793
    %6093 = vmatprep.subr.bf16.mxu0 %v5802
    %6094 = vmatpush1.bf16.msra.mxu0 %v5801
    %6095 = vmatprep.subr.bf16.mxu0 %v5810
    %6096 = vmatpush1.bf16.msra.mxu0 %v5809
    %6097 = vmatprep.subr.bf16.mxu0 %v5818
    %6098 = vmatpush1.bf16.msra.mxu0 %v5817
    %6099 = vmatprep.subr.bf16.mxu0 %v5826
    %6100 = vmatpush1.bf16.msra.mxu0 %v5825
    %6101 = vmatprep.subr.bf16.mxu0 %v5834
    %6102 = vmatpush1.bf16.msra.mxu0 %v5833
    %6103 = vmatprep.subr.bf16.mxu0 %v5842
    %6104 = vmatpush1.bf16.msra.mxu0 %v5841
    %6105 = vmatprep.subr.bf16.mxu0 %v5850
    %6106 = vmatpush1.bf16.msra.mxu0 %v5849
    %6107 = vmatprep.subr.bf16.mxu0 %v5858
    %6108 = vmatpush1.bf16.msra.mxu0 %v5857
    %6109 = vmatprep.subr.bf16.mxu0 %v5866
    %6110 = vmatpush1.bf16.msra.mxu0 %v5865
    %6111 = vmatprep.mubr.bf16.mxu0 %v92
    %6112 = vmatmul.mubr.bf16.gmra.mrb[0].mxu0 %v91
    %v6113 = vpop.f32.mrb[0].mxu0
    %v6114 = vadd.f32 0.0, %v6113
    %v6115 = vpop.f32.mrb[0].mxu0
    %v6116 = vadd.f32 0.0, %v6115
    %v6117 = vpop.f32.mrb[0].mxu0
    %v6118 = vpop.f32.mrb[0].mxu0
    %6119 = vdwg.mxu0
    %6120 = vmatprep.subr.bf16.mxu0 %v5748
    %6121 = vmatpush1.bf16.msra.mxu0 %v5747
    %6122 = vmatprep.subr.bf16.mxu0 %v5756
    %6123 = vmatpush1.bf16.msra.mxu0 %v5755
    %6124 = vmatprep.subr.bf16.mxu0 %v5764
    %6125 = vmatpush1.bf16.msra.mxu0 %v5763
    %6126 = vmatprep.subr.bf16.mxu0 %v5772
    %6127 = vmatpush1.bf16.msra.mxu0 %v5771
    %6128 = vmatprep.subr.bf16.mxu0 %v5780
    %6129 = vmatpush1.bf16.msra.mxu0 %v5779
    %6130 = vmatprep.subr.bf16.mxu0 %v5788
    %6131 = vmatpush1.bf16.msra.mxu0 %v5787
    %6132 = vmatprep.subr.bf16.mxu0 %v5796
    %6133 = vmatpush1.bf16.msra.mxu0 %v5795
    %6134 = vmatprep.subr.bf16.mxu0 %v5804
    %6135 = vmatpush1.bf16.msra.mxu0 %v5803
    %6136 = vmatprep.subr.bf16.mxu0 %v5812
    %6137 = vmatpush1.bf16.msra.mxu0 %v5811
    %6138 = vmatprep.subr.bf16.mxu0 %v5820
    %6139 = vmatpush1.bf16.msra.mxu0 %v5819
    %6140 = vmatprep.subr.bf16.mxu0 %v5828
    %6141 = vmatpush1.bf16.msra.mxu0 %v5827
    %6142 = vmatprep.subr.bf16.mxu0 %v5836
    %6143 = vmatpush1.bf16.msra.mxu0 %v5835
    %6144 = vmatprep.subr.bf16.mxu0 %v5844
    %6145 = vmatpush1.bf16.msra.mxu0 %v5843
    %6146 = vmatprep.subr.bf16.mxu0 %v5852
    %6147 = vmatpush1.bf16.msra.mxu0 %v5851
    %6148 = vmatprep.subr.bf16.mxu0 %v5860
    %6149 = vmatpush1.bf16.msra.mxu0 %v5859
    %6150 = vmatprep.subr.bf16.mxu0 %v5868
    %6151 = vmatpush1.bf16.msra.mxu0 %v5867
    %6152 = vmatprep.mubr.bf16.mxu0 %v92
    %6153 = vmatmul.mubr.bf16.gmra.mrb[0].mxu0 %v91
    %v6154 = vpop.f32.mrb[0].mxu0
    %v6155 = vadd.f32 0.0, %v6154
    %v6156 = vpop.f32.mrb[0].mxu0
    %v6157 = vadd.f32 0.0, %v6156
    %v6158 = vpop.f32.mrb[0].mxu0
    %v6159 = vpop.f32.mrb[0].mxu0
    %6160 = vdwg.mxu0
    %v6161 = vld [vmem:[#allocation6 + $0x60] sm:$0xff]
    %v6162 = vld [vmem:[#allocation6 + $0x68] sm:$0xff]
    %v6163 = vld [vmem:[#allocation6 + $0x70] sm:$0xff]
    %v6164 = vld [vmem:[#allocation6 + $0x78] sm:$0xff]
    %v6165 = vld [vmem:[#allocation6 + $0xe0] sm:$0xff]
    %v6166 = vld [vmem:[#allocation6 + $0xe8] sm:$0xff]
    %v6167 = vld [vmem:[#allocation6 + $0xf0] sm:$0xff]
    %v6168 = vld [vmem:[#allocation6 + $0xf8] sm:$0xff]
    %v6169 = vld [vmem:[#allocation6 + $0x160] sm:$0xff]
    %v6170 = vld [vmem:[#allocation6 + $0x168] sm:$0xff]
    %v6171 = vld [vmem:[#allocation6 + $0x170] sm:$0xff]
    %v6172 = vld [vmem:[#allocation6 + $0x178] sm:$0xff]
    %v6173 = vld [vmem:[#allocation6 + $0x1e0] sm:$0xff]
    %v6174 = vld [vmem:[#allocation6 + $0x1e8] sm:$0xff]
    %v6175 = vld [vmem:[#allocation6 + $0x1f0] sm:$0xff]
    %v6176 = vld [vmem:[#allocation6 + $0x1f8] sm:$0xff]
    %v6177 = vld [vmem:[#allocation6 + $0x260] sm:$0xff]
    %v6178 = vld [vmem:[#allocation6 + $0x268] sm:$0xff]
    %v6179 = vld [vmem:[#allocation6 + $0x270] sm:$0xff]
    %v6180 = vld [vmem:[#allocation6 + $0x278] sm:$0xff]
    %v6181 = vld [vmem:[#allocation6 + $0x2e0] sm:$0xff]
    %v6182 = vld [vmem:[#allocation6 + $0x2e8] sm:$0xff]
    %v6183 = vld [vmem:[#allocation6 + $0x2f0] sm:$0xff]
    %v6184 = vld [vmem:[#allocation6 + $0x2f8] sm:$0xff]
    %v6185 = vld [vmem:[#allocation6 + $0x360] sm:$0xff]
    %v6186 = vld [vmem:[#allocation6 + $0x368] sm:$0xff]
    %v6187 = vld [vmem:[#allocation6 + $0x370] sm:$0xff]
    %v6188 = vld [vmem:[#allocation6 + $0x378] sm:$0xff]
    %v6189 = vld [vmem:[#allocation6 + $0x3e0] sm:$0xff]
    %v6190 = vld [vmem:[#allocation6 + $0x3e8] sm:$0xff]
    %v6191 = vld [vmem:[#allocation6 + $0x3f0] sm:$0xff]
    %v6192 = vld [vmem:[#allocation6 + $0x3f8] sm:$0xff]
    %v6193 = vld [vmem:[#allocation6 + $0x460] sm:$0xff]
    %v6194 = vld [vmem:[#allocation6 + $0x468] sm:$0xff]
    %v6195 = vld [vmem:[#allocation6 + $0x470] sm:$0xff]
    %v6196 = vld [vmem:[#allocation6 + $0x478] sm:$0xff]
    %v6197 = vld [vmem:[#allocation6 + $0x4e0] sm:$0xff]
    %v6198 = vld [vmem:[#allocation6 + $0x4e8] sm:$0xff]
    %v6199 = vld [vmem:[#allocation6 + $0x4f0] sm:$0xff]
    %v6200 = vld [vmem:[#allocation6 + $0x4f8] sm:$0xff]
    %v6201 = vld [vmem:[#allocation6 + $0x560] sm:$0xff]
    %v6202 = vld [vmem:[#allocation6 + $0x568] sm:$0xff]
    %v6203 = vld [vmem:[#allocation6 + $0x570] sm:$0xff]
    %v6204 = vld [vmem:[#allocation6 + $0x578] sm:$0xff]
    %v6205 = vld [vmem:[#allocation6 + $0x5e0] sm:$0xff]
    %v6206 = vld [vmem:[#allocation6 + $0x5e8] sm:$0xff]
    %v6207 = vld [vmem:[#allocation6 + $0x5f0] sm:$0xff]
    %v6208 = vld [vmem:[#allocation6 + $0x5f8] sm:$0xff]
    %v6209 = vld [vmem:[#allocation6 + $0x660] sm:$0xff]
    %v6210 = vld [vmem:[#allocation6 + $0x668] sm:$0xff]
    %v6211 = vld [vmem:[#allocation6 + $0x670] sm:$0xff]
    %v6212 = vld [vmem:[#allocation6 + $0x678] sm:$0xff]
    %v6213 = vld [vmem:[#allocation6 + $0x6e0] sm:$0xff]
    %v6214 = vld [vmem:[#allocation6 + $0x6e8] sm:$0xff]
    %v6215 = vld [vmem:[#allocation6 + $0x6f0] sm:$0xff]
    %v6216 = vld [vmem:[#allocation6 + $0x6f8] sm:$0xff]
    %v6217 = vld [vmem:[#allocation6 + $0x760] sm:$0xff]
    %v6218 = vld [vmem:[#allocation6 + $0x768] sm:$0xff]
    %v6219 = vld [vmem:[#allocation6 + $0x770] sm:$0xff]
    %v6220 = vld [vmem:[#allocation6 + $0x778] sm:$0xff]
    %v6221 = vld [vmem:[#allocation6 + $0x7e0] sm:$0xff]
    %v6222 = vld [vmem:[#allocation6 + $0x7e8] sm:$0xff]
    %v6223 = vld [vmem:[#allocation6 + $0x7f0] sm:$0xff]
    %v6224 = vld [vmem:[#allocation6 + $0x7f8] sm:$0xff]
    %v6225 = vld [vmem:[#allocation6 + $0x860] sm:$0xff]
    %v6226 = vld [vmem:[#allocation6 + $0x868] sm:$0xff]
    %v6227 = vld [vmem:[#allocation6 + $0x870] sm:$0xff]
    %v6228 = vld [vmem:[#allocation6 + $0x878] sm:$0xff]
    %v6229 = vld [vmem:[#allocation6 + $0x8e0] sm:$0xff]
    %v6230 = vld [vmem:[#allocation6 + $0x8e8] sm:$0xff]
    %v6231 = vld [vmem:[#allocation6 + $0x8f0] sm:$0xff]
    %v6232 = vld [vmem:[#allocation6 + $0x8f8] sm:$0xff]
    %v6233 = vld [vmem:[#allocation6 + $0x960] sm:$0xff]
    %v6234 = vld [vmem:[#allocation6 + $0x968] sm:$0xff]
    %v6235 = vld [vmem:[#allocation6 + $0x970] sm:$0xff]
    %v6236 = vld [vmem:[#allocation6 + $0x978] sm:$0xff]
    %v6237 = vld [vmem:[#allocation6 + $0x9e0] sm:$0xff]
    %v6238 = vld [vmem:[#allocation6 + $0x9e8] sm:$0xff]
    %v6239 = vld [vmem:[#allocation6 + $0x9f0] sm:$0xff]
    %v6240 = vld [vmem:[#allocation6 + $0x9f8] sm:$0xff]
    %v6241 = vld [vmem:[#allocation6 + $0xa60] sm:$0xff]
    %v6242 = vld [vmem:[#allocation6 + $0xa68] sm:$0xff]
    %v6243 = vld [vmem:[#allocation6 + $0xa70] sm:$0xff]
    %v6244 = vld [vmem:[#allocation6 + $0xa78] sm:$0xff]
    %v6245 = vld [vmem:[#allocation6 + $0xae0] sm:$0xff]
    %v6246 = vld [vmem:[#allocation6 + $0xae8] sm:$0xff]
    %v6247 = vld [vmem:[#allocation6 + $0xaf0] sm:$0xff]
    %v6248 = vld [vmem:[#allocation6 + $0xaf8] sm:$0xff]
    %v6249 = vld [vmem:[#allocation6 + $0xb60] sm:$0xff]
    %v6250 = vld [vmem:[#allocation6 + $0xb68] sm:$0xff]
    %v6251 = vld [vmem:[#allocation6 + $0xb70] sm:$0xff]
    %v6252 = vld [vmem:[#allocation6 + $0xb78] sm:$0xff]
    %v6253 = vld [vmem:[#allocation6 + $0xbe0] sm:$0xff]
    %v6254 = vld [vmem:[#allocation6 + $0xbe8] sm:$0xff]
    %v6255 = vld [vmem:[#allocation6 + $0xbf0] sm:$0xff]
    %v6256 = vld [vmem:[#allocation6 + $0xbf8] sm:$0xff]
    %v6257 = vld [vmem:[#allocation6 + $0xc60] sm:$0xff]
    %v6258 = vld [vmem:[#allocation6 + $0xc68] sm:$0xff]
    %v6259 = vld [vmem:[#allocation6 + $0xc70] sm:$0xff]
    %v6260 = vld [vmem:[#allocation6 + $0xc78] sm:$0xff]
    %v6261 = vld [vmem:[#allocation6 + $0xce0] sm:$0xff]
    %v6262 = vld [vmem:[#allocation6 + $0xce8] sm:$0xff]
    %v6263 = vld [vmem:[#allocation6 + $0xcf0] sm:$0xff]
    %v6264 = vld [vmem:[#allocation6 + $0xcf8] sm:$0xff]
    %v6265 = vld [vmem:[#allocation6 + $0xd60] sm:$0xff]
    %v6266 = vld [vmem:[#allocation6 + $0xd68] sm:$0xff]
    %v6267 = vld [vmem:[#allocation6 + $0xd70] sm:$0xff]
    %v6268 = vld [vmem:[#allocation6 + $0xd78] sm:$0xff]
    %v6269 = vld [vmem:[#allocation6 + $0xde0] sm:$0xff]
    %v6270 = vld [vmem:[#allocation6 + $0xde8] sm:$0xff]
    %v6271 = vld [vmem:[#allocation6 + $0xdf0] sm:$0xff]
    %v6272 = vld [vmem:[#allocation6 + $0xdf8] sm:$0xff]
    %v6273 = vld [vmem:[#allocation6 + $0xe60] sm:$0xff]
    %v6274 = vld [vmem:[#allocation6 + $0xe68] sm:$0xff]
    %v6275 = vld [vmem:[#allocation6 + $0xe70] sm:$0xff]
    %v6276 = vld [vmem:[#allocation6 + $0xe78] sm:$0xff]
    %v6277 = vld [vmem:[#allocation6 + $0xee0] sm:$0xff]
    %v6278 = vld [vmem:[#allocation6 + $0xee8] sm:$0xff]
    %v6279 = vld [vmem:[#allocation6 + $0xef0] sm:$0xff]
    %v6280 = vld [vmem:[#allocation6 + $0xef8] sm:$0xff]
    %v6281 = vld [vmem:[#allocation6 + $0xf60] sm:$0xff]
    %v6282 = vld [vmem:[#allocation6 + $0xf68] sm:$0xff]
    %v6283 = vld [vmem:[#allocation6 + $0xf70] sm:$0xff]
    %v6284 = vld [vmem:[#allocation6 + $0xf78] sm:$0xff]
    %v6285 = vld [vmem:[#allocation6 + $0xfe0] sm:$0xff]
    %v6286 = vld [vmem:[#allocation6 + $0xfe8] sm:$0xff]
    %v6287 = vld [vmem:[#allocation6 + $0xff0] sm:$0xff]
    %v6288 = vld [vmem:[#allocation6 + $0xff8] sm:$0xff]
    %v6417 = vunpack.c.l.b16 %v6161
    %v6418 = vunpack.c.h.b16 %v6161
    %v6419 = vunpack.c.l.b16 %v6162
    %v6420 = vunpack.c.h.b16 %v6162
    %v6421 = vunpack.c.l.b16 %v6163
    %v6422 = vunpack.c.h.b16 %v6163
    %v6423 = vunpack.c.l.b16 %v6164
    %v6424 = vunpack.c.h.b16 %v6164
    %v6425 = vunpack.c.l.b16 %v6165
    %v6426 = vunpack.c.h.b16 %v6165
    %v6427 = vunpack.c.l.b16 %v6166
    %v6428 = vunpack.c.h.b16 %v6166
    %v6429 = vunpack.c.l.b16 %v6167
    %v6430 = vunpack.c.h.b16 %v6167
    %v6431 = vunpack.c.l.b16 %v6168
    %v6432 = vunpack.c.h.b16 %v6168
    %v6433 = vunpack.c.l.b16 %v6169
    %v6434 = vunpack.c.h.b16 %v6169
    %v6435 = vunpack.c.l.b16 %v6170
    %v6436 = vunpack.c.h.b16 %v6170
    %v6437 = vunpack.c.l.b16 %v6171
    %v6438 = vunpack.c.h.b16 %v6171
    %v6439 = vunpack.c.l.b16 %v6172
    %v6440 = vunpack.c.h.b16 %v6172
    %v6441 = vunpack.c.l.b16 %v6173
    %v6442 = vunpack.c.h.b16 %v6173
    %v6443 = vunpack.c.l.b16 %v6174
    %v6444 = vunpack.c.h.b16 %v6174
    %v6445 = vunpack.c.l.b16 %v6175
    %v6446 = vunpack.c.h.b16 %v6175
    %v6447 = vunpack.c.l.b16 %v6176
    %v6448 = vunpack.c.h.b16 %v6176
    %v6449 = vunpack.c.l.b16 %v6177
    %v6450 = vunpack.c.h.b16 %v6177
    %v6451 = vunpack.c.l.b16 %v6178
    %v6452 = vunpack.c.h.b16 %v6178
    %v6453 = vunpack.c.l.b16 %v6179
    %v6454 = vunpack.c.h.b16 %v6179
    %v6455 = vunpack.c.l.b16 %v6180
    %v6456 = vunpack.c.h.b16 %v6180
    %v6457 = vunpack.c.l.b16 %v6181
    %v6458 = vunpack.c.h.b16 %v6181
    %v6459 = vunpack.c.l.b16 %v6182
    %v6460 = vunpack.c.h.b16 %v6182
    %v6461 = vunpack.c.l.b16 %v6183
    %v6462 = vunpack.c.h.b16 %v6183
    %v6463 = vunpack.c.l.b16 %v6184
    %v6464 = vunpack.c.h.b16 %v6184
    %v6465 = vunpack.c.l.b16 %v6185
    %v6466 = vunpack.c.h.b16 %v6185
    %v6467 = vunpack.c.l.b16 %v6186
    %v6468 = vunpack.c.h.b16 %v6186
    %v6469 = vunpack.c.l.b16 %v6187
    %v6470 = vunpack.c.h.b16 %v6187
    %v6471 = vunpack.c.l.b16 %v6188
    %v6472 = vunpack.c.h.b16 %v6188
    %v6473 = vunpack.c.l.b16 %v6189
    %v6474 = vunpack.c.h.b16 %v6189
    %v6475 = vunpack.c.l.b16 %v6190
    %v6476 = vunpack.c.h.b16 %v6190
    %v6477 = vunpack.c.l.b16 %v6191
    %v6478 = vunpack.c.h.b16 %v6191
    %v6479 = vunpack.c.l.b16 %v6192
    %v6480 = vunpack.c.h.b16 %v6192
    %v6481 = vunpack.c.l.b16 %v6193
    %v6482 = vunpack.c.h.b16 %v6193
    %v6483 = vunpack.c.l.b16 %v6194
    %v6484 = vunpack.c.h.b16 %v6194
    %v6485 = vunpack.c.l.b16 %v6195
    %v6486 = vunpack.c.h.b16 %v6195
    %v6487 = vunpack.c.l.b16 %v6196
    %v6488 = vunpack.c.h.b16 %v6196
    %v6489 = vunpack.c.l.b16 %v6197
    %v6490 = vunpack.c.h.b16 %v6197
    %v6491 = vunpack.c.l.b16 %v6198
    %v6492 = vunpack.c.h.b16 %v6198
    %v6493 = vunpack.c.l.b16 %v6199
    %v6494 = vunpack.c.h.b16 %v6199
    %v6495 = vunpack.c.l.b16 %v6200
    %v6496 = vunpack.c.h.b16 %v6200
    %v6497 = vunpack.c.l.b16 %v6201
    %v6498 = vunpack.c.h.b16 %v6201
    %v6499 = vunpack.c.l.b16 %v6202
    %v6500 = vunpack.c.h.b16 %v6202
    %v6501 = vunpack.c.l.b16 %v6203
    %v6502 = vunpack.c.h.b16 %v6203
    %v6503 = vunpack.c.l.b16 %v6204
    %v6504 = vunpack.c.h.b16 %v6204
    %v6505 = vunpack.c.l.b16 %v6205
    %v6506 = vunpack.c.h.b16 %v6205
    %v6507 = vunpack.c.l.b16 %v6206
    %v6508 = vunpack.c.h.b16 %v6206
    %v6509 = vunpack.c.l.b16 %v6207
    %v6510 = vunpack.c.h.b16 %v6207
    %v6511 = vunpack.c.l.b16 %v6208
    %v6512 = vunpack.c.h.b16 %v6208
    %v6513 = vunpack.c.l.b16 %v6209
    %v6514 = vunpack.c.h.b16 %v6209
    %v6515 = vunpack.c.l.b16 %v6210
    %v6516 = vunpack.c.h.b16 %v6210
    %v6517 = vunpack.c.l.b16 %v6211
    %v6518 = vunpack.c.h.b16 %v6211
    %v6519 = vunpack.c.l.b16 %v6212
    %v6520 = vunpack.c.h.b16 %v6212
    %v6521 = vunpack.c.l.b16 %v6213
    %v6522 = vunpack.c.h.b16 %v6213
    %v6523 = vunpack.c.l.b16 %v6214
    %v6524 = vunpack.c.h.b16 %v6214
    %v6525 = vunpack.c.l.b16 %v6215
    %v6526 = vunpack.c.h.b16 %v6215
    %v6527 = vunpack.c.l.b16 %v6216
    %v6528 = vunpack.c.h.b16 %v6216
    %v6529 = vunpack.c.l.b16 %v6217
    %v6530 = vunpack.c.h.b16 %v6217
    %v6531 = vunpack.c.l.b16 %v6218
    %v6532 = vunpack.c.h.b16 %v6218
    %v6533 = vunpack.c.l.b16 %v6219
    %v6534 = vunpack.c.h.b16 %v6219
    %v6535 = vunpack.c.l.b16 %v6220
    %v6536 = vunpack.c.h.b16 %v6220
    %v6537 = vunpack.c.l.b16 %v6221
    %v6538 = vunpack.c.h.b16 %v6221
    %v6539 = vunpack.c.l.b16 %v6222
    %v6540 = vunpack.c.h.b16 %v6222
    %v6541 = vunpack.c.l.b16 %v6223
    %v6542 = vunpack.c.h.b16 %v6223
    %v6543 = vunpack.c.l.b16 %v6224
    %v6544 = vunpack.c.h.b16 %v6224
    %v6545 = vunpack.c.l.b16 %v6225
    %v6546 = vunpack.c.h.b16 %v6225
    %v6547 = vunpack.c.l.b16 %v6226
    %v6548 = vunpack.c.h.b16 %v6226
    %v6549 = vunpack.c.l.b16 %v6227
    %v6550 = vunpack.c.h.b16 %v6227
    %v6551 = vunpack.c.l.b16 %v6228
    %v6552 = vunpack.c.h.b16 %v6228
    %v6553 = vunpack.c.l.b16 %v6229
    %v6554 = vunpack.c.h.b16 %v6229
    %v6555 = vunpack.c.l.b16 %v6230
    %v6556 = vunpack.c.h.b16 %v6230
    %v6557 = vunpack.c.l.b16 %v6231
    %v6558 = vunpack.c.h.b16 %v6231
    %v6559 = vunpack.c.l.b16 %v6232
    %v6560 = vunpack.c.h.b16 %v6232
    %v6561 = vunpack.c.l.b16 %v6233
    %v6562 = vunpack.c.h.b16 %v6233
    %v6563 = vunpack.c.l.b16 %v6234
    %v6564 = vunpack.c.h.b16 %v6234
    %v6565 = vunpack.c.l.b16 %v6235
    %v6566 = vunpack.c.h.b16 %v6235
    %v6567 = vunpack.c.l.b16 %v6236
    %v6568 = vunpack.c.h.b16 %v6236
    %v6569 = vunpack.c.l.b16 %v6237
    %v6570 = vunpack.c.h.b16 %v6237
    %v6571 = vunpack.c.l.b16 %v6238
    %v6572 = vunpack.c.h.b16 %v6238
    %v6573 = vunpack.c.l.b16 %v6239
    %v6574 = vunpack.c.h.b16 %v6239
    %v6575 = vunpack.c.l.b16 %v6240
    %v6576 = vunpack.c.h.b16 %v6240
    %v6577 = vunpack.c.l.b16 %v6241
    %v6578 = vunpack.c.h.b16 %v6241
    %v6579 = vunpack.c.l.b16 %v6242
    %v6580 = vunpack.c.h.b16 %v6242
    %v6581 = vunpack.c.l.b16 %v6243
    %v6582 = vunpack.c.h.b16 %v6243
    %v6583 = vunpack.c.l.b16 %v6244
    %v6584 = vunpack.c.h.b16 %v6244
    %v6585 = vunpack.c.l.b16 %v6245
    %v6586 = vunpack.c.h.b16 %v6245
    %v6587 = vunpack.c.l.b16 %v6246
    %v6588 = vunpack.c.h.b16 %v6246
    %v6589 = vunpack.c.l.b16 %v6247
    %v6590 = vunpack.c.h.b16 %v6247
    %v6591 = vunpack.c.l.b16 %v6248
    %v6592 = vunpack.c.h.b16 %v6248
    %v6593 = vunpack.c.l.b16 %v6249
    %v6594 = vunpack.c.h.b16 %v6249
    %v6595 = vunpack.c.l.b16 %v6250
    %v6596 = vunpack.c.h.b16 %v6250
    %v6597 = vunpack.c.l.b16 %v6251
    %v6598 = vunpack.c.h.b16 %v6251
    %v6599 = vunpack.c.l.b16 %v6252
    %v6600 = vunpack.c.h.b16 %v6252
    %v6601 = vunpack.c.l.b16 %v6253
    %v6602 = vunpack.c.h.b16 %v6253
    %v6603 = vunpack.c.l.b16 %v6254
    %v6604 = vunpack.c.h.b16 %v6254
    %v6605 = vunpack.c.l.b16 %v6255
    %v6606 = vunpack.c.h.b16 %v6255
    %v6607 = vunpack.c.l.b16 %v6256
    %v6608 = vunpack.c.h.b16 %v6256
    %v6609 = vunpack.c.l.b16 %v6257
    %v6610 = vunpack.c.h.b16 %v6257
    %v6611 = vunpack.c.l.b16 %v6258
    %v6612 = vunpack.c.h.b16 %v6258
    %v6613 = vunpack.c.l.b16 %v6259
    %v6614 = vunpack.c.h.b16 %v6259
    %v6615 = vunpack.c.l.b16 %v6260
    %v6616 = vunpack.c.h.b16 %v6260
    %v6617 = vunpack.c.l.b16 %v6261
    %v6618 = vunpack.c.h.b16 %v6261
    %v6619 = vunpack.c.l.b16 %v6262
    %v6620 = vunpack.c.h.b16 %v6262
    %v6621 = vunpack.c.l.b16 %v6263
    %v6622 = vunpack.c.h.b16 %v6263
    %v6623 = vunpack.c.l.b16 %v6264
    %v6624 = vunpack.c.h.b16 %v6264
    %v6625 = vunpack.c.l.b16 %v6265
    %v6626 = vunpack.c.h.b16 %v6265
    %v6627 = vunpack.c.l.b16 %v6266
    %v6628 = vunpack.c.h.b16 %v6266
    %v6629 = vunpack.c.l.b16 %v6267
    %v6630 = vunpack.c.h.b16 %v6267
    %v6631 = vunpack.c.l.b16 %v6268
    %v6632 = vunpack.c.h.b16 %v6268
    %v6633 = vunpack.c.l.b16 %v6269
    %v6634 = vunpack.c.h.b16 %v6269
    %v6635 = vunpack.c.l.b16 %v6270
    %v6636 = vunpack.c.h.b16 %v6270
    %v6637 = vunpack.c.l.b16 %v6271
    %v6638 = vunpack.c.h.b16 %v6271
    %v6639 = vunpack.c.l.b16 %v6272
    %v6640 = vunpack.c.h.b16 %v6272
    %v6641 = vunpack.c.l.b16 %v6273
    %v6642 = vunpack.c.h.b16 %v6273
    %v6643 = vunpack.c.l.b16 %v6274
    %v6644 = vunpack.c.h.b16 %v6274
    %v6645 = vunpack.c.l.b16 %v6275
    %v6646 = vunpack.c.h.b16 %v6275
    %v6647 = vunpack.c.l.b16 %v6276
    %v6648 = vunpack.c.h.b16 %v6276
    %v6649 = vunpack.c.l.b16 %v6277
    %v6650 = vunpack.c.h.b16 %v6277
    %v6651 = vunpack.c.l.b16 %v6278
    %v6652 = vunpack.c.h.b16 %v6278
    %v6653 = vunpack.c.l.b16 %v6279
    %v6654 = vunpack.c.h.b16 %v6279
    %v6655 = vunpack.c.l.b16 %v6280
    %v6656 = vunpack.c.h.b16 %v6280
    %v6657 = vunpack.c.l.b16 %v6281
    %v6658 = vunpack.c.h.b16 %v6281
    %v6659 = vunpack.c.l.b16 %v6282
    %v6660 = vunpack.c.h.b16 %v6282
    %v6661 = vunpack.c.l.b16 %v6283
    %v6662 = vunpack.c.h.b16 %v6283
    %v6663 = vunpack.c.l.b16 %v6284
    %v6664 = vunpack.c.h.b16 %v6284
    %v6665 = vunpack.c.l.b16 %v6285
    %v6666 = vunpack.c.h.b16 %v6285
    %v6667 = vunpack.c.l.b16 %v6286
    %v6668 = vunpack.c.h.b16 %v6286
    %v6669 = vunpack.c.l.b16 %v6287
    %v6670 = vunpack.c.h.b16 %v6287
    %v6671 = vunpack.c.l.b16 %v6288
    %v6672 = vunpack.c.h.b16 %v6288
    %v6673 = vpack.c.b16 %v6425, %v6417
    %v6674 = vpack.c.b16 %v6426, %v6418
    %v6675 = vpack.c.b16 %v6427, %v6419
    %v6676 = vpack.c.b16 %v6428, %v6420
    %v6677 = vpack.c.b16 %v6429, %v6421
    %v6678 = vpack.c.b16 %v6430, %v6422
    %v6679 = vpack.c.b16 %v6431, %v6423
    %v6680 = vpack.c.b16 %v6432, %v6424
    %v6681 = vpack.c.b16 %v6441, %v6433
    %v6682 = vpack.c.b16 %v6442, %v6434
    %v6683 = vpack.c.b16 %v6443, %v6435
    %v6684 = vpack.c.b16 %v6444, %v6436
    %v6685 = vpack.c.b16 %v6445, %v6437
    %v6686 = vpack.c.b16 %v6446, %v6438
    %v6687 = vpack.c.b16 %v6447, %v6439
    %v6688 = vpack.c.b16 %v6448, %v6440
    %v6689 = vpack.c.b16 %v6457, %v6449
    %v6690 = vpack.c.b16 %v6458, %v6450
    %v6691 = vpack.c.b16 %v6459, %v6451
    %v6692 = vpack.c.b16 %v6460, %v6452
    %v6693 = vpack.c.b16 %v6461, %v6453
    %v6694 = vpack.c.b16 %v6462, %v6454
    %v6695 = vpack.c.b16 %v6463, %v6455
    %v6696 = vpack.c.b16 %v6464, %v6456
    %v6697 = vpack.c.b16 %v6473, %v6465
    %v6698 = vpack.c.b16 %v6474, %v6466
    %v6699 = vpack.c.b16 %v6475, %v6467
    %v6700 = vpack.c.b16 %v6476, %v6468
    %v6701 = vpack.c.b16 %v6477, %v6469
    %v6702 = vpack.c.b16 %v6478, %v6470
    %v6703 = vpack.c.b16 %v6479, %v6471
    %v6704 = vpack.c.b16 %v6480, %v6472
    %v6705 = vpack.c.b16 %v6489, %v6481
    %v6706 = vpack.c.b16 %v6490, %v6482
    %v6707 = vpack.c.b16 %v6491, %v6483
    %v6708 = vpack.c.b16 %v6492, %v6484
    %v6709 = vpack.c.b16 %v6493, %v6485
    %v6710 = vpack.c.b16 %v6494, %v6486
    %v6711 = vpack.c.b16 %v6495, %v6487
    %v6712 = vpack.c.b16 %v6496, %v6488
    %v6713 = vpack.c.b16 %v6505, %v6497
    %v6714 = vpack.c.b16 %v6506, %v6498
    %v6715 = vpack.c.b16 %v6507, %v6499
    %v6716 = vpack.c.b16 %v6508, %v6500
    %v6717 = vpack.c.b16 %v6509, %v6501
    %v6718 = vpack.c.b16 %v6510, %v6502
    %v6719 = vpack.c.b16 %v6511, %v6503
    %v6720 = vpack.c.b16 %v6512, %v6504
    %v6721 = vpack.c.b16 %v6521, %v6513
    %v6722 = vpack.c.b16 %v6522, %v6514
    %v6723 = vpack.c.b16 %v6523, %v6515
    %v6724 = vpack.c.b16 %v6524, %v6516
    %v6725 = vpack.c.b16 %v6525, %v6517
    %v6726 = vpack.c.b16 %v6526, %v6518
    %v6727 = vpack.c.b16 %v6527, %v6519
    %v6728 = vpack.c.b16 %v6528, %v6520
    %v6729 = vpack.c.b16 %v6537, %v6529
    %v6730 = vpack.c.b16 %v6538, %v6530
    %v6731 = vpack.c.b16 %v6539, %v6531
    %v6732 = vpack.c.b16 %v6540, %v6532
    %v6733 = vpack.c.b16 %v6541, %v6533
    %v6734 = vpack.c.b16 %v6542, %v6534
    %v6735 = vpack.c.b16 %v6543, %v6535
    %v6736 = vpack.c.b16 %v6544, %v6536
    %v6737 = vpack.c.b16 %v6553, %v6545
    %v6738 = vpack.c.b16 %v6554, %v6546
    %v6739 = vpack.c.b16 %v6555, %v6547
    %v6740 = vpack.c.b16 %v6556, %v6548
    %v6741 = vpack.c.b16 %v6557, %v6549
    %v6742 = vpack.c.b16 %v6558, %v6550
    %v6743 = vpack.c.b16 %v6559, %v6551
    %v6744 = vpack.c.b16 %v6560, %v6552
    %v6745 = vpack.c.b16 %v6569, %v6561
    %v6746 = vpack.c.b16 %v6570, %v6562
    %v6747 = vpack.c.b16 %v6571, %v6563
    %v6748 = vpack.c.b16 %v6572, %v6564
    %v6749 = vpack.c.b16 %v6573, %v6565
    %v6750 = vpack.c.b16 %v6574, %v6566
    %v6751 = vpack.c.b16 %v6575, %v6567
    %v6752 = vpack.c.b16 %v6576, %v6568
    %v6753 = vpack.c.b16 %v6585, %v6577
    %v6754 = vpack.c.b16 %v6586, %v6578
    %v6755 = vpack.c.b16 %v6587, %v6579
    %v6756 = vpack.c.b16 %v6588, %v6580
    %v6757 = vpack.c.b16 %v6589, %v6581
    %v6758 = vpack.c.b16 %v6590, %v6582
    %v6759 = vpack.c.b16 %v6591, %v6583
    %v6760 = vpack.c.b16 %v6592, %v6584
    %v6761 = vpack.c.b16 %v6601, %v6593
    %v6762 = vpack.c.b16 %v6602, %v6594
    %v6763 = vpack.c.b16 %v6603, %v6595
    %v6764 = vpack.c.b16 %v6604, %v6596
    %v6765 = vpack.c.b16 %v6605, %v6597
    %v6766 = vpack.c.b16 %v6606, %v6598
    %v6767 = vpack.c.b16 %v6607, %v6599
    %v6768 = vpack.c.b16 %v6608, %v6600
    %v6769 = vpack.c.b16 %v6617, %v6609
    %v6770 = vpack.c.b16 %v6618, %v6610
    %v6771 = vpack.c.b16 %v6619, %v6611
    %v6772 = vpack.c.b16 %v6620, %v6612
    %v6773 = vpack.c.b16 %v6621, %v6613
    %v6774 = vpack.c.b16 %v6622, %v6614
    %v6775 = vpack.c.b16 %v6623, %v6615
    %v6776 = vpack.c.b16 %v6624, %v6616
    %v6777 = vpack.c.b16 %v6633, %v6625
    %v6778 = vpack.c.b16 %v6634, %v6626
    %v6779 = vpack.c.b16 %v6635, %v6627
    %v6780 = vpack.c.b16 %v6636, %v6628
    %v6781 = vpack.c.b16 %v6637, %v6629
    %v6782 = vpack.c.b16 %v6638, %v6630
    %v6783 = vpack.c.b16 %v6639, %v6631
    %v6784 = vpack.c.b16 %v6640, %v6632
    %v6785 = vpack.c.b16 %v6649, %v6641
    %v6786 = vpack.c.b16 %v6650, %v6642
    %v6787 = vpack.c.b16 %v6651, %v6643
    %v6788 = vpack.c.b16 %v6652, %v6644
    %v6789 = vpack.c.b16 %v6653, %v6645
    %v6790 = vpack.c.b16 %v6654, %v6646
    %v6791 = vpack.c.b16 %v6655, %v6647
    %v6792 = vpack.c.b16 %v6656, %v6648
    %v6793 = vpack.c.b16 %v6665, %v6657
    %v6794 = vpack.c.b16 %v6666, %v6658
    %v6795 = vpack.c.b16 %v6667, %v6659
    %v6796 = vpack.c.b16 %v6668, %v6660
    %v6797 = vpack.c.b16 %v6669, %v6661
    %v6798 = vpack.c.b16 %v6670, %v6662
    %v6799 = vpack.c.b16 %v6671, %v6663
    %v6800 = vpack.c.b16 %v6672, %v6664
    %6929 = vmatprep.subr.bf16.mxu0 %v6674
    %6930 = vmatpush1.bf16.msra.mxu0 %v6673
    %6931 = vmatprep.subr.bf16.mxu0 %v6682
    %6932 = vmatpush1.bf16.msra.mxu0 %v6681
    %6933 = vmatprep.subr.bf16.mxu0 %v6690
    %6934 = vmatpush1.bf16.msra.mxu0 %v6689
    %6935 = vmatprep.subr.bf16.mxu0 %v6698
    %6936 = vmatpush1.bf16.msra.mxu0 %v6697
    %6937 = vmatprep.subr.bf16.mxu0 %v6706
    %6938 = vmatpush1.bf16.msra.mxu0 %v6705
    %6939 = vmatprep.subr.bf16.mxu0 %v6714
    %6940 = vmatpush1.bf16.msra.mxu0 %v6713
    %6941 = vmatprep.subr.bf16.mxu0 %v6722
    %6942 = vmatpush1.bf16.msra.mxu0 %v6721
    %6943 = vmatprep.subr.bf16.mxu0 %v6730
    %6944 = vmatpush1.bf16.msra.mxu0 %v6729
    %6945 = vmatprep.subr.bf16.mxu0 %v6738
    %6946 = vmatpush1.bf16.msra.mxu0 %v6737
    %6947 = vmatprep.subr.bf16.mxu0 %v6746
    %6948 = vmatpush1.bf16.msra.mxu0 %v6745
    %6949 = vmatprep.subr.bf16.mxu0 %v6754
    %6950 = vmatpush1.bf16.msra.mxu0 %v6753
    %6951 = vmatprep.subr.bf16.mxu0 %v6762
    %6952 = vmatpush1.bf16.msra.mxu0 %v6761
    %6953 = vmatprep.subr.bf16.mxu0 %v6770
    %6954 = vmatpush1.bf16.msra.mxu0 %v6769
    %6955 = vmatprep.subr.bf16.mxu0 %v6778
    %6956 = vmatpush1.bf16.msra.mxu0 %v6777
    %6957 = vmatprep.subr.bf16.mxu0 %v6786
    %6958 = vmatpush1.bf16.msra.mxu0 %v6785
    %6959 = vmatprep.subr.bf16.mxu0 %v6794
    %6960 = vmatpush1.bf16.msra.mxu0 %v6793
    %6961 = vmatprep.mubr.bf16.mxu0 %v92
    %6962 = vmatmul.mubr.bf16.gmra.mrb[0].mxu0 %v91
    %v6963 = vpop.f32.mrb[0].mxu0
    %v6964 = vadd.f32 0.0, %v6963
    %v6965 = vpop.f32.mrb[0].mxu0
    %v6966 = vadd.f32 0.0, %v6965
    %v6967 = vpop.f32.mrb[0].mxu0
    %v6968 = vpop.f32.mrb[0].mxu0
    %6969 = vdwg.mxu0
    %6970 = vmatprep.subr.bf16.mxu0 %v6676
    %6971 = vmatpush1.bf16.msra.mxu0 %v6675
    %6972 = vmatprep.subr.bf16.mxu0 %v6684
    %6973 = vmatpush1.bf16.msra.mxu0 %v6683
    %6974 = vmatprep.subr.bf16.mxu0 %v6692
    %6975 = vmatpush1.bf16.msra.mxu0 %v6691
    %6976 = vmatprep.subr.bf16.mxu0 %v6700
    %6977 = vmatpush1.bf16.msra.mxu0 %v6699
    %6978 = vmatprep.subr.bf16.mxu0 %v6708
    %6979 = vmatpush1.bf16.msra.mxu0 %v6707
    %6980 = vmatprep.subr.bf16.mxu0 %v6716
    %6981 = vmatpush1.bf16.msra.mxu0 %v6715
    %6982 = vmatprep.subr.bf16.mxu0 %v6724
    %6983 = vmatpush1.bf16.msra.mxu0 %v6723
    %6984 = vmatprep.subr.bf16.mxu0 %v6732
    %6985 = vmatpush1.bf16.msra.mxu0 %v6731
    %6986 = vmatprep.subr.bf16.mxu0 %v6740
    %6987 = vmatpush1.bf16.msra.mxu0 %v6739
    %6988 = vmatprep.subr.bf16.mxu0 %v6748
    %6989 = vmatpush1.bf16.msra.mxu0 %v6747
    %6990 = vmatprep.subr.bf16.mxu0 %v6756
    %6991 = vmatpush1.bf16.msra.mxu0 %v6755
    %6992 = vmatprep.subr.bf16.mxu0 %v6764
    %6993 = vmatpush1.bf16.msra.mxu0 %v6763
    %6994 = vmatprep.subr.bf16.mxu0 %v6772
    %6995 = vmatpush1.bf16.msra.mxu0 %v6771
    %6996 = vmatprep.subr.bf16.mxu0 %v6780
    %6997 = vmatpush1.bf16.msra.mxu0 %v6779
    %6998 = vmatprep.subr.bf16.mxu0 %v6788
    %6999 = vmatpush1.bf16.msra.mxu0 %v6787
    %7000 = vmatprep.subr.bf16.mxu0 %v6796
    %7001 = vmatpush1.bf16.msra.mxu0 %v6795
    %7002 = vmatprep.mubr.bf16.mxu0 %v92
    %7003 = vmatmul.mubr.bf16.gmra.mrb[0].mxu0 %v91
    %v7004 = vpop.f32.mrb[0].mxu0
    %v7005 = vadd.f32 0.0, %v7004
    %v7006 = vpop.f32.mrb[0].mxu0
    %v7007 = vadd.f32 0.0, %v7006
    %v7008 = vpop.f32.mrb[0].mxu0
    %v7009 = vpop.f32.mrb[0].mxu0
    %7010 = vdwg.mxu0
    %7011 = vmatprep.subr.bf16.mxu0 %v6678
    %7012 = vmatpush1.bf16.msra.mxu0 %v6677
    %7013 = vmatprep.subr.bf16.mxu0 %v6686
    %7014 = vmatpush1.bf16.msra.mxu0 %v6685
    %7015 = vmatprep.subr.bf16.mxu0 %v6694
    %7016 = vmatpush1.bf16.msra.mxu0 %v6693
    %7017 = vmatprep.subr.bf16.mxu0 %v6702
    %7018 = vmatpush1.bf16.msra.mxu0 %v6701
    %7019 = vmatprep.subr.bf16.mxu0 %v6710
    %7020 = vmatpush1.bf16.msra.mxu0 %v6709
    %7021 = vmatprep.subr.bf16.mxu0 %v6718
    %7022 = vmatpush1.bf16.msra.mxu0 %v6717
    %7023 = vmatprep.subr.bf16.mxu0 %v6726
    %7024 = vmatpush1.bf16.msra.mxu0 %v6725
    %7025 = vmatprep.subr.bf16.mxu0 %v6734
    %7026 = vmatpush1.bf16.msra.mxu0 %v6733
    %7027 = vmatprep.subr.bf16.mxu0 %v6742
    %7028 = vmatpush1.bf16.msra.mxu0 %v6741
    %7029 = vmatprep.subr.bf16.mxu0 %v6750
    %7030 = vmatpush1.bf16.msra.mxu0 %v6749
    %7031 = vmatprep.subr.bf16.mxu0 %v6758
    %7032 = vmatpush1.bf16.msra.mxu0 %v6757
    %7033 = vmatprep.subr.bf16.mxu0 %v6766
    %7034 = vmatpush1.bf16.msra.mxu0 %v6765
    %7035 = vmatprep.subr.bf16.mxu0 %v6774
    %7036 = vmatpush1.bf16.msra.mxu0 %v6773
    %7037 = vmatprep.subr.bf16.mxu0 %v6782
    %7038 = vmatpush1.bf16.msra.mxu0 %v6781
    %7039 = vmatprep.subr.bf16.mxu0 %v6790
    %7040 = vmatpush1.bf16.msra.mxu0 %v6789
    %7041 = vmatprep.subr.bf16.mxu0 %v6798
    %7042 = vmatpush1.bf16.msra.mxu0 %v6797
    %7043 = vmatprep.mubr.bf16.mxu0 %v92
    %7044 = vmatmul.mubr.bf16.gmra.mrb[0].mxu0 %v91
    %v7045 = vpop.f32.mrb[0].mxu0
    %v7046 = vadd.f32 0.0, %v7045
    %v7047 = vpop.f32.mrb[0].mxu0
    %v7048 = vadd.f32 0.0, %v7047
    %v7049 = vpop.f32.mrb[0].mxu0
    %v7050 = vpop.f32.mrb[0].mxu0
    %7051 = vdwg.mxu0
    %7052 = vmatprep.subr.bf16.mxu0 %v6680
    %7053 = vmatpush1.bf16.msra.mxu0 %v6679
    %7054 = vmatprep.subr.bf16.mxu0 %v6688
    %7055 = vmatpush1.bf16.msra.mxu0 %v6687
    %7056 = vmatprep.subr.bf16.mxu0 %v6696
    %7057 = vmatpush1.bf16.msra.mxu0 %v6695
    %7058 = vmatprep.subr.bf16.mxu0 %v6704
    %7059 = vmatpush1.bf16.msra.mxu0 %v6703
    %7060 = vmatprep.subr.bf16.mxu0 %v6712
    %7061 = vmatpush1.bf16.msra.mxu0 %v6711
    %7062 = vmatprep.subr.bf16.mxu0 %v6720
    %7063 = vmatpush1.bf16.msra.mxu0 %v6719
    %7064 = vmatprep.subr.bf16.mxu0 %v6728
    %7065 = vmatpush1.bf16.msra.mxu0 %v6727
    %7066 = vmatprep.subr.bf16.mxu0 %v6736
    %7067 = vmatpush1.bf16.msra.mxu0 %v6735
    %7068 = vmatprep.subr.bf16.mxu0 %v6744
    %7069 = vmatpush1.bf16.msra.mxu0 %v6743
    %7070 = vmatprep.subr.bf16.mxu0 %v6752
    %7071 = vmatpush1.bf16.msra.mxu0 %v6751
    %7072 = vmatprep.subr.bf16.mxu0 %v6760
    %7073 = vmatpush1.bf16.msra.mxu0 %v6759
    %7074 = vmatprep.subr.bf16.mxu0 %v6768
    %7075 = vmatpush1.bf16.msra.mxu0 %v6767
    %7076 = vmatprep.subr.bf16.mxu0 %v6776
    %7077 = vmatpush1.bf16.msra.mxu0 %v6775
    %7078 = vmatprep.subr.bf16.mxu0 %v6784
    %7079 = vmatpush1.bf16.msra.mxu0 %v6783
    %7080 = vmatprep.subr.bf16.mxu0 %v6792
    %7081 = vmatpush1.bf16.msra.mxu0 %v6791
    %7082 = vmatprep.subr.bf16.mxu0 %v6800
    %7083 = vmatpush1.bf16.msra.mxu0 %v6799
    %7084 = vmatprep.mubr.bf16.mxu0 %v92
    %7085 = vmatmul.mubr.bf16.gmra.mrb[0].mxu0 %v91
    %v7086 = vpop.f32.mrb[0].mxu0
    %v7087 = vadd.f32 0.0, %v7086
    %v7088 = vpop.f32.mrb[0].mxu0
    %v7089 = vadd.f32 0.0, %v7088
    %v7090 = vpop.f32.mrb[0].mxu0
    %v7091 = vpop.f32.mrb[0].mxu0
    %7092 = vdwg.mxu0
    %v7093 = vmul.f32 %v6032, %v6032
    %v7094 = vmul.f32 %v6034, %v6034
    %v7095 = vmul.f32 %v6073, %v6073
    %v7096 = vmul.f32 %v6075, %v6075
    %v7097 = vmul.f32 %v6114, %v6114
    %v7098 = vmul.f32 %v6116, %v6116
    %v7099 = vmul.f32 %v6155, %v6155
    %v7100 = vmul.f32 %v6157, %v6157
    %v7101 = vmul.f32 %v6964, %v6964
    %v7102 = vmul.f32 %v6966, %v6966
    %v7103 = vmul.f32 %v7005, %v7005
    %v7104 = vmul.f32 %v7007, %v7007
    %v7105 = vmul.f32 %v7046, %v7046
    %v7106 = vmul.f32 %v7048, %v7048
    %v7107 = vmul.f32 %v7087, %v7087
    %v7108 = vmul.f32 %v7089, %v7089
    %v7109 = vadd.f32 %v7093, %v7101
    %v7110 = vadd.f32 %v7094, %v7102
    %v7111 = vadd.f32 %v7095, %v7103
    %v7112 = vadd.f32 %v7096, %v7104
    %v7113 = vadd.f32 %v7097, %v7105
    %v7114 = vadd.f32 %v7098, %v7106
    %v7115 = vadd.f32 %v7099, %v7107
    %v7116 = vadd.f32 %v7100, %v7108
    %v7117 = vrsqrt.pop %v7109
    %v7118 = vmul.f32 %v7109, %v7117
    %vm7119 = vcmp.eq.f32.partialorder %v7109, inf
    %v7120 = vsel %vm7119, %v7109, %v7118
    %vm7121 = vcmp.eq.f32.partialorder %v7109, 0.0
    %v7122 = vand.u32 %v7109, 2147483648
    %v7123 = vsel %vm7121, %v7122, %v7120
    %v7124 = vrsqrt.pop %v7110
    %v7125 = vmul.f32 %v7110, %v7124
    %vm7126 = vcmp.eq.f32.partialorder %v7110, inf
    %v7127 = vsel %vm7126, %v7110, %v7125
    %vm7128 = vcmp.eq.f32.partialorder %v7110, 0.0
    %v7129 = vand.u32 %v7110, 2147483648
    %v7130 = vsel %vm7128, %v7129, %v7127
    %v7131 = vrsqrt.pop %v7111
    %v7132 = vmul.f32 %v7111, %v7131
    %vm7133 = vcmp.eq.f32.partialorder %v7111, inf
    %v7134 = vsel %vm7133, %v7111, %v7132
    %vm7135 = vcmp.eq.f32.partialorder %v7111, 0.0
    %v7136 = vand.u32 %v7111, 2147483648
    %v7137 = vsel %vm7135, %v7136, %v7134
    %v7138 = vrsqrt.pop %v7112
    %v7139 = vmul.f32 %v7112, %v7138
    %vm7140 = vcmp.eq.f32.partialorder %v7112, inf
    %v7141 = vsel %vm7140, %v7112, %v7139
    %vm7142 = vcmp.eq.f32.partialorder %v7112, 0.0
    %v7143 = vand.u32 %v7112, 2147483648
    %v7144 = vsel %vm7142, %v7143, %v7141
    %v7145 = vrsqrt.pop %v7113
    %v7146 = vmul.f32 %v7113, %v7145
    %vm7147 = vcmp.eq.f32.partialorder %v7113, inf
    %v7148 = vsel %vm7147, %v7113, %v7146
    %vm7149 = vcmp.eq.f32.partialorder %v7113, 0.0
    %v7150 = vand.u32 %v7113, 2147483648
    %v7151 = vsel %vm7149, %v7150, %v7148
    %v7152 = vrsqrt.pop %v7114
    %v7153 = vmul.f32 %v7114, %v7152
    %vm7154 = vcmp.eq.f32.partialorder %v7114, inf
    %v7155 = vsel %vm7154, %v7114, %v7153
    %vm7156 = vcmp.eq.f32.partialorder %v7114, 0.0
    %v7157 = vand.u32 %v7114, 2147483648
    %v7158 = vsel %vm7156, %v7157, %v7155
    %v7159 = vrsqrt.pop %v7115
    %v7160 = vmul.f32 %v7115, %v7159
    %vm7161 = vcmp.eq.f32.partialorder %v7115, inf
    %v7162 = vsel %vm7161, %v7115, %v7160
    %vm7163 = vcmp.eq.f32.partialorder %v7115, 0.0
    %v7164 = vand.u32 %v7115, 2147483648
    %v7165 = vsel %vm7163, %v7164, %v7162
    %v7166 = vrsqrt.pop %v7116
    %v7167 = vmul.f32 %v7116, %v7166
    %vm7168 = vcmp.eq.f32.partialorder %v7116, inf
    %v7169 = vsel %vm7168, %v7116, %v7167
    %vm7170 = vcmp.eq.f32.partialorder %v7116, 0.0
    %v7171 = vand.u32 %v7116, 2147483648
    %v7172 = vsel %vm7170, %v7171, %v7169
    %v7173 = vpack.c.bf16 %v7123, %v7123
    %v7174 = vpack.c.bf16 %v7130, %v7130
    %7175 = vst [vmem:[#allocation2] sm:$0xf] %v7173
    %7176 = vst [vmem:[#allocation2 + $0x8] sm:$0xf] %v7174
    %v7177 = vpack.c.bf16 %v7137, %v7137
    %v7178 = vpack.c.bf16 %v7144, %v7144
    %v7181 = vrot.slane %v7177, 4
    %v7182 = vrot.slane %v7178, 4
    %7185 = vst [vmem:[#allocation2] sm:$0xf0] %v7181
    %7186 = vst [vmem:[#allocation2 + $0x8] sm:$0xf0] %v7182
    %v7187 = vpack.c.bf16 %v7151, %v7151
    %v7188 = vpack.c.bf16 %v7158, %v7158
    %7189 = vst [vmem:[#allocation2 + $0x10] sm:$0xf] %v7187
    %7190 = vst [vmem:[#allocation2 + $0x18] sm:$0xf] %v7188
    %v7191 = vpack.c.bf16 %v7165, %v7165
    %v7192 = vpack.c.bf16 %v7172, %v7172
    %v7195 = vrot.slane %v7191, 4
    %v7196 = vrot.slane %v7192, 4
    %7199 = vst [vmem:[#allocation2 + $0x10] sm:$0xf0] %v7195
    %7200 = vst [vmem:[#allocation2 + $0x18] sm:$0xf0] %v7196
    %v7201 = vld [vmem:[#allocation2] sm:$0xff]
    %v7202 = vld [vmem:[#allocation2 + $0x8] sm:$0xff]
    %v7203 = vld [vmem:[#allocation2 + $0x10] sm:$0xff]
    %v7204 = vld [vmem:[#allocation2 + $0x18] sm:$0xff]
    %7205 = vmatprep.subr.bf16.mxu0 0
    %7206 = vmatpush1.bf16.msra.mxu0 %v159
    %7207 = vmatprep.subr.bf16.mxu0 0
    %7208 = vmatpush1.bf16.msra.mxu0 %v160
    %7209 = vmatprep.subr.bf16.mxu0 0
    %7210 = vmatpush1.bf16.msra.mxu0 %v161
    %7211 = vmatprep.subr.bf16.mxu0 0
    %7212 = vmatpush1.bf16.msra.mxu0 %v162
    %7213 = vmatprep.subr.bf16.mxu0 0
    %7214 = vmatpush1.bf16.msra.mxu0 %v163
    %7215 = vmatprep.subr.bf16.mxu0 0
    %7216 = vmatpush1.bf16.msra.mxu0 %v164
    %7217 = vmatprep.subr.bf16.mxu0 0
    %7218 = vmatpush1.bf16.msra.mxu0 %v165
    %7219 = vmatprep.subr.bf16.mxu0 0
    %7220 = vmatpush1.bf16.msra.mxu0 %v166
    %7221 = vmatprep.subr.bf16.mxu0 0
    %7222 = vmatpush1.bf16.msra.mxu0 %v167
    %7223 = vmatprep.subr.bf16.mxu0 0
    %7224 = vmatpush1.bf16.msra.mxu0 %v168
    %7225 = vmatprep.subr.bf16.mxu0 0
    %7226 = vmatpush1.bf16.msra.mxu0 %v169
    %7227 = vmatprep.subr.bf16.mxu0 0
    %7228 = vmatpush1.bf16.msra.mxu0 %v170
    %7229 = vmatprep.subr.bf16.mxu0 0
    %7230 = vmatpush1.bf16.msra.mxu0 %v171
    %7231 = vmatprep.subr.bf16.mxu0 0
    %7232 = vmatpush1.bf16.msra.mxu0 %v172
    %7233 = vmatprep.subr.bf16.mxu0 0
    %7234 = vmatpush1.bf16.msra.mxu0 %v173
    %7235 = vmatprep.subr.bf16.mxu0 0
    %7236 = vmatpush1.bf16.msra.mxu0 %v174
    %7237 = vmatprep.mubr.bf16.mxu0 %v7202
    %7238 = vmatmul.mubr.bf16.gmra.mrb[0].mxu0 %v7201
    %v7239 = vpop.f32.mrb[0].mxu0
    %v7240 = vadd.f32 0.0, %v7239
    %v7241 = vpop.f32.mrb[0].mxu0
    %v7242 = vpop.f32.mrb[0].mxu0
    %v7243 = vadd.f32 0.0, %v7242
    %v7244 = vpop.f32.mrb[0].mxu0
    %7245 = vmatprep.mubr.bf16.mxu0 %v7204
    %7246 = vmatmul.mubr.bf16.gmra.mrb[0].mxu0 %v7203
    %v7247 = vpop.f32.mrb[0].mxu0
    %v7248 = vadd.f32 0.0, %v7247
    %v7249 = vpop.f32.mrb[0].mxu0
    %v7250 = vpop.f32.mrb[0].mxu0
    %v7251 = vadd.f32 0.0, %v7250
    %v7252 = vpop.f32.mrb[0].mxu0
    %7253 = vdwg.mxu0
    %7254 = vst [vmem:[#allocation9 + $0x28] sm:$0xff] %v7240
    %7255 = vst [vmem:[#allocation9 + $0x30] sm:$0xff] %v7243
    %7256 = vst [vmem:[#allocation9 + $0x38] sm:$0xff] %v7248
    %7257 = vst [vmem:[#allocation9 + $0x40] sm:$0xff] %v7251
    // Predicated region
    $region26: #{tpu_custom_call.1} parent=1 // pred_check
      _
    $region27: #{tpu_custom_call.1} parent=1 // pred_check_branch
      %7259 = sbr.rel (0) target = $region29
    $region28: #{tpu_custom_call.1} parent=1 // pred_region
      %s7261 = ssub.s32 3200, 3200
      %7262 = vsyncadd [#allocation5], %s7261
      %s7263 = sshll.u32 [#allocation9], 4
      %s7264 = int_to_ptr.vmem [resolvable:$true] %s7263
      %7269 = dma.vmem_to_hbm [thread:$0]  %s7264, 3200, %s3, [#allocation5], 128, 128, 8
    $region29: #{tpu_custom_call.1} parent=1 // pred_fallthru
      _
    // Predicated region
    $region30: #{tpu_custom_call.1} parent=1 // pred_check
      _
    $region31: #{tpu_custom_call.1} parent=1 // pred_check_branch
      %7271 = sbr.rel (0) target = $region33
    $region32: #{tpu_custom_call.1} parent=1 // pred_region
      %7272 = dma.done [#allocation5], 3200
    $region33: #{tpu_custom_call.1} parent=1 // pred_fallthru
      _
    %7273 = vsyncpa [#allocation4], 1
    %7274 = vsyncpa [#allocation7], 1
    %7275 = vsyncpa [#allocation5], 1

</llo_original>
